<compile_context>
chip_gen: v6e
topology: v6e:2x2x1
jax: 0.10.0
libtpu: 0.0.40
codegen_flags: <defaults>
</compile_context>

<pallas_src>
import math
import jax
import jax.numpy as jnp
from jax.experimental import pallas as pl
from jax.experimental.pallas import tpu as pltpu

# ------------------------------------------------------------------ model dims
NATOM = 9
NRBF = 16
NS, NV = 100, 16          # node (scalar, vector) dims
SE, VE = 32, 1            # edge (scalar, vector) dims
H_MSG0 = 2 * NV + VE      # 33 : hidden vec dim of first message GVP
H_MSG = NV                # 16
H_FF = 2 * NV             # 32
H_OUT = NV                # 16

RB_TARGET = 256           # row block; fits easily in VMEM on v5e/v6e/v7x

_CP = pltpu.CompilerParams(dimension_semantics=("parallel",))


# ------------------------------------------------------------------ small utilities
def _round_up(n, m):
    return ((n + m - 1) // m) * m


def _choose_rb(n, target=RB_TARGET):
    return min(target, _round_up(max(int(n), 1), 8))


def _pad_rows_to(x, n_pad):
    n = x.shape[0]
    if n_pad == n:
        return x
    return jnp.pad(x, ((0, n_pad - n), (0, 0)))


def _row_spec(rb, cols):
    return pl.BlockSpec((rb, cols), lambda i: (i, 0))


def _full_spec(arr):
    return pl.BlockSpec(arr.shape, lambda i: (0, 0))


def _call_rowwise(kernel, n_pad, rb, row_ins, weight_ins, out_cols):
    """Run `kernel` over a 1-D row grid; row_ins are [n_pad, C] arrays, weight_ins are full blocks."""
    in_specs = ([_row_spec(rb, x.shape[1]) for x in row_ins]
                + [_full_spec(w) for w in weight_ins])
    multi = isinstance(out_cols, (tuple, list))
    if multi:
        out_shape = tuple(jax.ShapeDtypeStruct((n_pad, c), jnp.float32) for c in out_cols)
        out_specs = tuple(_row_spec(rb, c) for c in out_cols)
    else:
        out_shape = jax.ShapeDtypeStruct((n_pad, out_cols), jnp.float32)
        out_specs = _row_spec(rb, out_cols)
    return pl.pallas_call(
        kernel,
        grid=(n_pad // rb,),
        in_specs=in_specs,
        out_specs=out_specs,
        out_shape=out_shape,
        compiler_params=_CP,
    )(*row_ins, *weight_ins)


# ------------------------------------------------------------------ in-kernel helpers
def _ln_scalar(s, g_ref, b_ref):
    mu = jnp.mean(s, axis=-1, keepdims=True)
    var = jnp.mean(jnp.square(s - mu), axis=-1, keepdims=True)
    return (s - mu) * jax.lax.rsqrt(var + 1e-5) * g_ref[...] + b_ref[...]


def _ln_vector(vp, nv):
    # vp packed [R, 3*nv] = [x | y | z]; normalize by RMS of per-channel vector norms.
    sq = vp * vp
    vn2 = jnp.maximum(sq[:, :nv] + sq[:, nv:2 * nv] + sq[:, 2 * nv:3 * nv], 1e-8)
    inv = jax.lax.rsqrt(jnp.mean(vn2, axis=-1, keepdims=True))
    return vp * inv


def _gvp(s, vp, refs, *, h, relu, vec_out=True):
    """GVP with vector input, vector_gate=True, vector_act=None, on packed vectors.

    refs order: (wh_blockdiag, wss, wsvn, wsb[, wv_blockdiag, wg, wgb])
    wh/wv are 3x block-diagonal so a single MXU dot applies the per-coordinate linear.
    """
    bf16, f32 = jnp.bfloat16, jnp.float32
    if vec_out:
        wh, wss, wsvn, wsb, wv, wg, wgb = refs
    else:
        wh, wss, wsvn, wsb = refs
    vh = jnp.dot(vp.astype(bf16), wh[...], preferred_element_type=f32)        # [R, 3h]
    sq = vh * vh
    vn = jnp.sqrt(jnp.maximum(sq[:, :h] + sq[:, h:2 * h] + sq[:, 2 * h:3 * h], 1e-8))  # [R, h]
    s_out = (jnp.dot(s.astype(bf16), wss[...], preferred_element_type=f32)
             + jnp.dot(vn.astype(bf16), wsvn[...], preferred_element_type=f32)
             + wsb[...])
    if vec_out:
        glin = jnp.dot(s_out.astype(bf16), wg[...], preferred_element_type=f32) + wgb[...]
        gate = pl.reciprocal(1.0 + jnp.exp(-glin), approx=True)               # sigmoid on EUP
        v_out = jnp.dot(vh.astype(bf16), wv[...], preferred_element_type=f32)  # [R, 3vo]
        v_out = v_out * jnp.concatenate([gate, gate, gate], axis=-1)
        s_act = jnp.maximum(s_out, 0.0) if relu else s_out
        return s_act, v_out
    return jnp.maximum(s_out, 0.0) if relu else s_out


# ------------------------------------------------------------------ kernels
def node_embed_kernel(x_ref, g_ref, b_ref, w_ref, wb_ref, o_ref):
    # W_v: LayerNorm(9) + GVP((9,0)->(100,16)) with vi=0 -> plain Linear; vectors start at zero.
    s = _ln_scalar(x_ref[...], g_ref, b_ref)
    o_ref[...] = (jnp.dot(s.astype(jnp.bfloat16), w_ref[...],
                          preferred_element_type=jnp.float32) + wb_ref[...])


def edge_embed_kernel(es_ref, ev_ref, lng_ref, lnb_ref,
                      wss_ref, wsvn_ref, wsb_ref, wh_ref, wv_ref, wg_ref, wgb_ref,
                      so_ref, vo_ref):
    # W_e: tuple LayerNorm((16,1)) + GVP((16,1)->(32,1)); vi=h=vo=1 -> VPU elementwise path.
    bf16, f32 = jnp.bfloat16, jnp.float32
    s = _ln_scalar(es_ref[...], lng_ref, lnb_ref)                              # [R,16]
    ev = ev_ref[...]                                                           # [R,3] = (x,y,z)
    vn2 = jnp.maximum(jnp.sum(ev * ev, axis=-1, keepdims=True), 1e-8)
    ev = ev * jax.lax.rsqrt(vn2)                                               # vector LN (nv=1)
    vh = ev * wh_ref[...]                                                      # wh is a scalar
    vhn = jnp.sqrt(jnp.maximum(jnp.sum(vh * vh, axis=-1, keepdims=True), 1e-8))  # [R,1]
    s_out = (jnp.dot(s.astype(bf16), wss_ref[...], preferred_element_type=f32)
             + vhn * wsvn_ref[...] + wsb_ref[...])                             # [R,32]
    glin = jnp.sum(s_out * wg_ref[...], axis=-1, keepdims=True) + wgb_ref[...]  # [R,1]
    gate = pl.reciprocal(1.0 + jnp.exp(-glin), approx=True)
    so_ref[...] = s_out
    vo_ref[...] = vh * wv_ref[...] * gate


def message_kernel(ms_ref, mv_ref, *refs):
    # GVPConv message function: GVP(relu) -> GVP(relu) -> GVP(no act), all vector_gate=True.
    s, v = ms_ref[...], mv_ref[...]
    s, v = _gvp(s, v, refs[0:7], h=H_MSG0, relu=True)
    s, v = _gvp(s, v, refs[7:14], h=H_MSG, relu=True)
    s, v = _gvp(s, v, refs[14:21], h=H_MSG, relu=False)
    refs[21][...] = s
    refs[22][...] = v


def node_update_kernel(hs_ref, hv_ref, ags_ref, agv_ref, *refs):
    # residual + LN0 -> FF GVP(relu) -> FF GVP(no act) -> residual + LN1 (dropout = identity)
    ln0g, ln0b = refs[0], refs[1]
    ff0, ff1 = refs[2:9], refs[9:16]
    ln1g, ln1b = refs[16], refs[17]
    so_ref, vo_ref = refs[18], refs[19]

    s = hs_ref[...] + ags_ref[...]
    v = hv_ref[...] + agv_ref[...]
    s = _ln_scalar(s, ln0g, ln0b)
    v = _ln_vector(v, NV)
    fs, fv = _gvp(s, v, ff0, h=H_FF, relu=True)
    fs, fv = _gvp(fs, fv, ff1, h=H_FF, relu=False)
    so_ref[...] = _ln_scalar(s + fs, ln1g, ln1b)
    vo_ref[...] = _ln_vector(v + fv, NV)


def make_head_kernel(dense):
    if dense:
        def head_kernel(hs_ref, hv_ref, lng, lnb, wh, wss, wsvn, wsb,
                        w1, b1, w2, b2, o_ref):
            s = _ln_scalar(hs_ref[...], lng, lnb)
            v = _ln_vector(hv_ref[...], NV)
            s = _gvp(s, v, (wh, wss, wsvn, wsb), h=H_OUT, relu=True, vec_out=False)  # [R,100]
            y = (jnp.dot(s.astype(jnp.bfloat16), w1[...],
                         preferred_element_type=jnp.float32) + b1[...])
            y = jnp.maximum(y, 0.0)
            # dropout(p=0.1) between dense layers is identity in eval mode
            o_ref[...] = jnp.sum(y * w2[...], axis=-1, keepdims=True) + b2[...]      # [R,1] (VPU)
    else:
        def head_kernel(hs_ref, hv_ref, lng, lnb, wh, wss, wsvn, wsb, o_ref):
            s = _ln_scalar(hs_ref[...], lng, lnb)
            v = _ln_vector(hv_ref[...], NV)
            o_ref[...] = _gvp(s, v, (wh, wss, wsvn, wsb), h=H_OUT, relu=True, vec_out=False)
    return head_kernel


# ------------------------------------------------------------------ parameter init
def _init_dense(key, din, dout, bias=True):
    kw, kb = jax.random.split(key)
    sc = 1.0 / math.sqrt(din)
    w = jax.random.normal(kw, (din, dout), jnp.float32) * sc
    b = jax.random.normal(kb, (1, dout), jnp.float32) * sc if bias else None
    return w, b


def _blockdiag3(w):
    a, b = w.shape
    z = jnp.zeros((a, b), w.dtype)
    top = jnp.concatenate([w, z, z], axis=1)
    mid = jnp.concatenate([z, w, z], axis=1)
    bot = jnp.concatenate([z, z, w], axis=1)
    return jnp.concatenate([top, mid, bot], axis=0)


_GVP_KEYS = ("wh", "wss", "wsvn", "wsb", "wv", "wg", "wgb")


def _gvp_args(p):
    return [p[k] for k in _GVP_KEYS]


def init_gvp(key, si, vi, so, vo):
    h = max(vi, vo)
    ks = jax.random.split(key, 5)
    wh, _ = _init_dense(ks[0], vi, h, bias=False)
    wss, _ = _init_dense(ks[1], si, so, bias=False)
    wsvn, wsb = _init_dense(ks[2], h, so, bias=True)
    p = dict(wh=_blockdiag3(wh).astype(jnp.bfloat16),
             wss=wss.astype(jnp.bfloat16),
             wsvn=wsvn.astype(jnp.bfloat16),
             wsb=wsb)
    if vo:
        wv, _ = _init_dense(ks[3], h, vo, bias=False)
        wg, wgb = _init_dense(ks[4], so, vo, bias=True)
        p.update(wv=_blockdiag3(wv).astype(jnp.bfloat16),
                 wg=wg.astype(jnp.bfloat16),
                 wgb=wgb)
    return p


def init_edge_gvp(key):
    ks = jax.random.split(key, 5)
    wh, _ = _init_dense(ks[0], 1, 1, bias=False)          # (1,1) scalar
    wss, _ = _init_dense(ks[1], NRBF, SE, bias=False)     # (16,32)
    wsvn, wsb = _init_dense(ks[2], 1, SE, bias=True)      # (1,32), (1,32)
    wv, _ = _init_dense(ks[3], 1, 1, bias=False)          # (1,1) scalar
    wg, wgb = _init_dense(ks[4], SE, 1, bias=True)        # (32,1), (1,1)
    return dict(wh=wh, wss=wss.astype(jnp.bfloat16), wsvn=wsvn, wsb=wsb,
                wv=wv, wg=wg.T, wgb=wgb)                  # wg stored as (1,32) row for VPU reduce


def _ln_params(d):
    return dict(g=jnp.ones((1, d), jnp.float32), b=jnp.zeros((1, d), jnp.float32))


def init_layer(key):
    ks = jax.random.split(key, 5)
    return dict(
        msg0=init_gvp(ks[0], 2 * NS + SE, 2 * NV + VE, NS, NV),
        msg1=init_gvp(ks[1], NS, NV, NS, NV),
        msg2=init_gvp(ks[2], NS, NV, NS, NV),
        ln0=_ln_params(NS),
        ff0=init_gvp(ks[3], NS, NV, 4 * NS, 2 * NV),
        ff1=init_gvp(ks[4], 4 * NS, 2 * NV, NS, NV),
        ln1=_ln_params(NS),
    )


def init_params(key):
    ks = jax.random.split(key, 8)
    wv_w, wv_b = _init_dense(ks[1], NATOM, NS, bias=True)
    d1_w, d1_b = _init_dense(ks[5], NS, 2 * NS, bias=True)
    d2_w, d2_b = _init_dense(ks[6], 2 * NS, 1, bias=True)
    return dict(
        embed=jax.random.normal(ks[0], (NATOM, NATOM), jnp.float32),
        Wv_ln=_ln_params(NATOM),
        Wv_w=wv_w.astype(jnp.bfloat16), Wv_b=wv_b,
        We_ln=_ln_params(NRBF),
        We_gvp=init_edge_gvp(ks[2]),
        layers=[init_layer(k) for k in jax.random.split(ks[3], 5)],
        Wout_ln=_ln_params(NS),
        Wout_gvp=init_gvp(ks[4], NS, NV, NS, 0),
        d1_w=d1_w.astype(jnp.bfloat16), d1_b=d1_b,
        d2_w=d2_w.T,                       # (1, 200) row (dense2 done as VPU reduce)
        d2_b=d2_b,                         # (1, 1)
    )


# ------------------------------------------------------------------ model forward
def base_model_forward(params, atoms, edge_s, edge_v, edge_index, dense=True):
    n = atoms.shape[0]
    e = edge_s.shape[0]
    rb_n, rb_e = _choose_rb(n), _choose_rb(e)
    n_pad, e_pad = _round_up(n, rb_n), _round_up(e, rb_e)

    src, dst = edge_index[0], edge_index[1]
    src_p = jnp.pad(src, (0, e_pad - e))
    dst_p = jnp.pad(dst, (0, e_pad - e))

    # ---- node embedding (JAX gather) + W_v (fused LN + linear kernel) ----
    h0 = _pad_rows_to(params["embed"][atoms], n_pad)
    h_s = _call_rowwise(node_embed_kernel, n_pad, rb_n, [h0],
                        [params["Wv_ln"]["g"], params["Wv_ln"]["b"],
                         params["Wv_w"], params["Wv_b"]], NS)
    h_v = jnp.zeros((n_pad, 3 * NV), jnp.float32)          # packed [x|y|z] planes

    # ---- W_e: fused tuple LayerNorm + GVP ----
    es = _pad_rows_to(edge_s, e_pad)
    ev = _pad_rows_to(edge_v.reshape(e, 3 * VE), e_pad)
    g = params["We_gvp"]
    e_s, e_v = _call_rowwise(edge_embed_kernel, e_pad, rb_e, [es, ev],
                             [params["We_ln"]["g"], params["We_ln"]["b"],
                              g["wss"], g["wsvn"], g["wsb"], g["wh"], g["wv"],
                              g["wg"], g["wgb"]], (SE, 3 * VE))

    cnt = jnp.maximum(jnp.zeros((n_pad,), jnp.float32).at[dst].add(1.0), 1.0)[:, None]

    for lp in params["layers"]:
        # TODO(synk): edge gather / tuple_cat kept in plain JAX (data-dependent row gather).
        hsj, hsi = h_s[src_p], h_s[dst_p]
        hvj, hvi = h_v[src_p], h_v[dst_p]
        m_s = jnp.concatenate([hsj, e_s, hsi], axis=-1)                      # [E_pad, 232]
        m_v = jnp.concatenate([                                              # [E_pad, 99]
            hvj[:, 0:NV],         e_v[:, 0:1], hvi[:, 0:NV],
            hvj[:, NV:2 * NV],    e_v[:, 1:2], hvi[:, NV:2 * NV],
            hvj[:, 2 * NV:3 * NV], e_v[:, 2:3], hvi[:, 2 * NV:3 * NV]], axis=-1)

        w = _gvp_args(lp["msg0"]) + _gvp_args(lp["msg1"]) + _gvp_args(lp["msg2"])
        ms_o, mv_o = _call_rowwise(message_kernel, e_pad, rb_e, [m_s, m_v], w, (NS, 3 * NV))

        # TODO(synk): scatter-mean aggregation kept in plain JAX (data-dependent scatter).
        agg_s = jnp.zeros((n_pad, NS), jnp.float32).at[dst].add(ms_o[:e]) / cnt
        agg_v = jnp.zeros((n_pad, 3 * NV), jnp.float32).at[dst].add(mv_o[:e]) / cnt

        w = ([lp["ln0"]["g"], lp["ln0"]["b"]]
             + _gvp_args(lp["ff0"]) + _gvp_args(lp["ff1"])
             + [lp["ln1"]["g"], lp["ln1"]["b"]])
        h_s, h_v = _call_rowwise(node_update_kernel, n_pad, rb_n,
                                 [h_s, h_v, agg_s, agg_v], w, (NS, 3 * NV))

    # ---- W_out (+ optional dense head), fused ----
    g = params["Wout_gvp"]
    head_w = [params["Wout_ln"]["g"], params["Wout_ln"]["b"],
              g["wh"], g["wss"], g["wsvn"], g["wsb"]]
    if dense:
        head_w += [params["d1_w"], params["d1_b"], params["d2_w"], params["d2_b"]]
        out = _call_rowwise(make_head_kernel(True), n_pad, rb_n, [h_s, h_v], head_w, 1)
        return out[:n, 0]
    out = _call_rowwise(make_head_kernel(False), n_pad, rb_n, [h_s, h_v], head_w, NS)
    return out[:n]


# ------------------------------------------------------------------ main
if __name__ == "__main__":
    key = jax.random.PRNGKey(0)
    k_par, k_atom, k_es, k_ev, k_ei = jax.random.split(key, 5)

    params = init_params(k_par)

    N_NODES, N_EDGES = 16, 64
    atoms = jax.random.randint(k_atom, (N_NODES,), 0, NATOM, dtype=jnp.int32)
    edge_s = jax.random.normal(k_es, (N_EDGES, NRBF), jnp.float32)
    edge_v = jax.random.normal(k_ev, (N_EDGES, 1, 3), jnp.float32)
    edge_index = jax.random.randint(k_ei, (2, N_EDGES), 0, N_NODES, dtype=jnp.int32)

    fwd = jax.jit(base_model_forward, static_argnames=("dense",))
    out = fwd(params, atoms, edge_s, edge_v, edge_index, dense=True)
    out = jax.block_until_ready(out)

    assert out.shape == (N_NODES,)
    assert bool(jnp.all(jnp.isfinite(out)))
    print("KERNEL_OK")
</pallas_src>

<mosaic_0001>
module attributes {stable_mosaic.version = 11 : i64} {
  func.func private @main(%arg0: i32) attributes {dimension_semantics = [#tpu.dimension_semantics<core_parallel>], iteration_bounds = array<i64: 2>, tpu.core_type = #tpu.core_type<sc_scalar_subcore>, window_params = []} {
    return
  }
}

module attributes {stable_mosaic.version = 11 : i64} {
  func.func private @main(%arg0: i32) attributes {dimension_semantics = [#tpu.dimension_semantics<core_parallel>], iteration_bounds = array<i64: 2>, tpu.core_type = #tpu.core_type<sc_scalar_subcore>, window_params = []} {
    return
  }
}

module attributes {stable_mosaic.version = 11 : i64} {
  func.func @node_embed_kernel(%arg0: i32, %arg1: memref<16x9xf32, #tpu.memory_space<vmem>>, %arg2: memref<1x9xf32, #tpu.memory_space<vmem>>, %arg3: memref<1x9xf32, #tpu.memory_space<vmem>>, %arg4: memref<9x100xbf16, #tpu.memory_space<vmem>>, %arg5: memref<1x100xf32, #tpu.memory_space<vmem>>, %arg6: memref<16x100xf32, #tpu.memory_space<vmem>>) attributes {dimension_semantics = [#tpu.dimension_semantics<parallel>], iteration_bounds = array<i64: 1>, scalar_prefetch = 0 : i64, scratch_operands = 0 : i64, tpu.core_type = #tpu.core_type<tc>, window_params = [{transform_indices = @transform_0, window_bounds = array<i64: 16, 9>}, {pipeline_mode = #tpu.pipeline_mode<synchronous>, transform_indices = @transform_1, window_bounds = array<i64: 1, 9>}, {pipeline_mode = #tpu.pipeline_mode<synchronous>, transform_indices = @transform_2, window_bounds = array<i64: 1, 9>}, {pipeline_mode = #tpu.pipeline_mode<synchronous>, transform_indices = @transform_3, window_bounds = array<i64: 9, 100>}, {pipeline_mode = #tpu.pipeline_mode<synchronous>, transform_indices = @transform_4, window_bounds = array<i64: 1, 100>}, {transform_indices = @transform_5, window_bounds = array<i64: 16, 100>}]} {
    %c0 = arith.constant 0 : index
    %c0_0 = arith.constant 0 : index
    %0 = vector.load %arg1[%c0, %c0_0] : memref<16x9xf32, #tpu.memory_space<vmem>>, vector<16x9xf32>
    %cst = arith.constant dense<0.000000e+00> : vector<16xf32>
    %1 = vector.multi_reduction <add>, %0, %cst [1] : vector<16x9xf32> to vector<16xf32>
    %2 = vector.shape_cast %1 : vector<16xf32> to vector<16x1xf32>
    %cst_1 = arith.constant 9.000000e+00 : f32
    %3 = vector.broadcast %cst_1 : f32 to vector<16x1xf32>
    %4 = arith.divf %2, %3 : vector<16x1xf32>
    %5 = vector.broadcast %4 : vector<16x1xf32> to vector<16x9xf32>
    %6 = arith.subf %0, %5 : vector<16x9xf32>
    %7 = arith.mulf %6, %6 : vector<16x9xf32>
    %cst_2 = arith.constant dense<0.000000e+00> : vector<16xf32>
    %8 = vector.multi_reduction <add>, %7, %cst_2 [1] : vector<16x9xf32> to vector<16xf32>
    %9 = vector.shape_cast %8 : vector<16xf32> to vector<16x1xf32>
    %cst_3 = arith.constant 9.000000e+00 : f32
    %10 = vector.broadcast %cst_3 : f32 to vector<16x1xf32>
    %11 = arith.divf %9, %10 : vector<16x1xf32>
    %12 = vector.broadcast %4 : vector<16x1xf32> to vector<16x9xf32>
    %13 = arith.subf %0, %12 : vector<16x9xf32>
    %cst_4 = arith.constant 9.99999974E-6 : f32
    %14 = vector.broadcast %cst_4 : f32 to vector<16x1xf32>
    %15 = arith.addf %11, %14 : vector<16x1xf32>
    %16 = math.rsqrt %15 : vector<16x1xf32>
    %17 = vector.broadcast %16 : vector<16x1xf32> to vector<16x9xf32>
    %18 = arith.mulf %13, %17 : vector<16x9xf32>
    %c0_5 = arith.constant 0 : index
    %c0_6 = arith.constant 0 : index
    %19 = vector.load %arg2[%c0_5, %c0_6] : memref<1x9xf32, #tpu.memory_space<vmem>>, vector<1x9xf32>
    %20 = vector.broadcast %19 : vector<1x9xf32> to vector<16x9xf32>
    %21 = arith.mulf %18, %20 : vector<16x9xf32>
    %c0_7 = arith.constant 0 : index
    %c0_8 = arith.constant 0 : index
    %22 = vector.load %arg3[%c0_7, %c0_8] : memref<1x9xf32, #tpu.memory_space<vmem>>, vector<1x9xf32>
    %23 = vector.broadcast %22 : vector<1x9xf32> to vector<16x9xf32>
    %24 = arith.addf %21, %23 : vector<16x9xf32>
    %25 = arith.truncf %24 : vector<16x9xf32> to vector<16x9xbf16>
    %c0_9 = arith.constant 0 : index
    %c0_10 = arith.constant 0 : index
    %26 = vector.load %arg4[%c0_9, %c0_10] : memref<9x100xbf16, #tpu.memory_space<vmem>>, vector<9x100xbf16>
    %cst_11 = arith.constant dense<0.000000e+00> : vector<16x100xf32>
    %27 = tpu.matmul %25, %26, %cst_11 {dimension_numbers = #tpu.dot_dimension_numbers<[1], [0], [0], [1], [0, 0, 1, 1], [], []>} : vector<16x9xbf16>, vector<9x100xbf16>, vector<16x100xf32> -> vector<16x100xf32>
    %c0_12 = arith.constant 0 : index
    %c0_13 = arith.constant 0 : index
    %28 = vector.load %arg5[%c0_12, %c0_13] : memref<1x100xf32, #tpu.memory_space<vmem>>, vector<1x100xf32>
    %29 = vector.broadcast %28 : vector<1x100xf32> to vector<16x100xf32>
    %30 = arith.addf %27, %29 : vector<16x100xf32>
    %c0_14 = arith.constant 0 : index
    %c0_15 = arith.constant 0 : index
    %31 = vector.load %arg6[%c0_14, %c0_15] : memref<16x100xf32, #tpu.memory_space<vmem>>, vector<16x100xf32>
    tpu.vector_store %arg6[%c0_14, %c0_15], %30 {strides = array<i32>} : memref<16x100xf32, #tpu.memory_space<vmem>>, vector<16x100xf32>,
    return
  }
  func.func @transform_0(%arg0: i32) -> (i32, i32) {
    %c0_i32 = arith.constant 0 : i32
    %c0_i32_0 = arith.constant 0 : i32
    return %arg0, %c0_i32 : i32, i32
  }
  func.func @transform_1(%arg0: i32) -> (i32, i32) {
    %c0_i32 = arith.constant 0 : i32
    %c0_i32_0 = arith.constant 0 : i32
    %c0_i32_1 = arith.constant 0 : i32
    return %c0_i32, %c0_i32_0 : i32, i32
  }
  func.func @transform_2(%arg0: i32) -> (i32, i32) {
    %c0_i32 = arith.constant 0 : i32
    %c0_i32_0 = arith.constant 0 : i32
    %c0_i32_1 = arith.constant 0 : i32
    return %c0_i32, %c0_i32_0 : i32, i32
  }
  func.func @transform_3(%arg0: i32) -> (i32, i32) {
    %c0_i32 = arith.constant 0 : i32
    %c0_i32_0 = arith.constant 0 : i32
    %c0_i32_1 = arith.constant 0 : i32
    return %c0_i32, %c0_i32_0 : i32, i32
  }
  func.func @transform_4(%arg0: i32) -> (i32, i32) {
    %c0_i32 = arith.constant 0 : i32
    %c0_i32_0 = arith.constant 0 : i32
    %c0_i32_1 = arith.constant 0 : i32
    return %c0_i32, %c0_i32_0 : i32, i32
  }
  func.func @transform_5(%arg0: i32) -> (i32, i32) {
    %c0_i32 = arith.constant 0 : i32
    %c0_i32_0 = arith.constant 0 : i32
    return %arg0, %c0_i32 : i32, i32
  }
}

module attributes {stable_mosaic.version = 11 : i64} {
  func.func @edge_embed_kernel(%arg0: i32, %arg1: memref<64x16xf32, #tpu.memory_space<vmem>>, %arg2: memref<64x3xf32, #tpu.memory_space<vmem>>, %arg3: memref<1x16xf32, #tpu.memory_space<vmem>>, %arg4: memref<1x16xf32, #tpu.memory_space<vmem>>, %arg5: memref<16x32xbf16, #tpu.memory_space<vmem>>, %arg6: memref<1x32xf32, #tpu.memory_space<vmem>>, %arg7: memref<1x32xf32, #tpu.memory_space<vmem>>, %arg8: memref<1x1xf32, #tpu.memory_space<vmem>>, %arg9: memref<1x1xf32, #tpu.memory_space<vmem>>, %arg10: memref<1x32xf32, #tpu.memory_space<vmem>>, %arg11: memref<1x1xf32, #tpu.memory_space<vmem>>, %arg12: memref<64x32xf32, #tpu.memory_space<vmem>>, %arg13: memref<64x3xf32, #tpu.memory_space<vmem>>) attributes {dimension_semantics = [#tpu.dimension_semantics<parallel>], iteration_bounds = array<i64: 1>, scalar_prefetch = 0 : i64, scratch_operands = 0 : i64, tpu.core_type = #tpu.core_type<tc>, window_params = [{transform_indices = @transform_0, window_bounds = array<i64: 64, 16>}, {transform_indices = @transform_1, window_bounds = array<i64: 64, 3>}, {pipeline_mode = #tpu.pipeline_mode<synchronous>, transform_indices = @transform_2, window_bounds = array<i64: 1, 16>}, {pipeline_mode = #tpu.pipeline_mode<synchronous>, transform_indices = @transform_3, window_bounds = array<i64: 1, 16>}, {pipeline_mode = #tpu.pipeline_mode<synchronous>, transform_indices = @transform_4, window_bounds = array<i64: 16, 32>}, {pipeline_mode = #tpu.pipeline_mode<synchronous>, transform_indices = @transform_5, window_bounds = array<i64: 1, 32>}, {pipeline_mode = #tpu.pipeline_mode<synchronous>, transform_indices = @transform_6, window_bounds = array<i64: 1, 32>}, {pipeline_mode = #tpu.pipeline_mode<synchronous>, transform_indices = @transform_7, window_bounds = array<i64: 1, 1>}, {pipeline_mode = #tpu.pipeline_mode<synchronous>, transform_indices = @transform_8, window_bounds = array<i64: 1, 1>}, {pipeline_mode = #tpu.pipeline_mode<synchronous>, transform_indices = @transform_9, window_bounds = array<i64: 1, 32>}, {pipeline_mode = #tpu.pipeline_mode<synchronous>, transform_indices = @transform_10, window_bounds = array<i64: 1, 1>}, {transform_indices = @transform_11, window_bounds = array<i64: 64, 32>}, {transform_indices = @transform_12, window_bounds = array<i64: 64, 3>}]} {
    %c0 = arith.constant 0 : index
    %c0_0 = arith.constant 0 : index
    %0 = vector.load %arg1[%c0, %c0_0] : memref<64x16xf32, #tpu.memory_space<vmem>>, vector<64x16xf32>
    %cst = arith.constant dense<0.000000e+00> : vector<64xf32>
    %1 = vector.multi_reduction <add>, %0, %cst [1] : vector<64x16xf32> to vector<64xf32>
    %2 = vector.shape_cast %1 : vector<64xf32> to vector<64x1xf32>
    %cst_1 = arith.constant 1.600000e+01 : f32
    %3 = vector.broadcast %cst_1 : f32 to vector<64x1xf32>
    %4 = arith.divf %2, %3 : vector<64x1xf32>
    %5 = vector.broadcast %4 : vector<64x1xf32> to vector<64x16xf32>
    %6 = arith.subf %0, %5 : vector<64x16xf32>
    %7 = arith.mulf %6, %6 : vector<64x16xf32>
    %cst_2 = arith.constant dense<0.000000e+00> : vector<64xf32>
    %8 = vector.multi_reduction <add>, %7, %cst_2 [1] : vector<64x16xf32> to vector<64xf32>
    %9 = vector.shape_cast %8 : vector<64xf32> to vector<64x1xf32>
    %cst_3 = arith.constant 1.600000e+01 : f32
    %10 = vector.broadcast %cst_3 : f32 to vector<64x1xf32>
    %11 = arith.divf %9, %10 : vector<64x1xf32>
    %12 = vector.broadcast %4 : vector<64x1xf32> to vector<64x16xf32>
    %13 = arith.subf %0, %12 : vector<64x16xf32>
    %cst_4 = arith.constant 9.99999974E-6 : f32
    %14 = vector.broadcast %cst_4 : f32 to vector<64x1xf32>
    %15 = arith.addf %11, %14 : vector<64x1xf32>
    %16 = math.rsqrt %15 : vector<64x1xf32>
    %17 = vector.broadcast %16 : vector<64x1xf32> to vector<64x16xf32>
    %18 = arith.mulf %13, %17 : vector<64x16xf32>
    %c0_5 = arith.constant 0 : index
    %c0_6 = arith.constant 0 : index
    %19 = vector.load %arg3[%c0_5, %c0_6] : memref<1x16xf32, #tpu.memory_space<vmem>>, vector<1x16xf32>
    %20 = vector.broadcast %19 : vector<1x16xf32> to vector<64x16xf32>
    %21 = arith.mulf %18, %20 : vector<64x16xf32>
    %c0_7 = arith.constant 0 : index
    %c0_8 = arith.constant 0 : index
    %22 = vector.load %arg4[%c0_7, %c0_8] : memref<1x16xf32, #tpu.memory_space<vmem>>, vector<1x16xf32>
    %23 = vector.broadcast %22 : vector<1x16xf32> to vector<64x16xf32>
    %24 = arith.addf %21, %23 : vector<64x16xf32>
    %c0_9 = arith.constant 0 : index
    %c0_10 = arith.constant 0 : index
    %25 = vector.load %arg2[%c0_9, %c0_10] : memref<64x3xf32, #tpu.memory_space<vmem>>, vector<64x3xf32>
    %26 = arith.mulf %25, %25 : vector<64x3xf32>
    %cst_11 = arith.constant dense<0.000000e+00> : vector<64xf32>
    %27 = vector.multi_reduction <add>, %26, %cst_11 [1] : vector<64x3xf32> to vector<64xf32>
    %28 = vector.shape_cast %27 : vector<64xf32> to vector<64x1xf32>
    %cst_12 = arith.constant 9.99999993E-9 : f32
    %29 = vector.broadcast %cst_12 : f32 to vector<64x1xf32>
    %30 = arith.maximumf %28, %29 : vector<64x1xf32>
    %31 = math.rsqrt %30 : vector<64x1xf32>
    %32 = vector.broadcast %31 : vector<64x1xf32> to vector<64x3xf32>
    %33 = arith.mulf %25, %32 : vector<64x3xf32>
    %c0_13 = arith.constant 0 : index
    %c0_14 = arith.constant 0 : index
    %34 = vector.load %arg8[%c0_13, %c0_14] : memref<1x1xf32, #tpu.memory_space<vmem>>, vector<1x1xf32>
    %35 = vector.broadcast %34 : vector<1x1xf32> to vector<64x3xf32>
    %36 = arith.mulf %33, %35 : vector<64x3xf32>
    %37 = arith.mulf %36, %36 : vector<64x3xf32>
    %cst_15 = arith.constant dense<0.000000e+00> : vector<64xf32>
    %38 = vector.multi_reduction <add>, %37, %cst_15 [1] : vector<64x3xf32> to vector<64xf32>
    %39 = vector.shape_cast %38 : vector<64xf32> to vector<64x1xf32>
    %cst_16 = arith.constant 9.99999993E-9 : f32
    %40 = vector.broadcast %cst_16 : f32 to vector<64x1xf32>
    %41 = arith.maximumf %39, %40 : vector<64x1xf32>
    %42 = math.sqrt %41 : vector<64x1xf32>
    %43 = arith.truncf %24 : vector<64x16xf32> to vector<64x16xbf16>
    %c0_17 = arith.constant 0 : index
    %c0_18 = arith.constant 0 : index
    %44 = vector.load %arg5[%c0_17, %c0_18] : memref<16x32xbf16, #tpu.memory_space<vmem>>, vector<16x32xbf16>
    %cst_19 = arith.constant dense<0.000000e+00> : vector<64x32xf32>
    %45 = tpu.matmul %43, %44, %cst_19 {dimension_numbers = #tpu.dot_dimension_numbers<[1], [0], [0], [1], [0, 0, 1, 1], [], []>} : vector<64x16xbf16>, vector<16x32xbf16>, vector<64x32xf32> -> vector<64x32xf32>
    %c0_20 = arith.constant 0 : index
    %c0_21 = arith.constant 0 : index
    %46 = vector.load %arg6[%c0_20, %c0_21] : memref<1x32xf32, #tpu.memory_space<vmem>>, vector<1x32xf32>
    %47 = vector.broadcast %42 : vector<64x1xf32> to vector<64x32xf32>
    %48 = vector.broadcast %46 : vector<1x32xf32> to vector<64x32xf32>
    %49 = arith.mulf %47, %48 : vector<64x32xf32>
    %50 = arith.addf %45, %49 : vector<64x32xf32>
    %c0_22 = arith.constant 0 : index
    %c0_23 = arith.constant 0 : index
    %51 = vector.load %arg7[%c0_22, %c0_23] : memref<1x32xf32, #tpu.memory_space<vmem>>, vector<1x32xf32>
    %52 = vector.broadcast %51 : vector<1x32xf32> to vector<64x32xf32>
    %53 = arith.addf %50, %52 : vector<64x32xf32>
    %c0_24 = arith.constant 0 : index
    %c0_25 = arith.constant 0 : index
    %54 = vector.load %arg10[%c0_24, %c0_25] : memref<1x32xf32, #tpu.memory_space<vmem>>, vector<1x32xf32>
    %55 = vector.broadcast %54 : vector<1x32xf32> to vector<64x32xf32>
    %56 = arith.mulf %53, %55 : vector<64x32xf32>
    %cst_26 = arith.constant dense<0.000000e+00> : vector<64xf32>
    %57 = vector.multi_reduction <add>, %56, %cst_26 [1] : vector<64x32xf32> to vector<64xf32>
    %58 = vector.shape_cast %57 : vector<64xf32> to vector<64x1xf32>
    %c0_27 = arith.constant 0 : index
    %c0_28 = arith.constant 0 : index
    %59 = vector.load %arg11[%c0_27, %c0_28] : memref<1x1xf32, #tpu.memory_space<vmem>>, vector<1x1xf32>
    %60 = vector.broadcast %59 : vector<1x1xf32> to vector<64x1xf32>
    %61 = arith.addf %58, %60 : vector<64x1xf32>
    %cst_29 = arith.constant 0.000000e+00 : f32
    %62 = vector.broadcast %cst_29 : f32 to vector<64x1xf32>
    %63 = arith.subf %62, %61 : vector<64x1xf32>
    %64 = math.exp %63 : vector<64x1xf32>
    %cst_30 = arith.constant 1.000000e+00 : f32
    %65 = vector.broadcast %cst_30 : f32 to vector<64x1xf32>
    %66 = arith.addf %65, %64 : vector<64x1xf32>
    %67 = tpu.reciprocal %66 {approx = true} : vector<64x1xf32> -> vector<64x1xf32>
    %c0_31 = arith.constant 0 : index
    %c0_32 = arith.constant 0 : index
    %68 = vector.load %arg12[%c0_31, %c0_32] : memref<64x32xf32, #tpu.memory_space<vmem>>, vector<64x32xf32>
    tpu.vector_store %arg12[%c0_31, %c0_32], %53 {strides = array<i32>} : memref<64x32xf32, #tpu.memory_space<vmem>>, vector<64x32xf32>,
    %c0_33 = arith.constant 0 : index
    %c0_34 = arith.constant 0 : index
    %69 = vector.load %arg9[%c0_33, %c0_34] : memref<1x1xf32, #tpu.memory_space<vmem>>, vector<1x1xf32>
    %70 = vector.broadcast %69 : vector<1x1xf32> to vector<64x3xf32>
    %71 = arith.mulf %36, %70 : vector<64x3xf32>
    %72 = vector.broadcast %67 : vector<64x1xf32> to vector<64x3xf32>
    %73 = arith.mulf %71, %72 : vector<64x3xf32>
    %c0_35 = arith.constant 0 : index
    %c0_36 = arith.constant 0 : index
    %74 = vector.load %arg13[%c0_35, %c0_36] : memref<64x3xf32, #tpu.memory_space<vmem>>, vector<64x3xf32>
    tpu.vector_store %arg13[%c0_35, %c0_36], %73 {strides = array<i32>} : memref<64x3xf32, #tpu.memory_space<vmem>>, vector<64x3xf32>,
    return
  }
  func.func @transform_0(%arg0: i32) -> (i32, i32) {
    %c0_i32 = arith.constant 0 : i32
    %c0_i32_0 = arith.constant 0 : i32
    return %arg0, %c0_i32 : i32, i32
  }
  func.func @transform_1(%arg0: i32) -> (i32, i32) {
    %c0_i32 = arith.constant 0 : i32
    %c0_i32_0 = arith.constant 0 : i32
    return %arg0, %c0_i32 : i32, i32
  }
  func.func @transform_2(%arg0: i32) -> (i32, i32) {
    %c0_i32 = arith.constant 0 : i32
    %c0_i32_0 = arith.constant 0 : i32
    %c0_i32_1 = arith.constant 0 : i32
    return %c0_i32, %c0_i32_0 : i32, i32
  }
  func.func @transform_3(%arg0: i32) -> (i32, i32) {
    %c0_i32 = arith.constant 0 : i32
    %c0_i32_0 = arith.constant 0 : i32
    %c0_i32_1 = arith.constant 0 : i32
    return %c0_i32, %c0_i32_0 : i32, i32
  }
  func.func @transform_4(%arg0: i32) -> (i32, i32) {
    %c0_i32 = arith.constant 0 : i32
    %c0_i32_0 = arith.constant 0 : i32
    %c0_i32_1 = arith.constant 0 : i32
    return %c0_i32, %c0_i32_0 : i32, i32
  }
  func.func @transform_5(%arg0: i32) -> (i32, i32) {
    %c0_i32 = arith.constant 0 : i32
    %c0_i32_0 = arith.constant 0 : i32
    %c0_i32_1 = arith.constant 0 : i32
    return %c0_i32, %c0_i32_0 : i32, i32
  }
  func.func @transform_6(%arg0: i32) -> (i32, i32) {
    %c0_i32 = arith.constant 0 : i32
    %c0_i32_0 = arith.constant 0 : i32
    %c0_i32_1 = arith.constant 0 : i32
    return %c0_i32, %c0_i32_0 : i32, i32
  }
  func.func @transform_7(%arg0: i32) -> (i32, i32) {
    %c0_i32 = arith.constant 0 : i32
    %c0_i32_0 = arith.constant 0 : i32
    %c0_i32_1 = arith.constant 0 : i32
    return %c0_i32, %c0_i32_0 : i32, i32
  }
  func.func @transform_8(%arg0: i32) -> (i32, i32) {
    %c0_i32 = arith.constant 0 : i32
    %c0_i32_0 = arith.constant 0 : i32
    %c0_i32_1 = arith.constant 0 : i32
    return %c0_i32, %c0_i32_0 : i32, i32
  }
  func.func @transform_9(%arg0: i32) -> (i32, i32) {
    %c0_i32 = arith.constant 0 : i32
    %c0_i32_0 = arith.constant 0 : i32
    %c0_i32_1 = arith.constant 0 : i32
    return %c0_i32, %c0_i32_0 : i32, i32
  }
  func.func @transform_10(%arg0: i32) -> (i32, i32) {
    %c0_i32 = arith.constant 0 : i32
    %c0_i32_0 = arith.constant 0 : i32
    %c0_i32_1 = arith.constant 0 : i32
    return %c0_i32, %c0_i32_0 : i32, i32
  }
  func.func @transform_11(%arg0: i32) -> (i32, i32) {
    %c0_i32 = arith.constant 0 : i32
    %c0_i32_0 = arith.constant 0 : i32
    return %arg0, %c0_i32 : i32, i32
  }
  func.func @transform_12(%arg0: i32) -> (i32, i32) {
    %c0_i32 = arith.constant 0 : i32
    %c0_i32_0 = arith.constant 0 : i32
    return %arg0, %c0_i32 : i32, i32
  }
}

module attributes {stable_mosaic.version = 11 : i64} {
  func.func @message_kernel(%arg0: i32, %arg1: memref<64x232xf32, #tpu.memory_space<vmem>>, %arg2: memref<64x99xf32, #tpu.memory_space<vmem>>, %arg3: memref<99x99xbf16, #tpu.memory_space<vmem>>, %arg4: memref<232x100xbf16, #tpu.memory_space<vmem>>, %arg5: memref<33x100xbf16, #tpu.memory_space<vmem>>, %arg6: memref<1x100xf32, #tpu.memory_space<vmem>>, %arg7: memref<99x48xbf16, #tpu.memory_space<vmem>>, %arg8: memref<100x16xbf16, #tpu.memory_space<vmem>>, %arg9: memref<1x16xf32, #tpu.memory_space<vmem>>, %arg10: memref<48x48xbf16, #tpu.memory_space<vmem>>, %arg11: memref<100x100xbf16, #tpu.memory_space<vmem>>, %arg12: memref<16x100xbf16, #tpu.memory_space<vmem>>, %arg13: memref<1x100xf32, #tpu.memory_space<vmem>>, %arg14: memref<48x48xbf16, #tpu.memory_space<vmem>>, %arg15: memref<100x16xbf16, #tpu.memory_space<vmem>>, %arg16: memref<1x16xf32, #tpu.memory_space<vmem>>, %arg17: memref<48x48xbf16, #tpu.memory_space<vmem>>, %arg18: memref<100x100xbf16, #tpu.memory_space<vmem>>, %arg19: memref<16x100xbf16, #tpu.memory_space<vmem>>, %arg20: memref<1x100xf32, #tpu.memory_space<vmem>>, %arg21: memref<48x48xbf16, #tpu.memory_space<vmem>>, %arg22: memref<100x16xbf16, #tpu.memory_space<vmem>>, %arg23: memref<1x16xf32, #tpu.memory_space<vmem>>, %arg24: memref<64x100xf32, #tpu.memory_space<vmem>>, %arg25: memref<64x48xf32, #tpu.memory_space<vmem>>) attributes {dimension_semantics = [#tpu.dimension_semantics<parallel>], iteration_bounds = array<i64: 1>, scalar_prefetch = 0 : i64, scratch_operands = 0 : i64, tpu.core_type = #tpu.core_type<tc>, window_params = [{transform_indices = @transform_0, window_bounds = array<i64: 64, 232>}, {transform_indices = @transform_1, window_bounds = array<i64: 64, 99>}, {pipeline_mode = #tpu.pipeline_mode<synchronous>, transform_indices = @transform_2, window_bounds = array<i64: 99, 99>}, {pipeline_mode = #tpu.pipeline_mode<synchronous>, transform_indices = @transform_3, window_bounds = array<i64: 232, 100>}, {pipeline_mode = #tpu.pipeline_mode<synchronous>, transform_indices = @transform_4, window_bounds = array<i64: 33, 100>}, {pipeline_mode = #tpu.pipeline_mode<synchronous>, transform_indices = @transform_5, window_bounds = array<i64: 1, 100>}, {pipeline_mode = #tpu.pipeline_mode<synchronous>, transform_indices = @transform_6, window_bounds = array<i64: 99, 48>}, {pipeline_mode = #tpu.pipeline_mode<synchronous>, transform_indices = @transform_7, window_bounds = array<i64: 100, 16>}, {pipeline_mode = #tpu.pipeline_mode<synchronous>, transform_indices = @transform_8, window_bounds = array<i64: 1, 16>}, {pipeline_mode = #tpu.pipeline_mode<synchronous>, transform_indices = @transform_9, window_bounds = array<i64: 48, 48>}, {pipeline_mode = #tpu.pipeline_mode<synchronous>, transform_indices = @transform_10, window_bounds = array<i64: 100, 100>}, {pipeline_mode = #tpu.pipeline_mode<synchronous>, transform_indices = @transform_11, window_bounds = array<i64: 16, 100>}, {pipeline_mode = #tpu.pipeline_mode<synchronous>, transform_indices = @transform_12, window_bounds = array<i64: 1, 100>}, {pipeline_mode = #tpu.pipeline_mode<synchronous>, transform_indices = @transform_13, window_bounds = array<i64: 48, 48>}, {pipeline_mode = #tpu.pipeline_mode<synchronous>, transform_indices = @transform_14, window_bounds = array<i64: 100, 16>}, {pipeline_mode = #tpu.pipeline_mode<synchronous>, transform_indices = @transform_15, window_bounds = array<i64: 1, 16>}, {pipeline_mode = #tpu.pipeline_mode<synchronous>, transform_indices = @transform_16, window_bounds = array<i64: 48, 48>}, {pipeline_mode = #tpu.pipeline_mode<synchronous>, transform_indices = @transform_17, window_bounds = array<i64: 100, 100>}, {pipeline_mode = #tpu.pipeline_mode<synchronous>, transform_indices = @transform_18, window_bounds = array<i64: 16, 100>}, {pipeline_mode = #tpu.pipeline_mode<synchronous>, transform_indices = @transform_19, window_bounds = array<i64: 1, 100>}, {pipeline_mode = #tpu.pipeline_mode<synchronous>, transform_indices = @transform_20, window_bounds = array<i64: 48, 48>}, {pipeline_mode = #tpu.pipeline_mode<synchronous>, transform_indices = @transform_21, window_bounds = array<i64: 100, 16>}, {pipeline_mode = #tpu.pipeline_mode<synchronous>, transform_indices = @transform_22, window_bounds = array<i64: 1, 16>}, {transform_indices = @transform_23, window_bounds = array<i64: 64, 100>}, {transform_indices = @transform_24, window_bounds = array<i64: 64, 48>}]} {
    %c0 = arith.constant 0 : index
    %c0_0 = arith.constant 0 : index
    %0 = vector.load %arg1[%c0, %c0_0] : memref<64x232xf32, #tpu.memory_space<vmem>>, vector<64x232xf32>
    %c0_1 = arith.constant 0 : index
    %c0_2 = arith.constant 0 : index
    %1 = vector.load %arg2[%c0_1, %c0_2] : memref<64x99xf32, #tpu.memory_space<vmem>>, vector<64x99xf32>
    %2 = arith.truncf %1 : vector<64x99xf32> to vector<64x99xbf16>
    %c0_3 = arith.constant 0 : index
    %c0_4 = arith.constant 0 : index
    %3 = vector.load %arg3[%c0_3, %c0_4] : memref<99x99xbf16, #tpu.memory_space<vmem>>, vector<99x99xbf16>
    %cst = arith.constant dense<0.000000e+00> : vector<64x99xf32>
    %4 = tpu.matmul %2, %3, %cst {dimension_numbers = #tpu.dot_dimension_numbers<[1], [0], [0], [1], [0, 0, 1, 1], [], []>} : vector<64x99xbf16>, vector<99x99xbf16>, vector<64x99xf32> -> vector<64x99xf32>
    %5 = arith.mulf %4, %4 : vector<64x99xf32>
    %6 = vector.extract_strided_slice %5 {offsets = [0, 0], sizes = [64, 33], strides = [1, 1]} : vector<64x99xf32> to vector<64x33xf32>
    %7 = vector.extract_strided_slice %5 {offsets = [0, 33], sizes = [64, 33], strides = [1, 1]} : vector<64x99xf32> to vector<64x33xf32>
    %8 = arith.addf %6, %7 : vector<64x33xf32>
    %9 = vector.extract_strided_slice %5 {offsets = [0, 66], sizes = [64, 33], strides = [1, 1]} : vector<64x99xf32> to vector<64x33xf32>
    %10 = arith.addf %8, %9 : vector<64x33xf32>
    %cst_5 = arith.constant 9.99999993E-9 : f32
    %11 = vector.broadcast %cst_5 : f32 to vector<64x33xf32>
    %12 = arith.maximumf %10, %11 : vector<64x33xf32>
    %13 = math.sqrt %12 : vector<64x33xf32>
    %14 = arith.truncf %0 : vector<64x232xf32> to vector<64x232xbf16>
    %c0_6 = arith.constant 0 : index
    %c0_7 = arith.constant 0 : index
    %15 = vector.load %arg4[%c0_6, %c0_7] : memref<232x100xbf16, #tpu.memory_space<vmem>>, vector<232x100xbf16>
    %cst_8 = arith.constant dense<0.000000e+00> : vector<64x100xf32>
    %16 = tpu.matmul %14, %15, %cst_8 {dimension_numbers = #tpu.dot_dimension_numbers<[1], [0], [0], [1], [0, 0, 1, 1], [], []>} : vector<64x232xbf16>, vector<232x100xbf16>, vector<64x100xf32> -> vector<64x100xf32>
    %17 = arith.truncf %13 : vector<64x33xf32> to vector<64x33xbf16>
    %c0_9 = arith.constant 0 : index
    %c0_10 = arith.constant 0 : index
    %18 = vector.load %arg5[%c0_9, %c0_10] : memref<33x100xbf16, #tpu.memory_space<vmem>>, vector<33x100xbf16>
    %cst_11 = arith.constant dense<0.000000e+00> : vector<64x100xf32>
    %19 = tpu.matmul %17, %18, %cst_11 {dimension_numbers = #tpu.dot_dimension_numbers<[1], [0], [0], [1], [0, 0, 1, 1], [], []>} : vector<64x33xbf16>, vector<33x100xbf16>, vector<64x100xf32> -> vector<64x100xf32>
    %20 = arith.addf %16, %19 : vector<64x100xf32>
    %c0_12 = arith.constant 0 : index
    %c0_13 = arith.constant 0 : index
    %21 = vector.load %arg6[%c0_12, %c0_13] : memref<1x100xf32, #tpu.memory_space<vmem>>, vector<1x100xf32>
    %22 = vector.broadcast %21 : vector<1x100xf32> to vector<64x100xf32>
    %23 = arith.addf %20, %22 : vector<64x100xf32>
    %24 = arith.truncf %23 : vector<64x100xf32> to vector<64x100xbf16>
    %c0_14 = arith.constant 0 : index
    %c0_15 = arith.constant 0 : index
    %25 = vector.load %arg8[%c0_14, %c0_15] : memref<100x16xbf16, #tpu.memory_space<vmem>>, vector<100x16xbf16>
    %cst_16 = arith.constant dense<0.000000e+00> : vector<64x16xf32>
    %26 = tpu.matmul %24, %25, %cst_16 {dimension_numbers = #tpu.dot_dimension_numbers<[1], [0], [0], [1], [0, 0, 1, 1], [], []>} : vector<64x100xbf16>, vector<100x16xbf16>, vector<64x16xf32> -> vector<64x16xf32>
    %c0_17 = arith.constant 0 : index
    %c0_18 = arith.constant 0 : index
    %27 = vector.load %arg9[%c0_17, %c0_18] : memref<1x16xf32, #tpu.memory_space<vmem>>, vector<1x16xf32>
    %28 = vector.broadcast %27 : vector<1x16xf32> to vector<64x16xf32>
    %29 = arith.addf %26, %28 : vector<64x16xf32>
    %cst_19 = arith.constant 0.000000e+00 : f32
    %30 = vector.broadcast %cst_19 : f32 to vector<64x16xf32>
    %31 = arith.subf %30, %29 : vector<64x16xf32>
    %32 = math.exp %31 : vector<64x16xf32>
    %cst_20 = arith.constant 1.000000e+00 : f32
    %33 = vector.broadcast %cst_20 : f32 to vector<64x16xf32>
    %34 = arith.addf %33, %32 : vector<64x16xf32>
    %35 = tpu.reciprocal %34 {approx = true} : vector<64x16xf32> -> vector<64x16xf32>
    %36 = arith.truncf %4 : vector<64x99xf32> to vector<64x99xbf16>
    %c0_21 = arith.constant 0 : index
    %c0_22 = arith.constant 0 : index
    %37 = vector.load %arg7[%c0_21, %c0_22] : memref<99x48xbf16, #tpu.memory_space<vmem>>, vector<99x48xbf16>
    %cst_23 = arith.constant dense<0.000000e+00> : vector<64x48xf32>
    %38 = tpu.matmul %36, %37, %cst_23 {dimension_numbers = #tpu.dot_dimension_numbers<[1], [0], [0], [1], [0, 0, 1, 1], [], []>} : vector<64x99xbf16>, vector<99x48xbf16>, vector<64x48xf32> -> vector<64x48xf32>
    %39 = tpu.concatenate %35, %35, %35 in 1 : vector<64x16xf32>, vector<64x16xf32>, vector<64x16xf32> -> vector<64x48xf32>
    %40 = arith.mulf %38, %39 : vector<64x48xf32>
    %cst_24 = arith.constant 0.000000e+00 : f32
    %41 = vector.broadcast %cst_24 : f32 to vector<64x100xf32>
    %42 = arith.maximumf %23, %41 : vector<64x100xf32>
    %43 = arith.truncf %40 : vector<64x48xf32> to vector<64x48xbf16>
    %c0_25 = arith.constant 0 : index
    %c0_26 = arith.constant 0 : index
    %44 = vector.load %arg10[%c0_25, %c0_26] : memref<48x48xbf16, #tpu.memory_space<vmem>>, vector<48x48xbf16>
    %cst_27 = arith.constant dense<0.000000e+00> : vector<64x48xf32>
    %45 = tpu.matmul %43, %44, %cst_27 {dimension_numbers = #tpu.dot_dimension_numbers<[1], [0], [0], [1], [0, 0, 1, 1], [], []>} : vector<64x48xbf16>, vector<48x48xbf16>, vector<64x48xf32> -> vector<64x48xf32>
    %46 = arith.mulf %45, %45 : vector<64x48xf32>
    %47 = vector.extract_strided_slice %46 {offsets = [0, 0], sizes = [64, 16], strides = [1, 1]} : vector<64x48xf32> to vector<64x16xf32>
    %48 = vector.extract_strided_slice %46 {offsets = [0, 16], sizes = [64, 16], strides = [1, 1]} : vector<64x48xf32> to vector<64x16xf32>
    %49 = arith.addf %47, %48 : vector<64x16xf32>
    %50 = vector.extract_strided_slice %46 {offsets = [0, 32], sizes = [64, 16], strides = [1, 1]} : vector<64x48xf32> to vector<64x16xf32>
    %51 = arith.addf %49, %50 : vector<64x16xf32>
    %cst_28 = arith.constant 9.99999993E-9 : f32
    %52 = vector.broadcast %cst_28 : f32 to vector<64x16xf32>
    %53 = arith.maximumf %51, %52 : vector<64x16xf32>
    %54 = math.sqrt %53 : vector<64x16xf32>
    %55 = arith.truncf %42 : vector<64x100xf32> to vector<64x100xbf16>
    %c0_29 = arith.constant 0 : index
    %c0_30 = arith.constant 0 : index
    %56 = vector.load %arg11[%c0_29, %c0_30] : memref<100x100xbf16, #tpu.memory_space<vmem>>, vector<100x100xbf16>
    %cst_31 = arith.constant dense<0.000000e+00> : vector<64x100xf32>
    %57 = tpu.matmul %55, %56, %cst_31 {dimension_numbers = #tpu.dot_dimension_numbers<[1], [0], [0], [1], [0, 0, 1, 1], [], []>} : vector<64x100xbf16>, vector<100x100xbf16>, vector<64x100xf32> -> vector<64x100xf32>
    %58 = arith.truncf %54 : vector<64x16xf32> to vector<64x16xbf16>
    %c0_32 = arith.constant 0 : index
    %c0_33 = arith.constant 0 : index
    %59 = vector.load %arg12[%c0_32, %c0_33] : memref<16x100xbf16, #tpu.memory_space<vmem>>, vector<16x100xbf16>
    %cst_34 = arith.constant dense<0.000000e+00> : vector<64x100xf32>
    %60 = tpu.matmul %58, %59, %cst_34 {dimension_numbers = #tpu.dot_dimension_numbers<[1], [0], [0], [1], [0, 0, 1, 1], [], []>} : vector<64x16xbf16>, vector<16x100xbf16>, vector<64x100xf32> -> vector<64x100xf32>
    %61 = arith.addf %57, %60 : vector<64x100xf32>
    %c0_35 = arith.constant 0 : index
    %c0_36 = arith.constant 0 : index
    %62 = vector.load %arg13[%c0_35, %c0_36] : memref<1x100xf32, #tpu.memory_space<vmem>>, vector<1x100xf32>
    %63 = vector.broadcast %62 : vector<1x100xf32> to vector<64x100xf32>
    %64 = arith.addf %61, %63 : vector<64x100xf32>
    %65 = arith.truncf %64 : vector<64x100xf32> to vector<64x100xbf16>
    %c0_37 = arith.constant 0 : index
    %c0_38 = arith.constant 0 : index
    %66 = vector.load %arg15[%c0_37, %c0_38] : memref<100x16xbf16, #tpu.memory_space<vmem>>, vector<100x16xbf16>
    %cst_39 = arith.constant dense<0.000000e+00> : vector<64x16xf32>
    %67 = tpu.matmul %65, %66, %cst_39 {dimension_numbers = #tpu.dot_dimension_numbers<[1], [0], [0], [1], [0, 0, 1, 1], [], []>} : vector<64x100xbf16>, vector<100x16xbf16>, vector<64x16xf32> -> vector<64x16xf32>
    %c0_40 = arith.constant 0 : index
    %c0_41 = arith.constant 0 : index
    %68 = vector.load %arg16[%c0_40, %c0_41] : memref<1x16xf32, #tpu.memory_space<vmem>>, vector<1x16xf32>
    %69 = vector.broadcast %68 : vector<1x16xf32> to vector<64x16xf32>
    %70 = arith.addf %67, %69 : vector<64x16xf32>
    %cst_42 = arith.constant 0.000000e+00 : f32
    %71 = vector.broadcast %cst_42 : f32 to vector<64x16xf32>
    %72 = arith.subf %71, %70 : vector<64x16xf32>
    %73 = math.exp %72 : vector<64x16xf32>
    %cst_43 = arith.constant 1.000000e+00 : f32
    %74 = vector.broadcast %cst_43 : f32 to vector<64x16xf32>
    %75 = arith.addf %74, %73 : vector<64x16xf32>
    %76 = tpu.reciprocal %75 {approx = true} : vector<64x16xf32> -> vector<64x16xf32>
    %77 = arith.truncf %45 : vector<64x48xf32> to vector<64x48xbf16>
    %c0_44 = arith.constant 0 : index
    %c0_45 = arith.constant 0 : index
    %78 = vector.load %arg14[%c0_44, %c0_45] : memref<48x48xbf16, #tpu.memory_space<vmem>>, vector<48x48xbf16>
    %cst_46 = arith.constant dense<0.000000e+00> : vector<64x48xf32>
    %79 = tpu.matmul %77, %78, %cst_46 {dimension_numbers = #tpu.dot_dimension_numbers<[1], [0], [0], [1], [0, 0, 1, 1], [], []>} : vector<64x48xbf16>, vector<48x48xbf16>, vector<64x48xf32> -> vector<64x48xf32>
    %80 = tpu.concatenate %76, %76, %76 in 1 : vector<64x16xf32>, vector<64x16xf32>, vector<64x16xf32> -> vector<64x48xf32>
    %81 = arith.mulf %79, %80 : vector<64x48xf32>
    %cst_47 = arith.constant 0.000000e+00 : f32
    %82 = vector.broadcast %cst_47 : f32 to vector<64x100xf32>
    %83 = arith.maximumf %64, %82 : vector<64x100xf32>
    %84 = arith.truncf %81 : vector<64x48xf32> to vector<64x48xbf16>
    %c0_48 = arith.constant 0 : index
    %c0_49 = arith.constant 0 : index
    %85 = vector.load %arg17[%c0_48, %c0_49] : memref<48x48xbf16, #tpu.memory_space<vmem>>, vector<48x48xbf16>
    %cst_50 = arith.constant dense<0.000000e+00> : vector<64x48xf32>
    %86 = tpu.matmul %84, %85, %cst_50 {dimension_numbers = #tpu.dot_dimension_numbers<[1], [0], [0], [1], [0, 0, 1, 1], [], []>} : vector<64x48xbf16>, vector<48x48xbf16>, vector<64x48xf32> -> vector<64x48xf32>
    %87 = arith.mulf %86, %86 : vector<64x48xf32>
    %88 = vector.extract_strided_slice %87 {offsets = [0, 0], sizes = [64, 16], strides = [1, 1]} : vector<64x48xf32> to vector<64x16xf32>
    %89 = vector.extract_strided_slice %87 {offsets = [0, 16], sizes = [64, 16], strides = [1, 1]} : vector<64x48xf32> to vector<64x16xf32>
    %90 = arith.addf %88, %89 : vector<64x16xf32>
    %91 = vector.extract_strided_slice %87 {offsets = [0, 32], sizes = [64, 16], strides = [1, 1]} : vector<64x48xf32> to vector<64x16xf32>
    %92 = arith.addf %90, %91 : vector<64x16xf32>
    %cst_51 = arith.constant 9.99999993E-9 : f32
    %93 = vector.broadcast %cst_51 : f32 to vector<64x16xf32>
    %94 = arith.maximumf %92, %93 : vector<64x16xf32>
    %95 = math.sqrt %94 : vector<64x16xf32>
    %96 = arith.truncf %83 : vector<64x100xf32> to vector<64x100xbf16>
    %c0_52 = arith.constant 0 : index
    %c0_53 = arith.constant 0 : index
    %97 = vector.load %arg18[%c0_52, %c0_53] : memref<100x100xbf16, #tpu.memory_space<vmem>>, vector<100x100xbf16>
    %cst_54 = arith.constant dense<0.000000e+00> : vector<64x100xf32>
    %98 = tpu.matmul %96, %97, %cst_54 {dimension_numbers = #tpu.dot_dimension_numbers<[1], [0], [0], [1], [0, 0, 1, 1], [], []>} : vector<64x100xbf16>, vector<100x100xbf16>, vector<64x100xf32> -> vector<64x100xf32>
    %99 = arith.truncf %95 : vector<64x16xf32> to vector<64x16xbf16>
    %c0_55 = arith.constant 0 : index
    %c0_56 = arith.constant 0 : index
    %100 = vector.load %arg19[%c0_55, %c0_56] : memref<16x100xbf16, #tpu.memory_space<vmem>>, vector<16x100xbf16>
    %cst_57 = arith.constant dense<0.000000e+00> : vector<64x100xf32>
    %101 = tpu.matmul %99, %100, %cst_57 {dimension_numbers = #tpu.dot_dimension_numbers<[1], [0], [0], [1], [0, 0, 1, 1], [], []>} : vector<64x16xbf16>, vector<16x100xbf16>, vector<64x100xf32> -> vector<64x100xf32>
    %102 = arith.addf %98, %101 : vector<64x100xf32>
    %c0_58 = arith.constant 0 : index
    %c0_59 = arith.constant 0 : index
    %103 = vector.load %arg20[%c0_58, %c0_59] : memref<1x100xf32, #tpu.memory_space<vmem>>, vector<1x100xf32>
    %104 = vector.broadcast %103 : vector<1x100xf32> to vector<64x100xf32>
    %105 = arith.addf %102, %104 : vector<64x100xf32>
    %106 = arith.truncf %105 : vector<64x100xf32> to vector<64x100xbf16>
    %c0_60 = arith.constant 0 : index
    %c0_61 = arith.constant 0 : index
    %107 = vector.load %arg22[%c0_60, %c0_61] : memref<100x16xbf16, #tpu.memory_space<vmem>>, vector<100x16xbf16>
    %cst_62 = arith.constant dense<0.000000e+00> : vector<64x16xf32>
    %108 = tpu.matmul %106, %107, %cst_62 {dimension_numbers = #tpu.dot_dimension_numbers<[1], [0], [0], [1], [0, 0, 1, 1], [], []>} : vector<64x100xbf16>, vector<100x16xbf16>, vector<64x16xf32> -> vector<64x16xf32>
    %c0_63 = arith.constant 0 : index
    %c0_64 = arith.constant 0 : index
    %109 = vector.load %arg23[%c0_63, %c0_64] : memref<1x16xf32, #tpu.memory_space<vmem>>, vector<1x16xf32>
    %110 = vector.broadcast %109 : vector<1x16xf32> to vector<64x16xf32>
    %111 = arith.addf %108, %110 : vector<64x16xf32>
    %cst_65 = arith.constant 0.000000e+00 : f32
    %112 = vector.broadcast %cst_65 : f32 to vector<64x16xf32>
    %113 = arith.subf %112, %111 : vector<64x16xf32>
    %114 = math.exp %113 : vector<64x16xf32>
    %cst_66 = arith.constant 1.000000e+00 : f32
    %115 = vector.broadcast %cst_66 : f32 to vector<64x16xf32>
    %116 = arith.addf %115, %114 : vector<64x16xf32>
    %117 = tpu.reciprocal %116 {approx = true} : vector<64x16xf32> -> vector<64x16xf32>
    %118 = arith.truncf %86 : vector<64x48xf32> to vector<64x48xbf16>
    %c0_67 = arith.constant 0 : index
    %c0_68 = arith.constant 0 : index
    %119 = vector.load %arg21[%c0_67, %c0_68] : memref<48x48xbf16, #tpu.memory_space<vmem>>, vector<48x48xbf16>
    %cst_69 = arith.constant dense<0.000000e+00> : vector<64x48xf32>
    %120 = tpu.matmul %118, %119, %cst_69 {dimension_numbers = #tpu.dot_dimension_numbers<[1], [0], [0], [1], [0, 0, 1, 1], [], []>} : vector<64x48xbf16>, vector<48x48xbf16>, vector<64x48xf32> -> vector<64x48xf32>
    %121 = tpu.concatenate %117, %117, %117 in 1 : vector<64x16xf32>, vector<64x16xf32>, vector<64x16xf32> -> vector<64x48xf32>
    %122 = arith.mulf %120, %121 : vector<64x48xf32>
    %c0_70 = arith.constant 0 : index
    %c0_71 = arith.constant 0 : index
    %123 = vector.load %arg24[%c0_70, %c0_71] : memref<64x100xf32, #tpu.memory_space<vmem>>, vector<64x100xf32>
    tpu.vector_store %arg24[%c0_70, %c0_71], %105 {strides = array<i32>} : memref<64x100xf32, #tpu.memory_space<vmem>>, vector<64x100xf32>,
    %c0_72 = arith.constant 0 : index
    %c0_73 = arith.constant 0 : index
    %124 = vector.load %arg25[%c0_72, %c0_73] : memref<64x48xf32, #tpu.memory_space<vmem>>, vector<64x48xf32>
    tpu.vector_store %arg25[%c0_72, %c0_73], %122 {strides = array<i32>} : memref<64x48xf32, #tpu.memory_space<vmem>>, vector<64x48xf32>,
    return
  }
  func.func @transform_0(%arg0: i32) -> (i32, i32) {
    %c0_i32 = arith.constant 0 : i32
    %c0_i32_0 = arith.constant 0 : i32
    return %arg0, %c0_i32 : i32, i32
  }
  func.func @transform_1(%arg0: i32) -> (i32, i32) {
    %c0_i32 = arith.constant 0 : i32
    %c0_i32_0 = arith.constant 0 : i32
    return %arg0, %c0_i32 : i32, i32
  }
  func.func @transform_2(%arg0: i32) -> (i32, i32) {
    %c0_i32 = arith.constant 0 : i32
    %c0_i32_0 = arith.constant 0 : i32
    %c0_i32_1 = arith.constant 0 : i32
    return %c0_i32, %c0_i32_0 : i32, i32
  }
  func.func @transform_3(%arg0: i32) -> (i32, i32) {
    %c0_i32 = arith.constant 0 : i32
    %c0_i32_0 = arith.constant 0 : i32
    %c0_i32_1 = arith.constant 0 : i32
    return %c0_i32, %c0_i32_0 : i32, i32
  }
  func.func @transform_4(%arg0: i32) -> (i32, i32) {
    %c0_i32 = arith.constant 0 : i32
    %c0_i32_0 = arith.constant 0 : i32
    %c0_i32_1 = arith.constant 0 : i32
    return %c0_i32, %c0_i32_0 : i32, i32
  }
  func.func @transform_5(%arg0: i32) -> (i32, i32) {
    %c0_i32 = arith.constant 0 : i32
    %c0_i32_0 = arith.constant 0 : i32
    %c0_i32_1 = arith.constant 0 : i32
    return %c0_i32, %c0_i32_0 : i32, i32
  }
  func.func @transform_6(%arg0: i32) -> (i32, i32) {
    %c0_i32 = arith.constant 0 : i32
    %c0_i32_0 = arith.constant 0 : i32
    %c0_i32_1 = arith.constant 0 : i32
    return %c0_i32, %c0_i32_0 : i32, i32
  }
  func.func @transform_7(%arg0: i32) -> (i32, i32) {
    %c0_i32 = arith.constant 0 : i32
    %c0_i32_0 = arith.constant 0 : i32
    %c0_i32_1 = arith.constant 0 : i32
    return %c0_i32, %c0_i32_0 : i32, i32
  }
  func.func @transform_8(%arg0: i32) -> (i32, i32) {
    %c0_i32 = arith.constant 0 : i32
    %c0_i32_0 = arith.constant 0 : i32
    %c0_i32_1 = arith.constant 0 : i32
    return %c0_i32, %c0_i32_0 : i32, i32
  }
  func.func @transform_9(%arg0: i32) -> (i32, i32) {
    %c0_i32 = arith.constant 0 : i32
    %c0_i32_0 = arith.constant 0 : i32
    %c0_i32_1 = arith.constant 0 : i32
    return %c0_i32, %c0_i32_0 : i32, i32
  }
  func.func @transform_10(%arg0: i32) -> (i32, i32) {
    %c0_i32 = arith.constant 0 : i32
    %c0_i32_0 = arith.constant 0 : i32
    %c0_i32_1 = arith.constant 0 : i32
    return %c0_i32, %c0_i32_0 : i32, i32
  }
  func.func @transform_11(%arg0: i32) -> (i32, i32) {
    %c0_i32 = arith.constant 0 : i32
    %c0_i32_0 = arith.constant 0 : i32
    %c0_i32_1 = arith.constant 0 : i32
    return %c0_i32, %c0_i32_0 : i32, i32
  }
  func.func @transform_12(%arg0: i32) -> (i32, i32) {
    %c0_i32 = arith.constant 0 : i32
    %c0_i32_0 = arith.constant 0 : i32
    %c0_i32_1 = arith.constant 0 : i32
    return %c0_i32, %c0_i32_0 : i32, i32
  }
  func.func @transform_13(%arg0: i32) -> (i32, i32) {
    %c0_i32 = arith.constant 0 : i32
    %c0_i32_0 = arith.constant 0 : i32
    %c0_i32_1 = arith.constant 0 : i32
    return %c0_i32, %c0_i32_0 : i32, i32
  }
  func.func @transform_14(%arg0: i32) -> (i32, i32) {
    %c0_i32 = arith.constant 0 : i32
    %c0_i32_0 = arith.constant 0 : i32
    %c0_i32_1 = arith.constant 0 : i32
    return %c0_i32, %c0_i32_0 : i32, i32
  }
  func.func @transform_15(%arg0: i32) -> (i32, i32) {
    %c0_i32 = arith.constant 0 : i32
    %c0_i32_0 = arith.constant 0 : i32
    %c0_i32_1 = arith.constant 0 : i32
    return %c0_i32, %c0_i32_0 : i32, i32
  }
  func.func @transform_16(%arg0: i32) -> (i32, i32) {
    %c0_i32 = arith.constant 0 : i32
    %c0_i32_0 = arith.constant 0 : i32
    %c0_i32_1 = arith.constant 0 : i32
    return %c0_i32, %c0_i32_0 : i32, i32
  }
  func.func @transform_17(%arg0: i32) -> (i32, i32) {
    %c0_i32 = arith.constant 0 : i32
    %c0_i32_0 = arith.constant 0 : i32
    %c0_i32_1 = arith.constant 0 : i32
    return %c0_i32, %c0_i32_0 : i32, i32
  }
  func.func @transform_18(%arg0: i32) -> (i32, i32) {
    %c0_i32 = arith.constant 0 : i32
    %c0_i32_0 = arith.constant 0 : i32
    %c0_i32_1 = arith.constant 0 : i32
    return %c0_i32, %c0_i32_0 : i32, i32
  }
  func.func @transform_19(%arg0: i32) -> (i32, i32) {
    %c0_i32 = arith.constant 0 : i32
    %c0_i32_0 = arith.constant 0 : i32
    %c0_i32_1 = arith.constant 0 : i32
    return %c0_i32, %c0_i32_0 : i32, i32
  }
  func.func @transform_20(%arg0: i32) -> (i32, i32) {
    %c0_i32 = arith.constant 0 : i32
    %c0_i32_0 = arith.constant 0 : i32
    %c0_i32_1 = arith.constant 0 : i32
    return %c0_i32, %c0_i32_0 : i32, i32
  }
  func.func @transform_21(%arg0: i32) -> (i32, i32) {
    %c0_i32 = arith.constant 0 : i32
    %c0_i32_0 = arith.constant 0 : i32
    %c0_i32_1 = arith.constant 0 : i32
    return %c0_i32, %c0_i32_0 : i32, i32
  }
  func.func @transform_22(%arg0: i32) -> (i32, i32) {
    %c0_i32 = arith.constant 0 : i32
    %c0_i32_0 = arith.constant 0 : i32
    %c0_i32_1 = arith.constant 0 : i32
    return %c0_i32, %c0_i32_0 : i32, i32
  }
  func.func @transform_23(%arg0: i32) -> (i32, i32) {
    %c0_i32 = arith.constant 0 : i32
    %c0_i32_0 = arith.constant 0 : i32
    return %arg0, %c0_i32 : i32, i32
  }
  func.func @transform_24(%arg0: i32) -> (i32, i32) {
    %c0_i32 = arith.constant 0 : i32
    %c0_i32_0 = arith.constant 0 : i32
    return %arg0, %c0_i32 : i32, i32
  }
}

module attributes {stable_mosaic.version = 11 : i64} {
  func.func @node_update_kernel(%arg0: i32, %arg1: memref<16x100xf32, #tpu.memory_space<vmem>>, %arg2: memref<16x48xf32, #tpu.memory_space<vmem>>, %arg3: memref<16x100xf32, #tpu.memory_space<vmem>>, %arg4: memref<16x48xf32, #tpu.memory_space<vmem>>, %arg5: memref<1x100xf32, #tpu.memory_space<vmem>>, %arg6: memref<1x100xf32, #tpu.memory_space<vmem>>, %arg7: memref<48x96xbf16, #tpu.memory_space<vmem>>, %arg8: memref<100x400xbf16, #tpu.memory_space<vmem>>, %arg9: memref<32x400xbf16, #tpu.memory_space<vmem>>, %arg10: memref<1x400xf32, #tpu.memory_space<vmem>>, %arg11: memref<96x96xbf16, #tpu.memory_space<vmem>>, %arg12: memref<400x32xbf16, #tpu.memory_space<vmem>>, %arg13: memref<1x32xf32, #tpu.memory_space<vmem>>, %arg14: memref<96x96xbf16, #tpu.memory_space<vmem>>, %arg15: memref<400x100xbf16, #tpu.memory_space<vmem>>, %arg16: memref<32x100xbf16, #tpu.memory_space<vmem>>, %arg17: memref<1x100xf32, #tpu.memory_space<vmem>>, %arg18: memref<96x48xbf16, #tpu.memory_space<vmem>>, %arg19: memref<100x16xbf16, #tpu.memory_space<vmem>>, %arg20: memref<1x16xf32, #tpu.memory_space<vmem>>, %arg21: memref<1x100xf32, #tpu.memory_space<vmem>>, %arg22: memref<1x100xf32, #tpu.memory_space<vmem>>, %arg23: memref<16x100xf32, #tpu.memory_space<vmem>>, %arg24: memref<16x48xf32, #tpu.memory_space<vmem>>) attributes {dimension_semantics = [#tpu.dimension_semantics<parallel>], iteration_bounds = array<i64: 1>, scalar_prefetch = 0 : i64, scratch_operands = 0 : i64, tpu.core_type = #tpu.core_type<tc>, window_params = [{transform_indices = @transform_0, window_bounds = array<i64: 16, 100>}, {transform_indices = @transform_1, window_bounds = array<i64: 16, 48>}, {transform_indices = @transform_2, window_bounds = array<i64: 16, 100>}, {transform_indices = @transform_3, window_bounds = array<i64: 16, 48>}, {pipeline_mode = #tpu.pipeline_mode<synchronous>, transform_indices = @transform_4, window_bounds = array<i64: 1, 100>}, {pipeline_mode = #tpu.pipeline_mode<synchronous>, transform_indices = @transform_5, window_bounds = array<i64: 1, 100>}, {pipeline_mode = #tpu.pipeline_mode<synchronous>, transform_indices = @transform_6, window_bounds = array<i64: 48, 96>}, {pipeline_mode = #tpu.pipeline_mode<synchronous>, transform_indices = @transform_7, window_bounds = array<i64: 100, 400>}, {pipeline_mode = #tpu.pipeline_mode<synchronous>, transform_indices = @transform_8, window_bounds = array<i64: 32, 400>}, {pipeline_mode = #tpu.pipeline_mode<synchronous>, transform_indices = @transform_9, window_bounds = array<i64: 1, 400>}, {pipeline_mode = #tpu.pipeline_mode<synchronous>, transform_indices = @transform_10, window_bounds = array<i64: 96, 96>}, {pipeline_mode = #tpu.pipeline_mode<synchronous>, transform_indices = @transform_11, window_bounds = array<i64: 400, 32>}, {pipeline_mode = #tpu.pipeline_mode<synchronous>, transform_indices = @transform_12, window_bounds = array<i64: 1, 32>}, {pipeline_mode = #tpu.pipeline_mode<synchronous>, transform_indices = @transform_13, window_bounds = array<i64: 96, 96>}, {pipeline_mode = #tpu.pipeline_mode<synchronous>, transform_indices = @transform_14, window_bounds = array<i64: 400, 100>}, {pipeline_mode = #tpu.pipeline_mode<synchronous>, transform_indices = @transform_15, window_bounds = array<i64: 32, 100>}, {pipeline_mode = #tpu.pipeline_mode<synchronous>, transform_indices = @transform_16, window_bounds = array<i64: 1, 100>}, {pipeline_mode = #tpu.pipeline_mode<synchronous>, transform_indices = @transform_17, window_bounds = array<i64: 96, 48>}, {pipeline_mode = #tpu.pipeline_mode<synchronous>, transform_indices = @transform_18, window_bounds = array<i64: 100, 16>}, {pipeline_mode = #tpu.pipeline_mode<synchronous>, transform_indices = @transform_19, window_bounds = array<i64: 1, 16>}, {pipeline_mode = #tpu.pipeline_mode<synchronous>, transform_indices = @transform_20, window_bounds = array<i64: 1, 100>}, {pipeline_mode = #tpu.pipeline_mode<synchronous>, transform_indices = @transform_21, window_bounds = array<i64: 1, 100>}, {transform_indices = @transform_22, window_bounds = array<i64: 16, 100>}, {transform_indices = @transform_23, window_bounds = array<i64: 16, 48>}]} {
    %c0 = arith.constant 0 : index
    %c0_0 = arith.constant 0 : index
    %0 = vector.load %arg1[%c0, %c0_0] : memref<16x100xf32, #tpu.memory_space<vmem>>, vector<16x100xf32>
    %c0_1 = arith.constant 0 : index
    %c0_2 = arith.constant 0 : index
    %1 = vector.load %arg3[%c0_1, %c0_2] : memref<16x100xf32, #tpu.memory_space<vmem>>, vector<16x100xf32>
    %2 = arith.addf %0, %1 : vector<16x100xf32>
    %c0_3 = arith.constant 0 : index
    %c0_4 = arith.constant 0 : index
    %3 = vector.load %arg2[%c0_3, %c0_4] : memref<16x48xf32, #tpu.memory_space<vmem>>, vector<16x48xf32>
    %c0_5 = arith.constant 0 : index
    %c0_6 = arith.constant 0 : index
    %4 = vector.load %arg4[%c0_5, %c0_6] : memref<16x48xf32, #tpu.memory_space<vmem>>, vector<16x48xf32>
    %5 = arith.addf %3, %4 : vector<16x48xf32>
    %cst = arith.constant dense<0.000000e+00> : vector<16xf32>
    %6 = vector.multi_reduction <add>, %2, %cst [1] : vector<16x100xf32> to vector<16xf32>
    %7 = vector.shape_cast %6 : vector<16xf32> to vector<16x1xf32>
    %cst_7 = arith.constant 1.000000e+02 : f32
    %8 = vector.broadcast %cst_7 : f32 to vector<16x1xf32>
    %9 = arith.divf %7, %8 : vector<16x1xf32>
    %10 = vector.broadcast %9 : vector<16x1xf32> to vector<16x100xf32>
    %11 = arith.subf %2, %10 : vector<16x100xf32>
    %12 = arith.mulf %11, %11 : vector<16x100xf32>
    %cst_8 = arith.constant dense<0.000000e+00> : vector<16xf32>
    %13 = vector.multi_reduction <add>, %12, %cst_8 [1] : vector<16x100xf32> to vector<16xf32>
    %14 = vector.shape_cast %13 : vector<16xf32> to vector<16x1xf32>
    %cst_9 = arith.constant 1.000000e+02 : f32
    %15 = vector.broadcast %cst_9 : f32 to vector<16x1xf32>
    %16 = arith.divf %14, %15 : vector<16x1xf32>
    %17 = vector.broadcast %9 : vector<16x1xf32> to vector<16x100xf32>
    %18 = arith.subf %2, %17 : vector<16x100xf32>
    %cst_10 = arith.constant 9.99999974E-6 : f32
    %19 = vector.broadcast %cst_10 : f32 to vector<16x1xf32>
    %20 = arith.addf %16, %19 : vector<16x1xf32>
    %21 = math.rsqrt %20 : vector<16x1xf32>
    %22 = vector.broadcast %21 : vector<16x1xf32> to vector<16x100xf32>
    %23 = arith.mulf %18, %22 : vector<16x100xf32>
    %c0_11 = arith.constant 0 : index
    %c0_12 = arith.constant 0 : index
    %24 = vector.load %arg5[%c0_11, %c0_12] : memref<1x100xf32, #tpu.memory_space<vmem>>, vector<1x100xf32>
    %25 = vector.broadcast %24 : vector<1x100xf32> to vector<16x100xf32>
    %26 = arith.mulf %23, %25 : vector<16x100xf32>
    %c0_13 = arith.constant 0 : index
    %c0_14 = arith.constant 0 : index
    %27 = vector.load %arg6[%c0_13, %c0_14] : memref<1x100xf32, #tpu.memory_space<vmem>>, vector<1x100xf32>
    %28 = vector.broadcast %27 : vector<1x100xf32> to vector<16x100xf32>
    %29 = arith.addf %26, %28 : vector<16x100xf32>
    %30 = arith.mulf %5, %5 : vector<16x48xf32>
    %31 = vector.extract_strided_slice %30 {offsets = [0, 0], sizes = [16, 16], strides = [1, 1]} : vector<16x48xf32> to vector<16x16xf32>
    %32 = vector.extract_strided_slice %30 {offsets = [0, 16], sizes = [16, 16], strides = [1, 1]} : vector<16x48xf32> to vector<16x16xf32>
    %33 = arith.addf %31, %32 : vector<16x16xf32>
    %34 = vector.extract_strided_slice %30 {offsets = [0, 32], sizes = [16, 16], strides = [1, 1]} : vector<16x48xf32> to vector<16x16xf32>
    %35 = arith.addf %33, %34 : vector<16x16xf32>
    %cst_15 = arith.constant 9.99999993E-9 : f32
    %36 = vector.broadcast %cst_15 : f32 to vector<16x16xf32>
    %37 = arith.maximumf %35, %36 : vector<16x16xf32>
    %cst_16 = arith.constant dense<0.000000e+00> : vector<16xf32>
    %38 = vector.multi_reduction <add>, %37, %cst_16 [1] : vector<16x16xf32> to vector<16xf32>
    %39 = vector.shape_cast %38 : vector<16xf32> to vector<16x1xf32>
    %cst_17 = arith.constant 1.600000e+01 : f32
    %40 = vector.broadcast %cst_17 : f32 to vector<16x1xf32>
    %41 = arith.divf %39, %40 : vector<16x1xf32>
    %42 = math.rsqrt %41 : vector<16x1xf32>
    %43 = vector.broadcast %42 : vector<16x1xf32> to vector<16x48xf32>
    %44 = arith.mulf %5, %43 : vector<16x48xf32>
    %45 = arith.truncf %44 : vector<16x48xf32> to vector<16x48xbf16>
    %c0_18 = arith.constant 0 : index
    %c0_19 = arith.constant 0 : index
    %46 = vector.load %arg7[%c0_18, %c0_19] : memref<48x96xbf16, #tpu.memory_space<vmem>>, vector<48x96xbf16>
    %cst_20 = arith.constant dense<0.000000e+00> : vector<16x96xf32>
    %47 = tpu.matmul %45, %46, %cst_20 {dimension_numbers = #tpu.dot_dimension_numbers<[1], [0], [0], [1], [0, 0, 1, 1], [], []>} : vector<16x48xbf16>, vector<48x96xbf16>, vector<16x96xf32> -> vector<16x96xf32>
    %48 = arith.mulf %47, %47 : vector<16x96xf32>
    %49 = vector.extract_strided_slice %48 {offsets = [0, 0], sizes = [16, 32], strides = [1, 1]} : vector<16x96xf32> to vector<16x32xf32>
    %50 = vector.extract_strided_slice %48 {offsets = [0, 32], sizes = [16, 32], strides = [1, 1]} : vector<16x96xf32> to vector<16x32xf32>
    %51 = arith.addf %49, %50 : vector<16x32xf32>
    %52 = vector.extract_strided_slice %48 {offsets = [0, 64], sizes = [16, 32], strides = [1, 1]} : vector<16x96xf32> to vector<16x32xf32>
    %53 = arith.addf %51, %52 : vector<16x32xf32>
    %cst_21 = arith.constant 9.99999993E-9 : f32
    %54 = vector.broadcast %cst_21 : f32 to vector<16x32xf32>
    %55 = arith.maximumf %53, %54 : vector<16x32xf32>
    %56 = math.sqrt %55 : vector<16x32xf32>
    %57 = arith.truncf %29 : vector<16x100xf32> to vector<16x100xbf16>
    %c0_22 = arith.constant 0 : index
    %c0_23 = arith.constant 0 : index
    %58 = vector.load %arg8[%c0_22, %c0_23] : memref<100x400xbf16, #tpu.memory_space<vmem>>, vector<100x400xbf16>
    %cst_24 = arith.constant dense<0.000000e+00> : vector<16x400xf32>
    %59 = tpu.matmul %57, %58, %cst_24 {dimension_numbers = #tpu.dot_dimension_numbers<[1], [0], [0], [1], [0, 0, 1, 1], [], []>} : vector<16x100xbf16>, vector<100x400xbf16>, vector<16x400xf32> -> vector<16x400xf32>
    %60 = arith.truncf %56 : vector<16x32xf32> to vector<16x32xbf16>
    %c0_25 = arith.constant 0 : index
    %c0_26 = arith.constant 0 : index
    %61 = vector.load %arg9[%c0_25, %c0_26] : memref<32x400xbf16, #tpu.memory_space<vmem>>, vector<32x400xbf16>
    %cst_27 = arith.constant dense<0.000000e+00> : vector<16x400xf32>
    %62 = tpu.matmul %60, %61, %cst_27 {dimension_numbers = #tpu.dot_dimension_numbers<[1], [0], [0], [1], [0, 0, 1, 1], [], []>} : vector<16x32xbf16>, vector<32x400xbf16>, vector<16x400xf32> -> vector<16x400xf32>
    %63 = arith.addf %59, %62 : vector<16x400xf32>
    %c0_28 = arith.constant 0 : index
    %c0_29 = arith.constant 0 : index
    %64 = vector.load %arg10[%c0_28, %c0_29] : memref<1x400xf32, #tpu.memory_space<vmem>>, vector<1x400xf32>
    %65 = vector.broadcast %64 : vector<1x400xf32> to vector<16x400xf32>
    %66 = arith.addf %63, %65 : vector<16x400xf32>
    %67 = arith.truncf %66 : vector<16x400xf32> to vector<16x400xbf16>
    %c0_30 = arith.constant 0 : index
    %c0_31 = arith.constant 0 : index
    %68 = vector.load %arg12[%c0_30, %c0_31] : memref<400x32xbf16, #tpu.memory_space<vmem>>, vector<400x32xbf16>
    %cst_32 = arith.constant dense<0.000000e+00> : vector<16x32xf32>
    %69 = tpu.matmul %67, %68, %cst_32 {dimension_numbers = #tpu.dot_dimension_numbers<[1], [0], [0], [1], [0, 0, 1, 1], [], []>} : vector<16x400xbf16>, vector<400x32xbf16>, vector<16x32xf32> -> vector<16x32xf32>
    %c0_33 = arith.constant 0 : index
    %c0_34 = arith.constant 0 : index
    %70 = vector.load %arg13[%c0_33, %c0_34] : memref<1x32xf32, #tpu.memory_space<vmem>>, vector<1x32xf32>
    %71 = vector.broadcast %70 : vector<1x32xf32> to vector<16x32xf32>
    %72 = arith.addf %69, %71 : vector<16x32xf32>
    %cst_35 = arith.constant 0.000000e+00 : f32
    %73 = vector.broadcast %cst_35 : f32 to vector<16x32xf32>
    %74 = arith.subf %73, %72 : vector<16x32xf32>
    %75 = math.exp %74 : vector<16x32xf32>
    %cst_36 = arith.constant 1.000000e+00 : f32
    %76 = vector.broadcast %cst_36 : f32 to vector<16x32xf32>
    %77 = arith.addf %76, %75 : vector<16x32xf32>
    %78 = tpu.reciprocal %77 {approx = true} : vector<16x32xf32> -> vector<16x32xf32>
    %79 = arith.truncf %47 : vector<16x96xf32> to vector<16x96xbf16>
    %c0_37 = arith.constant 0 : index
    %c0_38 = arith.constant 0 : index
    %80 = vector.load %arg11[%c0_37, %c0_38] : memref<96x96xbf16, #tpu.memory_space<vmem>>, vector<96x96xbf16>
    %cst_39 = arith.constant dense<0.000000e+00> : vector<16x96xf32>
    %81 = tpu.matmul %79, %80, %cst_39 {dimension_numbers = #tpu.dot_dimension_numbers<[1], [0], [0], [1], [0, 0, 1, 1], [], []>} : vector<16x96xbf16>, vector<96x96xbf16>, vector<16x96xf32> -> vector<16x96xf32>
    %82 = tpu.concatenate %78, %78, %78 in 1 : vector<16x32xf32>, vector<16x32xf32>, vector<16x32xf32> -> vector<16x96xf32>
    %83 = arith.mulf %81, %82 : vector<16x96xf32>
    %cst_40 = arith.constant 0.000000e+00 : f32
    %84 = vector.broadcast %cst_40 : f32 to vector<16x400xf32>
    %85 = arith.maximumf %66, %84 : vector<16x400xf32>
    %86 = arith.truncf %83 : vector<16x96xf32> to vector<16x96xbf16>
    %c0_41 = arith.constant 0 : index
    %c0_42 = arith.constant 0 : index
    %87 = vector.load %arg14[%c0_41, %c0_42] : memref<96x96xbf16, #tpu.memory_space<vmem>>, vector<96x96xbf16>
    %cst_43 = arith.constant dense<0.000000e+00> : vector<16x96xf32>
    %88 = tpu.matmul %86, %87, %cst_43 {dimension_numbers = #tpu.dot_dimension_numbers<[1], [0], [0], [1], [0, 0, 1, 1], [], []>} : vector<16x96xbf16>, vector<96x96xbf16>, vector<16x96xf32> -> vector<16x96xf32>
    %89 = arith.mulf %88, %88 : vector<16x96xf32>
    %90 = vector.extract_strided_slice %89 {offsets = [0, 0], sizes = [16, 32], strides = [1, 1]} : vector<16x96xf32> to vector<16x32xf32>
    %91 = vector.extract_strided_slice %89 {offsets = [0, 32], sizes = [16, 32], strides = [1, 1]} : vector<16x96xf32> to vector<16x32xf32>
    %92 = arith.addf %90, %91 : vector<16x32xf32>
    %93 = vector.extract_strided_slice %89 {offsets = [0, 64], sizes = [16, 32], strides = [1, 1]} : vector<16x96xf32> to vector<16x32xf32>
    %94 = arith.addf %92, %93 : vector<16x32xf32>
    %cst_44 = arith.constant 9.99999993E-9 : f32
    %95 = vector.broadcast %cst_44 : f32 to vector<16x32xf32>
    %96 = arith.maximumf %94, %95 : vector<16x32xf32>
    %97 = math.sqrt %96 : vector<16x32xf32>
    %98 = arith.truncf %85 : vector<16x400xf32> to vector<16x400xbf16>
    %c0_45 = arith.constant 0 : index
    %c0_46 = arith.constant 0 : index
    %99 = vector.load %arg15[%c0_45, %c0_46] : memref<400x100xbf16, #tpu.memory_space<vmem>>, vector<400x100xbf16>
    %cst_47 = arith.constant dense<0.000000e+00> : vector<16x100xf32>
    %100 = tpu.matmul %98, %99, %cst_47 {dimension_numbers = #tpu.dot_dimension_numbers<[1], [0], [0], [1], [0, 0, 1, 1], [], []>} : vector<16x400xbf16>, vector<400x100xbf16>, vector<16x100xf32> -> vector<16x100xf32>
    %101 = arith.truncf %97 : vector<16x32xf32> to vector<16x32xbf16>
    %c0_48 = arith.constant 0 : index
    %c0_49 = arith.constant 0 : index
    %102 = vector.load %arg16[%c0_48, %c0_49] : memref<32x100xbf16, #tpu.memory_space<vmem>>, vector<32x100xbf16>
    %cst_50 = arith.constant dense<0.000000e+00> : vector<16x100xf32>
    %103 = tpu.matmul %101, %102, %cst_50 {dimension_numbers = #tpu.dot_dimension_numbers<[1], [0], [0], [1], [0, 0, 1, 1], [], []>} : vector<16x32xbf16>, vector<32x100xbf16>, vector<16x100xf32> -> vector<16x100xf32>
    %104 = arith.addf %100, %103 : vector<16x100xf32>
    %c0_51 = arith.constant 0 : index
    %c0_52 = arith.constant 0 : index
    %105 = vector.load %arg17[%c0_51, %c0_52] : memref<1x100xf32, #tpu.memory_space<vmem>>, vector<1x100xf32>
    %106 = vector.broadcast %105 : vector<1x100xf32> to vector<16x100xf32>
    %107 = arith.addf %104, %106 : vector<16x100xf32>
    %108 = arith.truncf %107 : vector<16x100xf32> to vector<16x100xbf16>
    %c0_53 = arith.constant 0 : index
    %c0_54 = arith.constant 0 : index
    %109 = vector.load %arg19[%c0_53, %c0_54] : memref<100x16xbf16, #tpu.memory_space<vmem>>, vector<100x16xbf16>
    %cst_55 = arith.constant dense<0.000000e+00> : vector<16x16xf32>
    %110 = tpu.matmul %108, %109, %cst_55 {dimension_numbers = #tpu.dot_dimension_numbers<[1], [0], [0], [1], [0, 0, 1, 1], [], []>} : vector<16x100xbf16>, vector<100x16xbf16>, vector<16x16xf32> -> vector<16x16xf32>
    %c0_56 = arith.constant 0 : index
    %c0_57 = arith.constant 0 : index
    %111 = vector.load %arg20[%c0_56, %c0_57] : memref<1x16xf32, #tpu.memory_space<vmem>>, vector<1x16xf32>
    %112 = vector.broadcast %111 : vector<1x16xf32> to vector<16x16xf32>
    %113 = arith.addf %110, %112 : vector<16x16xf32>
    %cst_58 = arith.constant 0.000000e+00 : f32
    %114 = vector.broadcast %cst_58 : f32 to vector<16x16xf32>
    %115 = arith.subf %114, %113 : vector<16x16xf32>
    %116 = math.exp %115 : vector<16x16xf32>
    %cst_59 = arith.constant 1.000000e+00 : f32
    %117 = vector.broadcast %cst_59 : f32 to vector<16x16xf32>
    %118 = arith.addf %117, %116 : vector<16x16xf32>
    %119 = tpu.reciprocal %118 {approx = true} : vector<16x16xf32> -> vector<16x16xf32>
    %120 = arith.truncf %88 : vector<16x96xf32> to vector<16x96xbf16>
    %c0_60 = arith.constant 0 : index
    %c0_61 = arith.constant 0 : index
    %121 = vector.load %arg18[%c0_60, %c0_61] : memref<96x48xbf16, #tpu.memory_space<vmem>>, vector<96x48xbf16>
    %cst_62 = arith.constant dense<0.000000e+00> : vector<16x48xf32>
    %122 = tpu.matmul %120, %121, %cst_62 {dimension_numbers = #tpu.dot_dimension_numbers<[1], [0], [0], [1], [0, 0, 1, 1], [], []>} : vector<16x96xbf16>, vector<96x48xbf16>, vector<16x48xf32> -> vector<16x48xf32>
    %123 = tpu.concatenate %119, %119, %119 in 1 : vector<16x16xf32>, vector<16x16xf32>, vector<16x16xf32> -> vector<16x48xf32>
    %124 = arith.mulf %122, %123 : vector<16x48xf32>
    %125 = arith.addf %29, %107 : vector<16x100xf32>
    %cst_63 = arith.constant dense<0.000000e+00> : vector<16xf32>
    %126 = vector.multi_reduction <add>, %125, %cst_63 [1] : vector<16x100xf32> to vector<16xf32>
    %127 = vector.shape_cast %126 : vector<16xf32> to vector<16x1xf32>
    %cst_64 = arith.constant 1.000000e+02 : f32
    %128 = vector.broadcast %cst_64 : f32 to vector<16x1xf32>
    %129 = arith.divf %127, %128 : vector<16x1xf32>
    %130 = vector.broadcast %129 : vector<16x1xf32> to vector<16x100xf32>
    %131 = arith.subf %125, %130 : vector<16x100xf32>
    %132 = arith.mulf %131, %131 : vector<16x100xf32>
    %cst_65 = arith.constant dense<0.000000e+00> : vector<16xf32>
    %133 = vector.multi_reduction <add>, %132, %cst_65 [1] : vector<16x100xf32> to vector<16xf32>
    %134 = vector.shape_cast %133 : vector<16xf32> to vector<16x1xf32>
    %cst_66 = arith.constant 1.000000e+02 : f32
    %135 = vector.broadcast %cst_66 : f32 to vector<16x1xf32>
    %136 = arith.divf %134, %135 : vector<16x1xf32>
    %137 = vector.broadcast %129 : vector<16x1xf32> to vector<16x100xf32>
    %138 = arith.subf %125, %137 : vector<16x100xf32>
    %cst_67 = arith.constant 9.99999974E-6 : f32
    %139 = vector.broadcast %cst_67 : f32 to vector<16x1xf32>
    %140 = arith.addf %136, %139 : vector<16x1xf32>
    %141 = math.rsqrt %140 : vector<16x1xf32>
    %142 = vector.broadcast %141 : vector<16x1xf32> to vector<16x100xf32>
    %143 = arith.mulf %138, %142 : vector<16x100xf32>
    %c0_68 = arith.constant 0 : index
    %c0_69 = arith.constant 0 : index
    %144 = vector.load %arg21[%c0_68, %c0_69] : memref<1x100xf32, #tpu.memory_space<vmem>>, vector<1x100xf32>
    %145 = vector.broadcast %144 : vector<1x100xf32> to vector<16x100xf32>
    %146 = arith.mulf %143, %145 : vector<16x100xf32>
    %c0_70 = arith.constant 0 : index
    %c0_71 = arith.constant 0 : index
    %147 = vector.load %arg22[%c0_70, %c0_71] : memref<1x100xf32, #tpu.memory_space<vmem>>, vector<1x100xf32>
    %148 = vector.broadcast %147 : vector<1x100xf32> to vector<16x100xf32>
    %149 = arith.addf %146, %148 : vector<16x100xf32>
    %c0_72 = arith.constant 0 : index
    %c0_73 = arith.constant 0 : index
    %150 = vector.load %arg23[%c0_72, %c0_73] : memref<16x100xf32, #tpu.memory_space<vmem>>, vector<16x100xf32>
    tpu.vector_store %arg23[%c0_72, %c0_73], %149 {strides = array<i32>} : memref<16x100xf32, #tpu.memory_space<vmem>>, vector<16x100xf32>,
    %151 = arith.addf %44, %124 : vector<16x48xf32>
    %152 = arith.mulf %151, %151 : vector<16x48xf32>
    %153 = vector.extract_strided_slice %152 {offsets = [0, 0], sizes = [16, 16], strides = [1, 1]} : vector<16x48xf32> to vector<16x16xf32>
    %154 = vector.extract_strided_slice %152 {offsets = [0, 16], sizes = [16, 16], strides = [1, 1]} : vector<16x48xf32> to vector<16x16xf32>
    %155 = arith.addf %153, %154 : vector<16x16xf32>
    %156 = vector.extract_strided_slice %152 {offsets = [0, 32], sizes = [16, 16], strides = [1, 1]} : vector<16x48xf32> to vector<16x16xf32>
    %157 = arith.addf %155, %156 : vector<16x16xf32>
    %cst_74 = arith.constant 9.99999993E-9 : f32
    %158 = vector.broadcast %cst_74 : f32 to vector<16x16xf32>
    %159 = arith.maximumf %157, %158 : vector<16x16xf32>
    %cst_75 = arith.constant dense<0.000000e+00> : vector<16xf32>
    %160 = vector.multi_reduction <add>, %159, %cst_75 [1] : vector<16x16xf32> to vector<16xf32>
    %161 = vector.shape_cast %160 : vector<16xf32> to vector<16x1xf32>
    %cst_76 = arith.constant 1.600000e+01 : f32
    %162 = vector.broadcast %cst_76 : f32 to vector<16x1xf32>
    %163 = arith.divf %161, %162 : vector<16x1xf32>
    %164 = math.rsqrt %163 : vector<16x1xf32>
    %165 = vector.broadcast %164 : vector<16x1xf32> to vector<16x48xf32>
    %166 = arith.mulf %151, %165 : vector<16x48xf32>
    %c0_77 = arith.constant 0 : index
    %c0_78 = arith.constant 0 : index
    %167 = vector.load %arg24[%c0_77, %c0_78] : memref<16x48xf32, #tpu.memory_space<vmem>>, vector<16x48xf32>
    tpu.vector_store %arg24[%c0_77, %c0_78], %166 {strides = array<i32>} : memref<16x48xf32, #tpu.memory_space<vmem>>, vector<16x48xf32>,
    return
  }
  func.func @transform_0(%arg0: i32) -> (i32, i32) {
    %c0_i32 = arith.constant 0 : i32
    %c0_i32_0 = arith.constant 0 : i32
    return %arg0, %c0_i32 : i32, i32
  }
  func.func @transform_1(%arg0: i32) -> (i32, i32) {
    %c0_i32 = arith.constant 0 : i32
    %c0_i32_0 = arith.constant 0 : i32
    return %arg0, %c0_i32 : i32, i32
  }
  func.func @transform_2(%arg0: i32) -> (i32, i32) {
    %c0_i32 = arith.constant 0 : i32
    %c0_i32_0 = arith.constant 0 : i32
    return %arg0, %c0_i32 : i32, i32
  }
  func.func @transform_3(%arg0: i32) -> (i32, i32) {
    %c0_i32 = arith.constant 0 : i32
    %c0_i32_0 = arith.constant 0 : i32
    return %arg0, %c0_i32 : i32, i32
  }
  func.func @transform_4(%arg0: i32) -> (i32, i32) {
    %c0_i32 = arith.constant 0 : i32
    %c0_i32_0 = arith.constant 0 : i32
    %c0_i32_1 = arith.constant 0 : i32
    return %c0_i32, %c0_i32_0 : i32, i32
  }
  func.func @transform_5(%arg0: i32) -> (i32, i32) {
    %c0_i32 = arith.constant 0 : i32
    %c0_i32_0 = arith.constant 0 : i32
    %c0_i32_1 = arith.constant 0 : i32
    return %c0_i32, %c0_i32_0 : i32, i32
  }
  func.func @transform_6(%arg0: i32) -> (i32, i32) {
    %c0_i32 = arith.constant 0 : i32
    %c0_i32_0 = arith.constant 0 : i32
    %c0_i32_1 = arith.constant 0 : i32
    return %c0_i32, %c0_i32_0 : i32, i32
  }
  func.func @transform_7(%arg0: i32) -> (i32, i32) {
    %c0_i32 = arith.constant 0 : i32
    %c0_i32_0 = arith.constant 0 : i32
    %c0_i32_1 = arith.constant 0 : i32
    return %c0_i32, %c0_i32_0 : i32, i32
  }
  func.func @transform_8(%arg0: i32) -> (i32, i32) {
    %c0_i32 = arith.constant 0 : i32
    %c0_i32_0 = arith.constant 0 : i32
    %c0_i32_1 = arith.constant 0 : i32
    return %c0_i32, %c0_i32_0 : i32, i32
  }
  func.func @transform_9(%arg0: i32) -> (i32, i32) {
    %c0_i32 = arith.constant 0 : i32
    %c0_i32_0 = arith.constant 0 : i32
    %c0_i32_1 = arith.constant 0 : i32
    return %c0_i32, %c0_i32_0 : i32, i32
  }
  func.func @transform_10(%arg0: i32) -> (i32, i32) {
    %c0_i32 = arith.constant 0 : i32
    %c0_i32_0 = arith.constant 0 : i32
    %c0_i32_1 = arith.constant 0 : i32
    return %c0_i32, %c0_i32_0 : i32, i32
  }
  func.func @transform_11(%arg0: i32) -> (i32, i32) {
    %c0_i32 = arith.constant 0 : i32
    %c0_i32_0 = arith.constant 0 : i32
    %c0_i32_1 = arith.constant 0 : i32
    return %c0_i32, %c0_i32_0 : i32, i32
  }
  func.func @transform_12(%arg0: i32) -> (i32, i32) {
    %c0_i32 = arith.constant 0 : i32
    %c0_i32_0 = arith.constant 0 : i32
    %c0_i32_1 = arith.constant 0 : i32
    return %c0_i32, %c0_i32_0 : i32, i32
  }
  func.func @transform_13(%arg0: i32) -> (i32, i32) {
    %c0_i32 = arith.constant 0 : i32
    %c0_i32_0 = arith.constant 0 : i32
    %c0_i32_1 = arith.constant 0 : i32
    return %c0_i32, %c0_i32_0 : i32, i32
  }
  func.func @transform_14(%arg0: i32) -> (i32, i32) {
    %c0_i32 = arith.constant 0 : i32
    %c0_i32_0 = arith.constant 0 : i32
    %c0_i32_1 = arith.constant 0 : i32
    return %c0_i32, %c0_i32_0 : i32, i32
  }
  func.func @transform_15(%arg0: i32) -> (i32, i32) {
    %c0_i32 = arith.constant 0 : i32
    %c0_i32_0 = arith.constant 0 : i32
    %c0_i32_1 = arith.constant 0 : i32
    return %c0_i32, %c0_i32_0 : i32, i32
  }
  func.func @transform_16(%arg0: i32) -> (i32, i32) {
    %c0_i32 = arith.constant 0 : i32
    %c0_i32_0 = arith.constant 0 : i32
    %c0_i32_1 = arith.constant 0 : i32
    return %c0_i32, %c0_i32_0 : i32, i32
  }
  func.func @transform_17(%arg0: i32) -> (i32, i32) {
    %c0_i32 = arith.constant 0 : i32
    %c0_i32_0 = arith.constant 0 : i32
    %c0_i32_1 = arith.constant 0 : i32
    return %c0_i32, %c0_i32_0 : i32, i32
  }
  func.func @transform_18(%arg0: i32) -> (i32, i32) {
    %c0_i32 = arith.constant 0 : i32
    %c0_i32_0 = arith.constant 0 : i32
    %c0_i32_1 = arith.constant 0 : i32
    return %c0_i32, %c0_i32_0 : i32, i32
  }
  func.func @transform_19(%arg0: i32) -> (i32, i32) {
    %c0_i32 = arith.constant 0 : i32
    %c0_i32_0 = arith.constant 0 : i32
    %c0_i32_1 = arith.constant 0 : i32
    return %c0_i32, %c0_i32_0 : i32, i32
  }
  func.func @transform_20(%arg0: i32) -> (i32, i32) {
    %c0_i32 = arith.constant 0 : i32
    %c0_i32_0 = arith.constant 0 : i32
    %c0_i32_1 = arith.constant 0 : i32
    return %c0_i32, %c0_i32_0 : i32, i32
  }
  func.func @transform_21(%arg0: i32) -> (i32, i32) {
    %c0_i32 = arith.constant 0 : i32
    %c0_i32_0 = arith.constant 0 : i32
    %c0_i32_1 = arith.constant 0 : i32
    return %c0_i32, %c0_i32_0 : i32, i32
  }
  func.func @transform_22(%arg0: i32) -> (i32, i32) {
    %c0_i32 = arith.constant 0 : i32
    %c0_i32_0 = arith.constant 0 : i32
    return %arg0, %c0_i32 : i32, i32
  }
  func.func @transform_23(%arg0: i32) -> (i32, i32) {
    %c0_i32 = arith.constant 0 : i32
    %c0_i32_0 = arith.constant 0 : i32
    return %arg0, %c0_i32 : i32, i32
  }
}

module attributes {stable_mosaic.version = 11 : i64} {
  func.func @head_kernel(%arg0: i32, %arg1: memref<16x100xf32, #tpu.memory_space<vmem>>, %arg2: memref<16x48xf32, #tpu.memory_space<vmem>>, %arg3: memref<1x100xf32, #tpu.memory_space<vmem>>, %arg4: memref<1x100xf32, #tpu.memory_space<vmem>>, %arg5: memref<48x48xbf16, #tpu.memory_space<vmem>>, %arg6: memref<100x100xbf16, #tpu.memory_space<vmem>>, %arg7: memref<16x100xbf16, #tpu.memory_space<vmem>>, %arg8: memref<1x100xf32, #tpu.memory_space<vmem>>, %arg9: memref<100x200xbf16, #tpu.memory_space<vmem>>, %arg10: memref<1x200xf32, #tpu.memory_space<vmem>>, %arg11: memref<1x200xf32, #tpu.memory_space<vmem>>, %arg12: memref<1x1xf32, #tpu.memory_space<vmem>>, %arg13: memref<16x1xf32, #tpu.memory_space<vmem>>) attributes {dimension_semantics = [#tpu.dimension_semantics<parallel>], iteration_bounds = array<i64: 1>, scalar_prefetch = 0 : i64, scratch_operands = 0 : i64, tpu.core_type = #tpu.core_type<tc>, window_params = [{transform_indices = @transform_0, window_bounds = array<i64: 16, 100>}, {transform_indices = @transform_1, window_bounds = array<i64: 16, 48>}, {pipeline_mode = #tpu.pipeline_mode<synchronous>, transform_indices = @transform_2, window_bounds = array<i64: 1, 100>}, {pipeline_mode = #tpu.pipeline_mode<synchronous>, transform_indices = @transform_3, window_bounds = array<i64: 1, 100>}, {pipeline_mode = #tpu.pipeline_mode<synchronous>, transform_indices = @transform_4, window_bounds = array<i64: 48, 48>}, {pipeline_mode = #tpu.pipeline_mode<synchronous>, transform_indices = @transform_5, window_bounds = array<i64: 100, 100>}, {pipeline_mode = #tpu.pipeline_mode<synchronous>, transform_indices = @transform_6, window_bounds = array<i64: 16, 100>}, {pipeline_mode = #tpu.pipeline_mode<synchronous>, transform_indices = @transform_7, window_bounds = array<i64: 1, 100>}, {pipeline_mode = #tpu.pipeline_mode<synchronous>, transform_indices = @transform_8, window_bounds = array<i64: 100, 200>}, {pipeline_mode = #tpu.pipeline_mode<synchronous>, transform_indices = @transform_9, window_bounds = array<i64: 1, 200>}, {pipeline_mode = #tpu.pipeline_mode<synchronous>, transform_indices = @transform_10, window_bounds = array<i64: 1, 200>}, {pipeline_mode = #tpu.pipeline_mode<synchronous>, transform_indices = @transform_11, window_bounds = array<i64: 1, 1>}, {transform_indices = @transform_12, window_bounds = array<i64: 16, 1>}]} {
    %c0 = arith.constant 0 : index
    %c0_0 = arith.constant 0 : index
    %0 = vector.load %arg1[%c0, %c0_0] : memref<16x100xf32, #tpu.memory_space<vmem>>, vector<16x100xf32>
    %cst = arith.constant dense<0.000000e+00> : vector<16xf32>
    %1 = vector.multi_reduction <add>, %0, %cst [1] : vector<16x100xf32> to vector<16xf32>
    %2 = vector.shape_cast %1 : vector<16xf32> to vector<16x1xf32>
    %cst_1 = arith.constant 1.000000e+02 : f32
    %3 = vector.broadcast %cst_1 : f32 to vector<16x1xf32>
    %4 = arith.divf %2, %3 : vector<16x1xf32>
    %5 = vector.broadcast %4 : vector<16x1xf32> to vector<16x100xf32>
    %6 = arith.subf %0, %5 : vector<16x100xf32>
    %7 = arith.mulf %6, %6 : vector<16x100xf32>
    %cst_2 = arith.constant dense<0.000000e+00> : vector<16xf32>
    %8 = vector.multi_reduction <add>, %7, %cst_2 [1] : vector<16x100xf32> to vector<16xf32>
    %9 = vector.shape_cast %8 : vector<16xf32> to vector<16x1xf32>
    %cst_3 = arith.constant 1.000000e+02 : f32
    %10 = vector.broadcast %cst_3 : f32 to vector<16x1xf32>
    %11 = arith.divf %9, %10 : vector<16x1xf32>
    %12 = vector.broadcast %4 : vector<16x1xf32> to vector<16x100xf32>
    %13 = arith.subf %0, %12 : vector<16x100xf32>
    %cst_4 = arith.constant 9.99999974E-6 : f32
    %14 = vector.broadcast %cst_4 : f32 to vector<16x1xf32>
    %15 = arith.addf %11, %14 : vector<16x1xf32>
    %16 = math.rsqrt %15 : vector<16x1xf32>
    %17 = vector.broadcast %16 : vector<16x1xf32> to vector<16x100xf32>
    %18 = arith.mulf %13, %17 : vector<16x100xf32>
    %c0_5 = arith.constant 0 : index
    %c0_6 = arith.constant 0 : index
    %19 = vector.load %arg3[%c0_5, %c0_6] : memref<1x100xf32, #tpu.memory_space<vmem>>, vector<1x100xf32>
    %20 = vector.broadcast %19 : vector<1x100xf32> to vector<16x100xf32>
    %21 = arith.mulf %18, %20 : vector<16x100xf32>
    %c0_7 = arith.constant 0 : index
    %c0_8 = arith.constant 0 : index
    %22 = vector.load %arg4[%c0_7, %c0_8] : memref<1x100xf32, #tpu.memory_space<vmem>>, vector<1x100xf32>
    %23 = vector.broadcast %22 : vector<1x100xf32> to vector<16x100xf32>
    %24 = arith.addf %21, %23 : vector<16x100xf32>
    %c0_9 = arith.constant 0 : index
    %c0_10 = arith.constant 0 : index
    %25 = vector.load %arg2[%c0_9, %c0_10] : memref<16x48xf32, #tpu.memory_space<vmem>>, vector<16x48xf32>
    %26 = arith.mulf %25, %25 : vector<16x48xf32>
    %27 = vector.extract_strided_slice %26 {offsets = [0, 0], sizes = [16, 16], strides = [1, 1]} : vector<16x48xf32> to vector<16x16xf32>
    %28 = vector.extract_strided_slice %26 {offsets = [0, 16], sizes = [16, 16], strides = [1, 1]} : vector<16x48xf32> to vector<16x16xf32>
    %29 = arith.addf %27, %28 : vector<16x16xf32>
    %30 = vector.extract_strided_slice %26 {offsets = [0, 32], sizes = [16, 16], strides = [1, 1]} : vector<16x48xf32> to vector<16x16xf32>
    %31 = arith.addf %29, %30 : vector<16x16xf32>
    %cst_11 = arith.constant 9.99999993E-9 : f32
    %32 = vector.broadcast %cst_11 : f32 to vector<16x16xf32>
    %33 = arith.maximumf %31, %32 : vector<16x16xf32>
    %cst_12 = arith.constant dense<0.000000e+00> : vector<16xf32>
    %34 = vector.multi_reduction <add>, %33, %cst_12 [1] : vector<16x16xf32> to vector<16xf32>
    %35 = vector.shape_cast %34 : vector<16xf32> to vector<16x1xf32>
    %cst_13 = arith.constant 1.600000e+01 : f32
    %36 = vector.broadcast %cst_13 : f32 to vector<16x1xf32>
    %37 = arith.divf %35, %36 : vector<16x1xf32>
    %38 = math.rsqrt %37 : vector<16x1xf32>
    %39 = vector.broadcast %38 : vector<16x1xf32> to vector<16x48xf32>
    %40 = arith.mulf %25, %39 : vector<16x48xf32>
    %41 = arith.truncf %40 : vector<16x48xf32> to vector<16x48xbf16>
    %c0_14 = arith.constant 0 : index
    %c0_15 = arith.constant 0 : index
    %42 = vector.load %arg5[%c0_14, %c0_15] : memref<48x48xbf16, #tpu.memory_space<vmem>>, vector<48x48xbf16>
    %cst_16 = arith.constant dense<0.000000e+00> : vector<16x48xf32>
    %43 = tpu.matmul %41, %42, %cst_16 {dimension_numbers = #tpu.dot_dimension_numbers<[1], [0], [0], [1], [0, 0, 1, 1], [], []>} : vector<16x48xbf16>, vector<48x48xbf16>, vector<16x48xf32> -> vector<16x48xf32>
    %44 = arith.mulf %43, %43 : vector<16x48xf32>
    %45 = vector.extract_strided_slice %44 {offsets = [0, 0], sizes = [16, 16], strides = [1, 1]} : vector<16x48xf32> to vector<16x16xf32>
    %46 = vector.extract_strided_slice %44 {offsets = [0, 16], sizes = [16, 16], strides = [1, 1]} : vector<16x48xf32> to vector<16x16xf32>
    %47 = arith.addf %45, %46 : vector<16x16xf32>
    %48 = vector.extract_strided_slice %44 {offsets = [0, 32], sizes = [16, 16], strides = [1, 1]} : vector<16x48xf32> to vector<16x16xf32>
    %49 = arith.addf %47, %48 : vector<16x16xf32>
    %cst_17 = arith.constant 9.99999993E-9 : f32
    %50 = vector.broadcast %cst_17 : f32 to vector<16x16xf32>
    %51 = arith.maximumf %49, %50 : vector<16x16xf32>
    %52 = math.sqrt %51 : vector<16x16xf32>
    %53 = arith.truncf %24 : vector<16x100xf32> to vector<16x100xbf16>
    %c0_18 = arith.constant 0 : index
    %c0_19 = arith.constant 0 : index
    %54 = vector.load %arg6[%c0_18, %c0_19] : memref<100x100xbf16, #tpu.memory_space<vmem>>, vector<100x100xbf16>
    %cst_20 = arith.constant dense<0.000000e+00> : vector<16x100xf32>
    %55 = tpu.matmul %53, %54, %cst_20 {dimension_numbers = #tpu.dot_dimension_numbers<[1], [0], [0], [1], [0, 0, 1, 1], [], []>} : vector<16x100xbf16>, vector<100x100xbf16>, vector<16x100xf32> -> vector<16x100xf32>
    %56 = arith.truncf %52 : vector<16x16xf32> to vector<16x16xbf16>
    %c0_21 = arith.constant 0 : index
    %c0_22 = arith.constant 0 : index
    %57 = vector.load %arg7[%c0_21, %c0_22] : memref<16x100xbf16, #tpu.memory_space<vmem>>, vector<16x100xbf16>
    %cst_23 = arith.constant dense<0.000000e+00> : vector<16x100xf32>
    %58 = tpu.matmul %56, %57, %cst_23 {dimension_numbers = #tpu.dot_dimension_numbers<[1], [0], [0], [1], [0, 0, 1, 1], [], []>} : vector<16x16xbf16>, vector<16x100xbf16>, vector<16x100xf32> -> vector<16x100xf32>
    %59 = arith.addf %55, %58 : vector<16x100xf32>
    %c0_24 = arith.constant 0 : index
    %c0_25 = arith.constant 0 : index
    %60 = vector.load %arg8[%c0_24, %c0_25] : memref<1x100xf32, #tpu.memory_space<vmem>>, vector<1x100xf32>
    %61 = vector.broadcast %60 : vector<1x100xf32> to vector<16x100xf32>
    %62 = arith.addf %59, %61 : vector<16x100xf32>
    %cst_26 = arith.constant 0.000000e+00 : f32
    %63 = vector.broadcast %cst_26 : f32 to vector<16x100xf32>
    %64 = arith.maximumf %62, %63 : vector<16x100xf32>
    %65 = arith.truncf %64 : vector<16x100xf32> to vector<16x100xbf16>
    %c0_27 = arith.constant 0 : index
    %c0_28 = arith.constant 0 : index
    %66 = vector.load %arg9[%c0_27, %c0_28] : memref<100x200xbf16, #tpu.memory_space<vmem>>, vector<100x200xbf16>
    %cst_29 = arith.constant dense<0.000000e+00> : vector<16x200xf32>
    %67 = tpu.matmul %65, %66, %cst_29 {dimension_numbers = #tpu.dot_dimension_numbers<[1], [0], [0], [1], [0, 0, 1, 1], [], []>} : vector<16x100xbf16>, vector<100x200xbf16>, vector<16x200xf32> -> vector<16x200xf32>
    %c0_30 = arith.constant 0 : index
    %c0_31 = arith.constant 0 : index
    %68 = vector.load %arg10[%c0_30, %c0_31] : memref<1x200xf32, #tpu.memory_space<vmem>>, vector<1x200xf32>
    %69 = vector.broadcast %68 : vector<1x200xf32> to vector<16x200xf32>
    %70 = arith.addf %67, %69 : vector<16x200xf32>
    %cst_32 = arith.constant 0.000000e+00 : f32
    %71 = vector.broadcast %cst_32 : f32 to vector<16x200xf32>
    %72 = arith.maximumf %70, %71 : vector<16x200xf32>
    %c0_33 = arith.constant 0 : index
    %c0_34 = arith.constant 0 : index
    %73 = vector.load %arg11[%c0_33, %c0_34] : memref<1x200xf32, #tpu.memory_space<vmem>>, vector<1x200xf32>
    %74 = vector.broadcast %73 : vector<1x200xf32> to vector<16x200xf32>
    %75 = arith.mulf %72, %74 : vector<16x200xf32>
    %cst_35 = arith.constant dense<0.000000e+00> : vector<16xf32>
    %76 = vector.multi_reduction <add>, %75, %cst_35 [1] : vector<16x200xf32> to vector<16xf32>
    %77 = vector.shape_cast %76 : vector<16xf32> to vector<16x1xf32>
    %c0_36 = arith.constant 0 : index
    %c0_37 = arith.constant 0 : index
    %78 = vector.load %arg12[%c0_36, %c0_37] : memref<1x1xf32, #tpu.memory_space<vmem>>, vector<1x1xf32>
    %79 = vector.broadcast %78 : vector<1x1xf32> to vector<16x1xf32>
    %80 = arith.addf %77, %79 : vector<16x1xf32>
    %c0_38 = arith.constant 0 : index
    %c0_39 = arith.constant 0 : index
    %81 = vector.load %arg13[%c0_38, %c0_39] : memref<16x1xf32, #tpu.memory_space<vmem>>, vector<16x1xf32>
    tpu.vector_store %arg13[%c0_38, %c0_39], %80 {strides = array<i32>} : memref<16x1xf32, #tpu.memory_space<vmem>>, vector<16x1xf32>,
    return
  }
  func.func @transform_0(%arg0: i32) -> (i32, i32) {
    %c0_i32 = arith.constant 0 : i32
    %c0_i32_0 = arith.constant 0 : i32
    return %arg0, %c0_i32 : i32, i32
  }
  func.func @transform_1(%arg0: i32) -> (i32, i32) {
    %c0_i32 = arith.constant 0 : i32
    %c0_i32_0 = arith.constant 0 : i32
    return %arg0, %c0_i32 : i32, i32
  }
  func.func @transform_2(%arg0: i32) -> (i32, i32) {
    %c0_i32 = arith.constant 0 : i32
    %c0_i32_0 = arith.constant 0 : i32
    %c0_i32_1 = arith.constant 0 : i32
    return %c0_i32, %c0_i32_0 : i32, i32
  }
  func.func @transform_3(%arg0: i32) -> (i32, i32) {
    %c0_i32 = arith.constant 0 : i32
    %c0_i32_0 = arith.constant 0 : i32
    %c0_i32_1 = arith.constant 0 : i32
    return %c0_i32, %c0_i32_0 : i32, i32
  }
  func.func @transform_4(%arg0: i32) -> (i32, i32) {
    %c0_i32 = arith.constant 0 : i32
    %c0_i32_0 = arith.constant 0 : i32
    %c0_i32_1 = arith.constant 0 : i32
    return %c0_i32, %c0_i32_0 : i32, i32
  }
  func.func @transform_5(%arg0: i32) -> (i32, i32) {
    %c0_i32 = arith.constant 0 : i32
    %c0_i32_0 = arith.constant 0 : i32
    %c0_i32_1 = arith.constant 0 : i32
    return %c0_i32, %c0_i32_0 : i32, i32
  }
  func.func @transform_6(%arg0: i32) -> (i32, i32) {
    %c0_i32 = arith.constant 0 : i32
    %c0_i32_0 = arith.constant 0 : i32
    %c0_i32_1 = arith.constant 0 : i32
    return %c0_i32, %c0_i32_0 : i32, i32
  }
  func.func @transform_7(%arg0: i32) -> (i32, i32) {
    %c0_i32 = arith.constant 0 : i32
    %c0_i32_0 = arith.constant 0 : i32
    %c0_i32_1 = arith.constant 0 : i32
    return %c0_i32, %c0_i32_0 : i32, i32
  }
  func.func @transform_8(%arg0: i32) -> (i32, i32) {
    %c0_i32 = arith.constant 0 : i32
    %c0_i32_0 = arith.constant 0 : i32
    %c0_i32_1 = arith.constant 0 : i32
    return %c0_i32, %c0_i32_0 : i32, i32
  }
  func.func @transform_9(%arg0: i32) -> (i32, i32) {
    %c0_i32 = arith.constant 0 : i32
    %c0_i32_0 = arith.constant 0 : i32
    %c0_i32_1 = arith.constant 0 : i32
    return %c0_i32, %c0_i32_0 : i32, i32
  }
  func.func @transform_10(%arg0: i32) -> (i32, i32) {
    %c0_i32 = arith.constant 0 : i32
    %c0_i32_0 = arith.constant 0 : i32
    %c0_i32_1 = arith.constant 0 : i32
    return %c0_i32, %c0_i32_0 : i32, i32
  }
  func.func @transform_11(%arg0: i32) -> (i32, i32) {
    %c0_i32 = arith.constant 0 : i32
    %c0_i32_0 = arith.constant 0 : i32
    %c0_i32_1 = arith.constant 0 : i32
    return %c0_i32, %c0_i32_0 : i32, i32
  }
  func.func @transform_12(%arg0: i32) -> (i32, i32) {
    %c0_i32 = arith.constant 0 : i32
    %c0_i32_0 = arith.constant 0 : i32
    return %arg0, %c0_i32 : i32, i32
  }
}

</mosaic_0001>

<llo_original>
// kernel: base_model_forward.13
$region0: #{base_model_forward.13}
  #allocation0 [shape = 'u32[]', space=smem, size = 0x4, offset = 0x4, fixed_abs, tag = 'smem constant byte address 0x4 - core index']
  #allocation1 [shape = 'u32[144,128]{1,0:T(1,128)}', space=vmem, size = 0x12000, scoped, tag = 'internal scratch']
  %s0 = inlined_call_operand.vmem [shape: f32[16,9], index: 0, kind: input, shape index: {}]
  %s1 = inlined_call_operand.vmem [shape: f32[1,9], index: 1, kind: input, shape index: {}]
  %s2 = inlined_call_operand.vmem [shape: f32[1,9], index: 2, kind: input, shape index: {}]
  %s3 = inlined_call_operand.vmem [shape: bf16[9,100], index: 3, kind: input, shape index: {}]
  %s4 = inlined_call_operand.vmem [shape: f32[1,100], index: 4, kind: input, shape index: {}]
  %s5 = inlined_call_operand.vmem [shape: f32[16,100], index: 5, kind: output, shape index: {}]
  %s6 = sld [smem:[#allocation0]]
  $region30: #{base_model_forward.13} parent=0
    _
  %s8 = ssub.s32 1, %s6
  %s9 = scalar_select 0, %s8, %s6
  // Predicated region
  $region2: #{base_model_forward.13} parent=0 // pred_check
    _
  $region3: #{base_model_forward.13} parent=0 // pred_check_branch
    %11 = sbr.rel (0) target = $region5
  $region4: #{base_model_forward.13} parent=0 // pred_region
    _
  $region5: #{base_model_forward.13} parent=0 // pred_fallthru
    _
  // Predicated region
  $region6: #{base_model_forward.13} parent=0 // pred_check
    _
  $region7: #{base_model_forward.13} parent=0 // pred_check_branch
    %13 = sbr.rel (0) target = $region9
  $region8: #{base_model_forward.13} parent=0 // pred_region
    _
  $region9: #{base_model_forward.13} parent=0 // pred_fallthru
    _
  // Predicated region
  $region10: #{base_model_forward.13} parent=0 // pred_check
    _
  $region11: #{base_model_forward.13} parent=0 // pred_check_branch
    %15 = sbr.rel (0) target = $region13
  $region12: #{base_model_forward.13} parent=0 // pred_region
    _
  $region13: #{base_model_forward.13} parent=0 // pred_fallthru
    _
  // Predicated region
  $region14: #{base_model_forward.13} parent=0 // pred_check
    _
  $region15: #{base_model_forward.13} parent=0 // pred_check_branch
    %17 = sbr.rel (0) target = $region17
  $region16: #{base_model_forward.13} parent=0 // pred_region
    _
  $region17: #{base_model_forward.13} parent=0 // pred_fallthru
    _
  // Predicated region
  $region18: #{base_model_forward.13} parent=0 // pred_check
    _
  $region19: #{base_model_forward.13} parent=0 // pred_check_branch
    %19 = sbr.rel (0) target = $region21
  $region20: #{base_model_forward.13} parent=0 // pred_region
    _
  $region21: #{base_model_forward.13} parent=0 // pred_fallthru
    _
  %v21 = vld [vmem:[%s0] sm:$0xff]
  %v22 = vld [vmem:[%s0 + $0x8] sm:$0xff]
  %vm23 = vcmask 72704
  %v24 = vsel %vm23, %v21, 0.0
  %25 = vadd.xlane.f32.xlu0 %v24
  %v26 = vpop.xlane.xlu0 %25
  %v27 = vsel %vm23, %v22, 0.0
  %28 = vadd.xlane.f32.xlu0 %v27
  %v29 = vpop.xlane.xlu0 %28
  %v30 = vrcp.pop 9.0
  %v31 = vmul.f32 %v26, %v30
  %v32 = vmul.f32 %v29, %v30
  %v33 = vsub.f32 %v21, %v31
  %v34 = vsub.f32 %v22, %v32
  %v35 = vmul.f32 %v33, %v33
  %v36 = vmul.f32 %v34, %v34
  %v37 = vsel %vm23, %v35, 0.0
  %38 = vadd.xlane.f32.xlu0 %v37
  %v39 = vpop.xlane.xlu0 %38
  %v40 = vsel %vm23, %v36, 0.0
  %41 = vadd.xlane.f32.xlu0 %v40
  %v42 = vpop.xlane.xlu0 %41
  %v43 = vmul.f32 %v39, %v30
  %v44 = vmul.f32 %v42, %v30
  %v45 = vadd.f32 %v43, 1e-05
  %v46 = vadd.f32 %v44, 1e-05
  %v47 = vrsqrt.pop %v45
  %v48 = vrsqrt.pop %v46
  %v49 = vmul.f32 %v33, %v47
  %v50 = vmul.f32 %v34, %v48
  %v51 = vld [vmem:[%s1] sm:$0x1]
  %v53 = vlaneseq
  %v54 = vshrl.u32 %v53, 7
  %v55 = vsub.s32 0, %v54
  %v56 = vrot.slane %v51, %v55
  %v58 = vmul.f32 %v49, %v56
  %v59 = vmul.f32 %v50, %v56
  %v60 = vld [vmem:[%s2] sm:$0x1]
  %v62 = vlaneseq
  %v63 = vshrl.u32 %v62, 7
  %v64 = vsub.s32 0, %v63
  %v65 = vrot.slane %v60, %v64
  %v67 = vadd.f32 %v58, %v65
  %v68 = vadd.f32 %v59, %v65
  %v69 = vpack.c.bf16 %v68, %v67
  %v70 = vld [vmem:[%s3] sm:$0xf]
  %v71 = vld [vmem:[%s3 + $0x4] sm:$0x1]
  %v72 = vld [vmem:[%s4] sm:$0x1]
  %v74 = vlaneseq
  %v75 = vshrl.u32 %v74, 7
  %v76 = vsub.s32 0, %v75
  %v77 = vrot.slane %v72, %v76
  %v81 = vunpack.c.l.b16 %v70
  %v82 = vunpack.c.l.b16 %v71
  %v83 = vpack.c.b16 %v82, %v81
  %v85 = vsel %vm23, %v69, 0
  %vm87 = vcmask 1043456
  %vm88 = vcmask 1044480
  %v89 = vsel %vm87, 4294967295, 65535
  %v90 = vsel %vm88, %v89, 0
  %v92 = vand.u32 %v83, %v90
  %94 = vmatprep.subr.bf16.mxu0 0
  %95 = vmatpush1.bf16.msra.mxu0 0
  %96 = vmatprep.subr.bf16.mxu0 0
  %97 = vmatpush1.bf16.msra.mxu0 0
  %98 = vmatprep.subr.bf16.mxu0 0
  %99 = vmatpush1.bf16.msra.mxu0 0
  %100 = vmatprep.subr.bf16.mxu0 0
  %101 = vmatpush1.bf16.msra.mxu0 0
  %102 = vmatprep.subr.bf16.mxu0 0
  %103 = vmatpush1.bf16.msra.mxu0 0
  %104 = vmatprep.subr.bf16.mxu0 0
  %105 = vmatpush1.bf16.msra.mxu0 0
  %106 = vmatprep.subr.bf16.mxu0 0
  %107 = vmatpush1.bf16.msra.mxu0 0
  %108 = vmatprep.subr.bf16.mxu0 0
  %109 = vmatpush1.bf16.msra.mxu0 %v92
  %110 = vmatprep.subr.bf16.mxu0 0
  %111 = vmatpush2.bf16.msra.mxu0 0
  %112 = vmatprep.subr.bf16.mxu0 0
  %113 = vmatpush2.bf16.msra.mxu0 0
  %114 = vmatprep.subr.bf16.mxu0 0
  %115 = vmatpush2.bf16.msra.mxu0 0
  %116 = vmatprep.subr.bf16.mxu0 0
  %117 = vmatpush2.bf16.msra.mxu0 0
  %118 = vmatprep.subr.bf16.mxu0 0
  %119 = vmatpush2.bf16.msra.mxu0 0
  %120 = vmatprep.subr.bf16.mxu0 0
  %121 = vmatpush2.bf16.msra.mxu0 0
  %122 = vmatprep.subr.bf16.mxu0 0
  %123 = vmatpush2.bf16.msra.mxu0 0
  %124 = vmatprep.subr.bf16.mxu0 0
  %125 = vmatpush2.bf16.msra.mxu0 0
  %126 = vmatprep.mubr.bf16.mxu0 0
  %127 = vmatmul.mubr.bf16.gmra.mxu0 %v85
  %v128 = vpop.f32.mrf.mxu0
  %v129 = vadd.f32 %v77, %v128
  %v130 = vpop.f32.mrf.mxu0
  %v131 = vpop.f32.mrf.mxu0
  %v132 = vadd.f32 %v77, %v131
  %v133 = vpop.f32.mrf.mxu0
  %134 = vdwg.mxu0
  %vm135 = vcmask 818176
  %136 = vst.msk [vmem:[%s5] sm:$0xff] %vm135, %v129
  %137 = vst.msk [vmem:[%s5 + $0x8] sm:$0xff] %vm135, %v132
  // Predicated region
  $region22: #{base_model_forward.13} parent=0 // pred_check
    _
  $region23: #{base_model_forward.13} parent=0 // pred_check_branch
    %139 = sbr.rel (0) target = $region25
  $region24: #{base_model_forward.13} parent=0 // pred_region
    _
  $region25: #{base_model_forward.13} parent=0 // pred_fallthru
    _
  // Predicated region
  $region26: #{base_model_forward.13} parent=0 // pred_check
    _
  $region27: #{base_model_forward.13} parent=0 // pred_check_branch
    %141 = sbr.rel (0) target = $region29
  $region28: #{base_model_forward.13} parent=0 // pred_region
    _
  $region29: #{base_model_forward.13} parent=0 // pred_fallthru
    _

// kernel: base_model_forward.14
$region0: #{base_model_forward.14}
  #allocation0 [shape = 'u32[]', space=smem, size = 0x4, offset = 0x4, fixed_abs, tag = 'smem constant byte address 0x4 - core index']
  #allocation1 [shape = 'u32[144,128]{1,0:T(1,128)}', space=vmem, size = 0x12000, scoped, tag = 'internal scratch']
  #allocation2 [shape = 'f32[1,1]{1,0:T(1,128)S(1)}', space=vmem, size = 0x200, scoped, tag = 'scoped memory for base_model_forward.14']
  #allocation3 [shape = 'f32[1,1]{1,0:T(1,128)S(1)}', space=vmem, size = 0x200, scoped, tag = 'scoped memory for base_model_forward.14']
  #allocation4 [shape = 'f32[1,1]{1,0:T(1,128)S(1)}', space=vmem, size = 0x200, scoped, tag = 'scoped memory for base_model_forward.14']
  %s0 = inlined_call_operand.vmem [shape: f32[64,16], index: 0, kind: input, shape index: {}]
  %s1 = inlined_call_operand.vmem [shape: f32[64,3], index: 1, kind: input, shape index: {}]
  %s2 = inlined_call_operand.vmem [shape: f32[1,16], index: 2, kind: input, shape index: {}]
  %s3 = inlined_call_operand.vmem [shape: f32[1,16], index: 3, kind: input, shape index: {}]
  %s4 = inlined_call_operand.vmem [shape: bf16[16,32], index: 4, kind: input, shape index: {}]
  %s5 = inlined_call_operand.vmem [shape: f32[1,32], index: 5, kind: input, shape index: {}]
  %s6 = inlined_call_operand.vmem [shape: f32[1,32], index: 6, kind: input, shape index: {}]
  %s7 = inlined_call_operand.<no memory space> [shape: f32[1,1], index: 7, kind: input, shape index: {}]
  %s8 = inlined_call_operand.<no memory space> [shape: f32[1,1], index: 8, kind: input, shape index: {}]
  %s9 = inlined_call_operand.vmem [shape: f32[1,32], index: 9, kind: input, shape index: {}]
  %s10 = inlined_call_operand.<no memory space> [shape: f32[1,1], index: 10, kind: input, shape index: {}]
  %s11 = inlined_call_operand.vmem [shape: f32[64,32], index: 11, kind: output, shape index: {0}]
  %s12 = inlined_call_operand.vmem [shape: f32[64,3], index: 12, kind: output, shape index: {1}]
  %13 = xla_tuple %s11, %s12
  %s14 = sld [smem:[#allocation0]]
  $region62: #{base_model_forward.14} parent=0
    _
  %s16 = ssub.s32 1, %s14
  %s17 = scalar_select 0, %s16, %s14
  %v18 = vstv %s7
  %19 = vst [vmem:[#allocation2] sm:$0x1] %v18
  %v20 = vstv %s8
  %21 = vst [vmem:[#allocation3] sm:$0x1] %v20
  %v22 = vstv %s10
  %23 = vst [vmem:[#allocation4] sm:$0x1] %v22
  // Predicated region
  $region2: #{base_model_forward.14} parent=0 // pred_check
    _
  $region3: #{base_model_forward.14} parent=0 // pred_check_branch
    %25 = sbr.rel (0) target = $region5
  $region4: #{base_model_forward.14} parent=0 // pred_region
    _
  $region5: #{base_model_forward.14} parent=0 // pred_fallthru
    _
  // Predicated region
  $region6: #{base_model_forward.14} parent=0 // pred_check
    _
  $region7: #{base_model_forward.14} parent=0 // pred_check_branch
    %27 = sbr.rel (0) target = $region9
  $region8: #{base_model_forward.14} parent=0 // pred_region
    _
  $region9: #{base_model_forward.14} parent=0 // pred_fallthru
    _
  // Predicated region
  $region10: #{base_model_forward.14} parent=0 // pred_check
    _
  $region11: #{base_model_forward.14} parent=0 // pred_check_branch
    %29 = sbr.rel (0) target = $region13
  $region12: #{base_model_forward.14} parent=0 // pred_region
    _
  $region13: #{base_model_forward.14} parent=0 // pred_fallthru
    _
  // Predicated region
  $region14: #{base_model_forward.14} parent=0 // pred_check
    _
  $region15: #{base_model_forward.14} parent=0 // pred_check_branch
    %31 = sbr.rel (0) target = $region17
  $region16: #{base_model_forward.14} parent=0 // pred_region
    _
  $region17: #{base_model_forward.14} parent=0 // pred_fallthru
    _
  // Predicated region
  $region18: #{base_model_forward.14} parent=0 // pred_check
    _
  $region19: #{base_model_forward.14} parent=0 // pred_check_branch
    %33 = sbr.rel (0) target = $region21
  $region20: #{base_model_forward.14} parent=0 // pred_region
    _
  $region21: #{base_model_forward.14} parent=0 // pred_fallthru
    _
  // Predicated region
  $region22: #{base_model_forward.14} parent=0 // pred_check
    _
  $region23: #{base_model_forward.14} parent=0 // pred_check_branch
    %35 = sbr.rel (0) target = $region25
  $region24: #{base_model_forward.14} parent=0 // pred_region
    _
  $region25: #{base_model_forward.14} parent=0 // pred_fallthru
    _
  // Predicated region
  $region26: #{base_model_forward.14} parent=0 // pred_check
    _
  $region27: #{base_model_forward.14} parent=0 // pred_check_branch
    %37 = sbr.rel (0) target = $region29
  $region28: #{base_model_forward.14} parent=0 // pred_region
    _
  $region29: #{base_model_forward.14} parent=0 // pred_fallthru
    _
  // Predicated region
  $region30: #{base_model_forward.14} parent=0 // pred_check
    _
  $region31: #{base_model_forward.14} parent=0 // pred_check_branch
    %39 = sbr.rel (0) target = $region33
  $region32: #{base_model_forward.14} parent=0 // pred_region
    _
  $region33: #{base_model_forward.14} parent=0 // pred_fallthru
    _
  // Predicated region
  $region34: #{base_model_forward.14} parent=0 // pred_check
    _
  $region35: #{base_model_forward.14} parent=0 // pred_check_branch
    %41 = sbr.rel (0) target = $region37
  $region36: #{base_model_forward.14} parent=0 // pred_region
    _
  $region37: #{base_model_forward.14} parent=0 // pred_fallthru
    _
  // Predicated region
  $region38: #{base_model_forward.14} parent=0 // pred_check
    _
  $region39: #{base_model_forward.14} parent=0 // pred_check_branch
    %43 = sbr.rel (0) target = $region41
  $region40: #{base_model_forward.14} parent=0 // pred_region
    _
  $region41: #{base_model_forward.14} parent=0 // pred_fallthru
    _
  // Predicated region
  $region42: #{base_model_forward.14} parent=0 // pred_check
    _
  $region43: #{base_model_forward.14} parent=0 // pred_check_branch
    %45 = sbr.rel (0) target = $region45
  $region44: #{base_model_forward.14} parent=0 // pred_region
    _
  $region45: #{base_model_forward.14} parent=0 // pred_fallthru
    _
  %v47 = vld [vmem:[%s0] sm:$0xff]
  %v48 = vld [vmem:[%s0 + $0x8] sm:$0xff]
  %v49 = vld [vmem:[%s0 + $0x10] sm:$0xff]
  %v50 = vld [vmem:[%s0 + $0x18] sm:$0xff]
  %v51 = vld [vmem:[%s0 + $0x20] sm:$0xff]
  %v52 = vld [vmem:[%s0 + $0x28] sm:$0xff]
  %v53 = vld [vmem:[%s0 + $0x30] sm:$0xff]
  %v54 = vld [vmem:[%s0 + $0x38] sm:$0xff]
  %vm55 = vcmask 130048
  %v56 = vsel %vm55, %v47, 0.0
  %57 = vadd.xlane.f32.xlu0 %v56
  %v58 = vpop.xlane.xlu0 %57
  %v59 = vsel %vm55, %v48, 0.0
  %60 = vadd.xlane.f32.xlu0 %v59
  %v61 = vpop.xlane.xlu0 %60
  %v62 = vsel %vm55, %v49, 0.0
  %63 = vadd.xlane.f32.xlu0 %v62
  %v64 = vpop.xlane.xlu0 %63
  %v65 = vsel %vm55, %v50, 0.0
  %66 = vadd.xlane.f32.xlu0 %v65
  %v67 = vpop.xlane.xlu0 %66
  %v68 = vsel %vm55, %v51, 0.0
  %69 = vadd.xlane.f32.xlu0 %v68
  %v70 = vpop.xlane.xlu0 %69
  %v71 = vsel %vm55, %v52, 0.0
  %72 = vadd.xlane.f32.xlu0 %v71
  %v73 = vpop.xlane.xlu0 %72
  %v74 = vsel %vm55, %v53, 0.0
  %75 = vadd.xlane.f32.xlu0 %v74
  %v76 = vpop.xlane.xlu0 %75
  %v77 = vsel %vm55, %v54, 0.0
  %78 = vadd.xlane.f32.xlu0 %v77
  %v79 = vpop.xlane.xlu0 %78
  %v80 = vrcp.pop 16.0
  %v81 = vmul.f32 %v58, %v80
  %v82 = vmul.f32 %v61, %v80
  %v83 = vmul.f32 %v64, %v80
  %v84 = vmul.f32 %v67, %v80
  %v85 = vmul.f32 %v70, %v80
  %v86 = vmul.f32 %v73, %v80
  %v87 = vmul.f32 %v76, %v80
  %v88 = vmul.f32 %v79, %v80
  %v89 = vsub.f32 %v47, %v81
  %v90 = vsub.f32 %v48, %v82
  %v91 = vsub.f32 %v49, %v83
  %v92 = vsub.f32 %v50, %v84
  %v93 = vsub.f32 %v51, %v85
  %v94 = vsub.f32 %v52, %v86
  %v95 = vsub.f32 %v53, %v87
  %v96 = vsub.f32 %v54, %v88
  %v97 = vmul.f32 %v89, %v89
  %v98 = vmul.f32 %v90, %v90
  %v99 = vmul.f32 %v91, %v91
  %v100 = vmul.f32 %v92, %v92
  %v101 = vmul.f32 %v93, %v93
  %v102 = vmul.f32 %v94, %v94
  %v103 = vmul.f32 %v95, %v95
  %v104 = vmul.f32 %v96, %v96
  %v105 = vsel %vm55, %v97, 0.0
  %106 = vadd.xlane.f32.xlu0 %v105
  %v107 = vpop.xlane.xlu0 %106
  %v108 = vsel %vm55, %v98, 0.0
  %109 = vadd.xlane.f32.xlu0 %v108
  %v110 = vpop.xlane.xlu0 %109
  %v111 = vsel %vm55, %v99, 0.0
  %112 = vadd.xlane.f32.xlu0 %v111
  %v113 = vpop.xlane.xlu0 %112
  %v114 = vsel %vm55, %v100, 0.0
  %115 = vadd.xlane.f32.xlu0 %v114
  %v116 = vpop.xlane.xlu0 %115
  %v117 = vsel %vm55, %v101, 0.0
  %118 = vadd.xlane.f32.xlu0 %v117
  %v119 = vpop.xlane.xlu0 %118
  %v120 = vsel %vm55, %v102, 0.0
  %121 = vadd.xlane.f32.xlu0 %v120
  %v122 = vpop.xlane.xlu0 %121
  %v123 = vsel %vm55, %v103, 0.0
  %124 = vadd.xlane.f32.xlu0 %v123
  %v125 = vpop.xlane.xlu0 %124
  %v126 = vsel %vm55, %v104, 0.0
  %127 = vadd.xlane.f32.xlu0 %v126
  %v128 = vpop.xlane.xlu0 %127
  %v129 = vmul.f32 %v107, %v80
  %v130 = vmul.f32 %v110, %v80
  %v131 = vmul.f32 %v113, %v80
  %v132 = vmul.f32 %v116, %v80
  %v133 = vmul.f32 %v119, %v80
  %v134 = vmul.f32 %v122, %v80
  %v135 = vmul.f32 %v125, %v80
  %v136 = vmul.f32 %v128, %v80
  %v137 = vadd.f32 %v129, 1e-05
  %v138 = vadd.f32 %v130, 1e-05
  %v139 = vadd.f32 %v131, 1e-05
  %v140 = vadd.f32 %v132, 1e-05
  %v141 = vadd.f32 %v133, 1e-05
  %v142 = vadd.f32 %v134, 1e-05
  %v143 = vadd.f32 %v135, 1e-05
  %v144 = vadd.f32 %v136, 1e-05
  %v145 = vrsqrt.pop %v137
  %v146 = vrsqrt.pop %v138
  %v147 = vrsqrt.pop %v139
  %v148 = vrsqrt.pop %v140
  %v149 = vrsqrt.pop %v141
  %v150 = vrsqrt.pop %v142
  %v151 = vrsqrt.pop %v143
  %v152 = vrsqrt.pop %v144
  %v153 = vmul.f32 %v89, %v145
  %v154 = vmul.f32 %v90, %v146
  %v155 = vmul.f32 %v91, %v147
  %v156 = vmul.f32 %v92, %v148
  %v157 = vmul.f32 %v93, %v149
  %v158 = vmul.f32 %v94, %v150
  %v159 = vmul.f32 %v95, %v151
  %v160 = vmul.f32 %v96, %v152
  %v161 = vld [vmem:[%s2] sm:$0x1]
  %v163 = vlaneseq
  %v164 = vshrl.u32 %v163, 7
  %v165 = vsub.s32 0, %v164
  %v166 = vrot.slane %v161, %v165
  %v168 = vmul.f32 %v153, %v166
  %v169 = vmul.f32 %v154, %v166
  %v170 = vmul.f32 %v155, %v166
  %v171 = vmul.f32 %v156, %v166
  %v172 = vmul.f32 %v157, %v166
  %v173 = vmul.f32 %v158, %v166
  %v174 = vmul.f32 %v159, %v166
  %v175 = vmul.f32 %v160, %v166
  %v176 = vld [vmem:[%s3] sm:$0x1]
  %v178 = vlaneseq
  %v179 = vshrl.u32 %v178, 7
  %v180 = vsub.s32 0, %v179
  %v181 = vrot.slane %v176, %v180
  %v183 = vadd.f32 %v168, %v181
  %v184 = vadd.f32 %v169, %v181
  %v185 = vadd.f32 %v170, %v181
  %v186 = vadd.f32 %v171, %v181
  %v187 = vadd.f32 %v172, %v181
  %v188 = vadd.f32 %v173, %v181
  %v189 = vadd.f32 %v174, %v181
  %v190 = vadd.f32 %v175, %v181
  %v191 = vld [vmem:[%s1] sm:$0xff]
  %v192 = vld [vmem:[%s1 + $0x8] sm:$0xff]
  %v193 = vld [vmem:[%s1 + $0x10] sm:$0xff]
  %v194 = vld [vmem:[%s1 + $0x18] sm:$0xff]
  %v195 = vld [vmem:[%s1 + $0x20] sm:$0xff]
  %v196 = vld [vmem:[%s1 + $0x28] sm:$0xff]
  %v197 = vld [vmem:[%s1 + $0x30] sm:$0xff]
  %v198 = vld [vmem:[%s1 + $0x38] sm:$0xff]
  %v199 = vmul.f32 %v191, %v191
  %v200 = vmul.f32 %v192, %v192
  %v201 = vmul.f32 %v193, %v193
  %v202 = vmul.f32 %v194, %v194
  %v203 = vmul.f32 %v195, %v195
  %v204 = vmul.f32 %v196, %v196
  %v205 = vmul.f32 %v197, %v197
  %v206 = vmul.f32 %v198, %v198
  %vm207 = vcmask 23552
  %v208 = vsel %vm207, %v199, 0.0
  %209 = vadd.xlane.f32.xlu0 %v208
  %v210 = vpop.xlane.xlu0 %209
  %v211 = vsel %vm207, %v200, 0.0
  %212 = vadd.xlane.f32.xlu0 %v211
  %v213 = vpop.xlane.xlu0 %212
  %v214 = vsel %vm207, %v201, 0.0
  %215 = vadd.xlane.f32.xlu0 %v214
  %v216 = vpop.xlane.xlu0 %215
  %v217 = vsel %vm207, %v202, 0.0
  %218 = vadd.xlane.f32.xlu0 %v217
  %v219 = vpop.xlane.xlu0 %218
  %v220 = vsel %vm207, %v203, 0.0
  %221 = vadd.xlane.f32.xlu0 %v220
  %v222 = vpop.xlane.xlu0 %221
  %v223 = vsel %vm207, %v204, 0.0
  %224 = vadd.xlane.f32.xlu0 %v223
  %v225 = vpop.xlane.xlu0 %224
  %v226 = vsel %vm207, %v205, 0.0
  %227 = vadd.xlane.f32.xlu0 %v226
  %v228 = vpop.xlane.xlu0 %227
  %v229 = vsel %vm207, %v206, 0.0
  %230 = vadd.xlane.f32.xlu0 %v229
  %v231 = vpop.xlane.xlu0 %230
  %v232 = vmax.f32 %v210, 1e-08
  %v233 = vmax.f32 %v213, 1e-08
  %v234 = vmax.f32 %v216, 1e-08
  %v235 = vmax.f32 %v219, 1e-08
  %v236 = vmax.f32 %v222, 1e-08
  %v237 = vmax.f32 %v225, 1e-08
  %v238 = vmax.f32 %v228, 1e-08
  %v239 = vmax.f32 %v231, 1e-08
  %v240 = vrsqrt.pop %v232
  %v241 = vrsqrt.pop %v233
  %v242 = vrsqrt.pop %v234
  %v243 = vrsqrt.pop %v235
  %v244 = vrsqrt.pop %v236
  %v245 = vrsqrt.pop %v237
  %v246 = vrsqrt.pop %v238
  %v247 = vrsqrt.pop %v239
  %v248 = vmul.f32 %v191, %v240
  %v249 = vmul.f32 %v192, %v241
  %v250 = vmul.f32 %v193, %v242
  %v251 = vmul.f32 %v194, %v243
  %v252 = vmul.f32 %v195, %v244
  %v253 = vmul.f32 %v196, %v245
  %v254 = vmul.f32 %v197, %v246
  %v255 = vmul.f32 %v198, %v247
  %v256 = vld [vmem:[#allocation2] sm:$0x1]
  %v258 = vlaneseq
  %v259 = vshrl.u32 %v258, 7
  %v260 = vsub.s32 0, %v259
  %v261 = vrot.slane %v256, %v260
  %262 = vset.pattern.permute.xlu0 0
  %263 = vperm.xlu0 %262, %v261
  %v264 = vpop.permute.xlu0 %263
  %v266 = vmul.f32 %v248, %v264
  %v267 = vmul.f32 %v249, %v264
  %v268 = vmul.f32 %v250, %v264
  %v269 = vmul.f32 %v251, %v264
  %v270 = vmul.f32 %v252, %v264
  %v271 = vmul.f32 %v253, %v264
  %v272 = vmul.f32 %v254, %v264
  %v273 = vmul.f32 %v255, %v264
  %v274 = vmul.f32 %v266, %v266
  %v275 = vmul.f32 %v267, %v267
  %v276 = vmul.f32 %v268, %v268
  %v277 = vmul.f32 %v269, %v269
  %v278 = vmul.f32 %v270, %v270
  %v279 = vmul.f32 %v271, %v271
  %v280 = vmul.f32 %v272, %v272
  %v281 = vmul.f32 %v273, %v273
  %v282 = vsel %vm207, %v274, 0.0
  %283 = vadd.xlane.f32.xlu0 %v282
  %v284 = vpop.xlane.xlu0 %283
  %v285 = vsel %vm207, %v275, 0.0
  %286 = vadd.xlane.f32.xlu0 %v285
  %v287 = vpop.xlane.xlu0 %286
  %v288 = vsel %vm207, %v276, 0.0
  %289 = vadd.xlane.f32.xlu0 %v288
  %v290 = vpop.xlane.xlu0 %289
  %v291 = vsel %vm207, %v277, 0.0
  %292 = vadd.xlane.f32.xlu0 %v291
  %v293 = vpop.xlane.xlu0 %292
  %v294 = vsel %vm207, %v278, 0.0
  %295 = vadd.xlane.f32.xlu0 %v294
  %v296 = vpop.xlane.xlu0 %295
  %v297 = vsel %vm207, %v279, 0.0
  %298 = vadd.xlane.f32.xlu0 %v297
  %v299 = vpop.xlane.xlu0 %298
  %v300 = vsel %vm207, %v280, 0.0
  %301 = vadd.xlane.f32.xlu0 %v300
  %v302 = vpop.xlane.xlu0 %301
  %v303 = vsel %vm207, %v281, 0.0
  %304 = vadd.xlane.f32.xlu0 %v303
  %v305 = vpop.xlane.xlu0 %304
  %v306 = vmax.f32 %v284, 1e-08
  %v307 = vmax.f32 %v287, 1e-08
  %v308 = vmax.f32 %v290, 1e-08
  %v309 = vmax.f32 %v293, 1e-08
  %v310 = vmax.f32 %v296, 1e-08
  %v311 = vmax.f32 %v299, 1e-08
  %v312 = vmax.f32 %v302, 1e-08
  %v313 = vmax.f32 %v305, 1e-08
  %v314 = vrsqrt.pop %v306
  %v315 = vmul.f32 %v306, %v314
  %vm316 = vcmp.eq.f32.partialorder %v306, inf
  %v317 = vsel %vm316, %v306, %v315
  %vm318 = vcmp.eq.f32.partialorder %v306, 0.0
  %v319 = vand.u32 %v306, 2147483648
  %v320 = vsel %vm318, %v319, %v317
  %v321 = vrsqrt.pop %v307
  %v322 = vmul.f32 %v307, %v321
  %vm323 = vcmp.eq.f32.partialorder %v307, inf
  %v324 = vsel %vm323, %v307, %v322
  %vm325 = vcmp.eq.f32.partialorder %v307, 0.0
  %v326 = vand.u32 %v307, 2147483648
  %v327 = vsel %vm325, %v326, %v324
  %v328 = vrsqrt.pop %v308
  %v329 = vmul.f32 %v308, %v328
  %vm330 = vcmp.eq.f32.partialorder %v308, inf
  %v331 = vsel %vm330, %v308, %v329
  %vm332 = vcmp.eq.f32.partialorder %v308, 0.0
  %v333 = vand.u32 %v308, 2147483648
  %v334 = vsel %vm332, %v333, %v331
  %v335 = vrsqrt.pop %v309
  %v336 = vmul.f32 %v309, %v335
  %vm337 = vcmp.eq.f32.partialorder %v309, inf
  %v338 = vsel %vm337, %v309, %v336
  %vm339 = vcmp.eq.f32.partialorder %v309, 0.0
  %v340 = vand.u32 %v309, 2147483648
  %v341 = vsel %vm339, %v340, %v338
  %v342 = vrsqrt.pop %v310
  %v343 = vmul.f32 %v310, %v342
  %vm344 = vcmp.eq.f32.partialorder %v310, inf
  %v345 = vsel %vm344, %v310, %v343
  %vm346 = vcmp.eq.f32.partialorder %v310, 0.0
  %v347 = vand.u32 %v310, 2147483648
  %v348 = vsel %vm346, %v347, %v345
  %v349 = vrsqrt.pop %v311
  %v350 = vmul.f32 %v311, %v349
  %vm351 = vcmp.eq.f32.partialorder %v311, inf
  %v352 = vsel %vm351, %v311, %v350
  %vm353 = vcmp.eq.f32.partialorder %v311, 0.0
  %v354 = vand.u32 %v311, 2147483648
  %v355 = vsel %vm353, %v354, %v352
  %v356 = vrsqrt.pop %v312
  %v357 = vmul.f32 %v312, %v356
  %vm358 = vcmp.eq.f32.partialorder %v312, inf
  %v359 = vsel %vm358, %v312, %v357
  %vm360 = vcmp.eq.f32.partialorder %v312, 0.0
  %v361 = vand.u32 %v312, 2147483648
  %v362 = vsel %vm360, %v361, %v359
  %v363 = vrsqrt.pop %v313
  %v364 = vmul.f32 %v313, %v363
  %vm365 = vcmp.eq.f32.partialorder %v313, inf
  %v366 = vsel %vm365, %v313, %v364
  %vm367 = vcmp.eq.f32.partialorder %v313, 0.0
  %v368 = vand.u32 %v313, 2147483648
  %v369 = vsel %vm367, %v368, %v366
  %v370 = vpack.c.bf16 %v184, %v183
  %v371 = vpack.c.bf16 %v186, %v185
  %v372 = vpack.c.bf16 %v188, %v187
  %v373 = vpack.c.bf16 %v190, %v189
  %v374 = vld [vmem:[%s4] sm:$0xf]
  %v375 = vld [vmem:[%s4 + $0x4] sm:$0xf]
  %v376 = vld [vmem:[%s5] sm:$0x1]
  %v378 = vlaneseq
  %v379 = vshrl.u32 %v378, 7
  %v380 = vsub.s32 0, %v379
  %v381 = vrot.slane %v376, %v380
  %v383 = vmul.f32 %v320, %v381
  %v384 = vmul.f32 %v327, %v381
  %v385 = vmul.f32 %v334, %v381
  %v386 = vmul.f32 %v341, %v381
  %v387 = vmul.f32 %v348, %v381
  %v388 = vmul.f32 %v355, %v381
  %v389 = vmul.f32 %v362, %v381
  %v390 = vmul.f32 %v369, %v381
  %v393 = vunpack.c.l.b16 %v374
  %v394 = vunpack.c.l.b16 %v375
  %v395 = vpack.c.b16 %v394, %v393
  %v398 = vsel %vm55, %v370, 0
  %v401 = vsel %vm55, %v371, 0
  %v404 = vsel %vm55, %v372, 0
  %v407 = vsel %vm55, %v373, 0
  %409 = vmatprep.subr.bf16.mxu0 0
  %410 = vmatpush1.bf16.msra.mxu0 0
  %411 = vmatprep.subr.bf16.mxu0 0
  %412 = vmatpush1.bf16.msra.mxu0 0
  %413 = vmatprep.subr.bf16.mxu0 0
  %414 = vmatpush1.bf16.msra.mxu0 0
  %415 = vmatprep.subr.bf16.mxu0 0
  %416 = vmatpush1.bf16.msra.mxu0 0
  %417 = vmatprep.subr.bf16.mxu0 0
  %418 = vmatpush1.bf16.msra.mxu0 0
  %419 = vmatprep.subr.bf16.mxu0 0
  %420 = vmatpush1.bf16.msra.mxu0 0
  %421 = vmatprep.subr.bf16.mxu0 0
  %422 = vmatpush1.bf16.msra.mxu0 0
  %423 = vmatprep.subr.bf16.mxu0 0
  %424 = vmatpush1.bf16.msra.mxu0 %v395
  %425 = vmatprep.subr.bf16.mxu0 0
  %426 = vmatpush2.bf16.msra.mxu0 0
  %427 = vmatprep.subr.bf16.mxu0 0
  %428 = vmatpush2.bf16.msra.mxu0 0
  %429 = vmatprep.subr.bf16.mxu0 0
  %430 = vmatpush2.bf16.msra.mxu0 0
  %431 = vmatprep.subr.bf16.mxu0 0
  %432 = vmatpush2.bf16.msra.mxu0 0
  %433 = vmatprep.subr.bf16.mxu0 0
  %434 = vmatpush2.bf16.msra.mxu0 0
  %435 = vmatprep.subr.bf16.mxu0 0
  %436 = vmatpush2.bf16.msra.mxu0 0
  %437 = vmatprep.subr.bf16.mxu0 0
  %438 = vmatpush2.bf16.msra.mxu0 0
  %439 = vmatprep.subr.bf16.mxu0 0
  %440 = vmatpush2.bf16.msra.mxu0 0
  %441 = vmatprep.mubr.bf16.mxu0 0
  %442 = vmatmul.mubr.bf16.gmra.mxu0 %v398
  %v443 = vpop.f32.mrf.mxu0
  %v444 = vadd.f32 %v383, %v443
  %v445 = vpop.f32.mrf.mxu0
  %v446 = vpop.f32.mrf.mxu0
  %v447 = vadd.f32 %v384, %v446
  %v448 = vpop.f32.mrf.mxu0
  %449 = vmatprep.mubr.bf16.mxu0 0
  %450 = vmatmul.mubr.bf16.gmra.mxu0 %v401
  %v451 = vpop.f32.mrf.mxu0
  %v452 = vadd.f32 %v385, %v451
  %v453 = vpop.f32.mrf.mxu0
  %v454 = vpop.f32.mrf.mxu0
  %v455 = vadd.f32 %v386, %v454
  %v456 = vpop.f32.mrf.mxu0
  %457 = vmatprep.mubr.bf16.mxu0 0
  %458 = vmatmul.mubr.bf16.gmra.mxu0 %v404
  %v459 = vpop.f32.mrf.mxu0
  %v460 = vadd.f32 %v387, %v459
  %v461 = vpop.f32.mrf.mxu0
  %v462 = vpop.f32.mrf.mxu0
  %v463 = vadd.f32 %v388, %v462
  %v464 = vpop.f32.mrf.mxu0
  %465 = vmatprep.mubr.bf16.mxu0 0
  %466 = vmatmul.mubr.bf16.gmra.mxu0 %v407
  %v467 = vpop.f32.mrf.mxu0
  %v468 = vadd.f32 %v389, %v467
  %v469 = vpop.f32.mrf.mxu0
  %v470 = vpop.f32.mrf.mxu0
  %v471 = vadd.f32 %v390, %v470
  %v472 = vpop.f32.mrf.mxu0
  %473 = vdwg.mxu0
  %v474 = vld [vmem:[%s6] sm:$0x1]
  %v476 = vlaneseq
  %v477 = vshrl.u32 %v476, 7
  %v478 = vsub.s32 0, %v477
  %v479 = vrot.slane %v474, %v478
  %v481 = vadd.f32 %v444, %v479
  %v482 = vadd.f32 %v447, %v479
  %v483 = vadd.f32 %v452, %v479
  %v484 = vadd.f32 %v455, %v479
  %v485 = vadd.f32 %v460, %v479
  %v486 = vadd.f32 %v463, %v479
  %v487 = vadd.f32 %v468, %v479
  %v488 = vadd.f32 %v471, %v479
  %v489 = vld [vmem:[%s9] sm:$0x1]
  %v491 = vlaneseq
  %v492 = vshrl.u32 %v491, 7
  %v493 = vsub.s32 0, %v492
  %v494 = vrot.slane %v489, %v493
  %v496 = vmul.f32 %v481, %v494
  %v497 = vmul.f32 %v482, %v494
  %v498 = vmul.f32 %v483, %v494
  %v499 = vmul.f32 %v484, %v494
  %v500 = vmul.f32 %v485, %v494
  %v501 = vmul.f32 %v486, %v494
  %v502 = vmul.f32 %v487, %v494
  %v503 = vmul.f32 %v488, %v494
  %vm504 = vcmask 261120
  %v505 = vsel %vm504, %v496, 0.0
  %506 = vadd.xlane.f32.xlu0 %v505
  %v507 = vpop.xlane.xlu0 %506
  %v508 = vsel %vm504, %v497, 0.0
  %509 = vadd.xlane.f32.xlu0 %v508
  %v510 = vpop.xlane.xlu0 %509
  %v511 = vsel %vm504, %v498, 0.0
  %512 = vadd.xlane.f32.xlu0 %v511
  %v513 = vpop.xlane.xlu0 %512
  %v514 = vsel %vm504, %v499, 0.0
  %515 = vadd.xlane.f32.xlu0 %v514
  %v516 = vpop.xlane.xlu0 %515
  %v517 = vsel %vm504, %v500, 0.0
  %518 = vadd.xlane.f32.xlu0 %v517
  %v519 = vpop.xlane.xlu0 %518
  %v520 = vsel %vm504, %v501, 0.0
  %521 = vadd.xlane.f32.xlu0 %v520
  %v522 = vpop.xlane.xlu0 %521
  %v523 = vsel %vm504, %v502, 0.0
  %524 = vadd.xlane.f32.xlu0 %v523
  %v525 = vpop.xlane.xlu0 %524
  %v526 = vsel %vm504, %v503, 0.0
  %527 = vadd.xlane.f32.xlu0 %v526
  %v528 = vpop.xlane.xlu0 %527
  %v529 = vld [vmem:[#allocation4] sm:$0x1]
  %v531 = vlaneseq
  %v532 = vshrl.u32 %v531, 7
  %v533 = vsub.s32 0, %v532
  %v534 = vrot.slane %v529, %v533
  %v536 = vadd.f32 %v507, %v534
  %v537 = vadd.f32 %v510, %v534
  %v538 = vadd.f32 %v513, %v534
  %v539 = vadd.f32 %v516, %v534
  %v540 = vadd.f32 %v519, %v534
  %v541 = vadd.f32 %v522, %v534
  %v542 = vadd.f32 %v525, %v534
  %v543 = vadd.f32 %v528, %v534
  %v544 = vsub.f32 0.0, %v536
  %v545 = vsub.f32 0.0, %v537
  %v546 = vsub.f32 0.0, %v538
  %v547 = vsub.f32 0.0, %v539
  %v548 = vsub.f32 0.0, %v540
  %v549 = vsub.f32 0.0, %v541
  %v550 = vsub.f32 0.0, %v542
  %v551 = vsub.f32 0.0, %v543
  %v552 = vmul.f32 %v544, 1.442695
  %v553 = vpow.pop %v552
  %v554 = vmul.f32 %v545, 1.442695
  %v555 = vpow.pop %v554
  %v556 = vmul.f32 %v546, 1.442695
  %v557 = vpow.pop %v556
  %v558 = vmul.f32 %v547, 1.442695
  %v559 = vpow.pop %v558
  %v560 = vmul.f32 %v548, 1.442695
  %v561 = vpow.pop %v560
  %v562 = vmul.f32 %v549, 1.442695
  %v563 = vpow.pop %v562
  %v564 = vmul.f32 %v550, 1.442695
  %v565 = vpow.pop %v564
  %v566 = vmul.f32 %v551, 1.442695
  %v567 = vpow.pop %v566
  %v568 = vadd.f32 %v553, 1.0
  %v569 = vadd.f32 %v555, 1.0
  %v570 = vadd.f32 %v557, 1.0
  %v571 = vadd.f32 %v559, 1.0
  %v572 = vadd.f32 %v561, 1.0
  %v573 = vadd.f32 %v563, 1.0
  %v574 = vadd.f32 %v565, 1.0
  %v575 = vadd.f32 %v567, 1.0
  %v576 = vrcp.pop %v568
  %v577 = vrcp.pop %v569
  %v578 = vrcp.pop %v570
  %v579 = vrcp.pop %v571
  %v580 = vrcp.pop %v572
  %v581 = vrcp.pop %v573
  %v582 = vrcp.pop %v574
  %v583 = vrcp.pop %v575
  %584 = vst.msk [vmem:[%s11] sm:$0xff] %vm504, %v481
  %585 = vst.msk [vmem:[%s11 + $0x8] sm:$0xff] %vm504, %v482
  %586 = vst.msk [vmem:[%s11 + $0x10] sm:$0xff] %vm504, %v483
  %587 = vst.msk [vmem:[%s11 + $0x18] sm:$0xff] %vm504, %v484
  %588 = vst.msk [vmem:[%s11 + $0x20] sm:$0xff] %vm504, %v485
  %589 = vst.msk [vmem:[%s11 + $0x28] sm:$0xff] %vm504, %v486
  %590 = vst.msk [vmem:[%s11 + $0x30] sm:$0xff] %vm504, %v487
  %591 = vst.msk [vmem:[%s11 + $0x38] sm:$0xff] %vm504, %v488
  %v592 = vld [vmem:[#allocation3] sm:$0x1]
  %v594 = vlaneseq
  %v595 = vshrl.u32 %v594, 7
  %v596 = vsub.s32 0, %v595
  %v597 = vrot.slane %v592, %v596
  %598 = vset.pattern.permute.xlu0 0
  %599 = vperm.xlu0 %598, %v597
  %v600 = vpop.permute.xlu0 %599
  %v602 = vmul.f32 %v266, %v600
  %v603 = vmul.f32 %v267, %v600
  %v604 = vmul.f32 %v268, %v600
  %v605 = vmul.f32 %v269, %v600
  %v606 = vmul.f32 %v270, %v600
  %v607 = vmul.f32 %v271, %v600
  %v608 = vmul.f32 %v272, %v600
  %v609 = vmul.f32 %v273, %v600
  %611 = vset.pattern.permute.xlu0 0
  %612 = vperm.xlu0 %611, %v576
  %v613 = vpop.permute.xlu0 %612
  %616 = vset.pattern.permute.xlu0 0
  %617 = vperm.xlu0 %616, %v577
  %v618 = vpop.permute.xlu0 %617
  %621 = vset.pattern.permute.xlu0 0
  %622 = vperm.xlu0 %621, %v578
  %v623 = vpop.permute.xlu0 %622
  %626 = vset.pattern.permute.xlu0 0
  %627 = vperm.xlu0 %626, %v579
  %v628 = vpop.permute.xlu0 %627
  %631 = vset.pattern.permute.xlu0 0
  %632 = vperm.xlu0 %631, %v580
  %v633 = vpop.permute.xlu0 %632
  %636 = vset.pattern.permute.xlu0 0
  %637 = vperm.xlu0 %636, %v581
  %v638 = vpop.permute.xlu0 %637
  %641 = vset.pattern.permute.xlu0 0
  %642 = vperm.xlu0 %641, %v582
  %v643 = vpop.permute.xlu0 %642
  %646 = vset.pattern.permute.xlu0 0
  %647 = vperm.xlu0 %646, %v583
  %v648 = vpop.permute.xlu0 %647
  %v650 = vmul.f32 %v602, %v613
  %v651 = vmul.f32 %v603, %v618
  %v652 = vmul.f32 %v604, %v623
  %v653 = vmul.f32 %v605, %v628
  %v654 = vmul.f32 %v606, %v633
  %v655 = vmul.f32 %v607, %v638
  %v656 = vmul.f32 %v608, %v643
  %v657 = vmul.f32 %v609, %v648
  %658 = vst.msk [vmem:[%s12] sm:$0xff] %vm207, %v650
  %659 = vst.msk [vmem:[%s12 + $0x8] sm:$0xff] %vm207, %v651
  %660 = vst.msk [vmem:[%s12 + $0x10] sm:$0xff] %vm207, %v652
  %661 = vst.msk [vmem:[%s12 + $0x18] sm:$0xff] %vm207, %v653
  %662 = vst.msk [vmem:[%s12 + $0x20] sm:$0xff] %vm207, %v654
  %663 = vst.msk [vmem:[%s12 + $0x28] sm:$0xff] %vm207, %v655
  %664 = vst.msk [vmem:[%s12 + $0x30] sm:$0xff] %vm207, %v656
  %665 = vst.msk [vmem:[%s12 + $0x38] sm:$0xff] %vm207, %v657
  // Predicated region
  $region46: #{base_model_forward.14} parent=0 // pred_check
    _
  $region47: #{base_model_forward.14} parent=0 // pred_check_branch
    %667 = sbr.rel (0) target = $region49
  $region48: #{base_model_forward.14} parent=0 // pred_region
    _
  $region49: #{base_model_forward.14} parent=0 // pred_fallthru
    _
  // Predicated region
  $region50: #{base_model_forward.14} parent=0 // pred_check
    _
  $region51: #{base_model_forward.14} parent=0 // pred_check_branch
    %669 = sbr.rel (0) target = $region53
  $region52: #{base_model_forward.14} parent=0 // pred_region
    _
  $region53: #{base_model_forward.14} parent=0 // pred_fallthru
    _
  // Predicated region
  $region54: #{base_model_forward.14} parent=0 // pred_check
    _
  $region55: #{base_model_forward.14} parent=0 // pred_check_branch
    %671 = sbr.rel (0) target = $region57
  $region56: #{base_model_forward.14} parent=0 // pred_region
    _
  $region57: #{base_model_forward.14} parent=0 // pred_fallthru
    _
  // Predicated region
  $region58: #{base_model_forward.14} parent=0 // pred_check
    _
  $region59: #{base_model_forward.14} parent=0 // pred_check_branch
    %673 = sbr.rel (0) target = $region61
  $region60: #{base_model_forward.14} parent=0 // pred_region
    _
  $region61: #{base_model_forward.14} parent=0 // pred_fallthru
    _

// kernel: base_model_forward.25
$region0: #{base_model_forward.25}
  #allocation0 [shape = 'u32[]', space=smem, size = 0x4, offset = 0x4, fixed_abs, tag = 'smem constant byte address 0x4 - core index']
  #allocation1 [shape = 'u32[144,128]{1,0:T(1,128)}', space=vmem, size = 0x12000, scoped, tag = 'internal scratch']
  #allocation2 [shape = 'f32[1,1]{1,0:T(1,128)S(1)}', space=vmem, size = 0x200, scoped, tag = 'scoped memory for base_model_forward.25']
  %s0 = inlined_call_operand.vmem [shape: f32[16,100], index: 0, kind: input, shape index: {}]
  %s1 = inlined_call_operand.vmem [shape: f32[16,48], index: 1, kind: input, shape index: {}]
  %s2 = inlined_call_operand.vmem [shape: f32[1,100], index: 2, kind: input, shape index: {}]
  %s3 = inlined_call_operand.vmem [shape: f32[1,100], index: 3, kind: input, shape index: {}]
  %s4 = inlined_call_operand.vmem [shape: bf16[48,48], index: 4, kind: input, shape index: {}]
  %s5 = inlined_call_operand.vmem [shape: bf16[100,100], index: 5, kind: input, shape index: {}]
  %s6 = inlined_call_operand.vmem [shape: bf16[16,100], index: 6, kind: input, shape index: {}]
  %s7 = inlined_call_operand.vmem [shape: f32[1,100], index: 7, kind: input, shape index: {}]
  %s8 = inlined_call_operand.vmem [shape: bf16[100,200], index: 8, kind: input, shape index: {}]
  %s9 = inlined_call_operand.vmem [shape: f32[1,200], index: 9, kind: input, shape index: {}]
  %s10 = inlined_call_operand.vmem [shape: f32[1,200], index: 10, kind: input, shape index: {}]
  %s11 = inlined_call_operand.<no memory space> [shape: f32[1,1], index: 11, kind: input, shape index: {}]
  %s12 = inlined_call_operand.vmem [shape: f32[16,1], index: 12, kind: output, shape index: {}]
  %s13 = sld [smem:[#allocation0]]
  $region58: #{base_model_forward.25} parent=0
    _
  %s15 = ssub.s32 1, %s13
  %s16 = scalar_select 0, %s15, %s13
  %v17 = vstv %s11
  %18 = vst [vmem:[#allocation2] sm:$0x1] %v17
  // Predicated region
  $region2: #{base_model_forward.25} parent=0 // pred_check
    _
  $region3: #{base_model_forward.25} parent=0 // pred_check_branch
    %20 = sbr.rel (0) target = $region5
  $region4: #{base_model_forward.25} parent=0 // pred_region
    _
  $region5: #{base_model_forward.25} parent=0 // pred_fallthru
    _
  // Predicated region
  $region6: #{base_model_forward.25} parent=0 // pred_check
    _
  $region7: #{base_model_forward.25} parent=0 // pred_check_branch
    %22 = sbr.rel (0) target = $region9
  $region8: #{base_model_forward.25} parent=0 // pred_region
    _
  $region9: #{base_model_forward.25} parent=0 // pred_fallthru
    _
  // Predicated region
  $region10: #{base_model_forward.25} parent=0 // pred_check
    _
  $region11: #{base_model_forward.25} parent=0 // pred_check_branch
    %24 = sbr.rel (0) target = $region13
  $region12: #{base_model_forward.25} parent=0 // pred_region
    _
  $region13: #{base_model_forward.25} parent=0 // pred_fallthru
    _
  // Predicated region
  $region14: #{base_model_forward.25} parent=0 // pred_check
    _
  $region15: #{base_model_forward.25} parent=0 // pred_check_branch
    %26 = sbr.rel (0) target = $region17
  $region16: #{base_model_forward.25} parent=0 // pred_region
    _
  $region17: #{base_model_forward.25} parent=0 // pred_fallthru
    _
  // Predicated region
  $region18: #{base_model_forward.25} parent=0 // pred_check
    _
  $region19: #{base_model_forward.25} parent=0 // pred_check_branch
    %28 = sbr.rel (0) target = $region21
  $region20: #{base_model_forward.25} parent=0 // pred_region
    _
  $region21: #{base_model_forward.25} parent=0 // pred_fallthru
    _
  // Predicated region
  $region22: #{base_model_forward.25} parent=0 // pred_check
    _
  $region23: #{base_model_forward.25} parent=0 // pred_check_branch
    %30 = sbr.rel (0) target = $region25
  $region24: #{base_model_forward.25} parent=0 // pred_region
    _
  $region25: #{base_model_forward.25} parent=0 // pred_fallthru
    _
  // Predicated region
  $region26: #{base_model_forward.25} parent=0 // pred_check
    _
  $region27: #{base_model_forward.25} parent=0 // pred_check_branch
    %32 = sbr.rel (0) target = $region29
  $region28: #{base_model_forward.25} parent=0 // pred_region
    _
  $region29: #{base_model_forward.25} parent=0 // pred_fallthru
    _
  // Predicated region
  $region30: #{base_model_forward.25} parent=0 // pred_check
    _
  $region31: #{base_model_forward.25} parent=0 // pred_check_branch
    %34 = sbr.rel (0) target = $region33
  $region32: #{base_model_forward.25} parent=0 // pred_region
    _
  $region33: #{base_model_forward.25} parent=0 // pred_fallthru
    _
  // Predicated region
  $region34: #{base_model_forward.25} parent=0 // pred_check
    _
  $region35: #{base_model_forward.25} parent=0 // pred_check_branch
    %36 = sbr.rel (0) target = $region37
  $region36: #{base_model_forward.25} parent=0 // pred_region
    _
  $region37: #{base_model_forward.25} parent=0 // pred_fallthru
    _
  // Predicated region
  $region38: #{base_model_forward.25} parent=0 // pred_check
    _
  $region39: #{base_model_forward.25} parent=0 // pred_check_branch
    %38 = sbr.rel (0) target = $region41
  $region40: #{base_model_forward.25} parent=0 // pred_region
    _
  $region41: #{base_model_forward.25} parent=0 // pred_fallthru
    _
  // Predicated region
  $region42: #{base_model_forward.25} parent=0 // pred_check
    _
  $region43: #{base_model_forward.25} parent=0 // pred_check_branch
    %40 = sbr.rel (0) target = $region45
  $region44: #{base_model_forward.25} parent=0 // pred_region
    _
  $region45: #{base_model_forward.25} parent=0 // pred_fallthru
    _
  // Predicated region
  $region46: #{base_model_forward.25} parent=0 // pred_check
    _
  $region47: #{base_model_forward.25} parent=0 // pred_check_branch
    %42 = sbr.rel (0) target = $region49
  $region48: #{base_model_forward.25} parent=0 // pred_region
    _
  $region49: #{base_model_forward.25} parent=0 // pred_fallthru
    _
  %v44 = vld [vmem:[%s0] sm:$0xff]
  %v45 = vld [vmem:[%s0 + $0x8] sm:$0xff]
  %vm46 = vcmask 818176
  %v47 = vsel %vm46, %v44, 0.0
  %48 = vadd.xlane.f32.xlu0 %v47
  %v49 = vpop.xlane.xlu0 %48
  %v50 = vsel %vm46, %v45, 0.0
  %51 = vadd.xlane.f32.xlu0 %v50
  %v52 = vpop.xlane.xlu0 %51
  %v53 = vrcp.pop 100.0
  %v54 = vmul.f32 %v49, %v53
  %v55 = vmul.f32 %v52, %v53
  %v56 = vsub.f32 %v44, %v54
  %v57 = vsub.f32 %v45, %v55
  %v58 = vmul.f32 %v56, %v56
  %v59 = vmul.f32 %v57, %v57
  %v60 = vsel %vm46, %v58, 0.0
  %61 = vadd.xlane.f32.xlu0 %v60
  %v62 = vpop.xlane.xlu0 %61
  %v63 = vsel %vm46, %v59, 0.0
  %64 = vadd.xlane.f32.xlu0 %v63
  %v65 = vpop.xlane.xlu0 %64
  %v66 = vmul.f32 %v62, %v53
  %v67 = vmul.f32 %v65, %v53
  %v68 = vadd.f32 %v66, 1e-05
  %v69 = vadd.f32 %v67, 1e-05
  %v70 = vrsqrt.pop %v68
  %v71 = vrsqrt.pop %v69
  %v72 = vmul.f32 %v56, %v70
  %v73 = vmul.f32 %v57, %v71
  %v74 = vld [vmem:[%s2] sm:$0x1]
  %v76 = vlaneseq
  %v77 = vshrl.u32 %v76, 7
  %v78 = vsub.s32 0, %v77
  %v79 = vrot.slane %v74, %v78
  %v81 = vmul.f32 %v72, %v79
  %v82 = vmul.f32 %v73, %v79
  %v83 = vld [vmem:[%s3] sm:$0x1]
  %v85 = vlaneseq
  %v86 = vshrl.u32 %v85, 7
  %v87 = vsub.s32 0, %v86
  %v88 = vrot.slane %v83, %v87
  %v90 = vadd.f32 %v81, %v88
  %v91 = vadd.f32 %v82, %v88
  %v92 = vld [vmem:[%s1] sm:$0xff]
  %v93 = vld [vmem:[%s1 + $0x8] sm:$0xff]
  %v94 = vmul.f32 %v92, %v92
  %v95 = vmul.f32 %v93, %v93
  %98 = vrot.lane.b32.xlu0 %v94, 112
  %v99 = vpop.permute.xlu0 %98
  %100 = vrot.lane.b32.xlu0 %v95, 112
  %v101 = vpop.permute.xlu0 %100
  %v104 = vadd.f32 %v94, %v99
  %v105 = vadd.f32 %v95, %v101
  %106 = vrot.lane.b32.xlu0 %v94, 96
  %v107 = vpop.permute.xlu0 %106
  %108 = vrot.lane.b32.xlu0 %v95, 96
  %v109 = vpop.permute.xlu0 %108
  %v112 = vadd.f32 %v104, %v107
  %v113 = vadd.f32 %v105, %v109
  %v114 = vmax.f32 %v112, 1e-08
  %v115 = vmax.f32 %v113, 1e-08
  %vm116 = vcmask 130048
  %v117 = vsel %vm116, %v114, 0.0
  %118 = vadd.xlane.f32.xlu0 %v117
  %v119 = vpop.xlane.xlu0 %118
  %v120 = vsel %vm116, %v115, 0.0
  %121 = vadd.xlane.f32.xlu0 %v120
  %v122 = vpop.xlane.xlu0 %121
  %v123 = vrcp.pop 16.0
  %v124 = vmul.f32 %v119, %v123
  %v125 = vmul.f32 %v122, %v123
  %v126 = vrsqrt.pop %v124
  %v127 = vrsqrt.pop %v125
  %v128 = vmul.f32 %v92, %v126
  %v129 = vmul.f32 %v93, %v127
  %v130 = vpack.c.bf16 %v129, %v128
  %v131 = vld [vmem:[%s4] sm:$0xf]
  %v132 = vld [vmem:[%s4 + $0x4] sm:$0xf]
  %v133 = vld [vmem:[%s4 + $0x8] sm:$0xf]
  %v134 = vld [vmem:[%s4 + $0xc] sm:$0xf]
  %v135 = vld [vmem:[%s4 + $0x10] sm:$0xf]
  %v136 = vld [vmem:[%s4 + $0x14] sm:$0xf]
  %v143 = vunpack.c.l.b16 %v131
  %v144 = vunpack.c.l.b16 %v132
  %v145 = vunpack.c.l.b16 %v133
  %v146 = vunpack.c.l.b16 %v134
  %v147 = vunpack.c.l.b16 %v135
  %v148 = vunpack.c.l.b16 %v136
  %v149 = vpack.c.b16 %v144, %v143
  %v150 = vpack.c.b16 %v146, %v145
  %v151 = vpack.c.b16 %v148, %v147
  %vm155 = vcmask 392192
  %v157 = vsel %vm155, %v130, 0
  %159 = vmatprep.subr.bf16.mxu0 0
  %160 = vmatpush1.bf16.msra.mxu0 0
  %161 = vmatprep.subr.bf16.mxu0 0
  %162 = vmatpush1.bf16.msra.mxu0 0
  %163 = vmatprep.subr.bf16.mxu0 0
  %164 = vmatpush1.bf16.msra.mxu0 0
  %165 = vmatprep.subr.bf16.mxu0 0
  %166 = vmatpush1.bf16.msra.mxu0 0
  %167 = vmatprep.subr.bf16.mxu0 0
  %168 = vmatpush1.bf16.msra.mxu0 0
  %169 = vmatprep.subr.bf16.mxu0 0
  %170 = vmatpush1.bf16.msra.mxu0 %v151
  %171 = vmatprep.subr.bf16.mxu0 0
  %172 = vmatpush1.bf16.msra.mxu0 %v150
  %173 = vmatprep.subr.bf16.mxu0 0
  %174 = vmatpush1.bf16.msra.mxu0 %v149
  %175 = vmatprep.subr.bf16.mxu0 0
  %176 = vmatpush2.bf16.msra.mxu0 0
  %177 = vmatprep.subr.bf16.mxu0 0
  %178 = vmatpush2.bf16.msra.mxu0 0
  %179 = vmatprep.subr.bf16.mxu0 0
  %180 = vmatpush2.bf16.msra.mxu0 0
  %181 = vmatprep.subr.bf16.mxu0 0
  %182 = vmatpush2.bf16.msra.mxu0 0
  %183 = vmatprep.subr.bf16.mxu0 0
  %184 = vmatpush2.bf16.msra.mxu0 0
  %185 = vmatprep.subr.bf16.mxu0 0
  %186 = vmatpush2.bf16.msra.mxu0 0
  %187 = vmatprep.subr.bf16.mxu0 0
  %188 = vmatpush2.bf16.msra.mxu0 0
  %189 = vmatprep.subr.bf16.mxu0 0
  %190 = vmatpush2.bf16.msra.mxu0 0
  %191 = vmatprep.mubr.bf16.mxu0 0
  %192 = vmatmul.mubr.bf16.gmra.mxu0 %v157
  %v193 = vpop.f32.mrf.mxu0
  %v194 = vadd.f32 0.0, %v193
  %v195 = vpop.f32.mrf.mxu0
  %v196 = vpop.f32.mrf.mxu0
  %v197 = vadd.f32 0.0, %v196
  %v198 = vpop.f32.mrf.mxu0
  %199 = vdwg.mxu0
  %v200 = vmul.f32 %v194, %v194
  %v201 = vmul.f32 %v197, %v197
  %204 = vrot.lane.b32.xlu0 %v200, 112
  %v205 = vpop.permute.xlu0 %204
  %206 = vrot.lane.b32.xlu0 %v201, 112
  %v207 = vpop.permute.xlu0 %206
  %v210 = vadd.f32 %v200, %v205
  %v211 = vadd.f32 %v201, %v207
  %212 = vrot.lane.b32.xlu0 %v200, 96
  %v213 = vpop.permute.xlu0 %212
  %214 = vrot.lane.b32.xlu0 %v201, 96
  %v215 = vpop.permute.xlu0 %214
  %v218 = vadd.f32 %v210, %v213
  %v219 = vadd.f32 %v211, %v215
  %v220 = vmax.f32 %v218, 1e-08
  %v221 = vmax.f32 %v219, 1e-08
  %v222 = vrsqrt.pop %v220
  %v223 = vmul.f32 %v220, %v222
  %vm224 = vcmp.eq.f32.partialorder %v220, inf
  %v225 = vsel %vm224, %v220, %v223
  %vm226 = vcmp.eq.f32.partialorder %v220, 0.0
  %v227 = vand.u32 %v220, 2147483648
  %v228 = vsel %vm226, %v227, %v225
  %v229 = vrsqrt.pop %v221
  %v230 = vmul.f32 %v221, %v229
  %vm231 = vcmp.eq.f32.partialorder %v221, inf
  %v232 = vsel %vm231, %v221, %v230
  %vm233 = vcmp.eq.f32.partialorder %v221, 0.0
  %v234 = vand.u32 %v221, 2147483648
  %v235 = vsel %vm233, %v234, %v232
  %v236 = vpack.c.bf16 %v91, %v90
  %v237 = vld [vmem:[%s5] sm:$0xf]
  %v238 = vld [vmem:[%s5 + $0x4] sm:$0xf]
  %v239 = vld [vmem:[%s5 + $0x8] sm:$0xf]
  %v240 = vld [vmem:[%s5 + $0xc] sm:$0xf]
  %v241 = vld [vmem:[%s5 + $0x10] sm:$0xf]
  %v242 = vld [vmem:[%s5 + $0x14] sm:$0xf]
  %v243 = vld [vmem:[%s5 + $0x18] sm:$0xf]
  %v244 = vld [vmem:[%s5 + $0x1c] sm:$0xf]
  %v245 = vld [vmem:[%s5 + $0x20] sm:$0xf]
  %v246 = vld [vmem:[%s5 + $0x24] sm:$0xf]
  %v247 = vld [vmem:[%s5 + $0x28] sm:$0xf]
  %v248 = vld [vmem:[%s5 + $0x2c] sm:$0xf]
  %v249 = vld [vmem:[%s5 + $0x30] sm:$0x3]
  %v250 = vpack.c.bf16 %v235, %v228
  %v251 = vld [vmem:[%s6] sm:$0xf]
  %v252 = vld [vmem:[%s6 + $0x4] sm:$0xf]
  %v255 = vunpack.c.l.b16 %v251
  %v256 = vunpack.c.l.b16 %v252
  %v257 = vpack.c.b16 %v256, %v255
  %v260 = vsel %vm116, %v250, 0
  %262 = vmatprep.subr.bf16.mxu0 0
  %263 = vmatpush1.bf16.msra.mxu0 0
  %264 = vmatprep.subr.bf16.mxu0 0
  %265 = vmatpush1.bf16.msra.mxu0 0
  %266 = vmatprep.subr.bf16.mxu0 0
  %267 = vmatpush1.bf16.msra.mxu0 0
  %268 = vmatprep.subr.bf16.mxu0 0
  %269 = vmatpush1.bf16.msra.mxu0 0
  %270 = vmatprep.subr.bf16.mxu0 0
  %271 = vmatpush1.bf16.msra.mxu0 0
  %272 = vmatprep.subr.bf16.mxu0 0
  %273 = vmatpush1.bf16.msra.mxu0 0
  %274 = vmatprep.subr.bf16.mxu0 0
  %275 = vmatpush1.bf16.msra.mxu0 0
  %276 = vmatprep.subr.bf16.mxu0 0
  %277 = vmatpush1.bf16.msra.mxu0 %v257
  %278 = vmatprep.subr.bf16.mxu0 0
  %279 = vmatpush2.bf16.msra.mxu0 0
  %280 = vmatprep.subr.bf16.mxu0 0
  %281 = vmatpush2.bf16.msra.mxu0 0
  %282 = vmatprep.subr.bf16.mxu0 0
  %283 = vmatpush2.bf16.msra.mxu0 0
  %284 = vmatprep.subr.bf16.mxu0 0
  %285 = vmatpush2.bf16.msra.mxu0 0
  %286 = vmatprep.subr.bf16.mxu0 0
  %287 = vmatpush2.bf16.msra.mxu0 0
  %288 = vmatprep.subr.bf16.mxu0 0
  %289 = vmatpush2.bf16.msra.mxu0 0
  %290 = vmatprep.subr.bf16.mxu0 0
  %291 = vmatpush2.bf16.msra.mxu0 0
  %292 = vmatprep.subr.bf16.mxu0 0
  %293 = vmatpush2.bf16.msra.mxu0 0
  %294 = vmatprep.mubr.bf16.mxu0 0
  %295 = vmatmul.mubr.bf16.gmra.mxu0 %v260
  %v296 = vpop.f32.mrf.mxu0
  %v297 = vadd.f32 0.0, %v296
  %v298 = vpop.f32.mrf.mxu0
  %v299 = vpop.f32.mrf.mxu0
  %v300 = vadd.f32 0.0, %v299
  %v301 = vpop.f32.mrf.mxu0
  %302 = vdwg.mxu0
  %v316 = vunpack.c.l.b16 %v237
  %v317 = vunpack.c.l.b16 %v238
  %v318 = vunpack.c.l.b16 %v239
  %v319 = vunpack.c.l.b16 %v240
  %v320 = vunpack.c.l.b16 %v241
  %v321 = vunpack.c.l.b16 %v242
  %v322 = vunpack.c.l.b16 %v243
  %v323 = vunpack.c.l.b16 %v244
  %v324 = vunpack.c.l.b16 %v245
  %v325 = vunpack.c.l.b16 %v246
  %v326 = vunpack.c.l.b16 %v247
  %v327 = vunpack.c.l.b16 %v248
  %v328 = vunpack.c.l.b16 %v249
  %v329 = vpack.c.b16 %v317, %v316
  %v330 = vpack.c.b16 %v319, %v318
  %v331 = vpack.c.b16 %v321, %v320
  %v332 = vpack.c.b16 %v323, %v322
  %v333 = vpack.c.b16 %v325, %v324
  %v334 = vpack.c.b16 %v327, %v326
  %v335 = vpack.c.b16 %v328, %v328
  %v343 = vsel %vm46, %v236, 0
  %vm345 = vcmask 1041408
  %v347 = vsel %vm345, %v335, 0
  %349 = vmatprep.subr.bf16.mxu0 0
  %350 = vmatpush1.bf16.msra.mxu0 0
  %351 = vmatprep.subr.bf16.mxu0 0
  %352 = vmatpush1.bf16.msra.mxu0 %v347
  %353 = vmatprep.subr.bf16.mxu0 0
  %354 = vmatpush1.bf16.msra.mxu0 %v334
  %355 = vmatprep.subr.bf16.mxu0 0
  %356 = vmatpush1.bf16.msra.mxu0 %v333
  %357 = vmatprep.subr.bf16.mxu0 0
  %358 = vmatpush1.bf16.msra.mxu0 %v332
  %359 = vmatprep.subr.bf16.mxu0 0
  %360 = vmatpush1.bf16.msra.mxu0 %v331
  %361 = vmatprep.subr.bf16.mxu0 0
  %362 = vmatpush1.bf16.msra.mxu0 %v330
  %363 = vmatprep.subr.bf16.mxu0 0
  %364 = vmatpush1.bf16.msra.mxu0 %v329
  %365 = vmatprep.subr.bf16.mxu0 0
  %366 = vmatpush2.bf16.msra.mxu0 0
  %367 = vmatprep.subr.bf16.mxu0 0
  %368 = vmatpush2.bf16.msra.mxu0 0
  %369 = vmatprep.subr.bf16.mxu0 0
  %370 = vmatpush2.bf16.msra.mxu0 0
  %371 = vmatprep.subr.bf16.mxu0 0
  %372 = vmatpush2.bf16.msra.mxu0 0
  %373 = vmatprep.subr.bf16.mxu0 0
  %374 = vmatpush2.bf16.msra.mxu0 0
  %375 = vmatprep.subr.bf16.mxu0 0
  %376 = vmatpush2.bf16.msra.mxu0 0
  %377 = vmatprep.subr.bf16.mxu0 0
  %378 = vmatpush2.bf16.msra.mxu0 0
  %379 = vmatprep.subr.bf16.mxu0 0
  %380 = vmatpush2.bf16.msra.mxu0 0
  %381 = vmatprep.mubr.bf16.mxu0 0
  %382 = vmatmul.mubr.bf16.gmra.mxu0 %v343
  %v383 = vpop.f32.mrf.mxu0
  %v384 = vadd.f32 %v297, %v383
  %v385 = vpop.f32.mrf.mxu0
  %v386 = vpop.f32.mrf.mxu0
  %v387 = vadd.f32 %v300, %v386
  %v388 = vpop.f32.mrf.mxu0
  %389 = vdwg.mxu0
  %v390 = vld [vmem:[%s7] sm:$0x1]
  %v392 = vlaneseq
  %v393 = vshrl.u32 %v392, 7
  %v394 = vsub.s32 0, %v393
  %v395 = vrot.slane %v390, %v394
  %v397 = vadd.f32 %v384, %v395
  %v398 = vadd.f32 %v387, %v395
  %v399 = vmax.f32 %v397, 0.0
  %v400 = vmax.f32 %v398, 0.0
  %v401 = vpack.c.bf16 %v400, %v399
  %v402 = vld [vmem:[%s8] sm:$0xff]
  %v403 = vld [vmem:[%s8 + $0x8] sm:$0xff]
  %v404 = vld [vmem:[%s8 + $0x10] sm:$0xff]
  %v405 = vld [vmem:[%s8 + $0x18] sm:$0xff]
  %v406 = vld [vmem:[%s8 + $0x20] sm:$0xff]
  %v407 = vld [vmem:[%s8 + $0x28] sm:$0xff]
  %v408 = vld [vmem:[%s8 + $0x30] sm:$0xff]
  %v409 = vld [vmem:[%s8 + $0x38] sm:$0xff]
  %v410 = vld [vmem:[%s8 + $0x40] sm:$0xff]
  %v411 = vld [vmem:[%s8 + $0x48] sm:$0xff]
  %v412 = vld [vmem:[%s8 + $0x50] sm:$0xff]
  %v413 = vld [vmem:[%s8 + $0x58] sm:$0xff]
  %v414 = vld [vmem:[%s8 + $0x60] sm:$0x33]
  %v415 = vld [vmem:[%s9] sm:$0x3]
  %v417 = vlaneseq
  %v418 = vshrl.u32 %v417, 7
  %v419 = vsub.s32 0, %v418
  %v420 = vrot.slane %v415, %v419
  %v421 = vlaneseq
  %v422 = vshrl.u32 %v421, 7
  %v423 = vsub.s32 1, %v422
  %v424 = vrot.slane %v415, %v423
  %v440 = vunpack.c.l.b16 %v402
  %v441 = vunpack.c.h.b16 %v402
  %v442 = vunpack.c.l.b16 %v403
  %v443 = vunpack.c.h.b16 %v403
  %v444 = vunpack.c.l.b16 %v404
  %v445 = vunpack.c.h.b16 %v404
  %v446 = vunpack.c.l.b16 %v405
  %v447 = vunpack.c.h.b16 %v405
  %v448 = vunpack.c.l.b16 %v406
  %v449 = vunpack.c.h.b16 %v406
  %v450 = vunpack.c.l.b16 %v407
  %v451 = vunpack.c.h.b16 %v407
  %v452 = vunpack.c.l.b16 %v408
  %v453 = vunpack.c.h.b16 %v408
  %v454 = vunpack.c.l.b16 %v409
  %v455 = vunpack.c.h.b16 %v409
  %v456 = vunpack.c.l.b16 %v410
  %v457 = vunpack.c.h.b16 %v410
  %v458 = vunpack.c.l.b16 %v411
  %v459 = vunpack.c.h.b16 %v411
  %v460 = vunpack.c.l.b16 %v412
  %v461 = vunpack.c.h.b16 %v412
  %v462 = vunpack.c.l.b16 %v413
  %v463 = vunpack.c.h.b16 %v413
  %v464 = vunpack.c.l.b16 %v414
  %v465 = vunpack.c.h.b16 %v414
  %v466 = vpack.c.b16 %v442, %v440
  %v467 = vpack.c.b16 %v443, %v441
  %v468 = vpack.c.b16 %v446, %v444
  %v469 = vpack.c.b16 %v447, %v445
  %v470 = vpack.c.b16 %v450, %v448
  %v471 = vpack.c.b16 %v451, %v449
  %v472 = vpack.c.b16 %v454, %v452
  %v473 = vpack.c.b16 %v455, %v453
  %v474 = vpack.c.b16 %v458, %v456
  %v475 = vpack.c.b16 %v459, %v457
  %v476 = vpack.c.b16 %v462, %v460
  %v477 = vpack.c.b16 %v463, %v461
  %v478 = vpack.c.b16 %v464, %v464
  %v479 = vpack.c.b16 %v465, %v465
  %v493 = vsel %vm46, %v401, 0
  %v496 = vsel %vm345, %v478, 0
  %v499 = vsel %vm345, %v479, 0
  %501 = vmatprep.subr.bf16.mxu0 0
  %502 = vmatpush1.bf16.msra.mxu0 0
  %503 = vmatprep.subr.bf16.mxu0 %v499
  %504 = vmatpush1.bf16.msra.mxu0 %v496
  %505 = vmatprep.subr.bf16.mxu0 %v477
  %506 = vmatpush1.bf16.msra.mxu0 %v476
  %507 = vmatprep.subr.bf16.mxu0 %v475
  %508 = vmatpush1.bf16.msra.mxu0 %v474
  %509 = vmatprep.subr.bf16.mxu0 %v473
  %510 = vmatpush1.bf16.msra.mxu0 %v472
  %511 = vmatprep.subr.bf16.mxu0 %v471
  %512 = vmatpush1.bf16.msra.mxu0 %v470
  %513 = vmatprep.subr.bf16.mxu0 %v469
  %514 = vmatpush1.bf16.msra.mxu0 %v468
  %515 = vmatprep.subr.bf16.mxu0 %v467
  %516 = vmatpush1.bf16.msra.mxu0 %v466
  %517 = vmatprep.subr.bf16.mxu0 0
  %518 = vmatpush2.bf16.msra.mxu0 0
  %519 = vmatprep.subr.bf16.mxu0 0
  %520 = vmatpush2.bf16.msra.mxu0 0
  %521 = vmatprep.subr.bf16.mxu0 0
  %522 = vmatpush2.bf16.msra.mxu0 0
  %523 = vmatprep.subr.bf16.mxu0 0
  %524 = vmatpush2.bf16.msra.mxu0 0
  %525 = vmatprep.subr.bf16.mxu0 0
  %526 = vmatpush2.bf16.msra.mxu0 0
  %527 = vmatprep.subr.bf16.mxu0 0
  %528 = vmatpush2.bf16.msra.mxu0 0
  %529 = vmatprep.subr.bf16.mxu0 0
  %530 = vmatpush2.bf16.msra.mxu0 0
  %531 = vmatprep.subr.bf16.mxu0 0
  %532 = vmatpush2.bf16.msra.mxu0 0
  %533 = vmatprep.mubr.bf16.mxu0 0
  %534 = vmatmul.mubr.bf16.gmra.mxu0 %v493
  %v535 = vpop.f32.mrf.mxu0
  %v536 = vadd.f32 %v420, %v535
  %v537 = vpop.f32.mrf.mxu0
  %v538 = vadd.f32 %v424, %v537
  %v539 = vpop.f32.mrf.mxu0
  %v540 = vadd.f32 %v420, %v539
  %v541 = vpop.f32.mrf.mxu0
  %v542 = vadd.f32 %v424, %v541
  %543 = vdwg.mxu0
  %v544 = vmax.f32 %v536, 0.0
  %v545 = vmax.f32 %v538, 0.0
  %v546 = vmax.f32 %v540, 0.0
  %v547 = vmax.f32 %v542, 0.0
  %v548 = vld [vmem:[%s10] sm:$0x3]
  %v550 = vlaneseq
  %v551 = vshrl.u32 %v550, 7
  %v552 = vsub.s32 0, %v551
  %v553 = vrot.slane %v548, %v552
  %v554 = vlaneseq
  %v555 = vshrl.u32 %v554, 7
  %v556 = vsub.s32 1, %v555
  %v557 = vrot.slane %v548, %v556
  %v560 = vmul.f32 %v544, %v553
  %v561 = vmul.f32 %v545, %v557
  %v562 = vmul.f32 %v546, %v553
  %v563 = vmul.f32 %v547, %v557
  %vm564 = vcmask 588800
  %v565 = vsel %vm564, %v561, 0.0
  %v566 = vadd.f32 %v560, %v565
  %567 = vadd.xlane.f32.xlu0 %v566
  %v568 = vpop.xlane.xlu0 %567
  %v569 = vsel %vm564, %v563, 0.0
  %v570 = vadd.f32 %v562, %v569
  %571 = vadd.xlane.f32.xlu0 %v570
  %v572 = vpop.xlane.xlu0 %571
  %v573 = vld [vmem:[#allocation2] sm:$0x1]
  %v575 = vlaneseq
  %v576 = vshrl.u32 %v575, 7
  %v577 = vsub.s32 0, %v576
  %v578 = vrot.slane %v573, %v577
  %v580 = vadd.f32 %v568, %v578
  %v581 = vadd.f32 %v572, %v578
  %vm582 = vcmask 7168
  %583 = vst.msk [vmem:[%s12] sm:$0xff] %vm582, %v580
  %584 = vst.msk [vmem:[%s12 + $0x8] sm:$0xff] %vm582, %v581
  // Predicated region
  $region50: #{base_model_forward.25} parent=0 // pred_check
    _
  $region51: #{base_model_forward.25} parent=0 // pred_check_branch
    %586 = sbr.rel (0) target = $region53
  $region52: #{base_model_forward.25} parent=0 // pred_region
    _
  $region53: #{base_model_forward.25} parent=0 // pred_fallthru
    _
  // Predicated region
  $region54: #{base_model_forward.25} parent=0 // pred_check
    _
  $region55: #{base_model_forward.25} parent=0 // pred_check_branch
    %588 = sbr.rel (0) target = $region57
  $region56: #{base_model_forward.25} parent=0 // pred_region
    _
  $region57: #{base_model_forward.25} parent=0 // pred_fallthru
    _

// kernel: base_model_forward.15
$region0: #{base_model_forward.15}
  #allocation0 [shape = 'u32[]', space=smem, size = 0x4, offset = 0x4, fixed_abs, tag = 'smem constant byte address 0x4 - core index']
  #allocation1 [shape = 'u32[144,128]{1,0:T(1,128)}', space=vmem, size = 0x12000, scoped, tag = 'internal scratch']
  %s0 = inlined_call_operand.vmem [shape: f32[64,232], index: 0, kind: input, shape index: {}]
  %s1 = inlined_call_operand.vmem [shape: f32[64,99], index: 1, kind: input, shape index: {}]
  %s2 = inlined_call_operand.vmem [shape: bf16[99,99], index: 2, kind: input, shape index: {}]
  %s3 = inlined_call_operand.vmem [shape: bf16[232,100], index: 3, kind: input, shape index: {}]
  %s4 = inlined_call_operand.vmem [shape: bf16[33,100], index: 4, kind: input, shape index: {}]
  %s5 = inlined_call_operand.vmem [shape: f32[1,100], index: 5, kind: input, shape index: {}]
  %s6 = inlined_call_operand.vmem [shape: bf16[99,48], index: 6, kind: input, shape index: {}]
  %s7 = inlined_call_operand.vmem [shape: bf16[100,16], index: 7, kind: input, shape index: {}]
  %s8 = inlined_call_operand.vmem [shape: f32[1,16], index: 8, kind: input, shape index: {}]
  %s9 = inlined_call_operand.vmem [shape: bf16[48,48], index: 9, kind: input, shape index: {}]
  %s10 = inlined_call_operand.vmem [shape: bf16[100,100], index: 10, kind: input, shape index: {}]
  %s11 = inlined_call_operand.vmem [shape: bf16[16,100], index: 11, kind: input, shape index: {}]
  %s12 = inlined_call_operand.vmem [shape: f32[1,100], index: 12, kind: input, shape index: {}]
  %s13 = inlined_call_operand.vmem [shape: bf16[48,48], index: 13, kind: input, shape index: {}]
  %s14 = inlined_call_operand.vmem [shape: bf16[100,16], index: 14, kind: input, shape index: {}]
  %s15 = inlined_call_operand.vmem [shape: f32[1,16], index: 15, kind: input, shape index: {}]
  %s16 = inlined_call_operand.vmem [shape: bf16[48,48], index: 16, kind: input, shape index: {}]
  %s17 = inlined_call_operand.vmem [shape: bf16[100,100], index: 17, kind: input, shape index: {}]
  %s18 = inlined_call_operand.vmem [shape: bf16[16,100], index: 18, kind: input, shape index: {}]
  %s19 = inlined_call_operand.vmem [shape: f32[1,100], index: 19, kind: input, shape index: {}]
  %s20 = inlined_call_operand.vmem [shape: bf16[48,48], index: 20, kind: input, shape index: {}]
  %s21 = inlined_call_operand.vmem [shape: bf16[100,16], index: 21, kind: input, shape index: {}]
  %s22 = inlined_call_operand.vmem [shape: f32[1,16], index: 22, kind: input, shape index: {}]
  %s23 = inlined_call_operand.vmem [shape: f32[64,100], index: 23, kind: output, shape index: {0}]
  %s24 = inlined_call_operand.vmem [shape: f32[64,48], index: 24, kind: output, shape index: {1}]
  %25 = xla_tuple %s23, %s24
  %s26 = sld [smem:[#allocation0]]
  $region110: #{base_model_forward.15} parent=0
    _
  %s28 = ssub.s32 1, %s26
  %s29 = scalar_select 0, %s28, %s26
  // Predicated region
  $region2: #{base_model_forward.15} parent=0 // pred_check
    _
  $region3: #{base_model_forward.15} parent=0 // pred_check_branch
    %31 = sbr.rel (0) target = $region5
  $region4: #{base_model_forward.15} parent=0 // pred_region
    _
  $region5: #{base_model_forward.15} parent=0 // pred_fallthru
    _
  // Predicated region
  $region6: #{base_model_forward.15} parent=0 // pred_check
    _
  $region7: #{base_model_forward.15} parent=0 // pred_check_branch
    %33 = sbr.rel (0) target = $region9
  $region8: #{base_model_forward.15} parent=0 // pred_region
    _
  $region9: #{base_model_forward.15} parent=0 // pred_fallthru
    _
  // Predicated region
  $region10: #{base_model_forward.15} parent=0 // pred_check
    _
  $region11: #{base_model_forward.15} parent=0 // pred_check_branch
    %35 = sbr.rel (0) target = $region13
  $region12: #{base_model_forward.15} parent=0 // pred_region
    _
  $region13: #{base_model_forward.15} parent=0 // pred_fallthru
    _
  // Predicated region
  $region14: #{base_model_forward.15} parent=0 // pred_check
    _
  $region15: #{base_model_forward.15} parent=0 // pred_check_branch
    %37 = sbr.rel (0) target = $region17
  $region16: #{base_model_forward.15} parent=0 // pred_region
    _
  $region17: #{base_model_forward.15} parent=0 // pred_fallthru
    _
  // Predicated region
  $region18: #{base_model_forward.15} parent=0 // pred_check
    _
  $region19: #{base_model_forward.15} parent=0 // pred_check_branch
    %39 = sbr.rel (0) target = $region21
  $region20: #{base_model_forward.15} parent=0 // pred_region
    _
  $region21: #{base_model_forward.15} parent=0 // pred_fallthru
    _
  // Predicated region
  $region22: #{base_model_forward.15} parent=0 // pred_check
    _
  $region23: #{base_model_forward.15} parent=0 // pred_check_branch
    %41 = sbr.rel (0) target = $region25
  $region24: #{base_model_forward.15} parent=0 // pred_region
    _
  $region25: #{base_model_forward.15} parent=0 // pred_fallthru
    _
  // Predicated region
  $region26: #{base_model_forward.15} parent=0 // pred_check
    _
  $region27: #{base_model_forward.15} parent=0 // pred_check_branch
    %43 = sbr.rel (0) target = $region29
  $region28: #{base_model_forward.15} parent=0 // pred_region
    _
  $region29: #{base_model_forward.15} parent=0 // pred_fallthru
    _
  // Predicated region
  $region30: #{base_model_forward.15} parent=0 // pred_check
    _
  $region31: #{base_model_forward.15} parent=0 // pred_check_branch
    %45 = sbr.rel (0) target = $region33
  $region32: #{base_model_forward.15} parent=0 // pred_region
    _
  $region33: #{base_model_forward.15} parent=0 // pred_fallthru
    _
  // Predicated region
  $region34: #{base_model_forward.15} parent=0 // pred_check
    _
  $region35: #{base_model_forward.15} parent=0 // pred_check_branch
    %47 = sbr.rel (0) target = $region37
  $region36: #{base_model_forward.15} parent=0 // pred_region
    _
  $region37: #{base_model_forward.15} parent=0 // pred_fallthru
    _
  // Predicated region
  $region38: #{base_model_forward.15} parent=0 // pred_check
    _
  $region39: #{base_model_forward.15} parent=0 // pred_check_branch
    %49 = sbr.rel (0) target = $region41
  $region40: #{base_model_forward.15} parent=0 // pred_region
    _
  $region41: #{base_model_forward.15} parent=0 // pred_fallthru
    _
  // Predicated region
  $region42: #{base_model_forward.15} parent=0 // pred_check
    _
  $region43: #{base_model_forward.15} parent=0 // pred_check_branch
    %51 = sbr.rel (0) target = $region45
  $region44: #{base_model_forward.15} parent=0 // pred_region
    _
  $region45: #{base_model_forward.15} parent=0 // pred_fallthru
    _
  // Predicated region
  $region46: #{base_model_forward.15} parent=0 // pred_check
    _
  $region47: #{base_model_forward.15} parent=0 // pred_check_branch
    %53 = sbr.rel (0) target = $region49
  $region48: #{base_model_forward.15} parent=0 // pred_region
    _
  $region49: #{base_model_forward.15} parent=0 // pred_fallthru
    _
  // Predicated region
  $region50: #{base_model_forward.15} parent=0 // pred_check
    _
  $region51: #{base_model_forward.15} parent=0 // pred_check_branch
    %55 = sbr.rel (0) target = $region53
  $region52: #{base_model_forward.15} parent=0 // pred_region
    _
  $region53: #{base_model_forward.15} parent=0 // pred_fallthru
    _
  // Predicated region
  $region54: #{base_model_forward.15} parent=0 // pred_check
    _
  $region55: #{base_model_forward.15} parent=0 // pred_check_branch
    %57 = sbr.rel (0) target = $region57
  $region56: #{base_model_forward.15} parent=0 // pred_region
    _
  $region57: #{base_model_forward.15} parent=0 // pred_fallthru
    _
  // Predicated region
  $region58: #{base_model_forward.15} parent=0 // pred_check
    _
  $region59: #{base_model_forward.15} parent=0 // pred_check_branch
    %59 = sbr.rel (0) target = $region61
  $region60: #{base_model_forward.15} parent=0 // pred_region
    _
  $region61: #{base_model_forward.15} parent=0 // pred_fallthru
    _
  // Predicated region
  $region62: #{base_model_forward.15} parent=0 // pred_check
    _
  $region63: #{base_model_forward.15} parent=0 // pred_check_branch
    %61 = sbr.rel (0) target = $region65
  $region64: #{base_model_forward.15} parent=0 // pred_region
    _
  $region65: #{base_model_forward.15} parent=0 // pred_fallthru
    _
  // Predicated region
  $region66: #{base_model_forward.15} parent=0 // pred_check
    _
  $region67: #{base_model_forward.15} parent=0 // pred_check_branch
    %63 = sbr.rel (0) target = $region69
  $region68: #{base_model_forward.15} parent=0 // pred_region
    _
  $region69: #{base_model_forward.15} parent=0 // pred_fallthru
    _
  // Predicated region
  $region70: #{base_model_forward.15} parent=0 // pred_check
    _
  $region71: #{base_model_forward.15} parent=0 // pred_check_branch
    %65 = sbr.rel (0) target = $region73
  $region72: #{base_model_forward.15} parent=0 // pred_region
    _
  $region73: #{base_model_forward.15} parent=0 // pred_fallthru
    _
  // Predicated region
  $region74: #{base_model_forward.15} parent=0 // pred_check
    _
  $region75: #{base_model_forward.15} parent=0 // pred_check_branch
    %67 = sbr.rel (0) target = $region77
  $region76: #{base_model_forward.15} parent=0 // pred_region
    _
  $region77: #{base_model_forward.15} parent=0 // pred_fallthru
    _
  // Predicated region
  $region78: #{base_model_forward.15} parent=0 // pred_check
    _
  $region79: #{base_model_forward.15} parent=0 // pred_check_branch
    %69 = sbr.rel (0) target = $region81
  $region80: #{base_model_forward.15} parent=0 // pred_region
    _
  $region81: #{base_model_forward.15} parent=0 // pred_fallthru
    _
  // Predicated region
  $region82: #{base_model_forward.15} parent=0 // pred_check
    _
  $region83: #{base_model_forward.15} parent=0 // pred_check_branch
    %71 = sbr.rel (0) target = $region85
  $region84: #{base_model_forward.15} parent=0 // pred_region
    _
  $region85: #{base_model_forward.15} parent=0 // pred_fallthru
    _
  // Predicated region
  $region86: #{base_model_forward.15} parent=0 // pred_check
    _
  $region87: #{base_model_forward.15} parent=0 // pred_check_branch
    %73 = sbr.rel (0) target = $region89
  $region88: #{base_model_forward.15} parent=0 // pred_region
    _
  $region89: #{base_model_forward.15} parent=0 // pred_fallthru
    _
  // Predicated region
  $region90: #{base_model_forward.15} parent=0 // pred_check
    _
  $region91: #{base_model_forward.15} parent=0 // pred_check_branch
    %75 = sbr.rel (0) target = $region93
  $region92: #{base_model_forward.15} parent=0 // pred_region
    _
  $region93: #{base_model_forward.15} parent=0 // pred_fallthru
    _
  %v77 = vld [vmem:[%s0] sm:$0xff]
  %v78 = vld [vmem:[%s0 + $0x8] sm:$0xff]
  %v79 = vld [vmem:[%s0 + $0x10] sm:$0xff]
  %v80 = vld [vmem:[%s0 + $0x18] sm:$0xff]
  %v81 = vld [vmem:[%s0 + $0x20] sm:$0xff]
  %v82 = vld [vmem:[%s0 + $0x28] sm:$0xff]
  %v83 = vld [vmem:[%s0 + $0x30] sm:$0xff]
  %v84 = vld [vmem:[%s0 + $0x38] sm:$0xff]
  %v85 = vld [vmem:[%s0 + $0x40] sm:$0xff]
  %v86 = vld [vmem:[%s0 + $0x48] sm:$0xff]
  %v87 = vld [vmem:[%s0 + $0x50] sm:$0xff]
  %v88 = vld [vmem:[%s0 + $0x58] sm:$0xff]
  %v89 = vld [vmem:[%s0 + $0x60] sm:$0xff]
  %v90 = vld [vmem:[%s0 + $0x68] sm:$0xff]
  %v91 = vld [vmem:[%s0 + $0x70] sm:$0xff]
  %v92 = vld [vmem:[%s0 + $0x78] sm:$0xff]
  %v93 = vld [vmem:[%s1] sm:$0xff]
  %v94 = vld [vmem:[%s1 + $0x8] sm:$0xff]
  %v95 = vld [vmem:[%s1 + $0x10] sm:$0xff]
  %v96 = vld [vmem:[%s1 + $0x18] sm:$0xff]
  %v97 = vld [vmem:[%s1 + $0x20] sm:$0xff]
  %v98 = vld [vmem:[%s1 + $0x28] sm:$0xff]
  %v99 = vld [vmem:[%s1 + $0x30] sm:$0xff]
  %v100 = vld [vmem:[%s1 + $0x38] sm:$0xff]
  %v101 = vpack.c.bf16 %v94, %v93
  %v102 = vpack.c.bf16 %v96, %v95
  %v103 = vpack.c.bf16 %v98, %v97
  %v104 = vpack.c.bf16 %v100, %v99
  %v105 = vld [vmem:[%s2] sm:$0xf]
  %v106 = vld [vmem:[%s2 + $0x4] sm:$0xf]
  %v107 = vld [vmem:[%s2 + $0x8] sm:$0xf]
  %v108 = vld [vmem:[%s2 + $0xc] sm:$0xf]
  %v109 = vld [vmem:[%s2 + $0x10] sm:$0xf]
  %v110 = vld [vmem:[%s2 + $0x14] sm:$0xf]
  %v111 = vld [vmem:[%s2 + $0x18] sm:$0xf]
  %v112 = vld [vmem:[%s2 + $0x1c] sm:$0xf]
  %v113 = vld [vmem:[%s2 + $0x20] sm:$0xf]
  %v114 = vld [vmem:[%s2 + $0x24] sm:$0xf]
  %v115 = vld [vmem:[%s2 + $0x28] sm:$0xf]
  %v116 = vld [vmem:[%s2 + $0x2c] sm:$0xf]
  %v117 = vld [vmem:[%s2 + $0x30] sm:$0x3]
  %v131 = vunpack.c.l.b16 %v105
  %v132 = vunpack.c.l.b16 %v106
  %v133 = vunpack.c.l.b16 %v107
  %v134 = vunpack.c.l.b16 %v108
  %v135 = vunpack.c.l.b16 %v109
  %v136 = vunpack.c.l.b16 %v110
  %v137 = vunpack.c.l.b16 %v111
  %v138 = vunpack.c.l.b16 %v112
  %v139 = vunpack.c.l.b16 %v113
  %v140 = vunpack.c.l.b16 %v114
  %v141 = vunpack.c.l.b16 %v115
  %v142 = vunpack.c.l.b16 %v116
  %v143 = vunpack.c.l.b16 %v117
  %v144 = vpack.c.b16 %v132, %v131
  %v145 = vpack.c.b16 %v134, %v133
  %v146 = vpack.c.b16 %v136, %v135
  %v147 = vpack.c.b16 %v138, %v137
  %v148 = vpack.c.b16 %v140, %v139
  %v149 = vpack.c.b16 %v142, %v141
  %v150 = vpack.c.b16 %v143, %v143
  %vm157 = vcmask 809984
  %v159 = vsel %vm157, %v101, 0
  %v162 = vsel %vm157, %v102, 0
  %v165 = vsel %vm157, %v103, 0
  %v168 = vsel %vm157, %v104, 0
  %vm170 = vcmask 1040384
  %vm171 = vcmask 1041408
  %v172 = vsel %vm170, 4294967295, 65535
  %v173 = vsel %vm171, %v172, 0
  %v175 = vand.u32 %v150, %v173
  %177 = vmatprep.subr.bf16.mxu0 0
  %178 = vmatpush1.bf16.msra.mxu0 0
  %179 = vmatprep.subr.bf16.mxu0 0
  %180 = vmatpush1.bf16.msra.mxu0 %v175
  %181 = vmatprep.subr.bf16.mxu0 0
  %182 = vmatpush1.bf16.msra.mxu0 %v149
  %183 = vmatprep.subr.bf16.mxu0 0
  %184 = vmatpush1.bf16.msra.mxu0 %v148
  %185 = vmatprep.subr.bf16.mxu0 0
  %186 = vmatpush1.bf16.msra.mxu0 %v147
  %187 = vmatprep.subr.bf16.mxu0 0
  %188 = vmatpush1.bf16.msra.mxu0 %v146
  %189 = vmatprep.subr.bf16.mxu0 0
  %190 = vmatpush1.bf16.msra.mxu0 %v145
  %191 = vmatprep.subr.bf16.mxu0 0
  %192 = vmatpush1.bf16.msra.mxu0 %v144
  %193 = vmatprep.subr.bf16.mxu0 0
  %194 = vmatpush2.bf16.msra.mxu0 0
  %195 = vmatprep.subr.bf16.mxu0 0
  %196 = vmatpush2.bf16.msra.mxu0 0
  %197 = vmatprep.subr.bf16.mxu0 0
  %198 = vmatpush2.bf16.msra.mxu0 0
  %199 = vmatprep.subr.bf16.mxu0 0
  %200 = vmatpush2.bf16.msra.mxu0 0
  %201 = vmatprep.subr.bf16.mxu0 0
  %202 = vmatpush2.bf16.msra.mxu0 0
  %203 = vmatprep.subr.bf16.mxu0 0
  %204 = vmatpush2.bf16.msra.mxu0 0
  %205 = vmatprep.subr.bf16.mxu0 0
  %206 = vmatpush2.bf16.msra.mxu0 0
  %207 = vmatprep.subr.bf16.mxu0 0
  %208 = vmatpush2.bf16.msra.mxu0 0
  %209 = vmatprep.mubr.bf16.mxu0 0
  %210 = vmatmul.mubr.bf16.gmra.mxu0 %v159
  %v211 = vpop.f32.mrf.mxu0
  %v212 = vadd.f32 0.0, %v211
  %v213 = vpop.f32.mrf.mxu0
  %v214 = vpop.f32.mrf.mxu0
  %v215 = vadd.f32 0.0, %v214
  %v216 = vpop.f32.mrf.mxu0
  %217 = vmatprep.mubr.bf16.mxu0 0
  %218 = vmatmul.mubr.bf16.gmra.mxu0 %v162
  %v219 = vpop.f32.mrf.mxu0
  %v220 = vadd.f32 0.0, %v219
  %v221 = vpop.f32.mrf.mxu0
  %v222 = vpop.f32.mrf.mxu0
  %v223 = vadd.f32 0.0, %v222
  %v224 = vpop.f32.mrf.mxu0
  %225 = vmatprep.mubr.bf16.mxu0 0
  %226 = vmatmul.mubr.bf16.gmra.mxu0 %v165
  %v227 = vpop.f32.mrf.mxu0
  %v228 = vadd.f32 0.0, %v227
  %v229 = vpop.f32.mrf.mxu0
  %v230 = vpop.f32.mrf.mxu0
  %v231 = vadd.f32 0.0, %v230
  %v232 = vpop.f32.mrf.mxu0
  %233 = vmatprep.mubr.bf16.mxu0 0
  %234 = vmatmul.mubr.bf16.gmra.mxu0 %v168
  %v235 = vpop.f32.mrf.mxu0
  %v236 = vadd.f32 0.0, %v235
  %v237 = vpop.f32.mrf.mxu0
  %v238 = vpop.f32.mrf.mxu0
  %v239 = vadd.f32 0.0, %v238
  %v240 = vpop.f32.mrf.mxu0
  %241 = vdwg.mxu0
  %v242 = vmul.f32 %v212, %v212
  %v243 = vmul.f32 %v215, %v215
  %v244 = vmul.f32 %v220, %v220
  %v245 = vmul.f32 %v223, %v223
  %v246 = vmul.f32 %v228, %v228
  %v247 = vmul.f32 %v231, %v231
  %v248 = vmul.f32 %v236, %v236
  %v249 = vmul.f32 %v239, %v239
  %258 = vrot.lane.b32.xlu0 %v242, 95
  %v259 = vpop.permute.xlu0 %258
  %260 = vrot.lane.b32.xlu0 %v243, 95
  %v261 = vpop.permute.xlu0 %260
  %262 = vrot.lane.b32.xlu0 %v244, 95
  %v263 = vpop.permute.xlu0 %262
  %264 = vrot.lane.b32.xlu0 %v245, 95
  %v265 = vpop.permute.xlu0 %264
  %266 = vrot.lane.b32.xlu0 %v246, 95
  %v267 = vpop.permute.xlu0 %266
  %268 = vrot.lane.b32.xlu0 %v247, 95
  %v269 = vpop.permute.xlu0 %268
  %270 = vrot.lane.b32.xlu0 %v248, 95
  %v271 = vpop.permute.xlu0 %270
  %272 = vrot.lane.b32.xlu0 %v249, 95
  %v273 = vpop.permute.xlu0 %272
  %v282 = vadd.f32 %v242, %v259
  %v283 = vadd.f32 %v243, %v261
  %v284 = vadd.f32 %v244, %v263
  %v285 = vadd.f32 %v245, %v265
  %v286 = vadd.f32 %v246, %v267
  %v287 = vadd.f32 %v247, %v269
  %v288 = vadd.f32 %v248, %v271
  %v289 = vadd.f32 %v249, %v273
  %290 = vrot.lane.b32.xlu0 %v242, 62
  %v291 = vpop.permute.xlu0 %290
  %292 = vrot.lane.b32.xlu0 %v243, 62
  %v293 = vpop.permute.xlu0 %292
  %294 = vrot.lane.b32.xlu0 %v244, 62
  %v295 = vpop.permute.xlu0 %294
  %296 = vrot.lane.b32.xlu0 %v245, 62
  %v297 = vpop.permute.xlu0 %296
  %298 = vrot.lane.b32.xlu0 %v246, 62
  %v299 = vpop.permute.xlu0 %298
  %300 = vrot.lane.b32.xlu0 %v247, 62
  %v301 = vpop.permute.xlu0 %300
  %302 = vrot.lane.b32.xlu0 %v248, 62
  %v303 = vpop.permute.xlu0 %302
  %304 = vrot.lane.b32.xlu0 %v249, 62
  %v305 = vpop.permute.xlu0 %304
  %v314 = vadd.f32 %v282, %v291
  %v315 = vadd.f32 %v283, %v293
  %v316 = vadd.f32 %v284, %v295
  %v317 = vadd.f32 %v285, %v297
  %v318 = vadd.f32 %v286, %v299
  %v319 = vadd.f32 %v287, %v301
  %v320 = vadd.f32 %v288, %v303
  %v321 = vadd.f32 %v289, %v305
  %v322 = vmax.f32 %v314, 1e-08
  %v323 = vmax.f32 %v315, 1e-08
  %v324 = vmax.f32 %v316, 1e-08
  %v325 = vmax.f32 %v317, 1e-08
  %v326 = vmax.f32 %v318, 1e-08
  %v327 = vmax.f32 %v319, 1e-08
  %v328 = vmax.f32 %v320, 1e-08
  %v329 = vmax.f32 %v321, 1e-08
  %v330 = vrsqrt.pop %v322
  %v331 = vmul.f32 %v322, %v330
  %vm332 = vcmp.eq.f32.partialorder %v322, inf
  %v333 = vsel %vm332, %v322, %v331
  %vm334 = vcmp.eq.f32.partialorder %v322, 0.0
  %v335 = vand.u32 %v322, 2147483648
  %v336 = vsel %vm334, %v335, %v333
  %v337 = vrsqrt.pop %v323
  %v338 = vmul.f32 %v323, %v337
  %vm339 = vcmp.eq.f32.partialorder %v323, inf
  %v340 = vsel %vm339, %v323, %v338
  %vm341 = vcmp.eq.f32.partialorder %v323, 0.0
  %v342 = vand.u32 %v323, 2147483648
  %v343 = vsel %vm341, %v342, %v340
  %v344 = vrsqrt.pop %v324
  %v345 = vmul.f32 %v324, %v344
  %vm346 = vcmp.eq.f32.partialorder %v324, inf
  %v347 = vsel %vm346, %v324, %v345
  %vm348 = vcmp.eq.f32.partialorder %v324, 0.0
  %v349 = vand.u32 %v324, 2147483648
  %v350 = vsel %vm348, %v349, %v347
  %v351 = vrsqrt.pop %v325
  %v352 = vmul.f32 %v325, %v351
  %vm353 = vcmp.eq.f32.partialorder %v325, inf
  %v354 = vsel %vm353, %v325, %v352
  %vm355 = vcmp.eq.f32.partialorder %v325, 0.0
  %v356 = vand.u32 %v325, 2147483648
  %v357 = vsel %vm355, %v356, %v354
  %v358 = vrsqrt.pop %v326
  %v359 = vmul.f32 %v326, %v358
  %vm360 = vcmp.eq.f32.partialorder %v326, inf
  %v361 = vsel %vm360, %v326, %v359
  %vm362 = vcmp.eq.f32.partialorder %v326, 0.0
  %v363 = vand.u32 %v326, 2147483648
  %v364 = vsel %vm362, %v363, %v361
  %v365 = vrsqrt.pop %v327
  %v366 = vmul.f32 %v327, %v365
  %vm367 = vcmp.eq.f32.partialorder %v327, inf
  %v368 = vsel %vm367, %v327, %v366
  %vm369 = vcmp.eq.f32.partialorder %v327, 0.0
  %v370 = vand.u32 %v327, 2147483648
  %v371 = vsel %vm369, %v370, %v368
  %v372 = vrsqrt.pop %v328
  %v373 = vmul.f32 %v328, %v372
  %vm374 = vcmp.eq.f32.partialorder %v328, inf
  %v375 = vsel %vm374, %v328, %v373
  %vm376 = vcmp.eq.f32.partialorder %v328, 0.0
  %v377 = vand.u32 %v328, 2147483648
  %v378 = vsel %vm376, %v377, %v375
  %v379 = vrsqrt.pop %v329
  %v380 = vmul.f32 %v329, %v379
  %vm381 = vcmp.eq.f32.partialorder %v329, inf
  %v382 = vsel %vm381, %v329, %v380
  %vm383 = vcmp.eq.f32.partialorder %v329, 0.0
  %v384 = vand.u32 %v329, 2147483648
  %v385 = vsel %vm383, %v384, %v382
  %v386 = vpack.c.bf16 %v79, %v77
  %v387 = vpack.c.bf16 %v80, %v78
  %v388 = vpack.c.bf16 %v83, %v81
  %v389 = vpack.c.bf16 %v84, %v82
  %v390 = vpack.c.bf16 %v87, %v85
  %v391 = vpack.c.bf16 %v88, %v86
  %v392 = vpack.c.bf16 %v91, %v89
  %v393 = vpack.c.bf16 %v92, %v90
  %v394 = vld [vmem:[%s3] sm:$0xf]
  %v395 = vld [vmem:[%s3 + $0x4] sm:$0xf]
  %v396 = vld [vmem:[%s3 + $0x8] sm:$0xf]
  %v397 = vld [vmem:[%s3 + $0xc] sm:$0xf]
  %v398 = vld [vmem:[%s3 + $0x10] sm:$0xf]
  %v399 = vld [vmem:[%s3 + $0x14] sm:$0xf]
  %v400 = vld [vmem:[%s3 + $0x18] sm:$0xf]
  %v401 = vld [vmem:[%s3 + $0x1c] sm:$0xf]
  %v402 = vld [vmem:[%s3 + $0x20] sm:$0xf]
  %v403 = vld [vmem:[%s3 + $0x24] sm:$0xf]
  %v404 = vld [vmem:[%s3 + $0x28] sm:$0xf]
  %v405 = vld [vmem:[%s3 + $0x2c] sm:$0xf]
  %v406 = vld [vmem:[%s3 + $0x30] sm:$0xf]
  %v407 = vld [vmem:[%s3 + $0x34] sm:$0xf]
  %v408 = vld [vmem:[%s3 + $0x38] sm:$0xf]
  %v409 = vld [vmem:[%s3 + $0x3c] sm:$0xf]
  %v410 = vld [vmem:[%s3 + $0x40] sm:$0xf]
  %v411 = vld [vmem:[%s3 + $0x44] sm:$0xf]
  %v412 = vld [vmem:[%s3 + $0x48] sm:$0xf]
  %v413 = vld [vmem:[%s3 + $0x4c] sm:$0xf]
  %v414 = vld [vmem:[%s3 + $0x50] sm:$0xf]
  %v415 = vld [vmem:[%s3 + $0x54] sm:$0xf]
  %v416 = vld [vmem:[%s3 + $0x58] sm:$0xf]
  %v417 = vld [vmem:[%s3 + $0x5c] sm:$0xf]
  %v418 = vld [vmem:[%s3 + $0x60] sm:$0xf]
  %v419 = vld [vmem:[%s3 + $0x64] sm:$0xf]
  %v420 = vld [vmem:[%s3 + $0x68] sm:$0xf]
  %v421 = vld [vmem:[%s3 + $0x6c] sm:$0xf]
  %v422 = vld [vmem:[%s3 + $0x70] sm:$0xf]
  %v423 = vpack.c.bf16 %v343, %v336
  %v424 = vpack.c.bf16 %v357, %v350
  %v425 = vpack.c.bf16 %v371, %v364
  %v426 = vpack.c.bf16 %v385, %v378
  %v427 = vld [vmem:[%s4] sm:$0xf]
  %v428 = vld [vmem:[%s4 + $0x4] sm:$0xf]
  %v429 = vld [vmem:[%s4 + $0x8] sm:$0xf]
  %v430 = vld [vmem:[%s4 + $0xc] sm:$0xf]
  %v431 = vld [vmem:[%s4 + $0x10] sm:$0x1]
  %v437 = vunpack.c.l.b16 %v427
  %v438 = vunpack.c.l.b16 %v428
  %v439 = vunpack.c.l.b16 %v429
  %v440 = vunpack.c.l.b16 %v430
  %v441 = vunpack.c.l.b16 %v431
  %v442 = vpack.c.b16 %v438, %v437
  %v443 = vpack.c.b16 %v440, %v439
  %v444 = vpack.c.b16 %v441, %v441
  %vm447 = vcmask 269312
  %v449 = vsel %vm447, %v423, 0
  %v452 = vsel %vm447, %v424, 0
  %v455 = vsel %vm447, %v425, 0
  %v458 = vsel %vm447, %v426, 0
  %v460 = vsel 0, 4294967295, 65535
  %v461 = vsel %vm170, %v460, 0
  %v463 = vand.u32 %v444, %v461
  %465 = vmatprep.subr.bf16.mxu0 0
  %466 = vmatpush1.bf16.msra.mxu0 0
  %467 = vmatprep.subr.bf16.mxu0 0
  %468 = vmatpush1.bf16.msra.mxu0 0
  %469 = vmatprep.subr.bf16.mxu0 0
  %470 = vmatpush1.bf16.msra.mxu0 0
  %471 = vmatprep.subr.bf16.mxu0 0
  %472 = vmatpush1.bf16.msra.mxu0 0
  %473 = vmatprep.subr.bf16.mxu0 0
  %474 = vmatpush1.bf16.msra.mxu0 0
  %475 = vmatprep.subr.bf16.mxu0 0
  %476 = vmatpush1.bf16.msra.mxu0 %v463
  %477 = vmatprep.subr.bf16.mxu0 0
  %478 = vmatpush1.bf16.msra.mxu0 %v443
  %479 = vmatprep.subr.bf16.mxu0 0
  %480 = vmatpush1.bf16.msra.mxu0 %v442
  %481 = vmatprep.subr.bf16.mxu0 0
  %482 = vmatpush2.bf16.msra.mxu0 0
  %483 = vmatprep.subr.bf16.mxu0 0
  %484 = vmatpush2.bf16.msra.mxu0 0
  %485 = vmatprep.subr.bf16.mxu0 0
  %486 = vmatpush2.bf16.msra.mxu0 0
  %487 = vmatprep.subr.bf16.mxu0 0
  %488 = vmatpush2.bf16.msra.mxu0 0
  %489 = vmatprep.subr.bf16.mxu0 0
  %490 = vmatpush2.bf16.msra.mxu0 0
  %491 = vmatprep.subr.bf16.mxu0 0
  %492 = vmatpush2.bf16.msra.mxu0 0
  %493 = vmatprep.subr.bf16.mxu0 0
  %494 = vmatpush2.bf16.msra.mxu0 0
  %495 = vmatprep.subr.bf16.mxu0 0
  %496 = vmatpush2.bf16.msra.mxu0 0
  %497 = vmatprep.mubr.bf16.mxu0 0
  %498 = vmatmul.mubr.bf16.gmra.mxu0 %v449
  %v499 = vpop.f32.mrf.mxu0
  %v500 = vadd.f32 0.0, %v499
  %v501 = vpop.f32.mrf.mxu0
  %v502 = vpop.f32.mrf.mxu0
  %v503 = vadd.f32 0.0, %v502
  %v504 = vpop.f32.mrf.mxu0
  %505 = vmatprep.mubr.bf16.mxu0 0
  %506 = vmatmul.mubr.bf16.gmra.mxu0 %v452
  %v507 = vpop.f32.mrf.mxu0
  %v508 = vadd.f32 0.0, %v507
  %v509 = vpop.f32.mrf.mxu0
  %v510 = vpop.f32.mrf.mxu0
  %v511 = vadd.f32 0.0, %v510
  %v512 = vpop.f32.mrf.mxu0
  %513 = vmatprep.mubr.bf16.mxu0 0
  %514 = vmatmul.mubr.bf16.gmra.mxu0 %v455
  %v515 = vpop.f32.mrf.mxu0
  %v516 = vadd.f32 0.0, %v515
  %v517 = vpop.f32.mrf.mxu0
  %v518 = vpop.f32.mrf.mxu0
  %v519 = vadd.f32 0.0, %v518
  %v520 = vpop.f32.mrf.mxu0
  %521 = vmatprep.mubr.bf16.mxu0 0
  %522 = vmatmul.mubr.bf16.gmra.mxu0 %v458
  %v523 = vpop.f32.mrf.mxu0
  %v524 = vadd.f32 0.0, %v523
  %v525 = vpop.f32.mrf.mxu0
  %v526 = vpop.f32.mrf.mxu0
  %v527 = vadd.f32 0.0, %v526
  %v528 = vpop.f32.mrf.mxu0
  %529 = vdwg.mxu0
  %v559 = vunpack.c.l.b16 %v394
  %v560 = vunpack.c.l.b16 %v395
  %v561 = vunpack.c.l.b16 %v396
  %v562 = vunpack.c.l.b16 %v397
  %v563 = vunpack.c.l.b16 %v398
  %v564 = vunpack.c.l.b16 %v399
  %v565 = vunpack.c.l.b16 %v400
  %v566 = vunpack.c.l.b16 %v401
  %v567 = vunpack.c.l.b16 %v402
  %v568 = vunpack.c.l.b16 %v403
  %v569 = vunpack.c.l.b16 %v404
  %v570 = vunpack.c.l.b16 %v405
  %v571 = vunpack.c.l.b16 %v406
  %v572 = vunpack.c.l.b16 %v407
  %v573 = vunpack.c.l.b16 %v408
  %v574 = vunpack.c.l.b16 %v409
  %v575 = vunpack.c.l.b16 %v410
  %v576 = vunpack.c.l.b16 %v411
  %v577 = vunpack.c.l.b16 %v412
  %v578 = vunpack.c.l.b16 %v413
  %v579 = vunpack.c.l.b16 %v414
  %v580 = vunpack.c.l.b16 %v415
  %v581 = vunpack.c.l.b16 %v416
  %v582 = vunpack.c.l.b16 %v417
  %v583 = vunpack.c.l.b16 %v418
  %v584 = vunpack.c.l.b16 %v419
  %v585 = vunpack.c.l.b16 %v420
  %v586 = vunpack.c.l.b16 %v421
  %v587 = vunpack.c.l.b16 %v422
  %v588 = vpack.c.b16 %v560, %v559
  %v589 = vpack.c.b16 %v562, %v561
  %v590 = vpack.c.b16 %v564, %v563
  %v591 = vpack.c.b16 %v566, %v565
  %v592 = vpack.c.b16 %v568, %v567
  %v593 = vpack.c.b16 %v570, %v569
  %v594 = vpack.c.b16 %v572, %v571
  %v595 = vpack.c.b16 %v574, %v573
  %v596 = vpack.c.b16 %v576, %v575
  %v597 = vpack.c.b16 %v578, %v577
  %v598 = vpack.c.b16 %v580, %v579
  %v599 = vpack.c.b16 %v582, %v581
  %v600 = vpack.c.b16 %v584, %v583
  %v601 = vpack.c.b16 %v586, %v585
  %v602 = vpack.c.b16 %v587, %v587
  %vm617 = vcmask 850944
  %v619 = vsel %vm617, %v387, 0
  %v622 = vsel %vm617, %v389, 0
  %v625 = vsel %vm617, %v391, 0
  %v628 = vsel %vm617, %v393, 0
  %vm630 = vcmask 1043456
  %v632 = vsel %vm630, %v602, 0
  %634 = vmatprep.subr.bf16.mxu0 0
  %635 = vmatpush1.bf16.msra.mxu0 %v595
  %636 = vmatprep.subr.bf16.mxu0 0
  %637 = vmatpush1.bf16.msra.mxu0 %v594
  %638 = vmatprep.subr.bf16.mxu0 0
  %639 = vmatpush1.bf16.msra.mxu0 %v593
  %640 = vmatprep.subr.bf16.mxu0 0
  %641 = vmatpush1.bf16.msra.mxu0 %v592
  %642 = vmatprep.subr.bf16.mxu0 0
  %643 = vmatpush1.bf16.msra.mxu0 %v591
  %644 = vmatprep.subr.bf16.mxu0 0
  %645 = vmatpush1.bf16.msra.mxu0 %v590
  %646 = vmatprep.subr.bf16.mxu0 0
  %647 = vmatpush1.bf16.msra.mxu0 %v589
  %648 = vmatprep.subr.bf16.mxu0 0
  %649 = vmatpush1.bf16.msra.mxu0 %v588
  %650 = vmatprep.subr.bf16.mxu0 0
  %651 = vmatpush2.bf16.msra.mxu0 0
  %652 = vmatprep.subr.bf16.mxu0 0
  %653 = vmatpush2.bf16.msra.mxu0 %v632
  %654 = vmatprep.subr.bf16.mxu0 0
  %655 = vmatpush2.bf16.msra.mxu0 %v601
  %656 = vmatprep.subr.bf16.mxu0 0
  %657 = vmatpush2.bf16.msra.mxu0 %v600
  %658 = vmatprep.subr.bf16.mxu0 0
  %659 = vmatpush2.bf16.msra.mxu0 %v599
  %660 = vmatprep.subr.bf16.mxu0 0
  %661 = vmatpush2.bf16.msra.mxu0 %v598
  %662 = vmatprep.subr.bf16.mxu0 0
  %663 = vmatpush2.bf16.msra.mxu0 %v597
  %664 = vmatprep.subr.bf16.mxu0 0
  %665 = vmatpush2.bf16.msra.mxu0 %v596
  %666 = vmatprep.mubr.bf16.mxu0 %v619
  %667 = vmatmul.mubr.bf16.gmra.mxu0 %v386
  %v668 = vpop.f32.mrf.mxu0
  %v669 = vadd.f32 %v500, %v668
  %v670 = vpop.f32.mrf.mxu0
  %v671 = vpop.f32.mrf.mxu0
  %v672 = vadd.f32 %v503, %v671
  %v673 = vpop.f32.mrf.mxu0
  %674 = vmatprep.mubr.bf16.mxu0 %v622
  %675 = vmatmul.mubr.bf16.gmra.mxu0 %v388
  %v676 = vpop.f32.mrf.mxu0
  %v677 = vadd.f32 %v508, %v676
  %v678 = vpop.f32.mrf.mxu0
  %v679 = vpop.f32.mrf.mxu0
  %v680 = vadd.f32 %v511, %v679
  %v681 = vpop.f32.mrf.mxu0
  %682 = vmatprep.mubr.bf16.mxu0 %v625
  %683 = vmatmul.mubr.bf16.gmra.mxu0 %v390
  %v684 = vpop.f32.mrf.mxu0
  %v685 = vadd.f32 %v516, %v684
  %v686 = vpop.f32.mrf.mxu0
  %v687 = vpop.f32.mrf.mxu0
  %v688 = vadd.f32 %v519, %v687
  %v689 = vpop.f32.mrf.mxu0
  %690 = vmatprep.mubr.bf16.mxu0 %v628
  %691 = vmatmul.mubr.bf16.gmra.mxu0 %v392
  %v692 = vpop.f32.mrf.mxu0
  %v693 = vadd.f32 %v524, %v692
  %v694 = vpop.f32.mrf.mxu0
  %v695 = vpop.f32.mrf.mxu0
  %v696 = vadd.f32 %v527, %v695
  %v697 = vpop.f32.mrf.mxu0
  %698 = vdwg.mxu0
  %v699 = vld [vmem:[%s5] sm:$0x1]
  %v701 = vlaneseq
  %v702 = vshrl.u32 %v701, 7
  %v703 = vsub.s32 0, %v702
  %v704 = vrot.slane %v699, %v703
  %v706 = vadd.f32 %v669, %v704
  %v707 = vadd.f32 %v672, %v704
  %v708 = vadd.f32 %v677, %v704
  %v709 = vadd.f32 %v680, %v704
  %v710 = vadd.f32 %v685, %v704
  %v711 = vadd.f32 %v688, %v704
  %v712 = vadd.f32 %v693, %v704
  %v713 = vadd.f32 %v696, %v704
  %v714 = vpack.c.bf16 %v707, %v706
  %v715 = vpack.c.bf16 %v709, %v708
  %v716 = vpack.c.bf16 %v711, %v710
  %v717 = vpack.c.bf16 %v713, %v712
  %v718 = vld [vmem:[%s7] sm:$0xf]
  %v719 = vld [vmem:[%s7 + $0x4] sm:$0xf]
  %v720 = vld [vmem:[%s7 + $0x8] sm:$0xf]
  %v721 = vld [vmem:[%s7 + $0xc] sm:$0xf]
  %v722 = vld [vmem:[%s7 + $0x10] sm:$0xf]
  %v723 = vld [vmem:[%s7 + $0x14] sm:$0xf]
  %v724 = vld [vmem:[%s7 + $0x18] sm:$0xf]
  %v725 = vld [vmem:[%s7 + $0x1c] sm:$0xf]
  %v726 = vld [vmem:[%s7 + $0x20] sm:$0xf]
  %v727 = vld [vmem:[%s7 + $0x24] sm:$0xf]
  %v728 = vld [vmem:[%s7 + $0x28] sm:$0xf]
  %v729 = vld [vmem:[%s7 + $0x2c] sm:$0xf]
  %v730 = vld [vmem:[%s7 + $0x30] sm:$0x3]
  %v731 = vld [vmem:[%s8] sm:$0x1]
  %v733 = vlaneseq
  %v734 = vshrl.u32 %v733, 7
  %v735 = vsub.s32 0, %v734
  %v736 = vrot.slane %v731, %v735
  %v751 = vunpack.c.l.b16 %v718
  %v752 = vunpack.c.l.b16 %v719
  %v753 = vunpack.c.l.b16 %v720
  %v754 = vunpack.c.l.b16 %v721
  %v755 = vunpack.c.l.b16 %v722
  %v756 = vunpack.c.l.b16 %v723
  %v757 = vunpack.c.l.b16 %v724
  %v758 = vunpack.c.l.b16 %v725
  %v759 = vunpack.c.l.b16 %v726
  %v760 = vunpack.c.l.b16 %v727
  %v761 = vunpack.c.l.b16 %v728
  %v762 = vunpack.c.l.b16 %v729
  %v763 = vunpack.c.l.b16 %v730
  %v764 = vpack.c.b16 %v752, %v751
  %v765 = vpack.c.b16 %v754, %v753
  %v766 = vpack.c.b16 %v756, %v755
  %v767 = vpack.c.b16 %v758, %v757
  %v768 = vpack.c.b16 %v760, %v759
  %v769 = vpack.c.b16 %v762, %v761
  %v770 = vpack.c.b16 %v763, %v763
  %vm777 = vcmask 818176
  %v779 = vsel %vm777, %v714, 0
  %v782 = vsel %vm777, %v715, 0
  %v785 = vsel %vm777, %v716, 0
  %v788 = vsel %vm777, %v717, 0
  %v791 = vsel %vm171, %v770, 0
  %793 = vmatprep.subr.bf16.mxu0 0
  %794 = vmatpush1.bf16.msra.mxu0 0
  %795 = vmatprep.subr.bf16.mxu0 0
  %796 = vmatpush1.bf16.msra.mxu0 %v791
  %797 = vmatprep.subr.bf16.mxu0 0
  %798 = vmatpush1.bf16.msra.mxu0 %v769
  %799 = vmatprep.subr.bf16.mxu0 0
  %800 = vmatpush1.bf16.msra.mxu0 %v768
  %801 = vmatprep.subr.bf16.mxu0 0
  %802 = vmatpush1.bf16.msra.mxu0 %v767
  %803 = vmatprep.subr.bf16.mxu0 0
  %804 = vmatpush1.bf16.msra.mxu0 %v766
  %805 = vmatprep.subr.bf16.mxu0 0
  %806 = vmatpush1.bf16.msra.mxu0 %v765
  %807 = vmatprep.subr.bf16.mxu0 0
  %808 = vmatpush1.bf16.msra.mxu0 %v764
  %809 = vmatprep.subr.bf16.mxu0 0
  %810 = vmatpush2.bf16.msra.mxu0 0
  %811 = vmatprep.subr.bf16.mxu0 0
  %812 = vmatpush2.bf16.msra.mxu0 0
  %813 = vmatprep.subr.bf16.mxu0 0
  %814 = vmatpush2.bf16.msra.mxu0 0
  %815 = vmatprep.subr.bf16.mxu0 0
  %816 = vmatpush2.bf16.msra.mxu0 0
  %817 = vmatprep.subr.bf16.mxu0 0
  %818 = vmatpush2.bf16.msra.mxu0 0
  %819 = vmatprep.subr.bf16.mxu0 0
  %820 = vmatpush2.bf16.msra.mxu0 0
  %821 = vmatprep.subr.bf16.mxu0 0
  %822 = vmatpush2.bf16.msra.mxu0 0
  %823 = vmatprep.subr.bf16.mxu0 0
  %824 = vmatpush2.bf16.msra.mxu0 0
  %825 = vmatprep.mubr.bf16.mxu0 0
  %826 = vmatmul.mubr.bf16.gmra.mxu0 %v779
  %v827 = vpop.f32.mrf.mxu0
  %v828 = vadd.f32 %v736, %v827
  %v829 = vpop.f32.mrf.mxu0
  %v830 = vpop.f32.mrf.mxu0
  %v831 = vadd.f32 %v736, %v830
  %v832 = vpop.f32.mrf.mxu0
  %833 = vmatprep.mubr.bf16.mxu0 0
  %834 = vmatmul.mubr.bf16.gmra.mxu0 %v782
  %v835 = vpop.f32.mrf.mxu0
  %v836 = vadd.f32 %v736, %v835
  %v837 = vpop.f32.mrf.mxu0
  %v838 = vpop.f32.mrf.mxu0
  %v839 = vadd.f32 %v736, %v838
  %v840 = vpop.f32.mrf.mxu0
  %841 = vmatprep.mubr.bf16.mxu0 0
  %842 = vmatmul.mubr.bf16.gmra.mxu0 %v785
  %v843 = vpop.f32.mrf.mxu0
  %v844 = vadd.f32 %v736, %v843
  %v845 = vpop.f32.mrf.mxu0
  %v846 = vpop.f32.mrf.mxu0
  %v847 = vadd.f32 %v736, %v846
  %v848 = vpop.f32.mrf.mxu0
  %849 = vmatprep.mubr.bf16.mxu0 0
  %850 = vmatmul.mubr.bf16.gmra.mxu0 %v788
  %v851 = vpop.f32.mrf.mxu0
  %v852 = vadd.f32 %v736, %v851
  %v853 = vpop.f32.mrf.mxu0
  %v854 = vpop.f32.mrf.mxu0
  %v855 = vadd.f32 %v736, %v854
  %v856 = vpop.f32.mrf.mxu0
  %857 = vdwg.mxu0
  %v858 = vsub.f32 0.0, %v828
  %v859 = vsub.f32 0.0, %v831
  %v860 = vsub.f32 0.0, %v836
  %v861 = vsub.f32 0.0, %v839
  %v862 = vsub.f32 0.0, %v844
  %v863 = vsub.f32 0.0, %v847
  %v864 = vsub.f32 0.0, %v852
  %v865 = vsub.f32 0.0, %v855
  %v866 = vmul.f32 %v858, 1.442695
  %v867 = vpow.pop %v866
  %v868 = vmul.f32 %v859, 1.442695
  %v869 = vpow.pop %v868
  %v870 = vmul.f32 %v860, 1.442695
  %v871 = vpow.pop %v870
  %v872 = vmul.f32 %v861, 1.442695
  %v873 = vpow.pop %v872
  %v874 = vmul.f32 %v862, 1.442695
  %v875 = vpow.pop %v874
  %v876 = vmul.f32 %v863, 1.442695
  %v877 = vpow.pop %v876
  %v878 = vmul.f32 %v864, 1.442695
  %v879 = vpow.pop %v878
  %v880 = vmul.f32 %v865, 1.442695
  %v881 = vpow.pop %v880
  %v882 = vadd.f32 %v867, 1.0
  %v883 = vadd.f32 %v869, 1.0
  %v884 = vadd.f32 %v871, 1.0
  %v885 = vadd.f32 %v873, 1.0
  %v886 = vadd.f32 %v875, 1.0
  %v887 = vadd.f32 %v877, 1.0
  %v888 = vadd.f32 %v879, 1.0
  %v889 = vadd.f32 %v881, 1.0
  %v890 = vrcp.pop %v882
  %v891 = vrcp.pop %v883
  %v892 = vrcp.pop %v884
  %v893 = vrcp.pop %v885
  %v894 = vrcp.pop %v886
  %v895 = vrcp.pop %v887
  %v896 = vrcp.pop %v888
  %v897 = vrcp.pop %v889
  %v898 = vpack.c.bf16 %v215, %v212
  %v899 = vpack.c.bf16 %v223, %v220
  %v900 = vpack.c.bf16 %v231, %v228
  %v901 = vpack.c.bf16 %v239, %v236
  %v902 = vld [vmem:[%s6] sm:$0xf]
  %v903 = vld [vmem:[%s6 + $0x4] sm:$0xf]
  %v904 = vld [vmem:[%s6 + $0x8] sm:$0xf]
  %v905 = vld [vmem:[%s6 + $0xc] sm:$0xf]
  %v906 = vld [vmem:[%s6 + $0x10] sm:$0xf]
  %v907 = vld [vmem:[%s6 + $0x14] sm:$0xf]
  %v908 = vld [vmem:[%s6 + $0x18] sm:$0xf]
  %v909 = vld [vmem:[%s6 + $0x1c] sm:$0xf]
  %v910 = vld [vmem:[%s6 + $0x20] sm:$0xf]
  %v911 = vld [vmem:[%s6 + $0x24] sm:$0xf]
  %v912 = vld [vmem:[%s6 + $0x28] sm:$0xf]
  %v913 = vld [vmem:[%s6 + $0x2c] sm:$0xf]
  %v914 = vld [vmem:[%s6 + $0x30] sm:$0x3]
  %v928 = vunpack.c.l.b16 %v902
  %v929 = vunpack.c.l.b16 %v903
  %v930 = vunpack.c.l.b16 %v904
  %v931 = vunpack.c.l.b16 %v905
  %v932 = vunpack.c.l.b16 %v906
  %v933 = vunpack.c.l.b16 %v907
  %v934 = vunpack.c.l.b16 %v908
  %v935 = vunpack.c.l.b16 %v909
  %v936 = vunpack.c.l.b16 %v910
  %v937 = vunpack.c.l.b16 %v911
  %v938 = vunpack.c.l.b16 %v912
  %v939 = vunpack.c.l.b16 %v913
  %v940 = vunpack.c.l.b16 %v914
  %v941 = vpack.c.b16 %v929, %v928
  %v942 = vpack.c.b16 %v931, %v930
  %v943 = vpack.c.b16 %v933, %v932
  %v944 = vpack.c.b16 %v935, %v934
  %v945 = vpack.c.b16 %v937, %v936
  %v946 = vpack.c.b16 %v939, %v938
  %v947 = vpack.c.b16 %v940, %v940
  %v955 = vsel %vm157, %v898, 0
  %v958 = vsel %vm157, %v899, 0
  %v961 = vsel %vm157, %v900, 0
  %v964 = vsel %vm157, %v901, 0
  %v967 = vand.u32 %v947, %v173
  %969 = vmatprep.subr.bf16.mxu0 0
  %970 = vmatpush1.bf16.msra.mxu0 0
  %971 = vmatprep.subr.bf16.mxu0 0
  %972 = vmatpush1.bf16.msra.mxu0 %v967
  %973 = vmatprep.subr.bf16.mxu0 0
  %974 = vmatpush1.bf16.msra.mxu0 %v946
  %975 = vmatprep.subr.bf16.mxu0 0
  %976 = vmatpush1.bf16.msra.mxu0 %v945
  %977 = vmatprep.subr.bf16.mxu0 0
  %978 = vmatpush1.bf16.msra.mxu0 %v944
  %979 = vmatprep.subr.bf16.mxu0 0
  %980 = vmatpush1.bf16.msra.mxu0 %v943
  %981 = vmatprep.subr.bf16.mxu0 0
  %982 = vmatpush1.bf16.msra.mxu0 %v942
  %983 = vmatprep.subr.bf16.mxu0 0
  %984 = vmatpush1.bf16.msra.mxu0 %v941
  %985 = vmatprep.subr.bf16.mxu0 0
  %986 = vmatpush2.bf16.msra.mxu0 0
  %987 = vmatprep.subr.bf16.mxu0 0
  %988 = vmatpush2.bf16.msra.mxu0 0
  %989 = vmatprep.subr.bf16.mxu0 0
  %990 = vmatpush2.bf16.msra.mxu0 0
  %991 = vmatprep.subr.bf16.mxu0 0
  %992 = vmatpush2.bf16.msra.mxu0 0
  %993 = vmatprep.subr.bf16.mxu0 0
  %994 = vmatpush2.bf16.msra.mxu0 0
  %995 = vmatprep.subr.bf16.mxu0 0
  %996 = vmatpush2.bf16.msra.mxu0 0
  %997 = vmatprep.subr.bf16.mxu0 0
  %998 = vmatpush2.bf16.msra.mxu0 0
  %999 = vmatprep.subr.bf16.mxu0 0
  %1000 = vmatpush2.bf16.msra.mxu0 0
  %1001 = vmatprep.mubr.bf16.mxu0 0
  %1002 = vmatmul.mubr.bf16.gmra.mxu0 %v955
  %v1003 = vpop.f32.mrf.mxu0
  %v1004 = vadd.f32 0.0, %v1003
  %v1005 = vpop.f32.mrf.mxu0
  %v1006 = vpop.f32.mrf.mxu0
  %v1007 = vadd.f32 0.0, %v1006
  %v1008 = vpop.f32.mrf.mxu0
  %1009 = vmatprep.mubr.bf16.mxu0 0
  %1010 = vmatmul.mubr.bf16.gmra.mxu0 %v958
  %v1011 = vpop.f32.mrf.mxu0
  %v1012 = vadd.f32 0.0, %v1011
  %v1013 = vpop.f32.mrf.mxu0
  %v1014 = vpop.f32.mrf.mxu0
  %v1015 = vadd.f32 0.0, %v1014
  %v1016 = vpop.f32.mrf.mxu0
  %1017 = vmatprep.mubr.bf16.mxu0 0
  %1018 = vmatmul.mubr.bf16.gmra.mxu0 %v961
  %v1019 = vpop.f32.mrf.mxu0
  %v1020 = vadd.f32 0.0, %v1019
  %v1021 = vpop.f32.mrf.mxu0
  %v1022 = vpop.f32.mrf.mxu0
  %v1023 = vadd.f32 0.0, %v1022
  %v1024 = vpop.f32.mrf.mxu0
  %1025 = vmatprep.mubr.bf16.mxu0 0
  %1026 = vmatmul.mubr.bf16.gmra.mxu0 %v964
  %v1027 = vpop.f32.mrf.mxu0
  %v1028 = vadd.f32 0.0, %v1027
  %v1029 = vpop.f32.mrf.mxu0
  %v1030 = vpop.f32.mrf.mxu0
  %v1031 = vadd.f32 0.0, %v1030
  %v1032 = vpop.f32.mrf.mxu0
  %1033 = vdwg.mxu0
  %1042 = vrot.lane.b32.xlu0 %v890, 16
  %v1043 = vpop.permute.xlu0 %1042
  %1044 = vrot.lane.b32.xlu0 %v891, 16
  %v1045 = vpop.permute.xlu0 %1044
  %1046 = vrot.lane.b32.xlu0 %v892, 16
  %v1047 = vpop.permute.xlu0 %1046
  %1048 = vrot.lane.b32.xlu0 %v893, 16
  %v1049 = vpop.permute.xlu0 %1048
  %1050 = vrot.lane.b32.xlu0 %v894, 16
  %v1051 = vpop.permute.xlu0 %1050
  %1052 = vrot.lane.b32.xlu0 %v895, 16
  %v1053 = vpop.permute.xlu0 %1052
  %1054 = vrot.lane.b32.xlu0 %v896, 16
  %v1055 = vpop.permute.xlu0 %1054
  %1056 = vrot.lane.b32.xlu0 %v897, 16
  %v1057 = vpop.permute.xlu0 %1056
  %1066 = vrot.lane.b32.xlu0 %v890, 32
  %v1067 = vpop.permute.xlu0 %1066
  %1068 = vrot.lane.b32.xlu0 %v891, 32
  %v1069 = vpop.permute.xlu0 %1068
  %1070 = vrot.lane.b32.xlu0 %v892, 32
  %v1071 = vpop.permute.xlu0 %1070
  %1072 = vrot.lane.b32.xlu0 %v893, 32
  %v1073 = vpop.permute.xlu0 %1072
  %1074 = vrot.lane.b32.xlu0 %v894, 32
  %v1075 = vpop.permute.xlu0 %1074
  %1076 = vrot.lane.b32.xlu0 %v895, 32
  %v1077 = vpop.permute.xlu0 %1076
  %1078 = vrot.lane.b32.xlu0 %v896, 32
  %v1079 = vpop.permute.xlu0 %1078
  %1080 = vrot.lane.b32.xlu0 %v897, 32
  %v1081 = vpop.permute.xlu0 %1080
  %vm1090 = vcmask 130048
  %v1091 = vsel %vm1090, %v890, %v1043
  %v1092 = vsel %vm1090, %v891, %v1045
  %v1093 = vsel %vm1090, %v892, %v1047
  %v1094 = vsel %vm1090, %v893, %v1049
  %v1095 = vsel %vm1090, %v894, %v1051
  %v1096 = vsel %vm1090, %v895, %v1053
  %v1097 = vsel %vm1090, %v896, %v1055
  %v1098 = vsel %vm1090, %v897, %v1057
  %vm1099 = vcmask 261120
  %v1100 = vsel %vm1099, %v1091, %v1067
  %v1101 = vsel %vm1099, %v1092, %v1069
  %v1102 = vsel %vm1099, %v1093, %v1071
  %v1103 = vsel %vm1099, %v1094, %v1073
  %v1104 = vsel %vm1099, %v1095, %v1075
  %v1105 = vsel %vm1099, %v1096, %v1077
  %v1106 = vsel %vm1099, %v1097, %v1079
  %v1107 = vsel %vm1099, %v1098, %v1081
  %v1108 = vmul.f32 %v1004, %v1100
  %v1109 = vmul.f32 %v1007, %v1101
  %v1110 = vmul.f32 %v1012, %v1102
  %v1111 = vmul.f32 %v1015, %v1103
  %v1112 = vmul.f32 %v1020, %v1104
  %v1113 = vmul.f32 %v1023, %v1105
  %v1114 = vmul.f32 %v1028, %v1106
  %v1115 = vmul.f32 %v1031, %v1107
  %v1116 = vmax.f32 %v706, 0.0
  %v1117 = vmax.f32 %v707, 0.0
  %v1118 = vmax.f32 %v708, 0.0
  %v1119 = vmax.f32 %v709, 0.0
  %v1120 = vmax.f32 %v710, 0.0
  %v1121 = vmax.f32 %v711, 0.0
  %v1122 = vmax.f32 %v712, 0.0
  %v1123 = vmax.f32 %v713, 0.0
  %v1124 = vpack.c.bf16 %v1109, %v1108
  %v1125 = vpack.c.bf16 %v1111, %v1110
  %v1126 = vpack.c.bf16 %v1113, %v1112
  %v1127 = vpack.c.bf16 %v1115, %v1114
  %v1128 = vld [vmem:[%s9] sm:$0xf]
  %v1129 = vld [vmem:[%s9 + $0x4] sm:$0xf]
  %v1130 = vld [vmem:[%s9 + $0x8] sm:$0xf]
  %v1131 = vld [vmem:[%s9 + $0xc] sm:$0xf]
  %v1132 = vld [vmem:[%s9 + $0x10] sm:$0xf]
  %v1133 = vld [vmem:[%s9 + $0x14] sm:$0xf]
  %v1140 = vunpack.c.l.b16 %v1128
  %v1141 = vunpack.c.l.b16 %v1129
  %v1142 = vunpack.c.l.b16 %v1130
  %v1143 = vunpack.c.l.b16 %v1131
  %v1144 = vunpack.c.l.b16 %v1132
  %v1145 = vunpack.c.l.b16 %v1133
  %v1146 = vpack.c.b16 %v1141, %v1140
  %v1147 = vpack.c.b16 %v1143, %v1142
  %v1148 = vpack.c.b16 %v1145, %v1144
  %vm1152 = vcmask 392192
  %v1154 = vsel %vm1152, %v1124, 0
  %v1157 = vsel %vm1152, %v1125, 0
  %v1160 = vsel %vm1152, %v1126, 0
  %v1163 = vsel %vm1152, %v1127, 0
  %1165 = vmatprep.subr.bf16.mxu0 0
  %1166 = vmatpush1.bf16.msra.mxu0 0
  %1167 = vmatprep.subr.bf16.mxu0 0
  %1168 = vmatpush1.bf16.msra.mxu0 0
  %1169 = vmatprep.subr.bf16.mxu0 0
  %1170 = vmatpush1.bf16.msra.mxu0 0
  %1171 = vmatprep.subr.bf16.mxu0 0
  %1172 = vmatpush1.bf16.msra.mxu0 0
  %1173 = vmatprep.subr.bf16.mxu0 0
  %1174 = vmatpush1.bf16.msra.mxu0 0
  %1175 = vmatprep.subr.bf16.mxu0 0
  %1176 = vmatpush1.bf16.msra.mxu0 %v1148
  %1177 = vmatprep.subr.bf16.mxu0 0
  %1178 = vmatpush1.bf16.msra.mxu0 %v1147
  %1179 = vmatprep.subr.bf16.mxu0 0
  %1180 = vmatpush1.bf16.msra.mxu0 %v1146
  %1181 = vmatprep.subr.bf16.mxu0 0
  %1182 = vmatpush2.bf16.msra.mxu0 0
  %1183 = vmatprep.subr.bf16.mxu0 0
  %1184 = vmatpush2.bf16.msra.mxu0 0
  %1185 = vmatprep.subr.bf16.mxu0 0
  %1186 = vmatpush2.bf16.msra.mxu0 0
  %1187 = vmatprep.subr.bf16.mxu0 0
  %1188 = vmatpush2.bf16.msra.mxu0 0
  %1189 = vmatprep.subr.bf16.mxu0 0
  %1190 = vmatpush2.bf16.msra.mxu0 0
  %1191 = vmatprep.subr.bf16.mxu0 0
  %1192 = vmatpush2.bf16.msra.mxu0 0
  %1193 = vmatprep.subr.bf16.mxu0 0
  %1194 = vmatpush2.bf16.msra.mxu0 0
  %1195 = vmatprep.subr.bf16.mxu0 0
  %1196 = vmatpush2.bf16.msra.mxu0 0
  %1197 = vmatprep.mubr.bf16.mxu0 0
  %1198 = vmatmul.mubr.bf16.gmra.mxu0 %v1154
  %v1199 = vpop.f32.mrf.mxu0
  %v1200 = vadd.f32 0.0, %v1199
  %v1201 = vpop.f32.mrf.mxu0
  %v1202 = vpop.f32.mrf.mxu0
  %v1203 = vadd.f32 0.0, %v1202
  %v1204 = vpop.f32.mrf.mxu0
  %1205 = vmatprep.mubr.bf16.mxu0 0
  %1206 = vmatmul.mubr.bf16.gmra.mxu0 %v1157
  %v1207 = vpop.f32.mrf.mxu0
  %v1208 = vadd.f32 0.0, %v1207
  %v1209 = vpop.f32.mrf.mxu0
  %v1210 = vpop.f32.mrf.mxu0
  %v1211 = vadd.f32 0.0, %v1210
  %v1212 = vpop.f32.mrf.mxu0
  %1213 = vmatprep.mubr.bf16.mxu0 0
  %1214 = vmatmul.mubr.bf16.gmra.mxu0 %v1160
  %v1215 = vpop.f32.mrf.mxu0
  %v1216 = vadd.f32 0.0, %v1215
  %v1217 = vpop.f32.mrf.mxu0
  %v1218 = vpop.f32.mrf.mxu0
  %v1219 = vadd.f32 0.0, %v1218
  %v1220 = vpop.f32.mrf.mxu0
  %1221 = vmatprep.mubr.bf16.mxu0 0
  %1222 = vmatmul.mubr.bf16.gmra.mxu0 %v1163
  %v1223 = vpop.f32.mrf.mxu0
  %v1224 = vadd.f32 0.0, %v1223
  %v1225 = vpop.f32.mrf.mxu0
  %v1226 = vpop.f32.mrf.mxu0
  %v1227 = vadd.f32 0.0, %v1226
  %v1228 = vpop.f32.mrf.mxu0
  %1229 = vdwg.mxu0
  %v1230 = vmul.f32 %v1200, %v1200
  %v1231 = vmul.f32 %v1203, %v1203
  %v1232 = vmul.f32 %v1208, %v1208
  %v1233 = vmul.f32 %v1211, %v1211
  %v1234 = vmul.f32 %v1216, %v1216
  %v1235 = vmul.f32 %v1219, %v1219
  %v1236 = vmul.f32 %v1224, %v1224
  %v1237 = vmul.f32 %v1227, %v1227
  %1246 = vrot.lane.b32.xlu0 %v1230, 112
  %v1247 = vpop.permute.xlu0 %1246
  %1248 = vrot.lane.b32.xlu0 %v1231, 112
  %v1249 = vpop.permute.xlu0 %1248
  %1250 = vrot.lane.b32.xlu0 %v1232, 112
  %v1251 = vpop.permute.xlu0 %1250
  %1252 = vrot.lane.b32.xlu0 %v1233, 112
  %v1253 = vpop.permute.xlu0 %1252
  %1254 = vrot.lane.b32.xlu0 %v1234, 112
  %v1255 = vpop.permute.xlu0 %1254
  %1256 = vrot.lane.b32.xlu0 %v1235, 112
  %v1257 = vpop.permute.xlu0 %1256
  %1258 = vrot.lane.b32.xlu0 %v1236, 112
  %v1259 = vpop.permute.xlu0 %1258
  %1260 = vrot.lane.b32.xlu0 %v1237, 112
  %v1261 = vpop.permute.xlu0 %1260
  %v1270 = vadd.f32 %v1230, %v1247
  %v1271 = vadd.f32 %v1231, %v1249
  %v1272 = vadd.f32 %v1232, %v1251
  %v1273 = vadd.f32 %v1233, %v1253
  %v1274 = vadd.f32 %v1234, %v1255
  %v1275 = vadd.f32 %v1235, %v1257
  %v1276 = vadd.f32 %v1236, %v1259
  %v1277 = vadd.f32 %v1237, %v1261
  %1278 = vrot.lane.b32.xlu0 %v1230, 96
  %v1279 = vpop.permute.xlu0 %1278
  %1280 = vrot.lane.b32.xlu0 %v1231, 96
  %v1281 = vpop.permute.xlu0 %1280
  %1282 = vrot.lane.b32.xlu0 %v1232, 96
  %v1283 = vpop.permute.xlu0 %1282
  %1284 = vrot.lane.b32.xlu0 %v1233, 96
  %v1285 = vpop.permute.xlu0 %1284
  %1286 = vrot.lane.b32.xlu0 %v1234, 96
  %v1287 = vpop.permute.xlu0 %1286
  %1288 = vrot.lane.b32.xlu0 %v1235, 96
  %v1289 = vpop.permute.xlu0 %1288
  %1290 = vrot.lane.b32.xlu0 %v1236, 96
  %v1291 = vpop.permute.xlu0 %1290
  %1292 = vrot.lane.b32.xlu0 %v1237, 96
  %v1293 = vpop.permute.xlu0 %1292
  %v1302 = vadd.f32 %v1270, %v1279
  %v1303 = vadd.f32 %v1271, %v1281
  %v1304 = vadd.f32 %v1272, %v1283
  %v1305 = vadd.f32 %v1273, %v1285
  %v1306 = vadd.f32 %v1274, %v1287
  %v1307 = vadd.f32 %v1275, %v1289
  %v1308 = vadd.f32 %v1276, %v1291
  %v1309 = vadd.f32 %v1277, %v1293
  %v1310 = vmax.f32 %v1302, 1e-08
  %v1311 = vmax.f32 %v1303, 1e-08
  %v1312 = vmax.f32 %v1304, 1e-08
  %v1313 = vmax.f32 %v1305, 1e-08
  %v1314 = vmax.f32 %v1306, 1e-08
  %v1315 = vmax.f32 %v1307, 1e-08
  %v1316 = vmax.f32 %v1308, 1e-08
  %v1317 = vmax.f32 %v1309, 1e-08
  %v1318 = vrsqrt.pop %v1310
  %v1319 = vmul.f32 %v1310, %v1318
  %vm1320 = vcmp.eq.f32.partialorder %v1310, inf
  %v1321 = vsel %vm1320, %v1310, %v1319
  %vm1322 = vcmp.eq.f32.partialorder %v1310, 0.0
  %v1323 = vand.u32 %v1310, 2147483648
  %v1324 = vsel %vm1322, %v1323, %v1321
  %v1325 = vrsqrt.pop %v1311
  %v1326 = vmul.f32 %v1311, %v1325
  %vm1327 = vcmp.eq.f32.partialorder %v1311, inf
  %v1328 = vsel %vm1327, %v1311, %v1326
  %vm1329 = vcmp.eq.f32.partialorder %v1311, 0.0
  %v1330 = vand.u32 %v1311, 2147483648
  %v1331 = vsel %vm1329, %v1330, %v1328
  %v1332 = vrsqrt.pop %v1312
  %v1333 = vmul.f32 %v1312, %v1332
  %vm1334 = vcmp.eq.f32.partialorder %v1312, inf
  %v1335 = vsel %vm1334, %v1312, %v1333
  %vm1336 = vcmp.eq.f32.partialorder %v1312, 0.0
  %v1337 = vand.u32 %v1312, 2147483648
  %v1338 = vsel %vm1336, %v1337, %v1335
  %v1339 = vrsqrt.pop %v1313
  %v1340 = vmul.f32 %v1313, %v1339
  %vm1341 = vcmp.eq.f32.partialorder %v1313, inf
  %v1342 = vsel %vm1341, %v1313, %v1340
  %vm1343 = vcmp.eq.f32.partialorder %v1313, 0.0
  %v1344 = vand.u32 %v1313, 2147483648
  %v1345 = vsel %vm1343, %v1344, %v1342
  %v1346 = vrsqrt.pop %v1314
  %v1347 = vmul.f32 %v1314, %v1346
  %vm1348 = vcmp.eq.f32.partialorder %v1314, inf
  %v1349 = vsel %vm1348, %v1314, %v1347
  %vm1350 = vcmp.eq.f32.partialorder %v1314, 0.0
  %v1351 = vand.u32 %v1314, 2147483648
  %v1352 = vsel %vm1350, %v1351, %v1349
  %v1353 = vrsqrt.pop %v1315
  %v1354 = vmul.f32 %v1315, %v1353
  %vm1355 = vcmp.eq.f32.partialorder %v1315, inf
  %v1356 = vsel %vm1355, %v1315, %v1354
  %vm1357 = vcmp.eq.f32.partialorder %v1315, 0.0
  %v1358 = vand.u32 %v1315, 2147483648
  %v1359 = vsel %vm1357, %v1358, %v1356
  %v1360 = vrsqrt.pop %v1316
  %v1361 = vmul.f32 %v1316, %v1360
  %vm1362 = vcmp.eq.f32.partialorder %v1316, inf
  %v1363 = vsel %vm1362, %v1316, %v1361
  %vm1364 = vcmp.eq.f32.partialorder %v1316, 0.0
  %v1365 = vand.u32 %v1316, 2147483648
  %v1366 = vsel %vm1364, %v1365, %v1363
  %v1367 = vrsqrt.pop %v1317
  %v1368 = vmul.f32 %v1317, %v1367
  %vm1369 = vcmp.eq.f32.partialorder %v1317, inf
  %v1370 = vsel %vm1369, %v1317, %v1368
  %vm1371 = vcmp.eq.f32.partialorder %v1317, 0.0
  %v1372 = vand.u32 %v1317, 2147483648
  %v1373 = vsel %vm1371, %v1372, %v1370
  %v1374 = vpack.c.bf16 %v1117, %v1116
  %v1375 = vpack.c.bf16 %v1119, %v1118
  %v1376 = vpack.c.bf16 %v1121, %v1120
  %v1377 = vpack.c.bf16 %v1123, %v1122
  %v1378 = vld [vmem:[%s10] sm:$0xf]
  %v1379 = vld [vmem:[%s10 + $0x4] sm:$0xf]
  %v1380 = vld [vmem:[%s10 + $0x8] sm:$0xf]
  %v1381 = vld [vmem:[%s10 + $0xc] sm:$0xf]
  %v1382 = vld [vmem:[%s10 + $0x10] sm:$0xf]
  %v1383 = vld [vmem:[%s10 + $0x14] sm:$0xf]
  %v1384 = vld [vmem:[%s10 + $0x18] sm:$0xf]
  %v1385 = vld [vmem:[%s10 + $0x1c] sm:$0xf]
  %v1386 = vld [vmem:[%s10 + $0x20] sm:$0xf]
  %v1387 = vld [vmem:[%s10 + $0x24] sm:$0xf]
  %v1388 = vld [vmem:[%s10 + $0x28] sm:$0xf]
  %v1389 = vld [vmem:[%s10 + $0x2c] sm:$0xf]
  %v1390 = vld [vmem:[%s10 + $0x30] sm:$0x3]
  %v1391 = vpack.c.bf16 %v1331, %v1324
  %v1392 = vpack.c.bf16 %v1345, %v1338
  %v1393 = vpack.c.bf16 %v1359, %v1352
  %v1394 = vpack.c.bf16 %v1373, %v1366
  %v1395 = vld [vmem:[%s11] sm:$0xf]
  %v1396 = vld [vmem:[%s11 + $0x4] sm:$0xf]
  %v1399 = vunpack.c.l.b16 %v1395
  %v1400 = vunpack.c.l.b16 %v1396
  %v1401 = vpack.c.b16 %v1400, %v1399
  %v1404 = vsel %vm1090, %v1391, 0
  %v1407 = vsel %vm1090, %v1392, 0
  %v1410 = vsel %vm1090, %v1393, 0
  %v1413 = vsel %vm1090, %v1394, 0
  %1415 = vmatprep.subr.bf16.mxu0 0
  %1416 = vmatpush1.bf16.msra.mxu0 0
  %1417 = vmatprep.subr.bf16.mxu0 0
  %1418 = vmatpush1.bf16.msra.mxu0 0
  %1419 = vmatprep.subr.bf16.mxu0 0
  %1420 = vmatpush1.bf16.msra.mxu0 0
  %1421 = vmatprep.subr.bf16.mxu0 0
  %1422 = vmatpush1.bf16.msra.mxu0 0
  %1423 = vmatprep.subr.bf16.mxu0 0
  %1424 = vmatpush1.bf16.msra.mxu0 0
  %1425 = vmatprep.subr.bf16.mxu0 0
  %1426 = vmatpush1.bf16.msra.mxu0 0
  %1427 = vmatprep.subr.bf16.mxu0 0
  %1428 = vmatpush1.bf16.msra.mxu0 0
  %1429 = vmatprep.subr.bf16.mxu0 0
  %1430 = vmatpush1.bf16.msra.mxu0 %v1401
  %1431 = vmatprep.subr.bf16.mxu0 0
  %1432 = vmatpush2.bf16.msra.mxu0 0
  %1433 = vmatprep.subr.bf16.mxu0 0
  %1434 = vmatpush2.bf16.msra.mxu0 0
  %1435 = vmatprep.subr.bf16.mxu0 0
  %1436 = vmatpush2.bf16.msra.mxu0 0
  %1437 = vmatprep.subr.bf16.mxu0 0
  %1438 = vmatpush2.bf16.msra.mxu0 0
  %1439 = vmatprep.subr.bf16.mxu0 0
  %1440 = vmatpush2.bf16.msra.mxu0 0
  %1441 = vmatprep.subr.bf16.mxu0 0
  %1442 = vmatpush2.bf16.msra.mxu0 0
  %1443 = vmatprep.subr.bf16.mxu0 0
  %1444 = vmatpush2.bf16.msra.mxu0 0
  %1445 = vmatprep.subr.bf16.mxu0 0
  %1446 = vmatpush2.bf16.msra.mxu0 0
  %1447 = vmatprep.mubr.bf16.mxu0 0
  %1448 = vmatmul.mubr.bf16.gmra.mxu0 %v1404
  %v1449 = vpop.f32.mrf.mxu0
  %v1450 = vadd.f32 0.0, %v1449
  %v1451 = vpop.f32.mrf.mxu0
  %v1452 = vpop.f32.mrf.mxu0
  %v1453 = vadd.f32 0.0, %v1452
  %v1454 = vpop.f32.mrf.mxu0
  %1455 = vmatprep.mubr.bf16.mxu0 0
  %1456 = vmatmul.mubr.bf16.gmra.mxu0 %v1407
  %v1457 = vpop.f32.mrf.mxu0
  %v1458 = vadd.f32 0.0, %v1457
  %v1459 = vpop.f32.mrf.mxu0
  %v1460 = vpop.f32.mrf.mxu0
  %v1461 = vadd.f32 0.0, %v1460
  %v1462 = vpop.f32.mrf.mxu0
  %1463 = vmatprep.mubr.bf16.mxu0 0
  %1464 = vmatmul.mubr.bf16.gmra.mxu0 %v1410
  %v1465 = vpop.f32.mrf.mxu0
  %v1466 = vadd.f32 0.0, %v1465
  %v1467 = vpop.f32.mrf.mxu0
  %v1468 = vpop.f32.mrf.mxu0
  %v1469 = vadd.f32 0.0, %v1468
  %v1470 = vpop.f32.mrf.mxu0
  %1471 = vmatprep.mubr.bf16.mxu0 0
  %1472 = vmatmul.mubr.bf16.gmra.mxu0 %v1413
  %v1473 = vpop.f32.mrf.mxu0
  %v1474 = vadd.f32 0.0, %v1473
  %v1475 = vpop.f32.mrf.mxu0
  %v1476 = vpop.f32.mrf.mxu0
  %v1477 = vadd.f32 0.0, %v1476
  %v1478 = vpop.f32.mrf.mxu0
  %1479 = vdwg.mxu0
  %v1493 = vunpack.c.l.b16 %v1378
  %v1494 = vunpack.c.l.b16 %v1379
  %v1495 = vunpack.c.l.b16 %v1380
  %v1496 = vunpack.c.l.b16 %v1381
  %v1497 = vunpack.c.l.b16 %v1382
  %v1498 = vunpack.c.l.b16 %v1383
  %v1499 = vunpack.c.l.b16 %v1384
  %v1500 = vunpack.c.l.b16 %v1385
  %v1501 = vunpack.c.l.b16 %v1386
  %v1502 = vunpack.c.l.b16 %v1387
  %v1503 = vunpack.c.l.b16 %v1388
  %v1504 = vunpack.c.l.b16 %v1389
  %v1505 = vunpack.c.l.b16 %v1390
  %v1506 = vpack.c.b16 %v1494, %v1493
  %v1507 = vpack.c.b16 %v1496, %v1495
  %v1508 = vpack.c.b16 %v1498, %v1497
  %v1509 = vpack.c.b16 %v1500, %v1499
  %v1510 = vpack.c.b16 %v1502, %v1501
  %v1511 = vpack.c.b16 %v1504, %v1503
  %v1512 = vpack.c.b16 %v1505, %v1505
  %v1520 = vsel %vm777, %v1374, 0
  %v1523 = vsel %vm777, %v1375, 0
  %v1526 = vsel %vm777, %v1376, 0
  %v1529 = vsel %vm777, %v1377, 0
  %v1532 = vsel %vm171, %v1512, 0
  %1534 = vmatprep.subr.bf16.mxu0 0
  %1535 = vmatpush1.bf16.msra.mxu0 0
  %1536 = vmatprep.subr.bf16.mxu0 0
  %1537 = vmatpush1.bf16.msra.mxu0 %v1532
  %1538 = vmatprep.subr.bf16.mxu0 0
  %1539 = vmatpush1.bf16.msra.mxu0 %v1511
  %1540 = vmatprep.subr.bf16.mxu0 0
  %1541 = vmatpush1.bf16.msra.mxu0 %v1510
  %1542 = vmatprep.subr.bf16.mxu0 0
  %1543 = vmatpush1.bf16.msra.mxu0 %v1509
  %1544 = vmatprep.subr.bf16.mxu0 0
  %1545 = vmatpush1.bf16.msra.mxu0 %v1508
  %1546 = vmatprep.subr.bf16.mxu0 0
  %1547 = vmatpush1.bf16.msra.mxu0 %v1507
  %1548 = vmatprep.subr.bf16.mxu0 0
  %1549 = vmatpush1.bf16.msra.mxu0 %v1506
  %1550 = vmatprep.subr.bf16.mxu0 0
  %1551 = vmatpush2.bf16.msra.mxu0 0
  %1552 = vmatprep.subr.bf16.mxu0 0
  %1553 = vmatpush2.bf16.msra.mxu0 0
  %1554 = vmatprep.subr.bf16.mxu0 0
  %1555 = vmatpush2.bf16.msra.mxu0 0
  %1556 = vmatprep.subr.bf16.mxu0 0
  %1557 = vmatpush2.bf16.msra.mxu0 0
  %1558 = vmatprep.subr.bf16.mxu0 0
  %1559 = vmatpush2.bf16.msra.mxu0 0
  %1560 = vmatprep.subr.bf16.mxu0 0
  %1561 = vmatpush2.bf16.msra.mxu0 0
  %1562 = vmatprep.subr.bf16.mxu0 0
  %1563 = vmatpush2.bf16.msra.mxu0 0
  %1564 = vmatprep.subr.bf16.mxu0 0
  %1565 = vmatpush2.bf16.msra.mxu0 0
  %1566 = vmatprep.mubr.bf16.mxu0 0
  %1567 = vmatmul.mubr.bf16.gmra.mxu0 %v1520
  %v1568 = vpop.f32.mrf.mxu0
  %v1569 = vadd.f32 %v1450, %v1568
  %v1570 = vpop.f32.mrf.mxu0
  %v1571 = vpop.f32.mrf.mxu0
  %v1572 = vadd.f32 %v1453, %v1571
  %v1573 = vpop.f32.mrf.mxu0
  %1574 = vmatprep.mubr.bf16.mxu0 0
  %1575 = vmatmul.mubr.bf16.gmra.mxu0 %v1523
  %v1576 = vpop.f32.mrf.mxu0
  %v1577 = vadd.f32 %v1458, %v1576
  %v1578 = vpop.f32.mrf.mxu0
  %v1579 = vpop.f32.mrf.mxu0
  %v1580 = vadd.f32 %v1461, %v1579
  %v1581 = vpop.f32.mrf.mxu0
  %1582 = vmatprep.mubr.bf16.mxu0 0
  %1583 = vmatmul.mubr.bf16.gmra.mxu0 %v1526
  %v1584 = vpop.f32.mrf.mxu0
  %v1585 = vadd.f32 %v1466, %v1584
  %v1586 = vpop.f32.mrf.mxu0
  %v1587 = vpop.f32.mrf.mxu0
  %v1588 = vadd.f32 %v1469, %v1587
  %v1589 = vpop.f32.mrf.mxu0
  %1590 = vmatprep.mubr.bf16.mxu0 0
  %1591 = vmatmul.mubr.bf16.gmra.mxu0 %v1529
  %v1592 = vpop.f32.mrf.mxu0
  %v1593 = vadd.f32 %v1474, %v1592
  %v1594 = vpop.f32.mrf.mxu0
  %v1595 = vpop.f32.mrf.mxu0
  %v1596 = vadd.f32 %v1477, %v1595
  %v1597 = vpop.f32.mrf.mxu0
  %1598 = vdwg.mxu0
  %v1599 = vld [vmem:[%s12] sm:$0x1]
  %v1601 = vlaneseq
  %v1602 = vshrl.u32 %v1601, 7
  %v1603 = vsub.s32 0, %v1602
  %v1604 = vrot.slane %v1599, %v1603
  %v1606 = vadd.f32 %v1569, %v1604
  %v1607 = vadd.f32 %v1572, %v1604
  %v1608 = vadd.f32 %v1577, %v1604
  %v1609 = vadd.f32 %v1580, %v1604
  %v1610 = vadd.f32 %v1585, %v1604
  %v1611 = vadd.f32 %v1588, %v1604
  %v1612 = vadd.f32 %v1593, %v1604
  %v1613 = vadd.f32 %v1596, %v1604
  %v1614 = vpack.c.bf16 %v1607, %v1606
  %v1615 = vpack.c.bf16 %v1609, %v1608
  %v1616 = vpack.c.bf16 %v1611, %v1610
  %v1617 = vpack.c.bf16 %v1613, %v1612
  %v1618 = vld [vmem:[%s14] sm:$0xf]
  %v1619 = vld [vmem:[%s14 + $0x4] sm:$0xf]
  %v1620 = vld [vmem:[%s14 + $0x8] sm:$0xf]
  %v1621 = vld [vmem:[%s14 + $0xc] sm:$0xf]
  %v1622 = vld [vmem:[%s14 + $0x10] sm:$0xf]
  %v1623 = vld [vmem:[%s14 + $0x14] sm:$0xf]
  %v1624 = vld [vmem:[%s14 + $0x18] sm:$0xf]
  %v1625 = vld [vmem:[%s14 + $0x1c] sm:$0xf]
  %v1626 = vld [vmem:[%s14 + $0x20] sm:$0xf]
  %v1627 = vld [vmem:[%s14 + $0x24] sm:$0xf]
  %v1628 = vld [vmem:[%s14 + $0x28] sm:$0xf]
  %v1629 = vld [vmem:[%s14 + $0x2c] sm:$0xf]
  %v1630 = vld [vmem:[%s14 + $0x30] sm:$0x3]
  %v1631 = vld [vmem:[%s15] sm:$0x1]
  %v1633 = vlaneseq
  %v1634 = vshrl.u32 %v1633, 7
  %v1635 = vsub.s32 0, %v1634
  %v1636 = vrot.slane %v1631, %v1635
  %v1651 = vunpack.c.l.b16 %v1618
  %v1652 = vunpack.c.l.b16 %v1619
  %v1653 = vunpack.c.l.b16 %v1620
  %v1654 = vunpack.c.l.b16 %v1621
  %v1655 = vunpack.c.l.b16 %v1622
  %v1656 = vunpack.c.l.b16 %v1623
  %v1657 = vunpack.c.l.b16 %v1624
  %v1658 = vunpack.c.l.b16 %v1625
  %v1659 = vunpack.c.l.b16 %v1626
  %v1660 = vunpack.c.l.b16 %v1627
  %v1661 = vunpack.c.l.b16 %v1628
  %v1662 = vunpack.c.l.b16 %v1629
  %v1663 = vunpack.c.l.b16 %v1630
  %v1664 = vpack.c.b16 %v1652, %v1651
  %v1665 = vpack.c.b16 %v1654, %v1653
  %v1666 = vpack.c.b16 %v1656, %v1655
  %v1667 = vpack.c.b16 %v1658, %v1657
  %v1668 = vpack.c.b16 %v1660, %v1659
  %v1669 = vpack.c.b16 %v1662, %v1661
  %v1670 = vpack.c.b16 %v1663, %v1663
  %v1678 = vsel %vm777, %v1614, 0
  %v1681 = vsel %vm777, %v1615, 0
  %v1684 = vsel %vm777, %v1616, 0
  %v1687 = vsel %vm777, %v1617, 0
  %v1690 = vsel %vm171, %v1670, 0
  %1692 = vmatprep.subr.bf16.mxu0 0
  %1693 = vmatpush1.bf16.msra.mxu0 0
  %1694 = vmatprep.subr.bf16.mxu0 0
  %1695 = vmatpush1.bf16.msra.mxu0 %v1690
  %1696 = vmatprep.subr.bf16.mxu0 0
  %1697 = vmatpush1.bf16.msra.mxu0 %v1669
  %1698 = vmatprep.subr.bf16.mxu0 0
  %1699 = vmatpush1.bf16.msra.mxu0 %v1668
  %1700 = vmatprep.subr.bf16.mxu0 0
  %1701 = vmatpush1.bf16.msra.mxu0 %v1667
  %1702 = vmatprep.subr.bf16.mxu0 0
  %1703 = vmatpush1.bf16.msra.mxu0 %v1666
  %1704 = vmatprep.subr.bf16.mxu0 0
  %1705 = vmatpush1.bf16.msra.mxu0 %v1665
  %1706 = vmatprep.subr.bf16.mxu0 0
  %1707 = vmatpush1.bf16.msra.mxu0 %v1664
  %1708 = vmatprep.subr.bf16.mxu0 0
  %1709 = vmatpush2.bf16.msra.mxu0 0
  %1710 = vmatprep.subr.bf16.mxu0 0
  %1711 = vmatpush2.bf16.msra.mxu0 0
  %1712 = vmatprep.subr.bf16.mxu0 0
  %1713 = vmatpush2.bf16.msra.mxu0 0
  %1714 = vmatprep.subr.bf16.mxu0 0
  %1715 = vmatpush2.bf16.msra.mxu0 0
  %1716 = vmatprep.subr.bf16.mxu0 0
  %1717 = vmatpush2.bf16.msra.mxu0 0
  %1718 = vmatprep.subr.bf16.mxu0 0
  %1719 = vmatpush2.bf16.msra.mxu0 0
  %1720 = vmatprep.subr.bf16.mxu0 0
  %1721 = vmatpush2.bf16.msra.mxu0 0
  %1722 = vmatprep.subr.bf16.mxu0 0
  %1723 = vmatpush2.bf16.msra.mxu0 0
  %1724 = vmatprep.mubr.bf16.mxu0 0
  %1725 = vmatmul.mubr.bf16.gmra.mxu0 %v1678
  %v1726 = vpop.f32.mrf.mxu0
  %v1727 = vadd.f32 %v1636, %v1726
  %v1728 = vpop.f32.mrf.mxu0
  %v1729 = vpop.f32.mrf.mxu0
  %v1730 = vadd.f32 %v1636, %v1729
  %v1731 = vpop.f32.mrf.mxu0
  %1732 = vmatprep.mubr.bf16.mxu0 0
  %1733 = vmatmul.mubr.bf16.gmra.mxu0 %v1681
  %v1734 = vpop.f32.mrf.mxu0
  %v1735 = vadd.f32 %v1636, %v1734
  %v1736 = vpop.f32.mrf.mxu0
  %v1737 = vpop.f32.mrf.mxu0
  %v1738 = vadd.f32 %v1636, %v1737
  %v1739 = vpop.f32.mrf.mxu0
  %1740 = vmatprep.mubr.bf16.mxu0 0
  %1741 = vmatmul.mubr.bf16.gmra.mxu0 %v1684
  %v1742 = vpop.f32.mrf.mxu0
  %v1743 = vadd.f32 %v1636, %v1742
  %v1744 = vpop.f32.mrf.mxu0
  %v1745 = vpop.f32.mrf.mxu0
  %v1746 = vadd.f32 %v1636, %v1745
  %v1747 = vpop.f32.mrf.mxu0
  %1748 = vmatprep.mubr.bf16.mxu0 0
  %1749 = vmatmul.mubr.bf16.gmra.mxu0 %v1687
  %v1750 = vpop.f32.mrf.mxu0
  %v1751 = vadd.f32 %v1636, %v1750
  %v1752 = vpop.f32.mrf.mxu0
  %v1753 = vpop.f32.mrf.mxu0
  %v1754 = vadd.f32 %v1636, %v1753
  %v1755 = vpop.f32.mrf.mxu0
  %1756 = vdwg.mxu0
  %v1757 = vsub.f32 0.0, %v1727
  %v1758 = vsub.f32 0.0, %v1730
  %v1759 = vsub.f32 0.0, %v1735
  %v1760 = vsub.f32 0.0, %v1738
  %v1761 = vsub.f32 0.0, %v1743
  %v1762 = vsub.f32 0.0, %v1746
  %v1763 = vsub.f32 0.0, %v1751
  %v1764 = vsub.f32 0.0, %v1754
  %v1765 = vmul.f32 %v1757, 1.442695
  %v1766 = vpow.pop %v1765
  %v1767 = vmul.f32 %v1758, 1.442695
  %v1768 = vpow.pop %v1767
  %v1769 = vmul.f32 %v1759, 1.442695
  %v1770 = vpow.pop %v1769
  %v1771 = vmul.f32 %v1760, 1.442695
  %v1772 = vpow.pop %v1771
  %v1773 = vmul.f32 %v1761, 1.442695
  %v1774 = vpow.pop %v1773
  %v1775 = vmul.f32 %v1762, 1.442695
  %v1776 = vpow.pop %v1775
  %v1777 = vmul.f32 %v1763, 1.442695
  %v1778 = vpow.pop %v1777
  %v1779 = vmul.f32 %v1764, 1.442695
  %v1780 = vpow.pop %v1779
  %v1781 = vadd.f32 %v1766, 1.0
  %v1782 = vadd.f32 %v1768, 1.0
  %v1783 = vadd.f32 %v1770, 1.0
  %v1784 = vadd.f32 %v1772, 1.0
  %v1785 = vadd.f32 %v1774, 1.0
  %v1786 = vadd.f32 %v1776, 1.0
  %v1787 = vadd.f32 %v1778, 1.0
  %v1788 = vadd.f32 %v1780, 1.0
  %v1789 = vrcp.pop %v1781
  %v1790 = vrcp.pop %v1782
  %v1791 = vrcp.pop %v1783
  %v1792 = vrcp.pop %v1784
  %v1793 = vrcp.pop %v1785
  %v1794 = vrcp.pop %v1786
  %v1795 = vrcp.pop %v1787
  %v1796 = vrcp.pop %v1788
  %v1797 = vpack.c.bf16 %v1203, %v1200
  %v1798 = vpack.c.bf16 %v1211, %v1208
  %v1799 = vpack.c.bf16 %v1219, %v1216
  %v1800 = vpack.c.bf16 %v1227, %v1224
  %v1801 = vld [vmem:[%s13] sm:$0xf]
  %v1802 = vld [vmem:[%s13 + $0x4] sm:$0xf]
  %v1803 = vld [vmem:[%s13 + $0x8] sm:$0xf]
  %v1804 = vld [vmem:[%s13 + $0xc] sm:$0xf]
  %v1805 = vld [vmem:[%s13 + $0x10] sm:$0xf]
  %v1806 = vld [vmem:[%s13 + $0x14] sm:$0xf]
  %v1813 = vunpack.c.l.b16 %v1801
  %v1814 = vunpack.c.l.b16 %v1802
  %v1815 = vunpack.c.l.b16 %v1803
  %v1816 = vunpack.c.l.b16 %v1804
  %v1817 = vunpack.c.l.b16 %v1805
  %v1818 = vunpack.c.l.b16 %v1806
  %v1819 = vpack.c.b16 %v1814, %v1813
  %v1820 = vpack.c.b16 %v1816, %v1815
  %v1821 = vpack.c.b16 %v1818, %v1817
  %v1826 = vsel %vm1152, %v1797, 0
  %v1829 = vsel %vm1152, %v1798, 0
  %v1832 = vsel %vm1152, %v1799, 0
  %v1835 = vsel %vm1152, %v1800, 0
  %1837 = vmatprep.subr.bf16.mxu0 0
  %1838 = vmatpush1.bf16.msra.mxu0 0
  %1839 = vmatprep.subr.bf16.mxu0 0
  %1840 = vmatpush1.bf16.msra.mxu0 0
  %1841 = vmatprep.subr.bf16.mxu0 0
  %1842 = vmatpush1.bf16.msra.mxu0 0
  %1843 = vmatprep.subr.bf16.mxu0 0
  %1844 = vmatpush1.bf16.msra.mxu0 0
  %1845 = vmatprep.subr.bf16.mxu0 0
  %1846 = vmatpush1.bf16.msra.mxu0 0
  %1847 = vmatprep.subr.bf16.mxu0 0
  %1848 = vmatpush1.bf16.msra.mxu0 %v1821
  %1849 = vmatprep.subr.bf16.mxu0 0
  %1850 = vmatpush1.bf16.msra.mxu0 %v1820
  %1851 = vmatprep.subr.bf16.mxu0 0
  %1852 = vmatpush1.bf16.msra.mxu0 %v1819
  %1853 = vmatprep.subr.bf16.mxu0 0
  %1854 = vmatpush2.bf16.msra.mxu0 0
  %1855 = vmatprep.subr.bf16.mxu0 0
  %1856 = vmatpush2.bf16.msra.mxu0 0
  %1857 = vmatprep.subr.bf16.mxu0 0
  %1858 = vmatpush2.bf16.msra.mxu0 0
  %1859 = vmatprep.subr.bf16.mxu0 0
  %1860 = vmatpush2.bf16.msra.mxu0 0
  %1861 = vmatprep.subr.bf16.mxu0 0
  %1862 = vmatpush2.bf16.msra.mxu0 0
  %1863 = vmatprep.subr.bf16.mxu0 0
  %1864 = vmatpush2.bf16.msra.mxu0 0
  %1865 = vmatprep.subr.bf16.mxu0 0
  %1866 = vmatpush2.bf16.msra.mxu0 0
  %1867 = vmatprep.subr.bf16.mxu0 0
  %1868 = vmatpush2.bf16.msra.mxu0 0
  %1869 = vmatprep.mubr.bf16.mxu0 0
  %1870 = vmatmul.mubr.bf16.gmra.mxu0 %v1826
  %v1871 = vpop.f32.mrf.mxu0
  %v1872 = vadd.f32 0.0, %v1871
  %v1873 = vpop.f32.mrf.mxu0
  %v1874 = vpop.f32.mrf.mxu0
  %v1875 = vadd.f32 0.0, %v1874
  %v1876 = vpop.f32.mrf.mxu0
  %1877 = vmatprep.mubr.bf16.mxu0 0
  %1878 = vmatmul.mubr.bf16.gmra.mxu0 %v1829
  %v1879 = vpop.f32.mrf.mxu0
  %v1880 = vadd.f32 0.0, %v1879
  %v1881 = vpop.f32.mrf.mxu0
  %v1882 = vpop.f32.mrf.mxu0
  %v1883 = vadd.f32 0.0, %v1882
  %v1884 = vpop.f32.mrf.mxu0
  %1885 = vmatprep.mubr.bf16.mxu0 0
  %1886 = vmatmul.mubr.bf16.gmra.mxu0 %v1832
  %v1887 = vpop.f32.mrf.mxu0
  %v1888 = vadd.f32 0.0, %v1887
  %v1889 = vpop.f32.mrf.mxu0
  %v1890 = vpop.f32.mrf.mxu0
  %v1891 = vadd.f32 0.0, %v1890
  %v1892 = vpop.f32.mrf.mxu0
  %1893 = vmatprep.mubr.bf16.mxu0 0
  %1894 = vmatmul.mubr.bf16.gmra.mxu0 %v1835
  %v1895 = vpop.f32.mrf.mxu0
  %v1896 = vadd.f32 0.0, %v1895
  %v1897 = vpop.f32.mrf.mxu0
  %v1898 = vpop.f32.mrf.mxu0
  %v1899 = vadd.f32 0.0, %v1898
  %v1900 = vpop.f32.mrf.mxu0
  %1901 = vdwg.mxu0
  %1910 = vrot.lane.b32.xlu0 %v1789, 16
  %v1911 = vpop.permute.xlu0 %1910
  %1912 = vrot.lane.b32.xlu0 %v1790, 16
  %v1913 = vpop.permute.xlu0 %1912
  %1914 = vrot.lane.b32.xlu0 %v1791, 16
  %v1915 = vpop.permute.xlu0 %1914
  %1916 = vrot.lane.b32.xlu0 %v1792, 16
  %v1917 = vpop.permute.xlu0 %1916
  %1918 = vrot.lane.b32.xlu0 %v1793, 16
  %v1919 = vpop.permute.xlu0 %1918
  %1920 = vrot.lane.b32.xlu0 %v1794, 16
  %v1921 = vpop.permute.xlu0 %1920
  %1922 = vrot.lane.b32.xlu0 %v1795, 16
  %v1923 = vpop.permute.xlu0 %1922
  %1924 = vrot.lane.b32.xlu0 %v1796, 16
  %v1925 = vpop.permute.xlu0 %1924
  %1934 = vrot.lane.b32.xlu0 %v1789, 32
  %v1935 = vpop.permute.xlu0 %1934
  %1936 = vrot.lane.b32.xlu0 %v1790, 32
  %v1937 = vpop.permute.xlu0 %1936
  %1938 = vrot.lane.b32.xlu0 %v1791, 32
  %v1939 = vpop.permute.xlu0 %1938
  %1940 = vrot.lane.b32.xlu0 %v1792, 32
  %v1941 = vpop.permute.xlu0 %1940
  %1942 = vrot.lane.b32.xlu0 %v1793, 32
  %v1943 = vpop.permute.xlu0 %1942
  %1944 = vrot.lane.b32.xlu0 %v1794, 32
  %v1945 = vpop.permute.xlu0 %1944
  %1946 = vrot.lane.b32.xlu0 %v1795, 32
  %v1947 = vpop.permute.xlu0 %1946
  %1948 = vrot.lane.b32.xlu0 %v1796, 32
  %v1949 = vpop.permute.xlu0 %1948
  %v1958 = vsel %vm1090, %v1789, %v1911
  %v1959 = vsel %vm1090, %v1790, %v1913
  %v1960 = vsel %vm1090, %v1791, %v1915
  %v1961 = vsel %vm1090, %v1792, %v1917
  %v1962 = vsel %vm1090, %v1793, %v1919
  %v1963 = vsel %vm1090, %v1794, %v1921
  %v1964 = vsel %vm1090, %v1795, %v1923
  %v1965 = vsel %vm1090, %v1796, %v1925
  %v1966 = vsel %vm1099, %v1958, %v1935
  %v1967 = vsel %vm1099, %v1959, %v1937
  %v1968 = vsel %vm1099, %v1960, %v1939
  %v1969 = vsel %vm1099, %v1961, %v1941
  %v1970 = vsel %vm1099, %v1962, %v1943
  %v1971 = vsel %vm1099, %v1963, %v1945
  %v1972 = vsel %vm1099, %v1964, %v1947
  %v1973 = vsel %vm1099, %v1965, %v1949
  %v1974 = vmul.f32 %v1872, %v1966
  %v1975 = vmul.f32 %v1875, %v1967
  %v1976 = vmul.f32 %v1880, %v1968
  %v1977 = vmul.f32 %v1883, %v1969
  %v1978 = vmul.f32 %v1888, %v1970
  %v1979 = vmul.f32 %v1891, %v1971
  %v1980 = vmul.f32 %v1896, %v1972
  %v1981 = vmul.f32 %v1899, %v1973
  %v1982 = vmax.f32 %v1606, 0.0
  %v1983 = vmax.f32 %v1607, 0.0
  %v1984 = vmax.f32 %v1608, 0.0
  %v1985 = vmax.f32 %v1609, 0.0
  %v1986 = vmax.f32 %v1610, 0.0
  %v1987 = vmax.f32 %v1611, 0.0
  %v1988 = vmax.f32 %v1612, 0.0
  %v1989 = vmax.f32 %v1613, 0.0
  %v1990 = vpack.c.bf16 %v1975, %v1974
  %v1991 = vpack.c.bf16 %v1977, %v1976
  %v1992 = vpack.c.bf16 %v1979, %v1978
  %v1993 = vpack.c.bf16 %v1981, %v1980
  %v1994 = vld [vmem:[%s16] sm:$0xf]
  %v1995 = vld [vmem:[%s16 + $0x4] sm:$0xf]
  %v1996 = vld [vmem:[%s16 + $0x8] sm:$0xf]
  %v1997 = vld [vmem:[%s16 + $0xc] sm:$0xf]
  %v1998 = vld [vmem:[%s16 + $0x10] sm:$0xf]
  %v1999 = vld [vmem:[%s16 + $0x14] sm:$0xf]
  %v2006 = vunpack.c.l.b16 %v1994
  %v2007 = vunpack.c.l.b16 %v1995
  %v2008 = vunpack.c.l.b16 %v1996
  %v2009 = vunpack.c.l.b16 %v1997
  %v2010 = vunpack.c.l.b16 %v1998
  %v2011 = vunpack.c.l.b16 %v1999
  %v2012 = vpack.c.b16 %v2007, %v2006
  %v2013 = vpack.c.b16 %v2009, %v2008
  %v2014 = vpack.c.b16 %v2011, %v2010
  %v2019 = vsel %vm1152, %v1990, 0
  %v2022 = vsel %vm1152, %v1991, 0
  %v2025 = vsel %vm1152, %v1992, 0
  %v2028 = vsel %vm1152, %v1993, 0
  %2030 = vmatprep.subr.bf16.mxu0 0
  %2031 = vmatpush1.bf16.msra.mxu0 0
  %2032 = vmatprep.subr.bf16.mxu0 0
  %2033 = vmatpush1.bf16.msra.mxu0 0
  %2034 = vmatprep.subr.bf16.mxu0 0
  %2035 = vmatpush1.bf16.msra.mxu0 0
  %2036 = vmatprep.subr.bf16.mxu0 0
  %2037 = vmatpush1.bf16.msra.mxu0 0
  %2038 = vmatprep.subr.bf16.mxu0 0
  %2039 = vmatpush1.bf16.msra.mxu0 0
  %2040 = vmatprep.subr.bf16.mxu0 0
  %2041 = vmatpush1.bf16.msra.mxu0 %v2014
  %2042 = vmatprep.subr.bf16.mxu0 0
  %2043 = vmatpush1.bf16.msra.mxu0 %v2013
  %2044 = vmatprep.subr.bf16.mxu0 0
  %2045 = vmatpush1.bf16.msra.mxu0 %v2012
  %2046 = vmatprep.subr.bf16.mxu0 0
  %2047 = vmatpush2.bf16.msra.mxu0 0
  %2048 = vmatprep.subr.bf16.mxu0 0
  %2049 = vmatpush2.bf16.msra.mxu0 0
  %2050 = vmatprep.subr.bf16.mxu0 0
  %2051 = vmatpush2.bf16.msra.mxu0 0
  %2052 = vmatprep.subr.bf16.mxu0 0
  %2053 = vmatpush2.bf16.msra.mxu0 0
  %2054 = vmatprep.subr.bf16.mxu0 0
  %2055 = vmatpush2.bf16.msra.mxu0 0
  %2056 = vmatprep.subr.bf16.mxu0 0
  %2057 = vmatpush2.bf16.msra.mxu0 0
  %2058 = vmatprep.subr.bf16.mxu0 0
  %2059 = vmatpush2.bf16.msra.mxu0 0
  %2060 = vmatprep.subr.bf16.mxu0 0
  %2061 = vmatpush2.bf16.msra.mxu0 0
  %2062 = vmatprep.mubr.bf16.mxu0 0
  %2063 = vmatmul.mubr.bf16.gmra.mxu0 %v2019
  %v2064 = vpop.f32.mrf.mxu0
  %v2065 = vadd.f32 0.0, %v2064
  %v2066 = vpop.f32.mrf.mxu0
  %v2067 = vpop.f32.mrf.mxu0
  %v2068 = vadd.f32 0.0, %v2067
  %v2069 = vpop.f32.mrf.mxu0
  %2070 = vmatprep.mubr.bf16.mxu0 0
  %2071 = vmatmul.mubr.bf16.gmra.mxu0 %v2022
  %v2072 = vpop.f32.mrf.mxu0
  %v2073 = vadd.f32 0.0, %v2072
  %v2074 = vpop.f32.mrf.mxu0
  %v2075 = vpop.f32.mrf.mxu0
  %v2076 = vadd.f32 0.0, %v2075
  %v2077 = vpop.f32.mrf.mxu0
  %2078 = vmatprep.mubr.bf16.mxu0 0
  %2079 = vmatmul.mubr.bf16.gmra.mxu0 %v2025
  %v2080 = vpop.f32.mrf.mxu0
  %v2081 = vadd.f32 0.0, %v2080
  %v2082 = vpop.f32.mrf.mxu0
  %v2083 = vpop.f32.mrf.mxu0
  %v2084 = vadd.f32 0.0, %v2083
  %v2085 = vpop.f32.mrf.mxu0
  %2086 = vmatprep.mubr.bf16.mxu0 0
  %2087 = vmatmul.mubr.bf16.gmra.mxu0 %v2028
  %v2088 = vpop.f32.mrf.mxu0
  %v2089 = vadd.f32 0.0, %v2088
  %v2090 = vpop.f32.mrf.mxu0
  %v2091 = vpop.f32.mrf.mxu0
  %v2092 = vadd.f32 0.0, %v2091
  %v2093 = vpop.f32.mrf.mxu0
  %2094 = vdwg.mxu0
  %v2095 = vmul.f32 %v2065, %v2065
  %v2096 = vmul.f32 %v2068, %v2068
  %v2097 = vmul.f32 %v2073, %v2073
  %v2098 = vmul.f32 %v2076, %v2076
  %v2099 = vmul.f32 %v2081, %v2081
  %v2100 = vmul.f32 %v2084, %v2084
  %v2101 = vmul.f32 %v2089, %v2089
  %v2102 = vmul.f32 %v2092, %v2092
  %2111 = vrot.lane.b32.xlu0 %v2095, 112
  %v2112 = vpop.permute.xlu0 %2111
  %2113 = vrot.lane.b32.xlu0 %v2096, 112
  %v2114 = vpop.permute.xlu0 %2113
  %2115 = vrot.lane.b32.xlu0 %v2097, 112
  %v2116 = vpop.permute.xlu0 %2115
  %2117 = vrot.lane.b32.xlu0 %v2098, 112
  %v2118 = vpop.permute.xlu0 %2117
  %2119 = vrot.lane.b32.xlu0 %v2099, 112
  %v2120 = vpop.permute.xlu0 %2119
  %2121 = vrot.lane.b32.xlu0 %v2100, 112
  %v2122 = vpop.permute.xlu0 %2121
  %2123 = vrot.lane.b32.xlu0 %v2101, 112
  %v2124 = vpop.permute.xlu0 %2123
  %2125 = vrot.lane.b32.xlu0 %v2102, 112
  %v2126 = vpop.permute.xlu0 %2125
  %v2135 = vadd.f32 %v2095, %v2112
  %v2136 = vadd.f32 %v2096, %v2114
  %v2137 = vadd.f32 %v2097, %v2116
  %v2138 = vadd.f32 %v2098, %v2118
  %v2139 = vadd.f32 %v2099, %v2120
  %v2140 = vadd.f32 %v2100, %v2122
  %v2141 = vadd.f32 %v2101, %v2124
  %v2142 = vadd.f32 %v2102, %v2126
  %2143 = vrot.lane.b32.xlu0 %v2095, 96
  %v2144 = vpop.permute.xlu0 %2143
  %2145 = vrot.lane.b32.xlu0 %v2096, 96
  %v2146 = vpop.permute.xlu0 %2145
  %2147 = vrot.lane.b32.xlu0 %v2097, 96
  %v2148 = vpop.permute.xlu0 %2147
  %2149 = vrot.lane.b32.xlu0 %v2098, 96
  %v2150 = vpop.permute.xlu0 %2149
  %2151 = vrot.lane.b32.xlu0 %v2099, 96
  %v2152 = vpop.permute.xlu0 %2151
  %2153 = vrot.lane.b32.xlu0 %v2100, 96
  %v2154 = vpop.permute.xlu0 %2153
  %2155 = vrot.lane.b32.xlu0 %v2101, 96
  %v2156 = vpop.permute.xlu0 %2155
  %2157 = vrot.lane.b32.xlu0 %v2102, 96
  %v2158 = vpop.permute.xlu0 %2157
  %v2167 = vadd.f32 %v2135, %v2144
  %v2168 = vadd.f32 %v2136, %v2146
  %v2169 = vadd.f32 %v2137, %v2148
  %v2170 = vadd.f32 %v2138, %v2150
  %v2171 = vadd.f32 %v2139, %v2152
  %v2172 = vadd.f32 %v2140, %v2154
  %v2173 = vadd.f32 %v2141, %v2156
  %v2174 = vadd.f32 %v2142, %v2158
  %v2175 = vmax.f32 %v2167, 1e-08
  %v2176 = vmax.f32 %v2168, 1e-08
  %v2177 = vmax.f32 %v2169, 1e-08
  %v2178 = vmax.f32 %v2170, 1e-08
  %v2179 = vmax.f32 %v2171, 1e-08
  %v2180 = vmax.f32 %v2172, 1e-08
  %v2181 = vmax.f32 %v2173, 1e-08
  %v2182 = vmax.f32 %v2174, 1e-08
  %v2183 = vrsqrt.pop %v2175
  %v2184 = vmul.f32 %v2175, %v2183
  %vm2185 = vcmp.eq.f32.partialorder %v2175, inf
  %v2186 = vsel %vm2185, %v2175, %v2184
  %vm2187 = vcmp.eq.f32.partialorder %v2175, 0.0
  %v2188 = vand.u32 %v2175, 2147483648
  %v2189 = vsel %vm2187, %v2188, %v2186
  %v2190 = vrsqrt.pop %v2176
  %v2191 = vmul.f32 %v2176, %v2190
  %vm2192 = vcmp.eq.f32.partialorder %v2176, inf
  %v2193 = vsel %vm2192, %v2176, %v2191
  %vm2194 = vcmp.eq.f32.partialorder %v2176, 0.0
  %v2195 = vand.u32 %v2176, 2147483648
  %v2196 = vsel %vm2194, %v2195, %v2193
  %v2197 = vrsqrt.pop %v2177
  %v2198 = vmul.f32 %v2177, %v2197
  %vm2199 = vcmp.eq.f32.partialorder %v2177, inf
  %v2200 = vsel %vm2199, %v2177, %v2198
  %vm2201 = vcmp.eq.f32.partialorder %v2177, 0.0
  %v2202 = vand.u32 %v2177, 2147483648
  %v2203 = vsel %vm2201, %v2202, %v2200
  %v2204 = vrsqrt.pop %v2178
  %v2205 = vmul.f32 %v2178, %v2204
  %vm2206 = vcmp.eq.f32.partialorder %v2178, inf
  %v2207 = vsel %vm2206, %v2178, %v2205
  %vm2208 = vcmp.eq.f32.partialorder %v2178, 0.0
  %v2209 = vand.u32 %v2178, 2147483648
  %v2210 = vsel %vm2208, %v2209, %v2207
  %v2211 = vrsqrt.pop %v2179
  %v2212 = vmul.f32 %v2179, %v2211
  %vm2213 = vcmp.eq.f32.partialorder %v2179, inf
  %v2214 = vsel %vm2213, %v2179, %v2212
  %vm2215 = vcmp.eq.f32.partialorder %v2179, 0.0
  %v2216 = vand.u32 %v2179, 2147483648
  %v2217 = vsel %vm2215, %v2216, %v2214
  %v2218 = vrsqrt.pop %v2180
  %v2219 = vmul.f32 %v2180, %v2218
  %vm2220 = vcmp.eq.f32.partialorder %v2180, inf
  %v2221 = vsel %vm2220, %v2180, %v2219
  %vm2222 = vcmp.eq.f32.partialorder %v2180, 0.0
  %v2223 = vand.u32 %v2180, 2147483648
  %v2224 = vsel %vm2222, %v2223, %v2221
  %v2225 = vrsqrt.pop %v2181
  %v2226 = vmul.f32 %v2181, %v2225
  %vm2227 = vcmp.eq.f32.partialorder %v2181, inf
  %v2228 = vsel %vm2227, %v2181, %v2226
  %vm2229 = vcmp.eq.f32.partialorder %v2181, 0.0
  %v2230 = vand.u32 %v2181, 2147483648
  %v2231 = vsel %vm2229, %v2230, %v2228
  %v2232 = vrsqrt.pop %v2182
  %v2233 = vmul.f32 %v2182, %v2232
  %vm2234 = vcmp.eq.f32.partialorder %v2182, inf
  %v2235 = vsel %vm2234, %v2182, %v2233
  %vm2236 = vcmp.eq.f32.partialorder %v2182, 0.0
  %v2237 = vand.u32 %v2182, 2147483648
  %v2238 = vsel %vm2236, %v2237, %v2235
  %v2239 = vpack.c.bf16 %v1983, %v1982
  %v2240 = vpack.c.bf16 %v1985, %v1984
  %v2241 = vpack.c.bf16 %v1987, %v1986
  %v2242 = vpack.c.bf16 %v1989, %v1988
  %v2243 = vld [vmem:[%s17] sm:$0xf]
  %v2244 = vld [vmem:[%s17 + $0x4] sm:$0xf]
  %v2245 = vld [vmem:[%s17 + $0x8] sm:$0xf]
  %v2246 = vld [vmem:[%s17 + $0xc] sm:$0xf]
  %v2247 = vld [vmem:[%s17 + $0x10] sm:$0xf]
  %v2248 = vld [vmem:[%s17 + $0x14] sm:$0xf]
  %v2249 = vld [vmem:[%s17 + $0x18] sm:$0xf]
  %v2250 = vld [vmem:[%s17 + $0x1c] sm:$0xf]
  %v2251 = vld [vmem:[%s17 + $0x20] sm:$0xf]
  %v2252 = vld [vmem:[%s17 + $0x24] sm:$0xf]
  %v2253 = vld [vmem:[%s17 + $0x28] sm:$0xf]
  %v2254 = vld [vmem:[%s17 + $0x2c] sm:$0xf]
  %v2255 = vld [vmem:[%s17 + $0x30] sm:$0x3]
  %v2256 = vpack.c.bf16 %v2196, %v2189
  %v2257 = vpack.c.bf16 %v2210, %v2203
  %v2258 = vpack.c.bf16 %v2224, %v2217
  %v2259 = vpack.c.bf16 %v2238, %v2231
  %v2260 = vld [vmem:[%s18] sm:$0xf]
  %v2261 = vld [vmem:[%s18 + $0x4] sm:$0xf]
  %v2264 = vunpack.c.l.b16 %v2260
  %v2265 = vunpack.c.l.b16 %v2261
  %v2266 = vpack.c.b16 %v2265, %v2264
  %v2269 = vsel %vm1090, %v2256, 0
  %v2272 = vsel %vm1090, %v2257, 0
  %v2275 = vsel %vm1090, %v2258, 0
  %v2278 = vsel %vm1090, %v2259, 0
  %2280 = vmatprep.subr.bf16.mxu0 0
  %2281 = vmatpush1.bf16.msra.mxu0 0
  %2282 = vmatprep.subr.bf16.mxu0 0
  %2283 = vmatpush1.bf16.msra.mxu0 0
  %2284 = vmatprep.subr.bf16.mxu0 0
  %2285 = vmatpush1.bf16.msra.mxu0 0
  %2286 = vmatprep.subr.bf16.mxu0 0
  %2287 = vmatpush1.bf16.msra.mxu0 0
  %2288 = vmatprep.subr.bf16.mxu0 0
  %2289 = vmatpush1.bf16.msra.mxu0 0
  %2290 = vmatprep.subr.bf16.mxu0 0
  %2291 = vmatpush1.bf16.msra.mxu0 0
  %2292 = vmatprep.subr.bf16.mxu0 0
  %2293 = vmatpush1.bf16.msra.mxu0 0
  %2294 = vmatprep.subr.bf16.mxu0 0
  %2295 = vmatpush1.bf16.msra.mxu0 %v2266
  %2296 = vmatprep.subr.bf16.mxu0 0
  %2297 = vmatpush2.bf16.msra.mxu0 0
  %2298 = vmatprep.subr.bf16.mxu0 0
  %2299 = vmatpush2.bf16.msra.mxu0 0
  %2300 = vmatprep.subr.bf16.mxu0 0
  %2301 = vmatpush2.bf16.msra.mxu0 0
  %2302 = vmatprep.subr.bf16.mxu0 0
  %2303 = vmatpush2.bf16.msra.mxu0 0
  %2304 = vmatprep.subr.bf16.mxu0 0
  %2305 = vmatpush2.bf16.msra.mxu0 0
  %2306 = vmatprep.subr.bf16.mxu0 0
  %2307 = vmatpush2.bf16.msra.mxu0 0
  %2308 = vmatprep.subr.bf16.mxu0 0
  %2309 = vmatpush2.bf16.msra.mxu0 0
  %2310 = vmatprep.subr.bf16.mxu0 0
  %2311 = vmatpush2.bf16.msra.mxu0 0
  %2312 = vmatprep.mubr.bf16.mxu0 0
  %2313 = vmatmul.mubr.bf16.gmra.mxu0 %v2269
  %v2314 = vpop.f32.mrf.mxu0
  %v2315 = vadd.f32 0.0, %v2314
  %v2316 = vpop.f32.mrf.mxu0
  %v2317 = vpop.f32.mrf.mxu0
  %v2318 = vadd.f32 0.0, %v2317
  %v2319 = vpop.f32.mrf.mxu0
  %2320 = vmatprep.mubr.bf16.mxu0 0
  %2321 = vmatmul.mubr.bf16.gmra.mxu0 %v2272
  %v2322 = vpop.f32.mrf.mxu0
  %v2323 = vadd.f32 0.0, %v2322
  %v2324 = vpop.f32.mrf.mxu0
  %v2325 = vpop.f32.mrf.mxu0
  %v2326 = vadd.f32 0.0, %v2325
  %v2327 = vpop.f32.mrf.mxu0
  %2328 = vmatprep.mubr.bf16.mxu0 0
  %2329 = vmatmul.mubr.bf16.gmra.mxu0 %v2275
  %v2330 = vpop.f32.mrf.mxu0
  %v2331 = vadd.f32 0.0, %v2330
  %v2332 = vpop.f32.mrf.mxu0
  %v2333 = vpop.f32.mrf.mxu0
  %v2334 = vadd.f32 0.0, %v2333
  %v2335 = vpop.f32.mrf.mxu0
  %2336 = vmatprep.mubr.bf16.mxu0 0
  %2337 = vmatmul.mubr.bf16.gmra.mxu0 %v2278
  %v2338 = vpop.f32.mrf.mxu0
  %v2339 = vadd.f32 0.0, %v2338
  %v2340 = vpop.f32.mrf.mxu0
  %v2341 = vpop.f32.mrf.mxu0
  %v2342 = vadd.f32 0.0, %v2341
  %v2343 = vpop.f32.mrf.mxu0
  %2344 = vdwg.mxu0
  %v2358 = vunpack.c.l.b16 %v2243
  %v2359 = vunpack.c.l.b16 %v2244
  %v2360 = vunpack.c.l.b16 %v2245
  %v2361 = vunpack.c.l.b16 %v2246
  %v2362 = vunpack.c.l.b16 %v2247
  %v2363 = vunpack.c.l.b16 %v2248
  %v2364 = vunpack.c.l.b16 %v2249
  %v2365 = vunpack.c.l.b16 %v2250
  %v2366 = vunpack.c.l.b16 %v2251
  %v2367 = vunpack.c.l.b16 %v2252
  %v2368 = vunpack.c.l.b16 %v2253
  %v2369 = vunpack.c.l.b16 %v2254
  %v2370 = vunpack.c.l.b16 %v2255
  %v2371 = vpack.c.b16 %v2359, %v2358
  %v2372 = vpack.c.b16 %v2361, %v2360
  %v2373 = vpack.c.b16 %v2363, %v2362
  %v2374 = vpack.c.b16 %v2365, %v2364
  %v2375 = vpack.c.b16 %v2367, %v2366
  %v2376 = vpack.c.b16 %v2369, %v2368
  %v2377 = vpack.c.b16 %v2370, %v2370
  %v2385 = vsel %vm777, %v2239, 0
  %v2388 = vsel %vm777, %v2240, 0
  %v2391 = vsel %vm777, %v2241, 0
  %v2394 = vsel %vm777, %v2242, 0
  %v2397 = vsel %vm171, %v2377, 0
  %2399 = vmatprep.subr.bf16.mxu0 0
  %2400 = vmatpush1.bf16.msra.mxu0 0
  %2401 = vmatprep.subr.bf16.mxu0 0
  %2402 = vmatpush1.bf16.msra.mxu0 %v2397
  %2403 = vmatprep.subr.bf16.mxu0 0
  %2404 = vmatpush1.bf16.msra.mxu0 %v2376
  %2405 = vmatprep.subr.bf16.mxu0 0
  %2406 = vmatpush1.bf16.msra.mxu0 %v2375
  %2407 = vmatprep.subr.bf16.mxu0 0
  %2408 = vmatpush1.bf16.msra.mxu0 %v2374
  %2409 = vmatprep.subr.bf16.mxu0 0
  %2410 = vmatpush1.bf16.msra.mxu0 %v2373
  %2411 = vmatprep.subr.bf16.mxu0 0
  %2412 = vmatpush1.bf16.msra.mxu0 %v2372
  %2413 = vmatprep.subr.bf16.mxu0 0
  %2414 = vmatpush1.bf16.msra.mxu0 %v2371
  %2415 = vmatprep.subr.bf16.mxu0 0
  %2416 = vmatpush2.bf16.msra.mxu0 0
  %2417 = vmatprep.subr.bf16.mxu0 0
  %2418 = vmatpush2.bf16.msra.mxu0 0
  %2419 = vmatprep.subr.bf16.mxu0 0
  %2420 = vmatpush2.bf16.msra.mxu0 0
  %2421 = vmatprep.subr.bf16.mxu0 0
  %2422 = vmatpush2.bf16.msra.mxu0 0
  %2423 = vmatprep.subr.bf16.mxu0 0
  %2424 = vmatpush2.bf16.msra.mxu0 0
  %2425 = vmatprep.subr.bf16.mxu0 0
  %2426 = vmatpush2.bf16.msra.mxu0 0
  %2427 = vmatprep.subr.bf16.mxu0 0
  %2428 = vmatpush2.bf16.msra.mxu0 0
  %2429 = vmatprep.subr.bf16.mxu0 0
  %2430 = vmatpush2.bf16.msra.mxu0 0
  %2431 = vmatprep.mubr.bf16.mxu0 0
  %2432 = vmatmul.mubr.bf16.gmra.mxu0 %v2385
  %v2433 = vpop.f32.mrf.mxu0
  %v2434 = vadd.f32 %v2315, %v2433
  %v2435 = vpop.f32.mrf.mxu0
  %v2436 = vpop.f32.mrf.mxu0
  %v2437 = vadd.f32 %v2318, %v2436
  %v2438 = vpop.f32.mrf.mxu0
  %2439 = vmatprep.mubr.bf16.mxu0 0
  %2440 = vmatmul.mubr.bf16.gmra.mxu0 %v2388
  %v2441 = vpop.f32.mrf.mxu0
  %v2442 = vadd.f32 %v2323, %v2441
  %v2443 = vpop.f32.mrf.mxu0
  %v2444 = vpop.f32.mrf.mxu0
  %v2445 = vadd.f32 %v2326, %v2444
  %v2446 = vpop.f32.mrf.mxu0
  %2447 = vmatprep.mubr.bf16.mxu0 0
  %2448 = vmatmul.mubr.bf16.gmra.mxu0 %v2391
  %v2449 = vpop.f32.mrf.mxu0
  %v2450 = vadd.f32 %v2331, %v2449
  %v2451 = vpop.f32.mrf.mxu0
  %v2452 = vpop.f32.mrf.mxu0
  %v2453 = vadd.f32 %v2334, %v2452
  %v2454 = vpop.f32.mrf.mxu0
  %2455 = vmatprep.mubr.bf16.mxu0 0
  %2456 = vmatmul.mubr.bf16.gmra.mxu0 %v2394
  %v2457 = vpop.f32.mrf.mxu0
  %v2458 = vadd.f32 %v2339, %v2457
  %v2459 = vpop.f32.mrf.mxu0
  %v2460 = vpop.f32.mrf.mxu0
  %v2461 = vadd.f32 %v2342, %v2460
  %v2462 = vpop.f32.mrf.mxu0
  %2463 = vdwg.mxu0
  %v2464 = vld [vmem:[%s19] sm:$0x1]
  %v2466 = vlaneseq
  %v2467 = vshrl.u32 %v2466, 7
  %v2468 = vsub.s32 0, %v2467
  %v2469 = vrot.slane %v2464, %v2468
  %v2471 = vadd.f32 %v2434, %v2469
  %v2472 = vadd.f32 %v2437, %v2469
  %v2473 = vadd.f32 %v2442, %v2469
  %v2474 = vadd.f32 %v2445, %v2469
  %v2475 = vadd.f32 %v2450, %v2469
  %v2476 = vadd.f32 %v2453, %v2469
  %v2477 = vadd.f32 %v2458, %v2469
  %v2478 = vadd.f32 %v2461, %v2469
  %v2479 = vpack.c.bf16 %v2472, %v2471
  %v2480 = vpack.c.bf16 %v2474, %v2473
  %v2481 = vpack.c.bf16 %v2476, %v2475
  %v2482 = vpack.c.bf16 %v2478, %v2477
  %v2483 = vld [vmem:[%s21] sm:$0xf]
  %v2484 = vld [vmem:[%s21 + $0x4] sm:$0xf]
  %v2485 = vld [vmem:[%s21 + $0x8] sm:$0xf]
  %v2486 = vld [vmem:[%s21 + $0xc] sm:$0xf]
  %v2487 = vld [vmem:[%s21 + $0x10] sm:$0xf]
  %v2488 = vld [vmem:[%s21 + $0x14] sm:$0xf]
  %v2489 = vld [vmem:[%s21 + $0x18] sm:$0xf]
  %v2490 = vld [vmem:[%s21 + $0x1c] sm:$0xf]
  %v2491 = vld [vmem:[%s21 + $0x20] sm:$0xf]
  %v2492 = vld [vmem:[%s21 + $0x24] sm:$0xf]
  %v2493 = vld [vmem:[%s21 + $0x28] sm:$0xf]
  %v2494 = vld [vmem:[%s21 + $0x2c] sm:$0xf]
  %v2495 = vld [vmem:[%s21 + $0x30] sm:$0x3]
  %v2496 = vld [vmem:[%s22] sm:$0x1]
  %v2498 = vlaneseq
  %v2499 = vshrl.u32 %v2498, 7
  %v2500 = vsub.s32 0, %v2499
  %v2501 = vrot.slane %v2496, %v2500
  %v2516 = vunpack.c.l.b16 %v2483
  %v2517 = vunpack.c.l.b16 %v2484
  %v2518 = vunpack.c.l.b16 %v2485
  %v2519 = vunpack.c.l.b16 %v2486
  %v2520 = vunpack.c.l.b16 %v2487
  %v2521 = vunpack.c.l.b16 %v2488
  %v2522 = vunpack.c.l.b16 %v2489
  %v2523 = vunpack.c.l.b16 %v2490
  %v2524 = vunpack.c.l.b16 %v2491
  %v2525 = vunpack.c.l.b16 %v2492
  %v2526 = vunpack.c.l.b16 %v2493
  %v2527 = vunpack.c.l.b16 %v2494
  %v2528 = vunpack.c.l.b16 %v2495
  %v2529 = vpack.c.b16 %v2517, %v2516
  %v2530 = vpack.c.b16 %v2519, %v2518
  %v2531 = vpack.c.b16 %v2521, %v2520
  %v2532 = vpack.c.b16 %v2523, %v2522
  %v2533 = vpack.c.b16 %v2525, %v2524
  %v2534 = vpack.c.b16 %v2527, %v2526
  %v2535 = vpack.c.b16 %v2528, %v2528
  %v2543 = vsel %vm777, %v2479, 0
  %v2546 = vsel %vm777, %v2480, 0
  %v2549 = vsel %vm777, %v2481, 0
  %v2552 = vsel %vm777, %v2482, 0
  %v2555 = vsel %vm171, %v2535, 0
  %2557 = vmatprep.subr.bf16.mxu0 0
  %2558 = vmatpush1.bf16.msra.mxu0 0
  %2559 = vmatprep.subr.bf16.mxu0 0
  %2560 = vmatpush1.bf16.msra.mxu0 %v2555
  %2561 = vmatprep.subr.bf16.mxu0 0
  %2562 = vmatpush1.bf16.msra.mxu0 %v2534
  %2563 = vmatprep.subr.bf16.mxu0 0
  %2564 = vmatpush1.bf16.msra.mxu0 %v2533
  %2565 = vmatprep.subr.bf16.mxu0 0
  %2566 = vmatpush1.bf16.msra.mxu0 %v2532
  %2567 = vmatprep.subr.bf16.mxu0 0
  %2568 = vmatpush1.bf16.msra.mxu0 %v2531
  %2569 = vmatprep.subr.bf16.mxu0 0
  %2570 = vmatpush1.bf16.msra.mxu0 %v2530
  %2571 = vmatprep.subr.bf16.mxu0 0
  %2572 = vmatpush1.bf16.msra.mxu0 %v2529
  %2573 = vmatprep.subr.bf16.mxu0 0
  %2574 = vmatpush2.bf16.msra.mxu0 0
  %2575 = vmatprep.subr.bf16.mxu0 0
  %2576 = vmatpush2.bf16.msra.mxu0 0
  %2577 = vmatprep.subr.bf16.mxu0 0
  %2578 = vmatpush2.bf16.msra.mxu0 0
  %2579 = vmatprep.subr.bf16.mxu0 0
  %2580 = vmatpush2.bf16.msra.mxu0 0
  %2581 = vmatprep.subr.bf16.mxu0 0
  %2582 = vmatpush2.bf16.msra.mxu0 0
  %2583 = vmatprep.subr.bf16.mxu0 0
  %2584 = vmatpush2.bf16.msra.mxu0 0
  %2585 = vmatprep.subr.bf16.mxu0 0
  %2586 = vmatpush2.bf16.msra.mxu0 0
  %2587 = vmatprep.subr.bf16.mxu0 0
  %2588 = vmatpush2.bf16.msra.mxu0 0
  %2589 = vmatprep.mubr.bf16.mxu0 0
  %2590 = vmatmul.mubr.bf16.gmra.mxu0 %v2543
  %v2591 = vpop.f32.mrf.mxu0
  %v2592 = vadd.f32 %v2501, %v2591
  %v2593 = vpop.f32.mrf.mxu0
  %v2594 = vpop.f32.mrf.mxu0
  %v2595 = vadd.f32 %v2501, %v2594
  %v2596 = vpop.f32.mrf.mxu0
  %2597 = vmatprep.mubr.bf16.mxu0 0
  %2598 = vmatmul.mubr.bf16.gmra.mxu0 %v2546
  %v2599 = vpop.f32.mrf.mxu0
  %v2600 = vadd.f32 %v2501, %v2599
  %v2601 = vpop.f32.mrf.mxu0
  %v2602 = vpop.f32.mrf.mxu0
  %v2603 = vadd.f32 %v2501, %v2602
  %v2604 = vpop.f32.mrf.mxu0
  %2605 = vmatprep.mubr.bf16.mxu0 0
  %2606 = vmatmul.mubr.bf16.gmra.mxu0 %v2549
  %v2607 = vpop.f32.mrf.mxu0
  %v2608 = vadd.f32 %v2501, %v2607
  %v2609 = vpop.f32.mrf.mxu0
  %v2610 = vpop.f32.mrf.mxu0
  %v2611 = vadd.f32 %v2501, %v2610
  %v2612 = vpop.f32.mrf.mxu0
  %2613 = vmatprep.mubr.bf16.mxu0 0
  %2614 = vmatmul.mubr.bf16.gmra.mxu0 %v2552
  %v2615 = vpop.f32.mrf.mxu0
  %v2616 = vadd.f32 %v2501, %v2615
  %v2617 = vpop.f32.mrf.mxu0
  %v2618 = vpop.f32.mrf.mxu0
  %v2619 = vadd.f32 %v2501, %v2618
  %v2620 = vpop.f32.mrf.mxu0
  %2621 = vdwg.mxu0
  %v2622 = vsub.f32 0.0, %v2592
  %v2623 = vsub.f32 0.0, %v2595
  %v2624 = vsub.f32 0.0, %v2600
  %v2625 = vsub.f32 0.0, %v2603
  %v2626 = vsub.f32 0.0, %v2608
  %v2627 = vsub.f32 0.0, %v2611
  %v2628 = vsub.f32 0.0, %v2616
  %v2629 = vsub.f32 0.0, %v2619
  %v2630 = vmul.f32 %v2622, 1.442695
  %v2631 = vpow.pop %v2630
  %v2632 = vmul.f32 %v2623, 1.442695
  %v2633 = vpow.pop %v2632
  %v2634 = vmul.f32 %v2624, 1.442695
  %v2635 = vpow.pop %v2634
  %v2636 = vmul.f32 %v2625, 1.442695
  %v2637 = vpow.pop %v2636
  %v2638 = vmul.f32 %v2626, 1.442695
  %v2639 = vpow.pop %v2638
  %v2640 = vmul.f32 %v2627, 1.442695
  %v2641 = vpow.pop %v2640
  %v2642 = vmul.f32 %v2628, 1.442695
  %v2643 = vpow.pop %v2642
  %v2644 = vmul.f32 %v2629, 1.442695
  %v2645 = vpow.pop %v2644
  %v2646 = vadd.f32 %v2631, 1.0
  %v2647 = vadd.f32 %v2633, 1.0
  %v2648 = vadd.f32 %v2635, 1.0
  %v2649 = vadd.f32 %v2637, 1.0
  %v2650 = vadd.f32 %v2639, 1.0
  %v2651 = vadd.f32 %v2641, 1.0
  %v2652 = vadd.f32 %v2643, 1.0
  %v2653 = vadd.f32 %v2645, 1.0
  %v2654 = vrcp.pop %v2646
  %v2655 = vrcp.pop %v2647
  %v2656 = vrcp.pop %v2648
  %v2657 = vrcp.pop %v2649
  %v2658 = vrcp.pop %v2650
  %v2659 = vrcp.pop %v2651
  %v2660 = vrcp.pop %v2652
  %v2661 = vrcp.pop %v2653
  %v2662 = vpack.c.bf16 %v2068, %v2065
  %v2663 = vpack.c.bf16 %v2076, %v2073
  %v2664 = vpack.c.bf16 %v2084, %v2081
  %v2665 = vpack.c.bf16 %v2092, %v2089
  %v2666 = vld [vmem:[%s20] sm:$0xf]
  %v2667 = vld [vmem:[%s20 + $0x4] sm:$0xf]
  %v2668 = vld [vmem:[%s20 + $0x8] sm:$0xf]
  %v2669 = vld [vmem:[%s20 + $0xc] sm:$0xf]
  %v2670 = vld [vmem:[%s20 + $0x10] sm:$0xf]
  %v2671 = vld [vmem:[%s20 + $0x14] sm:$0xf]
  %v2678 = vunpack.c.l.b16 %v2666
  %v2679 = vunpack.c.l.b16 %v2667
  %v2680 = vunpack.c.l.b16 %v2668
  %v2681 = vunpack.c.l.b16 %v2669
  %v2682 = vunpack.c.l.b16 %v2670
  %v2683 = vunpack.c.l.b16 %v2671
  %v2684 = vpack.c.b16 %v2679, %v2678
  %v2685 = vpack.c.b16 %v2681, %v2680
  %v2686 = vpack.c.b16 %v2683, %v2682
  %v2691 = vsel %vm1152, %v2662, 0
  %v2694 = vsel %vm1152, %v2663, 0
  %v2697 = vsel %vm1152, %v2664, 0
  %v2700 = vsel %vm1152, %v2665, 0
  %2702 = vmatprep.subr.bf16.mxu0 0
  %2703 = vmatpush1.bf16.msra.mxu0 0
  %2704 = vmatprep.subr.bf16.mxu0 0
  %2705 = vmatpush1.bf16.msra.mxu0 0
  %2706 = vmatprep.subr.bf16.mxu0 0
  %2707 = vmatpush1.bf16.msra.mxu0 0
  %2708 = vmatprep.subr.bf16.mxu0 0
  %2709 = vmatpush1.bf16.msra.mxu0 0
  %2710 = vmatprep.subr.bf16.mxu0 0
  %2711 = vmatpush1.bf16.msra.mxu0 0
  %2712 = vmatprep.subr.bf16.mxu0 0
  %2713 = vmatpush1.bf16.msra.mxu0 %v2686
  %2714 = vmatprep.subr.bf16.mxu0 0
  %2715 = vmatpush1.bf16.msra.mxu0 %v2685
  %2716 = vmatprep.subr.bf16.mxu0 0
  %2717 = vmatpush1.bf16.msra.mxu0 %v2684
  %2718 = vmatprep.subr.bf16.mxu0 0
  %2719 = vmatpush2.bf16.msra.mxu0 0
  %2720 = vmatprep.subr.bf16.mxu0 0
  %2721 = vmatpush2.bf16.msra.mxu0 0
  %2722 = vmatprep.subr.bf16.mxu0 0
  %2723 = vmatpush2.bf16.msra.mxu0 0
  %2724 = vmatprep.subr.bf16.mxu0 0
  %2725 = vmatpush2.bf16.msra.mxu0 0
  %2726 = vmatprep.subr.bf16.mxu0 0
  %2727 = vmatpush2.bf16.msra.mxu0 0
  %2728 = vmatprep.subr.bf16.mxu0 0
  %2729 = vmatpush2.bf16.msra.mxu0 0
  %2730 = vmatprep.subr.bf16.mxu0 0
  %2731 = vmatpush2.bf16.msra.mxu0 0
  %2732 = vmatprep.subr.bf16.mxu0 0
  %2733 = vmatpush2.bf16.msra.mxu0 0
  %2734 = vmatprep.mubr.bf16.mxu0 0
  %2735 = vmatmul.mubr.bf16.gmra.mxu0 %v2691
  %v2736 = vpop.f32.mrf.mxu0
  %v2737 = vadd.f32 0.0, %v2736
  %v2738 = vpop.f32.mrf.mxu0
  %v2739 = vpop.f32.mrf.mxu0
  %v2740 = vadd.f32 0.0, %v2739
  %v2741 = vpop.f32.mrf.mxu0
  %2742 = vmatprep.mubr.bf16.mxu0 0
  %2743 = vmatmul.mubr.bf16.gmra.mxu0 %v2694
  %v2744 = vpop.f32.mrf.mxu0
  %v2745 = vadd.f32 0.0, %v2744
  %v2746 = vpop.f32.mrf.mxu0
  %v2747 = vpop.f32.mrf.mxu0
  %v2748 = vadd.f32 0.0, %v2747
  %v2749 = vpop.f32.mrf.mxu0
  %2750 = vmatprep.mubr.bf16.mxu0 0
  %2751 = vmatmul.mubr.bf16.gmra.mxu0 %v2697
  %v2752 = vpop.f32.mrf.mxu0
  %v2753 = vadd.f32 0.0, %v2752
  %v2754 = vpop.f32.mrf.mxu0
  %v2755 = vpop.f32.mrf.mxu0
  %v2756 = vadd.f32 0.0, %v2755
  %v2757 = vpop.f32.mrf.mxu0
  %2758 = vmatprep.mubr.bf16.mxu0 0
  %2759 = vmatmul.mubr.bf16.gmra.mxu0 %v2700
  %v2760 = vpop.f32.mrf.mxu0
  %v2761 = vadd.f32 0.0, %v2760
  %v2762 = vpop.f32.mrf.mxu0
  %v2763 = vpop.f32.mrf.mxu0
  %v2764 = vadd.f32 0.0, %v2763
  %v2765 = vpop.f32.mrf.mxu0
  %2766 = vdwg.mxu0
  %2775 = vrot.lane.b32.xlu0 %v2654, 16
  %v2776 = vpop.permute.xlu0 %2775
  %2777 = vrot.lane.b32.xlu0 %v2655, 16
  %v2778 = vpop.permute.xlu0 %2777
  %2779 = vrot.lane.b32.xlu0 %v2656, 16
  %v2780 = vpop.permute.xlu0 %2779
  %2781 = vrot.lane.b32.xlu0 %v2657, 16
  %v2782 = vpop.permute.xlu0 %2781
  %2783 = vrot.lane.b32.xlu0 %v2658, 16
  %v2784 = vpop.permute.xlu0 %2783
  %2785 = vrot.lane.b32.xlu0 %v2659, 16
  %v2786 = vpop.permute.xlu0 %2785
  %2787 = vrot.lane.b32.xlu0 %v2660, 16
  %v2788 = vpop.permute.xlu0 %2787
  %2789 = vrot.lane.b32.xlu0 %v2661, 16
  %v2790 = vpop.permute.xlu0 %2789
  %2799 = vrot.lane.b32.xlu0 %v2654, 32
  %v2800 = vpop.permute.xlu0 %2799
  %2801 = vrot.lane.b32.xlu0 %v2655, 32
  %v2802 = vpop.permute.xlu0 %2801
  %2803 = vrot.lane.b32.xlu0 %v2656, 32
  %v2804 = vpop.permute.xlu0 %2803
  %2805 = vrot.lane.b32.xlu0 %v2657, 32
  %v2806 = vpop.permute.xlu0 %2805
  %2807 = vrot.lane.b32.xlu0 %v2658, 32
  %v2808 = vpop.permute.xlu0 %2807
  %2809 = vrot.lane.b32.xlu0 %v2659, 32
  %v2810 = vpop.permute.xlu0 %2809
  %2811 = vrot.lane.b32.xlu0 %v2660, 32
  %v2812 = vpop.permute.xlu0 %2811
  %2813 = vrot.lane.b32.xlu0 %v2661, 32
  %v2814 = vpop.permute.xlu0 %2813
  %v2823 = vsel %vm1090, %v2654, %v2776
  %v2824 = vsel %vm1090, %v2655, %v2778
  %v2825 = vsel %vm1090, %v2656, %v2780
  %v2826 = vsel %vm1090, %v2657, %v2782
  %v2827 = vsel %vm1090, %v2658, %v2784
  %v2828 = vsel %vm1090, %v2659, %v2786
  %v2829 = vsel %vm1090, %v2660, %v2788
  %v2830 = vsel %vm1090, %v2661, %v2790
  %v2831 = vsel %vm1099, %v2823, %v2800
  %v2832 = vsel %vm1099, %v2824, %v2802
  %v2833 = vsel %vm1099, %v2825, %v2804
  %v2834 = vsel %vm1099, %v2826, %v2806
  %v2835 = vsel %vm1099, %v2827, %v2808
  %v2836 = vsel %vm1099, %v2828, %v2810
  %v2837 = vsel %vm1099, %v2829, %v2812
  %v2838 = vsel %vm1099, %v2830, %v2814
  %v2839 = vmul.f32 %v2737, %v2831
  %v2840 = vmul.f32 %v2740, %v2832
  %v2841 = vmul.f32 %v2745, %v2833
  %v2842 = vmul.f32 %v2748, %v2834
  %v2843 = vmul.f32 %v2753, %v2835
  %v2844 = vmul.f32 %v2756, %v2836
  %v2845 = vmul.f32 %v2761, %v2837
  %v2846 = vmul.f32 %v2764, %v2838
  %2847 = vst.msk [vmem:[%s23] sm:$0xff] %vm777, %v2471
  %2848 = vst.msk [vmem:[%s23 + $0x8] sm:$0xff] %vm777, %v2472
  %2849 = vst.msk [vmem:[%s23 + $0x10] sm:$0xff] %vm777, %v2473
  %2850 = vst.msk [vmem:[%s23 + $0x18] sm:$0xff] %vm777, %v2474
  %2851 = vst.msk [vmem:[%s23 + $0x20] sm:$0xff] %vm777, %v2475
  %2852 = vst.msk [vmem:[%s23 + $0x28] sm:$0xff] %vm777, %v2476
  %2853 = vst.msk [vmem:[%s23 + $0x30] sm:$0xff] %vm777, %v2477
  %2854 = vst.msk [vmem:[%s23 + $0x38] sm:$0xff] %vm777, %v2478
  %2855 = vst.msk [vmem:[%s24] sm:$0xff] %vm1152, %v2839
  %2856 = vst.msk [vmem:[%s24 + $0x8] sm:$0xff] %vm1152, %v2840
  %2857 = vst.msk [vmem:[%s24 + $0x10] sm:$0xff] %vm1152, %v2841
  %2858 = vst.msk [vmem:[%s24 + $0x18] sm:$0xff] %vm1152, %v2842
  %2859 = vst.msk [vmem:[%s24 + $0x20] sm:$0xff] %vm1152, %v2843
  %2860 = vst.msk [vmem:[%s24 + $0x28] sm:$0xff] %vm1152, %v2844
  %2861 = vst.msk [vmem:[%s24 + $0x30] sm:$0xff] %vm1152, %v2845
  %2862 = vst.msk [vmem:[%s24 + $0x38] sm:$0xff] %vm1152, %v2846
  // Predicated region
  $region94: #{base_model_forward.15} parent=0 // pred_check
    _
  $region95: #{base_model_forward.15} parent=0 // pred_check_branch
    %2864 = sbr.rel (0) target = $region97
  $region96: #{base_model_forward.15} parent=0 // pred_region
    _
  $region97: #{base_model_forward.15} parent=0 // pred_fallthru
    _
  // Predicated region
  $region98: #{base_model_forward.15} parent=0 // pred_check
    _
  $region99: #{base_model_forward.15} parent=0 // pred_check_branch
    %2866 = sbr.rel (0) target = $region101
  $region100: #{base_model_forward.15} parent=0 // pred_region
    _
  $region101: #{base_model_forward.15} parent=0 // pred_fallthru
    _
  // Predicated region
  $region102: #{base_model_forward.15} parent=0 // pred_check
    _
  $region103: #{base_model_forward.15} parent=0 // pred_check_branch
    %2868 = sbr.rel (0) target = $region105
  $region104: #{base_model_forward.15} parent=0 // pred_region
    _
  $region105: #{base_model_forward.15} parent=0 // pred_fallthru
    _
  // Predicated region
  $region106: #{base_model_forward.15} parent=0 // pred_check
    _
  $region107: #{base_model_forward.15} parent=0 // pred_check_branch
    %2870 = sbr.rel (0) target = $region109
  $region108: #{base_model_forward.15} parent=0 // pred_region
    _
  $region109: #{base_model_forward.15} parent=0 // pred_fallthru
    _

// kernel: base_model_forward.16
$region0: #{base_model_forward.16}
  #allocation0 [shape = 'u32[]', space=smem, size = 0x4, offset = 0x4, fixed_abs, tag = 'smem constant byte address 0x4 - core index']
  #allocation1 [shape = 'u32[144,128]{1,0:T(1,128)}', space=vmem, size = 0x12000, scoped, tag = 'internal scratch']
  %s0 = inlined_call_operand.vmem [shape: f32[16,100], index: 0, kind: input, shape index: {}]
  %s1 = inlined_call_operand.vmem [shape: f32[16,48], index: 1, kind: input, shape index: {}]
  %s2 = inlined_call_operand.vmem [shape: f32[16,100], index: 2, kind: input, shape index: {}]
  %s3 = inlined_call_operand.vmem [shape: f32[16,48], index: 3, kind: input, shape index: {}]
  %s4 = inlined_call_operand.vmem [shape: f32[1,100], index: 4, kind: input, shape index: {}]
  %s5 = inlined_call_operand.vmem [shape: f32[1,100], index: 5, kind: input, shape index: {}]
  %s6 = inlined_call_operand.vmem [shape: bf16[48,96], index: 6, kind: input, shape index: {}]
  %s7 = inlined_call_operand.vmem [shape: bf16[100,400], index: 7, kind: input, shape index: {}]
  %s8 = inlined_call_operand.vmem [shape: bf16[32,400], index: 8, kind: input, shape index: {}]
  %s9 = inlined_call_operand.vmem [shape: f32[1,400], index: 9, kind: input, shape index: {}]
  %s10 = inlined_call_operand.vmem [shape: bf16[96,96], index: 10, kind: input, shape index: {}]
  %s11 = inlined_call_operand.vmem [shape: bf16[400,32], index: 11, kind: input, shape index: {}]
  %s12 = inlined_call_operand.vmem [shape: f32[1,32], index: 12, kind: input, shape index: {}]
  %s13 = inlined_call_operand.vmem [shape: bf16[96,96], index: 13, kind: input, shape index: {}]
  %s14 = inlined_call_operand.vmem [shape: bf16[400,100], index: 14, kind: input, shape index: {}]
  %s15 = inlined_call_operand.vmem [shape: bf16[32,100], index: 15, kind: input, shape index: {}]
  %s16 = inlined_call_operand.vmem [shape: f32[1,100], index: 16, kind: input, shape index: {}]
  %s17 = inlined_call_operand.vmem [shape: bf16[96,48], index: 17, kind: input, shape index: {}]
  %s18 = inlined_call_operand.vmem [shape: bf16[100,16], index: 18, kind: input, shape index: {}]
  %s19 = inlined_call_operand.vmem [shape: f32[1,16], index: 19, kind: input, shape index: {}]
  %s20 = inlined_call_operand.vmem [shape: f32[1,100], index: 20, kind: input, shape index: {}]
  %s21 = inlined_call_operand.vmem [shape: f32[1,100], index: 21, kind: input, shape index: {}]
  %s22 = inlined_call_operand.vmem [shape: f32[16,100], index: 22, kind: output, shape index: {0}]
  %s23 = inlined_call_operand.vmem [shape: f32[16,48], index: 23, kind: output, shape index: {1}]
  %24 = xla_tuple %s22, %s23
  %s25 = sld [smem:[#allocation0]]
  $region106: #{base_model_forward.16} parent=0
    _
  %s27 = ssub.s32 1, %s25
  %s28 = scalar_select 0, %s27, %s25
  // Predicated region
  $region2: #{base_model_forward.16} parent=0 // pred_check
    _
  $region3: #{base_model_forward.16} parent=0 // pred_check_branch
    %30 = sbr.rel (0) target = $region5
  $region4: #{base_model_forward.16} parent=0 // pred_region
    _
  $region5: #{base_model_forward.16} parent=0 // pred_fallthru
    _
  // Predicated region
  $region6: #{base_model_forward.16} parent=0 // pred_check
    _
  $region7: #{base_model_forward.16} parent=0 // pred_check_branch
    %32 = sbr.rel (0) target = $region9
  $region8: #{base_model_forward.16} parent=0 // pred_region
    _
  $region9: #{base_model_forward.16} parent=0 // pred_fallthru
    _
  // Predicated region
  $region10: #{base_model_forward.16} parent=0 // pred_check
    _
  $region11: #{base_model_forward.16} parent=0 // pred_check_branch
    %34 = sbr.rel (0) target = $region13
  $region12: #{base_model_forward.16} parent=0 // pred_region
    _
  $region13: #{base_model_forward.16} parent=0 // pred_fallthru
    _
  // Predicated region
  $region14: #{base_model_forward.16} parent=0 // pred_check
    _
  $region15: #{base_model_forward.16} parent=0 // pred_check_branch
    %36 = sbr.rel (0) target = $region17
  $region16: #{base_model_forward.16} parent=0 // pred_region
    _
  $region17: #{base_model_forward.16} parent=0 // pred_fallthru
    _
  // Predicated region
  $region18: #{base_model_forward.16} parent=0 // pred_check
    _
  $region19: #{base_model_forward.16} parent=0 // pred_check_branch
    %38 = sbr.rel (0) target = $region21
  $region20: #{base_model_forward.16} parent=0 // pred_region
    _
  $region21: #{base_model_forward.16} parent=0 // pred_fallthru
    _
  // Predicated region
  $region22: #{base_model_forward.16} parent=0 // pred_check
    _
  $region23: #{base_model_forward.16} parent=0 // pred_check_branch
    %40 = sbr.rel (0) target = $region25
  $region24: #{base_model_forward.16} parent=0 // pred_region
    _
  $region25: #{base_model_forward.16} parent=0 // pred_fallthru
    _
  // Predicated region
  $region26: #{base_model_forward.16} parent=0 // pred_check
    _
  $region27: #{base_model_forward.16} parent=0 // pred_check_branch
    %42 = sbr.rel (0) target = $region29
  $region28: #{base_model_forward.16} parent=0 // pred_region
    _
  $region29: #{base_model_forward.16} parent=0 // pred_fallthru
    _
  // Predicated region
  $region30: #{base_model_forward.16} parent=0 // pred_check
    _
  $region31: #{base_model_forward.16} parent=0 // pred_check_branch
    %44 = sbr.rel (0) target = $region33
  $region32: #{base_model_forward.16} parent=0 // pred_region
    _
  $region33: #{base_model_forward.16} parent=0 // pred_fallthru
    _
  // Predicated region
  $region34: #{base_model_forward.16} parent=0 // pred_check
    _
  $region35: #{base_model_forward.16} parent=0 // pred_check_branch
    %46 = sbr.rel (0) target = $region37
  $region36: #{base_model_forward.16} parent=0 // pred_region
    _
  $region37: #{base_model_forward.16} parent=0 // pred_fallthru
    _
  // Predicated region
  $region38: #{base_model_forward.16} parent=0 // pred_check
    _
  $region39: #{base_model_forward.16} parent=0 // pred_check_branch
    %48 = sbr.rel (0) target = $region41
  $region40: #{base_model_forward.16} parent=0 // pred_region
    _
  $region41: #{base_model_forward.16} parent=0 // pred_fallthru
    _
  // Predicated region
  $region42: #{base_model_forward.16} parent=0 // pred_check
    _
  $region43: #{base_model_forward.16} parent=0 // pred_check_branch
    %50 = sbr.rel (0) target = $region45
  $region44: #{base_model_forward.16} parent=0 // pred_region
    _
  $region45: #{base_model_forward.16} parent=0 // pred_fallthru
    _
  // Predicated region
  $region46: #{base_model_forward.16} parent=0 // pred_check
    _
  $region47: #{base_model_forward.16} parent=0 // pred_check_branch
    %52 = sbr.rel (0) target = $region49
  $region48: #{base_model_forward.16} parent=0 // pred_region
    _
  $region49: #{base_model_forward.16} parent=0 // pred_fallthru
    _
  // Predicated region
  $region50: #{base_model_forward.16} parent=0 // pred_check
    _
  $region51: #{base_model_forward.16} parent=0 // pred_check_branch
    %54 = sbr.rel (0) target = $region53
  $region52: #{base_model_forward.16} parent=0 // pred_region
    _
  $region53: #{base_model_forward.16} parent=0 // pred_fallthru
    _
  // Predicated region
  $region54: #{base_model_forward.16} parent=0 // pred_check
    _
  $region55: #{base_model_forward.16} parent=0 // pred_check_branch
    %56 = sbr.rel (0) target = $region57
  $region56: #{base_model_forward.16} parent=0 // pred_region
    _
  $region57: #{base_model_forward.16} parent=0 // pred_fallthru
    _
  // Predicated region
  $region58: #{base_model_forward.16} parent=0 // pred_check
    _
  $region59: #{base_model_forward.16} parent=0 // pred_check_branch
    %58 = sbr.rel (0) target = $region61
  $region60: #{base_model_forward.16} parent=0 // pred_region
    _
  $region61: #{base_model_forward.16} parent=0 // pred_fallthru
    _
  // Predicated region
  $region62: #{base_model_forward.16} parent=0 // pred_check
    _
  $region63: #{base_model_forward.16} parent=0 // pred_check_branch
    %60 = sbr.rel (0) target = $region65
  $region64: #{base_model_forward.16} parent=0 // pred_region
    _
  $region65: #{base_model_forward.16} parent=0 // pred_fallthru
    _
  // Predicated region
  $region66: #{base_model_forward.16} parent=0 // pred_check
    _
  $region67: #{base_model_forward.16} parent=0 // pred_check_branch
    %62 = sbr.rel (0) target = $region69
  $region68: #{base_model_forward.16} parent=0 // pred_region
    _
  $region69: #{base_model_forward.16} parent=0 // pred_fallthru
    _
  // Predicated region
  $region70: #{base_model_forward.16} parent=0 // pred_check
    _
  $region71: #{base_model_forward.16} parent=0 // pred_check_branch
    %64 = sbr.rel (0) target = $region73
  $region72: #{base_model_forward.16} parent=0 // pred_region
    _
  $region73: #{base_model_forward.16} parent=0 // pred_fallthru
    _
  // Predicated region
  $region74: #{base_model_forward.16} parent=0 // pred_check
    _
  $region75: #{base_model_forward.16} parent=0 // pred_check_branch
    %66 = sbr.rel (0) target = $region77
  $region76: #{base_model_forward.16} parent=0 // pred_region
    _
  $region77: #{base_model_forward.16} parent=0 // pred_fallthru
    _
  // Predicated region
  $region78: #{base_model_forward.16} parent=0 // pred_check
    _
  $region79: #{base_model_forward.16} parent=0 // pred_check_branch
    %68 = sbr.rel (0) target = $region81
  $region80: #{base_model_forward.16} parent=0 // pred_region
    _
  $region81: #{base_model_forward.16} parent=0 // pred_fallthru
    _
  // Predicated region
  $region82: #{base_model_forward.16} parent=0 // pred_check
    _
  $region83: #{base_model_forward.16} parent=0 // pred_check_branch
    %70 = sbr.rel (0) target = $region85
  $region84: #{base_model_forward.16} parent=0 // pred_region
    _
  $region85: #{base_model_forward.16} parent=0 // pred_fallthru
    _
  // Predicated region
  $region86: #{base_model_forward.16} parent=0 // pred_check
    _
  $region87: #{base_model_forward.16} parent=0 // pred_check_branch
    %72 = sbr.rel (0) target = $region89
  $region88: #{base_model_forward.16} parent=0 // pred_region
    _
  $region89: #{base_model_forward.16} parent=0 // pred_fallthru
    _
  %v74 = vld [vmem:[%s0] sm:$0xff]
  %v75 = vld [vmem:[%s0 + $0x8] sm:$0xff]
  %v76 = vld [vmem:[%s2] sm:$0xff]
  %v77 = vld [vmem:[%s2 + $0x8] sm:$0xff]
  %v78 = vadd.f32 %v74, %v76
  %v79 = vadd.f32 %v75, %v77
  %v80 = vld [vmem:[%s1] sm:$0xff]
  %v81 = vld [vmem:[%s1 + $0x8] sm:$0xff]
  %v82 = vld [vmem:[%s3] sm:$0xff]
  %v83 = vld [vmem:[%s3 + $0x8] sm:$0xff]
  %v84 = vadd.f32 %v80, %v82
  %v85 = vadd.f32 %v81, %v83
  %vm86 = vcmask 818176
  %v87 = vsel %vm86, %v78, 0.0
  %88 = vadd.xlane.f32.xlu0 %v87
  %v89 = vpop.xlane.xlu0 %88
  %v90 = vsel %vm86, %v79, 0.0
  %91 = vadd.xlane.f32.xlu0 %v90
  %v92 = vpop.xlane.xlu0 %91
  %v93 = vrcp.pop 100.0
  %v94 = vmul.f32 %v89, %v93
  %v95 = vmul.f32 %v92, %v93
  %v96 = vsub.f32 %v78, %v94
  %v97 = vsub.f32 %v79, %v95
  %v98 = vmul.f32 %v96, %v96
  %v99 = vmul.f32 %v97, %v97
  %v100 = vsel %vm86, %v98, 0.0
  %101 = vadd.xlane.f32.xlu0 %v100
  %v102 = vpop.xlane.xlu0 %101
  %v103 = vsel %vm86, %v99, 0.0
  %104 = vadd.xlane.f32.xlu0 %v103
  %v105 = vpop.xlane.xlu0 %104
  %v106 = vmul.f32 %v102, %v93
  %v107 = vmul.f32 %v105, %v93
  %v108 = vadd.f32 %v106, 1e-05
  %v109 = vadd.f32 %v107, 1e-05
  %v110 = vrsqrt.pop %v108
  %v111 = vrsqrt.pop %v109
  %v112 = vmul.f32 %v96, %v110
  %v113 = vmul.f32 %v97, %v111
  %v114 = vld [vmem:[%s4] sm:$0x1]
  %v116 = vlaneseq
  %v117 = vshrl.u32 %v116, 7
  %v118 = vsub.s32 0, %v117
  %v119 = vrot.slane %v114, %v118
  %v121 = vmul.f32 %v112, %v119
  %v122 = vmul.f32 %v113, %v119
  %v123 = vld [vmem:[%s5] sm:$0x1]
  %v125 = vlaneseq
  %v126 = vshrl.u32 %v125, 7
  %v127 = vsub.s32 0, %v126
  %v128 = vrot.slane %v123, %v127
  %v130 = vadd.f32 %v121, %v128
  %v131 = vadd.f32 %v122, %v128
  %v132 = vmul.f32 %v84, %v84
  %v133 = vmul.f32 %v85, %v85
  %136 = vrot.lane.b32.xlu0 %v132, 112
  %v137 = vpop.permute.xlu0 %136
  %138 = vrot.lane.b32.xlu0 %v133, 112
  %v139 = vpop.permute.xlu0 %138
  %v142 = vadd.f32 %v132, %v137
  %v143 = vadd.f32 %v133, %v139
  %144 = vrot.lane.b32.xlu0 %v132, 96
  %v145 = vpop.permute.xlu0 %144
  %146 = vrot.lane.b32.xlu0 %v133, 96
  %v147 = vpop.permute.xlu0 %146
  %v150 = vadd.f32 %v142, %v145
  %v151 = vadd.f32 %v143, %v147
  %v152 = vmax.f32 %v150, 1e-08
  %v153 = vmax.f32 %v151, 1e-08
  %vm154 = vcmask 130048
  %v155 = vsel %vm154, %v152, 0.0
  %156 = vadd.xlane.f32.xlu0 %v155
  %v157 = vpop.xlane.xlu0 %156
  %v158 = vsel %vm154, %v153, 0.0
  %159 = vadd.xlane.f32.xlu0 %v158
  %v160 = vpop.xlane.xlu0 %159
  %v161 = vrcp.pop 16.0
  %v162 = vmul.f32 %v157, %v161
  %v163 = vmul.f32 %v160, %v161
  %v164 = vrsqrt.pop %v162
  %v165 = vrsqrt.pop %v163
  %v166 = vmul.f32 %v84, %v164
  %v167 = vmul.f32 %v85, %v165
  %v168 = vpack.c.bf16 %v167, %v166
  %v169 = vld [vmem:[%s6] sm:$0xf]
  %v170 = vld [vmem:[%s6 + $0x4] sm:$0xf]
  %v171 = vld [vmem:[%s6 + $0x8] sm:$0xf]
  %v172 = vld [vmem:[%s6 + $0xc] sm:$0xf]
  %v173 = vld [vmem:[%s6 + $0x10] sm:$0xf]
  %v174 = vld [vmem:[%s6 + $0x14] sm:$0xf]
  %v181 = vunpack.c.l.b16 %v169
  %v182 = vunpack.c.l.b16 %v170
  %v183 = vunpack.c.l.b16 %v171
  %v184 = vunpack.c.l.b16 %v172
  %v185 = vunpack.c.l.b16 %v173
  %v186 = vunpack.c.l.b16 %v174
  %v187 = vpack.c.b16 %v182, %v181
  %v188 = vpack.c.b16 %v184, %v183
  %v189 = vpack.c.b16 %v186, %v185
  %vm193 = vcmask 392192
  %v195 = vsel %vm193, %v168, 0
  %197 = vmatprep.subr.bf16.mxu0 0
  %198 = vmatpush1.bf16.msra.mxu0 0
  %199 = vmatprep.subr.bf16.mxu0 0
  %200 = vmatpush1.bf16.msra.mxu0 0
  %201 = vmatprep.subr.bf16.mxu0 0
  %202 = vmatpush1.bf16.msra.mxu0 0
  %203 = vmatprep.subr.bf16.mxu0 0
  %204 = vmatpush1.bf16.msra.mxu0 0
  %205 = vmatprep.subr.bf16.mxu0 0
  %206 = vmatpush1.bf16.msra.mxu0 0
  %207 = vmatprep.subr.bf16.mxu0 0
  %208 = vmatpush1.bf16.msra.mxu0 %v189
  %209 = vmatprep.subr.bf16.mxu0 0
  %210 = vmatpush1.bf16.msra.mxu0 %v188
  %211 = vmatprep.subr.bf16.mxu0 0
  %212 = vmatpush1.bf16.msra.mxu0 %v187
  %213 = vmatprep.subr.bf16.mxu0 0
  %214 = vmatpush2.bf16.msra.mxu0 0
  %215 = vmatprep.subr.bf16.mxu0 0
  %216 = vmatpush2.bf16.msra.mxu0 0
  %217 = vmatprep.subr.bf16.mxu0 0
  %218 = vmatpush2.bf16.msra.mxu0 0
  %219 = vmatprep.subr.bf16.mxu0 0
  %220 = vmatpush2.bf16.msra.mxu0 0
  %221 = vmatprep.subr.bf16.mxu0 0
  %222 = vmatpush2.bf16.msra.mxu0 0
  %223 = vmatprep.subr.bf16.mxu0 0
  %224 = vmatpush2.bf16.msra.mxu0 0
  %225 = vmatprep.subr.bf16.mxu0 0
  %226 = vmatpush2.bf16.msra.mxu0 0
  %227 = vmatprep.subr.bf16.mxu0 0
  %228 = vmatpush2.bf16.msra.mxu0 0
  %229 = vmatprep.mubr.bf16.mxu0 0
  %230 = vmatmul.mubr.bf16.gmra.mxu0 %v195
  %v231 = vpop.f32.mrf.mxu0
  %v232 = vadd.f32 0.0, %v231
  %v233 = vpop.f32.mrf.mxu0
  %v234 = vpop.f32.mrf.mxu0
  %v235 = vadd.f32 0.0, %v234
  %v236 = vpop.f32.mrf.mxu0
  %237 = vdwg.mxu0
  %v238 = vmul.f32 %v232, %v232
  %v239 = vmul.f32 %v235, %v235
  %242 = vrot.lane.b32.xlu0 %v238, 96
  %v243 = vpop.permute.xlu0 %242
  %244 = vrot.lane.b32.xlu0 %v239, 96
  %v245 = vpop.permute.xlu0 %244
  %v248 = vadd.f32 %v238, %v243
  %v249 = vadd.f32 %v239, %v245
  %250 = vrot.lane.b32.xlu0 %v238, 64
  %v251 = vpop.permute.xlu0 %250
  %252 = vrot.lane.b32.xlu0 %v239, 64
  %v253 = vpop.permute.xlu0 %252
  %v256 = vadd.f32 %v248, %v251
  %v257 = vadd.f32 %v249, %v253
  %v258 = vmax.f32 %v256, 1e-08
  %v259 = vmax.f32 %v257, 1e-08
  %v260 = vrsqrt.pop %v258
  %v261 = vmul.f32 %v258, %v260
  %vm262 = vcmp.eq.f32.partialorder %v258, inf
  %v263 = vsel %vm262, %v258, %v261
  %vm264 = vcmp.eq.f32.partialorder %v258, 0.0
  %v265 = vand.u32 %v258, 2147483648
  %v266 = vsel %vm264, %v265, %v263
  %v267 = vrsqrt.pop %v259
  %v268 = vmul.f32 %v259, %v267
  %vm269 = vcmp.eq.f32.partialorder %v259, inf
  %v270 = vsel %vm269, %v259, %v268
  %vm271 = vcmp.eq.f32.partialorder %v259, 0.0
  %v272 = vand.u32 %v259, 2147483648
  %v273 = vsel %vm271, %v272, %v270
  %v274 = vpack.c.bf16 %v131, %v130
  %v275 = vld [vmem:[%s7] sm:$0xff]
  %v276 = vld [vmem:[%s7 + $0x8] sm:$0xff]
  %v277 = vld [vmem:[%s7 + $0x10] sm:$0xff]
  %v278 = vld [vmem:[%s7 + $0x18] sm:$0xff]
  %v279 = vld [vmem:[%s7 + $0x20] sm:$0xff]
  %v280 = vld [vmem:[%s7 + $0x28] sm:$0xff]
  %v281 = vld [vmem:[%s7 + $0x30] sm:$0xff]
  %v282 = vld [vmem:[%s7 + $0x38] sm:$0xff]
  %v283 = vld [vmem:[%s7 + $0x40] sm:$0xff]
  %v284 = vld [vmem:[%s7 + $0x48] sm:$0xff]
  %v285 = vld [vmem:[%s7 + $0x50] sm:$0xff]
  %v286 = vld [vmem:[%s7 + $0x58] sm:$0xff]
  %v287 = vld [vmem:[%s7 + $0x60] sm:$0xff]
  %v288 = vld [vmem:[%s7 + $0x68] sm:$0xff]
  %v289 = vld [vmem:[%s7 + $0x70] sm:$0xff]
  %v290 = vld [vmem:[%s7 + $0x78] sm:$0xff]
  %v291 = vld [vmem:[%s7 + $0x80] sm:$0xff]
  %v292 = vld [vmem:[%s7 + $0x88] sm:$0xff]
  %v293 = vld [vmem:[%s7 + $0x90] sm:$0xff]
  %v294 = vld [vmem:[%s7 + $0x98] sm:$0xff]
  %v295 = vld [vmem:[%s7 + $0xa0] sm:$0xff]
  %v296 = vld [vmem:[%s7 + $0xa8] sm:$0xff]
  %v297 = vld [vmem:[%s7 + $0xb0] sm:$0xff]
  %v298 = vld [vmem:[%s7 + $0xb8] sm:$0xff]
  %v299 = vld [vmem:[%s7 + $0xc0] sm:$0x33]
  %v300 = vld [vmem:[%s7 + $0xc8] sm:$0x33]
  %v301 = vpack.c.bf16 %v273, %v266
  %v302 = vld [vmem:[%s8] sm:$0xff]
  %v303 = vld [vmem:[%s8 + $0x8] sm:$0xff]
  %v304 = vld [vmem:[%s8 + $0x10] sm:$0xff]
  %v305 = vld [vmem:[%s8 + $0x18] sm:$0xff]
  %v306 = vld [vmem:[%s8 + $0x20] sm:$0xff]
  %v307 = vld [vmem:[%s8 + $0x28] sm:$0xff]
  %v308 = vld [vmem:[%s8 + $0x30] sm:$0xff]
  %v309 = vld [vmem:[%s8 + $0x38] sm:$0xff]
  %v318 = vunpack.c.l.b16 %v302
  %v319 = vunpack.c.h.b16 %v302
  %v320 = vunpack.c.l.b16 %v303
  %v321 = vunpack.c.h.b16 %v303
  %v322 = vunpack.c.l.b16 %v304
  %v323 = vunpack.c.h.b16 %v304
  %v324 = vunpack.c.l.b16 %v305
  %v325 = vunpack.c.h.b16 %v305
  %v326 = vunpack.c.l.b16 %v306
  %v327 = vunpack.c.h.b16 %v306
  %v328 = vunpack.c.l.b16 %v307
  %v329 = vunpack.c.h.b16 %v307
  %v330 = vunpack.c.l.b16 %v308
  %v331 = vunpack.c.h.b16 %v308
  %v332 = vunpack.c.l.b16 %v309
  %v333 = vunpack.c.h.b16 %v309
  %v334 = vpack.c.b16 %v322, %v318
  %v335 = vpack.c.b16 %v323, %v319
  %v336 = vpack.c.b16 %v324, %v320
  %v337 = vpack.c.b16 %v325, %v321
  %v338 = vpack.c.b16 %v330, %v326
  %v339 = vpack.c.b16 %v331, %v327
  %v340 = vpack.c.b16 %v332, %v328
  %v341 = vpack.c.b16 %v333, %v329
  %vm350 = vcmask 261120
  %v352 = vsel %vm350, %v301, 0
  %354 = vmatprep.subr.bf16.mxu0 0
  %355 = vmatpush1.bf16.msra.mxu0 0
  %356 = vmatprep.subr.bf16.mxu0 0
  %357 = vmatpush1.bf16.msra.mxu0 0
  %358 = vmatprep.subr.bf16.mxu0 0
  %359 = vmatpush1.bf16.msra.mxu0 0
  %360 = vmatprep.subr.bf16.mxu0 0
  %361 = vmatpush1.bf16.msra.mxu0 0
  %362 = vmatprep.subr.bf16.mxu0 0
  %363 = vmatpush1.bf16.msra.mxu0 0
  %364 = vmatprep.subr.bf16.mxu0 0
  %365 = vmatpush1.bf16.msra.mxu0 0
  %366 = vmatprep.subr.bf16.mxu0 %v339
  %367 = vmatpush1.bf16.msra.mxu0 %v338
  %368 = vmatprep.subr.bf16.mxu0 %v335
  %369 = vmatpush1.bf16.msra.mxu0 %v334
  %370 = vmatprep.subr.bf16.mxu0 0
  %371 = vmatpush2.bf16.msra.mxu0 0
  %372 = vmatprep.subr.bf16.mxu0 0
  %373 = vmatpush2.bf16.msra.mxu0 0
  %374 = vmatprep.subr.bf16.mxu0 0
  %375 = vmatpush2.bf16.msra.mxu0 0
  %376 = vmatprep.subr.bf16.mxu0 0
  %377 = vmatpush2.bf16.msra.mxu0 0
  %378 = vmatprep.subr.bf16.mxu0 0
  %379 = vmatpush2.bf16.msra.mxu0 0
  %380 = vmatprep.subr.bf16.mxu0 0
  %381 = vmatpush2.bf16.msra.mxu0 0
  %382 = vmatprep.subr.bf16.mxu0 0
  %383 = vmatpush2.bf16.msra.mxu0 0
  %384 = vmatprep.subr.bf16.mxu0 0
  %385 = vmatpush2.bf16.msra.mxu0 0
  %386 = vmatprep.mubr.bf16.mxu0 0
  %387 = vmatmul.mubr.bf16.gmra.mxu0 %v352
  %v388 = vpop.f32.mrf.mxu0
  %v389 = vadd.f32 0.0, %v388
  %v390 = vpop.f32.mrf.mxu0
  %v391 = vadd.f32 0.0, %v390
  %v392 = vpop.f32.mrf.mxu0
  %v393 = vadd.f32 0.0, %v392
  %v394 = vpop.f32.mrf.mxu0
  %v395 = vadd.f32 0.0, %v394
  %396 = vdwg.mxu0
  %397 = vmatprep.subr.bf16.mxu0 0
  %398 = vmatpush1.bf16.msra.mxu0 0
  %399 = vmatprep.subr.bf16.mxu0 0
  %400 = vmatpush1.bf16.msra.mxu0 0
  %401 = vmatprep.subr.bf16.mxu0 0
  %402 = vmatpush1.bf16.msra.mxu0 0
  %403 = vmatprep.subr.bf16.mxu0 0
  %404 = vmatpush1.bf16.msra.mxu0 0
  %405 = vmatprep.subr.bf16.mxu0 0
  %406 = vmatpush1.bf16.msra.mxu0 0
  %407 = vmatprep.subr.bf16.mxu0 0
  %408 = vmatpush1.bf16.msra.mxu0 0
  %409 = vmatprep.subr.bf16.mxu0 %v341
  %410 = vmatpush1.bf16.msra.mxu0 %v340
  %411 = vmatprep.subr.bf16.mxu0 %v337
  %412 = vmatpush1.bf16.msra.mxu0 %v336
  %413 = vmatprep.subr.bf16.mxu0 0
  %414 = vmatpush2.bf16.msra.mxu0 0
  %415 = vmatprep.subr.bf16.mxu0 0
  %416 = vmatpush2.bf16.msra.mxu0 0
  %417 = vmatprep.subr.bf16.mxu0 0
  %418 = vmatpush2.bf16.msra.mxu0 0
  %419 = vmatprep.subr.bf16.mxu0 0
  %420 = vmatpush2.bf16.msra.mxu0 0
  %421 = vmatprep.subr.bf16.mxu0 0
  %422 = vmatpush2.bf16.msra.mxu0 0
  %423 = vmatprep.subr.bf16.mxu0 0
  %424 = vmatpush2.bf16.msra.mxu0 0
  %425 = vmatprep.subr.bf16.mxu0 0
  %426 = vmatpush2.bf16.msra.mxu0 0
  %427 = vmatprep.subr.bf16.mxu0 0
  %428 = vmatpush2.bf16.msra.mxu0 0
  %429 = vmatprep.mubr.bf16.mxu0 0
  %430 = vmatmul.mubr.bf16.gmra.mxu0 %v352
  %v431 = vpop.f32.mrf.mxu0
  %v432 = vadd.f32 0.0, %v431
  %v433 = vpop.f32.mrf.mxu0
  %v434 = vadd.f32 0.0, %v433
  %v435 = vpop.f32.mrf.mxu0
  %v436 = vadd.f32 0.0, %v435
  %v437 = vpop.f32.mrf.mxu0
  %v438 = vadd.f32 0.0, %v437
  %439 = vdwg.mxu0
  %v466 = vunpack.c.l.b16 %v275
  %v467 = vunpack.c.h.b16 %v275
  %v468 = vunpack.c.l.b16 %v276
  %v469 = vunpack.c.h.b16 %v276
  %v470 = vunpack.c.l.b16 %v277
  %v471 = vunpack.c.h.b16 %v277
  %v472 = vunpack.c.l.b16 %v278
  %v473 = vunpack.c.h.b16 %v278
  %v474 = vunpack.c.l.b16 %v279
  %v475 = vunpack.c.h.b16 %v279
  %v476 = vunpack.c.l.b16 %v280
  %v477 = vunpack.c.h.b16 %v280
  %v478 = vunpack.c.l.b16 %v281
  %v479 = vunpack.c.h.b16 %v281
  %v480 = vunpack.c.l.b16 %v282
  %v481 = vunpack.c.h.b16 %v282
  %v482 = vunpack.c.l.b16 %v283
  %v483 = vunpack.c.h.b16 %v283
  %v484 = vunpack.c.l.b16 %v284
  %v485 = vunpack.c.h.b16 %v284
  %v486 = vunpack.c.l.b16 %v285
  %v487 = vunpack.c.h.b16 %v285
  %v488 = vunpack.c.l.b16 %v286
  %v489 = vunpack.c.h.b16 %v286
  %v490 = vunpack.c.l.b16 %v287
  %v491 = vunpack.c.h.b16 %v287
  %v492 = vunpack.c.l.b16 %v288
  %v493 = vunpack.c.h.b16 %v288
  %v494 = vunpack.c.l.b16 %v289
  %v495 = vunpack.c.h.b16 %v289
  %v496 = vunpack.c.l.b16 %v290
  %v497 = vunpack.c.h.b16 %v290
  %v498 = vunpack.c.l.b16 %v291
  %v499 = vunpack.c.h.b16 %v291
  %v500 = vunpack.c.l.b16 %v292
  %v501 = vunpack.c.h.b16 %v292
  %v502 = vunpack.c.l.b16 %v293
  %v503 = vunpack.c.h.b16 %v293
  %v504 = vunpack.c.l.b16 %v294
  %v505 = vunpack.c.h.b16 %v294
  %v506 = vunpack.c.l.b16 %v295
  %v507 = vunpack.c.h.b16 %v295
  %v508 = vunpack.c.l.b16 %v296
  %v509 = vunpack.c.h.b16 %v296
  %v510 = vunpack.c.l.b16 %v297
  %v511 = vunpack.c.h.b16 %v297
  %v512 = vunpack.c.l.b16 %v298
  %v513 = vunpack.c.h.b16 %v298
  %v514 = vunpack.c.l.b16 %v299
  %v515 = vunpack.c.h.b16 %v299
  %v516 = vunpack.c.l.b16 %v300
  %v517 = vunpack.c.h.b16 %v300
  %v518 = vpack.c.b16 %v470, %v466
  %v519 = vpack.c.b16 %v471, %v467
  %v520 = vpack.c.b16 %v472, %v468
  %v521 = vpack.c.b16 %v473, %v469
  %v522 = vpack.c.b16 %v478, %v474
  %v523 = vpack.c.b16 %v479, %v475
  %v524 = vpack.c.b16 %v480, %v476
  %v525 = vpack.c.b16 %v481, %v477
  %v526 = vpack.c.b16 %v486, %v482
  %v527 = vpack.c.b16 %v487, %v483
  %v528 = vpack.c.b16 %v488, %v484
  %v529 = vpack.c.b16 %v489, %v485
  %v530 = vpack.c.b16 %v494, %v490
  %v531 = vpack.c.b16 %v495, %v491
  %v532 = vpack.c.b16 %v496, %v492
  %v533 = vpack.c.b16 %v497, %v493
  %v534 = vpack.c.b16 %v502, %v498
  %v535 = vpack.c.b16 %v503, %v499
  %v536 = vpack.c.b16 %v504, %v500
  %v537 = vpack.c.b16 %v505, %v501
  %v538 = vpack.c.b16 %v510, %v506
  %v539 = vpack.c.b16 %v511, %v507
  %v540 = vpack.c.b16 %v512, %v508
  %v541 = vpack.c.b16 %v513, %v509
  %v542 = vpack.c.b16 %v514, %v514
  %v543 = vpack.c.b16 %v515, %v515
  %v544 = vpack.c.b16 %v516, %v516
  %v545 = vpack.c.b16 %v517, %v517
  %v571 = vsel %vm86, %v274, 0
  %vm573 = vcmask 1041408
  %v575 = vsel %vm573, %v542, 0
  %v578 = vsel %vm573, %v543, 0
  %v581 = vsel %vm573, %v544, 0
  %v584 = vsel %vm573, %v545, 0
  %586 = vmatprep.subr.bf16.mxu0 0
  %587 = vmatpush1.bf16.msra.mxu0 0
  %588 = vmatprep.subr.bf16.mxu0 %v578
  %589 = vmatpush1.bf16.msra.mxu0 %v575
  %590 = vmatprep.subr.bf16.mxu0 %v539
  %591 = vmatpush1.bf16.msra.mxu0 %v538
  %592 = vmatprep.subr.bf16.mxu0 %v535
  %593 = vmatpush1.bf16.msra.mxu0 %v534
  %594 = vmatprep.subr.bf16.mxu0 %v531
  %595 = vmatpush1.bf16.msra.mxu0 %v530
  %596 = vmatprep.subr.bf16.mxu0 %v527
  %597 = vmatpush1.bf16.msra.mxu0 %v526
  %598 = vmatprep.subr.bf16.mxu0 %v523
  %599 = vmatpush1.bf16.msra.mxu0 %v522
  %600 = vmatprep.subr.bf16.mxu0 %v519
  %601 = vmatpush1.bf16.msra.mxu0 %v518
  %602 = vmatprep.subr.bf16.mxu0 0
  %603 = vmatpush2.bf16.msra.mxu0 0
  %604 = vmatprep.subr.bf16.mxu0 0
  %605 = vmatpush2.bf16.msra.mxu0 0
  %606 = vmatprep.subr.bf16.mxu0 0
  %607 = vmatpush2.bf16.msra.mxu0 0
  %608 = vmatprep.subr.bf16.mxu0 0
  %609 = vmatpush2.bf16.msra.mxu0 0
  %610 = vmatprep.subr.bf16.mxu0 0
  %611 = vmatpush2.bf16.msra.mxu0 0
  %612 = vmatprep.subr.bf16.mxu0 0
  %613 = vmatpush2.bf16.msra.mxu0 0
  %614 = vmatprep.subr.bf16.mxu0 0
  %615 = vmatpush2.bf16.msra.mxu0 0
  %616 = vmatprep.subr.bf16.mxu0 0
  %617 = vmatpush2.bf16.msra.mxu0 0
  %618 = vmatprep.mubr.bf16.mxu0 0
  %619 = vmatmul.mubr.bf16.gmra.mxu0 %v571
  %v620 = vpop.f32.mrf.mxu0
  %v621 = vadd.f32 %v389, %v620
  %v622 = vpop.f32.mrf.mxu0
  %v623 = vadd.f32 %v391, %v622
  %v624 = vpop.f32.mrf.mxu0
  %v625 = vadd.f32 %v393, %v624
  %v626 = vpop.f32.mrf.mxu0
  %v627 = vadd.f32 %v395, %v626
  %628 = vdwg.mxu0
  %629 = vmatprep.subr.bf16.mxu0 0
  %630 = vmatpush1.bf16.msra.mxu0 0
  %631 = vmatprep.subr.bf16.mxu0 %v584
  %632 = vmatpush1.bf16.msra.mxu0 %v581
  %633 = vmatprep.subr.bf16.mxu0 %v541
  %634 = vmatpush1.bf16.msra.mxu0 %v540
  %635 = vmatprep.subr.bf16.mxu0 %v537
  %636 = vmatpush1.bf16.msra.mxu0 %v536
  %637 = vmatprep.subr.bf16.mxu0 %v533
  %638 = vmatpush1.bf16.msra.mxu0 %v532
  %639 = vmatprep.subr.bf16.mxu0 %v529
  %640 = vmatpush1.bf16.msra.mxu0 %v528
  %641 = vmatprep.subr.bf16.mxu0 %v525
  %642 = vmatpush1.bf16.msra.mxu0 %v524
  %643 = vmatprep.subr.bf16.mxu0 %v521
  %644 = vmatpush1.bf16.msra.mxu0 %v520
  %645 = vmatprep.subr.bf16.mxu0 0
  %646 = vmatpush2.bf16.msra.mxu0 0
  %647 = vmatprep.subr.bf16.mxu0 0
  %648 = vmatpush2.bf16.msra.mxu0 0
  %649 = vmatprep.subr.bf16.mxu0 0
  %650 = vmatpush2.bf16.msra.mxu0 0
  %651 = vmatprep.subr.bf16.mxu0 0
  %652 = vmatpush2.bf16.msra.mxu0 0
  %653 = vmatprep.subr.bf16.mxu0 0
  %654 = vmatpush2.bf16.msra.mxu0 0
  %655 = vmatprep.subr.bf16.mxu0 0
  %656 = vmatpush2.bf16.msra.mxu0 0
  %657 = vmatprep.subr.bf16.mxu0 0
  %658 = vmatpush2.bf16.msra.mxu0 0
  %659 = vmatprep.subr.bf16.mxu0 0
  %660 = vmatpush2.bf16.msra.mxu0 0
  %661 = vmatprep.mubr.bf16.mxu0 0
  %662 = vmatmul.mubr.bf16.gmra.mxu0 %v571
  %v663 = vpop.f32.mrf.mxu0
  %v664 = vadd.f32 %v432, %v663
  %v665 = vpop.f32.mrf.mxu0
  %v666 = vadd.f32 %v434, %v665
  %v667 = vpop.f32.mrf.mxu0
  %v668 = vadd.f32 %v436, %v667
  %v669 = vpop.f32.mrf.mxu0
  %v670 = vadd.f32 %v438, %v669
  %671 = vdwg.mxu0
  %v672 = vld [vmem:[%s9] sm:$0xf]
  %v674 = vlaneseq
  %v675 = vshrl.u32 %v674, 7
  %v676 = vsub.s32 0, %v675
  %v677 = vrot.slane %v672, %v676
  %v678 = vlaneseq
  %v679 = vshrl.u32 %v678, 7
  %v680 = vsub.s32 1, %v679
  %v681 = vrot.slane %v672, %v680
  %v682 = vlaneseq
  %v683 = vshrl.u32 %v682, 7
  %v684 = vsub.s32 2, %v683
  %v685 = vrot.slane %v672, %v684
  %v686 = vlaneseq
  %v687 = vshrl.u32 %v686, 7
  %v688 = vsub.s32 3, %v687
  %v689 = vrot.slane %v672, %v688
  %v694 = vadd.f32 %v621, %v677
  %v695 = vadd.f32 %v623, %v681
  %v696 = vadd.f32 %v664, %v685
  %v697 = vadd.f32 %v666, %v689
  %v698 = vadd.f32 %v625, %v677
  %v699 = vadd.f32 %v627, %v681
  %v700 = vadd.f32 %v668, %v685
  %v701 = vadd.f32 %v670, %v689
  %v702 = vpack.c.bf16 %v698, %v694
  %v703 = vpack.c.bf16 %v699, %v695
  %v704 = vpack.c.bf16 %v700, %v696
  %v705 = vpack.c.bf16 %v701, %v697
  %v706 = vld [vmem:[%s11] sm:$0xf]
  %v707 = vld [vmem:[%s11 + $0x4] sm:$0xf]
  %v708 = vld [vmem:[%s11 + $0x8] sm:$0xf]
  %v709 = vld [vmem:[%s11 + $0xc] sm:$0xf]
  %v710 = vld [vmem:[%s11 + $0x10] sm:$0xf]
  %v711 = vld [vmem:[%s11 + $0x14] sm:$0xf]
  %v712 = vld [vmem:[%s11 + $0x18] sm:$0xf]
  %v713 = vld [vmem:[%s11 + $0x1c] sm:$0xf]
  %v714 = vld [vmem:[%s11 + $0x20] sm:$0xf]
  %v715 = vld [vmem:[%s11 + $0x24] sm:$0xf]
  %v716 = vld [vmem:[%s11 + $0x28] sm:$0xf]
  %v717 = vld [vmem:[%s11 + $0x2c] sm:$0xf]
  %v718 = vld [vmem:[%s11 + $0x30] sm:$0xf]
  %v719 = vld [vmem:[%s11 + $0x34] sm:$0xf]
  %v720 = vld [vmem:[%s11 + $0x38] sm:$0xf]
  %v721 = vld [vmem:[%s11 + $0x3c] sm:$0xf]
  %v722 = vld [vmem:[%s11 + $0x40] sm:$0xf]
  %v723 = vld [vmem:[%s11 + $0x44] sm:$0xf]
  %v724 = vld [vmem:[%s11 + $0x48] sm:$0xf]
  %v725 = vld [vmem:[%s11 + $0x4c] sm:$0xf]
  %v726 = vld [vmem:[%s11 + $0x50] sm:$0xf]
  %v727 = vld [vmem:[%s11 + $0x54] sm:$0xf]
  %v728 = vld [vmem:[%s11 + $0x58] sm:$0xf]
  %v729 = vld [vmem:[%s11 + $0x5c] sm:$0xf]
  %v730 = vld [vmem:[%s11 + $0x60] sm:$0xf]
  %v731 = vld [vmem:[%s11 + $0x64] sm:$0xf]
  %v732 = vld [vmem:[%s11 + $0x68] sm:$0xf]
  %v733 = vld [vmem:[%s11 + $0x6c] sm:$0xf]
  %v734 = vld [vmem:[%s11 + $0x70] sm:$0xf]
  %v735 = vld [vmem:[%s11 + $0x74] sm:$0xf]
  %v736 = vld [vmem:[%s11 + $0x78] sm:$0xf]
  %v737 = vld [vmem:[%s11 + $0x7c] sm:$0xf]
  %v738 = vld [vmem:[%s11 + $0x80] sm:$0xf]
  %v739 = vld [vmem:[%s11 + $0x84] sm:$0xf]
  %v740 = vld [vmem:[%s11 + $0x88] sm:$0xf]
  %v741 = vld [vmem:[%s11 + $0x8c] sm:$0xf]
  %v742 = vld [vmem:[%s11 + $0x90] sm:$0xf]
  %v743 = vld [vmem:[%s11 + $0x94] sm:$0xf]
  %v744 = vld [vmem:[%s11 + $0x98] sm:$0xf]
  %v745 = vld [vmem:[%s11 + $0x9c] sm:$0xf]
  %v746 = vld [vmem:[%s11 + $0xa0] sm:$0xf]
  %v747 = vld [vmem:[%s11 + $0xa4] sm:$0xf]
  %v748 = vld [vmem:[%s11 + $0xa8] sm:$0xf]
  %v749 = vld [vmem:[%s11 + $0xac] sm:$0xf]
  %v750 = vld [vmem:[%s11 + $0xb0] sm:$0xf]
  %v751 = vld [vmem:[%s11 + $0xb4] sm:$0xf]
  %v752 = vld [vmem:[%s11 + $0xb8] sm:$0xf]
  %v753 = vld [vmem:[%s11 + $0xbc] sm:$0xf]
  %v754 = vld [vmem:[%s11 + $0xc0] sm:$0xf]
  %v755 = vld [vmem:[%s11 + $0xc4] sm:$0xf]
  %v756 = vld [vmem:[%s12] sm:$0x1]
  %v758 = vlaneseq
  %v759 = vshrl.u32 %v758, 7
  %v760 = vsub.s32 0, %v759
  %v761 = vrot.slane %v756, %v760
  %v813 = vunpack.c.l.b16 %v706
  %v814 = vunpack.c.l.b16 %v707
  %v815 = vunpack.c.l.b16 %v708
  %v816 = vunpack.c.l.b16 %v709
  %v817 = vunpack.c.l.b16 %v710
  %v818 = vunpack.c.l.b16 %v711
  %v819 = vunpack.c.l.b16 %v712
  %v820 = vunpack.c.l.b16 %v713
  %v821 = vunpack.c.l.b16 %v714
  %v822 = vunpack.c.l.b16 %v715
  %v823 = vunpack.c.l.b16 %v716
  %v824 = vunpack.c.l.b16 %v717
  %v825 = vunpack.c.l.b16 %v718
  %v826 = vunpack.c.l.b16 %v719
  %v827 = vunpack.c.l.b16 %v720
  %v828 = vunpack.c.l.b16 %v721
  %v829 = vunpack.c.l.b16 %v722
  %v830 = vunpack.c.l.b16 %v723
  %v831 = vunpack.c.l.b16 %v724
  %v832 = vunpack.c.l.b16 %v725
  %v833 = vunpack.c.l.b16 %v726
  %v834 = vunpack.c.l.b16 %v727
  %v835 = vunpack.c.l.b16 %v728
  %v836 = vunpack.c.l.b16 %v729
  %v837 = vunpack.c.l.b16 %v730
  %v838 = vunpack.c.l.b16 %v731
  %v839 = vunpack.c.l.b16 %v732
  %v840 = vunpack.c.l.b16 %v733
  %v841 = vunpack.c.l.b16 %v734
  %v842 = vunpack.c.l.b16 %v735
  %v843 = vunpack.c.l.b16 %v736
  %v844 = vunpack.c.l.b16 %v737
  %v845 = vunpack.c.l.b16 %v738
  %v846 = vunpack.c.l.b16 %v739
  %v847 = vunpack.c.l.b16 %v740
  %v848 = vunpack.c.l.b16 %v741
  %v849 = vunpack.c.l.b16 %v742
  %v850 = vunpack.c.l.b16 %v743
  %v851 = vunpack.c.l.b16 %v744
  %v852 = vunpack.c.l.b16 %v745
  %v853 = vunpack.c.l.b16 %v746
  %v854 = vunpack.c.l.b16 %v747
  %v855 = vunpack.c.l.b16 %v748
  %v856 = vunpack.c.l.b16 %v749
  %v857 = vunpack.c.l.b16 %v750
  %v858 = vunpack.c.l.b16 %v751
  %v859 = vunpack.c.l.b16 %v752
  %v860 = vunpack.c.l.b16 %v753
  %v861 = vunpack.c.l.b16 %v754
  %v862 = vunpack.c.l.b16 %v755
  %v863 = vpack.c.b16 %v814, %v813
  %v864 = vpack.c.b16 %v816, %v815
  %v865 = vpack.c.b16 %v818, %v817
  %v866 = vpack.c.b16 %v820, %v819
  %v867 = vpack.c.b16 %v822, %v821
  %v868 = vpack.c.b16 %v824, %v823
  %v869 = vpack.c.b16 %v826, %v825
  %v870 = vpack.c.b16 %v828, %v827
  %v871 = vpack.c.b16 %v830, %v829
  %v872 = vpack.c.b16 %v832, %v831
  %v873 = vpack.c.b16 %v834, %v833
  %v874 = vpack.c.b16 %v836, %v835
  %v875 = vpack.c.b16 %v838, %v837
  %v876 = vpack.c.b16 %v840, %v839
  %v877 = vpack.c.b16 %v842, %v841
  %v878 = vpack.c.b16 %v844, %v843
  %v879 = vpack.c.b16 %v846, %v845
  %v880 = vpack.c.b16 %v848, %v847
  %v881 = vpack.c.b16 %v850, %v849
  %v882 = vpack.c.b16 %v852, %v851
  %v883 = vpack.c.b16 %v854, %v853
  %v884 = vpack.c.b16 %v856, %v855
  %v885 = vpack.c.b16 %v858, %v857
  %v886 = vpack.c.b16 %v860, %v859
  %v887 = vpack.c.b16 %v862, %v861
  %v914 = vsel %vm154, %v705, 0
  %916 = vmatprep.subr.bf16.mxu0 0
  %917 = vmatpush1.bf16.msra.mxu0 %v870
  %918 = vmatprep.subr.bf16.mxu0 0
  %919 = vmatpush1.bf16.msra.mxu0 %v869
  %920 = vmatprep.subr.bf16.mxu0 0
  %921 = vmatpush1.bf16.msra.mxu0 %v868
  %922 = vmatprep.subr.bf16.mxu0 0
  %923 = vmatpush1.bf16.msra.mxu0 %v867
  %924 = vmatprep.subr.bf16.mxu0 0
  %925 = vmatpush1.bf16.msra.mxu0 %v866
  %926 = vmatprep.subr.bf16.mxu0 0
  %927 = vmatpush1.bf16.msra.mxu0 %v865
  %928 = vmatprep.subr.bf16.mxu0 0
  %929 = vmatpush1.bf16.msra.mxu0 %v864
  %930 = vmatprep.subr.bf16.mxu0 0
  %931 = vmatpush1.bf16.msra.mxu0 %v863
  %932 = vmatprep.subr.bf16.mxu0 0
  %933 = vmatpush2.bf16.msra.mxu0 %v878
  %934 = vmatprep.subr.bf16.mxu0 0
  %935 = vmatpush2.bf16.msra.mxu0 %v877
  %936 = vmatprep.subr.bf16.mxu0 0
  %937 = vmatpush2.bf16.msra.mxu0 %v876
  %938 = vmatprep.subr.bf16.mxu0 0
  %939 = vmatpush2.bf16.msra.mxu0 %v875
  %940 = vmatprep.subr.bf16.mxu0 0
  %941 = vmatpush2.bf16.msra.mxu0 %v874
  %942 = vmatprep.subr.bf16.mxu0 0
  %943 = vmatpush2.bf16.msra.mxu0 %v873
  %944 = vmatprep.subr.bf16.mxu0 0
  %945 = vmatpush2.bf16.msra.mxu0 %v872
  %946 = vmatprep.subr.bf16.mxu0 0
  %947 = vmatpush2.bf16.msra.mxu0 %v871
  %948 = vmatprep.mubr.bf16.mxu0 %v703
  %949 = vmatmul.mubr.bf16.gmra.mxu0 %v702
  %v950 = vpop.f32.mrf.mxu0
  %v951 = vadd.f32 %v761, %v950
  %v952 = vpop.f32.mrf.mxu0
  %v953 = vpop.f32.mrf.mxu0
  %v954 = vadd.f32 %v761, %v953
  %v955 = vpop.f32.mrf.mxu0
  %956 = vdwg.mxu0
  %957 = vmatprep.subr.bf16.mxu0 0
  %958 = vmatpush1.bf16.msra.mxu0 %v886
  %959 = vmatprep.subr.bf16.mxu0 0
  %960 = vmatpush1.bf16.msra.mxu0 %v885
  %961 = vmatprep.subr.bf16.mxu0 0
  %962 = vmatpush1.bf16.msra.mxu0 %v884
  %963 = vmatprep.subr.bf16.mxu0 0
  %964 = vmatpush1.bf16.msra.mxu0 %v883
  %965 = vmatprep.subr.bf16.mxu0 0
  %966 = vmatpush1.bf16.msra.mxu0 %v882
  %967 = vmatprep.subr.bf16.mxu0 0
  %968 = vmatpush1.bf16.msra.mxu0 %v881
  %969 = vmatprep.subr.bf16.mxu0 0
  %970 = vmatpush1.bf16.msra.mxu0 %v880
  %971 = vmatprep.subr.bf16.mxu0 0
  %972 = vmatpush1.bf16.msra.mxu0 %v879
  %973 = vmatprep.subr.bf16.mxu0 0
  %974 = vmatpush2.bf16.msra.mxu0 0
  %975 = vmatprep.subr.bf16.mxu0 0
  %976 = vmatpush2.bf16.msra.mxu0 0
  %977 = vmatprep.subr.bf16.mxu0 0
  %978 = vmatpush2.bf16.msra.mxu0 0
  %979 = vmatprep.subr.bf16.mxu0 0
  %980 = vmatpush2.bf16.msra.mxu0 0
  %981 = vmatprep.subr.bf16.mxu0 0
  %982 = vmatpush2.bf16.msra.mxu0 0
  %983 = vmatprep.subr.bf16.mxu0 0
  %984 = vmatpush2.bf16.msra.mxu0 0
  %985 = vmatprep.subr.bf16.mxu0 0
  %986 = vmatpush2.bf16.msra.mxu0 0
  %987 = vmatprep.subr.bf16.mxu0 0
  %988 = vmatpush2.bf16.msra.mxu0 %v887
  %989 = vmatprep.mubr.bf16.mxu0 %v914
  %990 = vmatmul.mubr.bf16.gmra.mxu0 %v704
  %v991 = vpop.f32.mrf.mxu0
  %v992 = vadd.f32 %v951, %v991
  %v993 = vpop.f32.mrf.mxu0
  %v994 = vpop.f32.mrf.mxu0
  %v995 = vadd.f32 %v954, %v994
  %v996 = vpop.f32.mrf.mxu0
  %997 = vdwg.mxu0
  %v998 = vsub.f32 0.0, %v992
  %v999 = vsub.f32 0.0, %v995
  %v1000 = vmul.f32 %v998, 1.442695
  %v1001 = vpow.pop %v1000
  %v1002 = vmul.f32 %v999, 1.442695
  %v1003 = vpow.pop %v1002
  %v1004 = vadd.f32 %v1001, 1.0
  %v1005 = vadd.f32 %v1003, 1.0
  %v1006 = vrcp.pop %v1004
  %v1007 = vrcp.pop %v1005
  %v1008 = vpack.c.bf16 %v235, %v232
  %v1009 = vld [vmem:[%s10] sm:$0xf]
  %v1010 = vld [vmem:[%s10 + $0x4] sm:$0xf]
  %v1011 = vld [vmem:[%s10 + $0x8] sm:$0xf]
  %v1012 = vld [vmem:[%s10 + $0xc] sm:$0xf]
  %v1013 = vld [vmem:[%s10 + $0x10] sm:$0xf]
  %v1014 = vld [vmem:[%s10 + $0x14] sm:$0xf]
  %v1015 = vld [vmem:[%s10 + $0x18] sm:$0xf]
  %v1016 = vld [vmem:[%s10 + $0x1c] sm:$0xf]
  %v1017 = vld [vmem:[%s10 + $0x20] sm:$0xf]
  %v1018 = vld [vmem:[%s10 + $0x24] sm:$0xf]
  %v1019 = vld [vmem:[%s10 + $0x28] sm:$0xf]
  %v1020 = vld [vmem:[%s10 + $0x2c] sm:$0xf]
  %v1033 = vunpack.c.l.b16 %v1009
  %v1034 = vunpack.c.l.b16 %v1010
  %v1035 = vunpack.c.l.b16 %v1011
  %v1036 = vunpack.c.l.b16 %v1012
  %v1037 = vunpack.c.l.b16 %v1013
  %v1038 = vunpack.c.l.b16 %v1014
  %v1039 = vunpack.c.l.b16 %v1015
  %v1040 = vunpack.c.l.b16 %v1016
  %v1041 = vunpack.c.l.b16 %v1017
  %v1042 = vunpack.c.l.b16 %v1018
  %v1043 = vunpack.c.l.b16 %v1019
  %v1044 = vunpack.c.l.b16 %v1020
  %v1045 = vpack.c.b16 %v1034, %v1033
  %v1046 = vpack.c.b16 %v1036, %v1035
  %v1047 = vpack.c.b16 %v1038, %v1037
  %v1048 = vpack.c.b16 %v1040, %v1039
  %v1049 = vpack.c.b16 %v1042, %v1041
  %v1050 = vpack.c.b16 %v1044, %v1043
  %vm1057 = vcmask 785408
  %v1059 = vsel %vm1057, %v1008, 0
  %1061 = vmatprep.subr.bf16.mxu0 0
  %1062 = vmatpush1.bf16.msra.mxu0 0
  %1063 = vmatprep.subr.bf16.mxu0 0
  %1064 = vmatpush1.bf16.msra.mxu0 0
  %1065 = vmatprep.subr.bf16.mxu0 0
  %1066 = vmatpush1.bf16.msra.mxu0 %v1050
  %1067 = vmatprep.subr.bf16.mxu0 0
  %1068 = vmatpush1.bf16.msra.mxu0 %v1049
  %1069 = vmatprep.subr.bf16.mxu0 0
  %1070 = vmatpush1.bf16.msra.mxu0 %v1048
  %1071 = vmatprep.subr.bf16.mxu0 0
  %1072 = vmatpush1.bf16.msra.mxu0 %v1047
  %1073 = vmatprep.subr.bf16.mxu0 0
  %1074 = vmatpush1.bf16.msra.mxu0 %v1046
  %1075 = vmatprep.subr.bf16.mxu0 0
  %1076 = vmatpush1.bf16.msra.mxu0 %v1045
  %1077 = vmatprep.subr.bf16.mxu0 0
  %1078 = vmatpush2.bf16.msra.mxu0 0
  %1079 = vmatprep.subr.bf16.mxu0 0
  %1080 = vmatpush2.bf16.msra.mxu0 0
  %1081 = vmatprep.subr.bf16.mxu0 0
  %1082 = vmatpush2.bf16.msra.mxu0 0
  %1083 = vmatprep.subr.bf16.mxu0 0
  %1084 = vmatpush2.bf16.msra.mxu0 0
  %1085 = vmatprep.subr.bf16.mxu0 0
  %1086 = vmatpush2.bf16.msra.mxu0 0
  %1087 = vmatprep.subr.bf16.mxu0 0
  %1088 = vmatpush2.bf16.msra.mxu0 0
  %1089 = vmatprep.subr.bf16.mxu0 0
  %1090 = vmatpush2.bf16.msra.mxu0 0
  %1091 = vmatprep.subr.bf16.mxu0 0
  %1092 = vmatpush2.bf16.msra.mxu0 0
  %1093 = vmatprep.mubr.bf16.mxu0 0
  %1094 = vmatmul.mubr.bf16.gmra.mxu0 %v1059
  %v1095 = vpop.f32.mrf.mxu0
  %v1096 = vadd.f32 0.0, %v1095
  %v1097 = vpop.f32.mrf.mxu0
  %v1098 = vpop.f32.mrf.mxu0
  %v1099 = vadd.f32 0.0, %v1098
  %v1100 = vpop.f32.mrf.mxu0
  %1101 = vdwg.mxu0
  %1104 = vrot.lane.b32.xlu0 %v1006, 32
  %v1105 = vpop.permute.xlu0 %1104
  %1106 = vrot.lane.b32.xlu0 %v1007, 32
  %v1107 = vpop.permute.xlu0 %1106
  %1110 = vrot.lane.b32.xlu0 %v1006, 64
  %v1111 = vpop.permute.xlu0 %1110
  %1112 = vrot.lane.b32.xlu0 %v1007, 64
  %v1113 = vpop.permute.xlu0 %1112
  %v1116 = vsel %vm350, %v1006, %v1105
  %v1117 = vsel %vm350, %v1007, %v1107
  %vm1118 = vcmask 523264
  %v1119 = vsel %vm1118, %v1116, %v1111
  %v1120 = vsel %vm1118, %v1117, %v1113
  %v1121 = vmul.f32 %v1096, %v1119
  %v1122 = vmul.f32 %v1099, %v1120
  %v1123 = vmax.f32 %v694, 0.0
  %v1124 = vmax.f32 %v695, 0.0
  %v1125 = vmax.f32 %v696, 0.0
  %v1126 = vmax.f32 %v697, 0.0
  %v1127 = vmax.f32 %v698, 0.0
  %v1128 = vmax.f32 %v699, 0.0
  %v1129 = vmax.f32 %v700, 0.0
  %v1130 = vmax.f32 %v701, 0.0
  %v1131 = vpack.c.bf16 %v1122, %v1121
  %v1132 = vld [vmem:[%s13] sm:$0xf]
  %v1133 = vld [vmem:[%s13 + $0x4] sm:$0xf]
  %v1134 = vld [vmem:[%s13 + $0x8] sm:$0xf]
  %v1135 = vld [vmem:[%s13 + $0xc] sm:$0xf]
  %v1136 = vld [vmem:[%s13 + $0x10] sm:$0xf]
  %v1137 = vld [vmem:[%s13 + $0x14] sm:$0xf]
  %v1138 = vld [vmem:[%s13 + $0x18] sm:$0xf]
  %v1139 = vld [vmem:[%s13 + $0x1c] sm:$0xf]
  %v1140 = vld [vmem:[%s13 + $0x20] sm:$0xf]
  %v1141 = vld [vmem:[%s13 + $0x24] sm:$0xf]
  %v1142 = vld [vmem:[%s13 + $0x28] sm:$0xf]
  %v1143 = vld [vmem:[%s13 + $0x2c] sm:$0xf]
  %v1156 = vunpack.c.l.b16 %v1132
  %v1157 = vunpack.c.l.b16 %v1133
  %v1158 = vunpack.c.l.b16 %v1134
  %v1159 = vunpack.c.l.b16 %v1135
  %v1160 = vunpack.c.l.b16 %v1136
  %v1161 = vunpack.c.l.b16 %v1137
  %v1162 = vunpack.c.l.b16 %v1138
  %v1163 = vunpack.c.l.b16 %v1139
  %v1164 = vunpack.c.l.b16 %v1140
  %v1165 = vunpack.c.l.b16 %v1141
  %v1166 = vunpack.c.l.b16 %v1142
  %v1167 = vunpack.c.l.b16 %v1143
  %v1168 = vpack.c.b16 %v1157, %v1156
  %v1169 = vpack.c.b16 %v1159, %v1158
  %v1170 = vpack.c.b16 %v1161, %v1160
  %v1171 = vpack.c.b16 %v1163, %v1162
  %v1172 = vpack.c.b16 %v1165, %v1164
  %v1173 = vpack.c.b16 %v1167, %v1166
  %v1181 = vsel %vm1057, %v1131, 0
  %1183 = vmatprep.subr.bf16.mxu0 0
  %1184 = vmatpush1.bf16.msra.mxu0 0
  %1185 = vmatprep.subr.bf16.mxu0 0
  %1186 = vmatpush1.bf16.msra.mxu0 0
  %1187 = vmatprep.subr.bf16.mxu0 0
  %1188 = vmatpush1.bf16.msra.mxu0 %v1173
  %1189 = vmatprep.subr.bf16.mxu0 0
  %1190 = vmatpush1.bf16.msra.mxu0 %v1172
  %1191 = vmatprep.subr.bf16.mxu0 0
  %1192 = vmatpush1.bf16.msra.mxu0 %v1171
  %1193 = vmatprep.subr.bf16.mxu0 0
  %1194 = vmatpush1.bf16.msra.mxu0 %v1170
  %1195 = vmatprep.subr.bf16.mxu0 0
  %1196 = vmatpush1.bf16.msra.mxu0 %v1169
  %1197 = vmatprep.subr.bf16.mxu0 0
  %1198 = vmatpush1.bf16.msra.mxu0 %v1168
  %1199 = vmatprep.subr.bf16.mxu0 0
  %1200 = vmatpush2.bf16.msra.mxu0 0
  %1201 = vmatprep.subr.bf16.mxu0 0
  %1202 = vmatpush2.bf16.msra.mxu0 0
  %1203 = vmatprep.subr.bf16.mxu0 0
  %1204 = vmatpush2.bf16.msra.mxu0 0
  %1205 = vmatprep.subr.bf16.mxu0 0
  %1206 = vmatpush2.bf16.msra.mxu0 0
  %1207 = vmatprep.subr.bf16.mxu0 0
  %1208 = vmatpush2.bf16.msra.mxu0 0
  %1209 = vmatprep.subr.bf16.mxu0 0
  %1210 = vmatpush2.bf16.msra.mxu0 0
  %1211 = vmatprep.subr.bf16.mxu0 0
  %1212 = vmatpush2.bf16.msra.mxu0 0
  %1213 = vmatprep.subr.bf16.mxu0 0
  %1214 = vmatpush2.bf16.msra.mxu0 0
  %1215 = vmatprep.mubr.bf16.mxu0 0
  %1216 = vmatmul.mubr.bf16.gmra.mxu0 %v1181
  %v1217 = vpop.f32.mrf.mxu0
  %v1218 = vadd.f32 0.0, %v1217
  %v1219 = vpop.f32.mrf.mxu0
  %v1220 = vpop.f32.mrf.mxu0
  %v1221 = vadd.f32 0.0, %v1220
  %v1222 = vpop.f32.mrf.mxu0
  %1223 = vdwg.mxu0
  %v1224 = vmul.f32 %v1218, %v1218
  %v1225 = vmul.f32 %v1221, %v1221
  %1228 = vrot.lane.b32.xlu0 %v1224, 96
  %v1229 = vpop.permute.xlu0 %1228
  %1230 = vrot.lane.b32.xlu0 %v1225, 96
  %v1231 = vpop.permute.xlu0 %1230
  %v1234 = vadd.f32 %v1224, %v1229
  %v1235 = vadd.f32 %v1225, %v1231
  %1236 = vrot.lane.b32.xlu0 %v1224, 64
  %v1237 = vpop.permute.xlu0 %1236
  %1238 = vrot.lane.b32.xlu0 %v1225, 64
  %v1239 = vpop.permute.xlu0 %1238
  %v1242 = vadd.f32 %v1234, %v1237
  %v1243 = vadd.f32 %v1235, %v1239
  %v1244 = vmax.f32 %v1242, 1e-08
  %v1245 = vmax.f32 %v1243, 1e-08
  %v1246 = vrsqrt.pop %v1244
  %v1247 = vmul.f32 %v1244, %v1246
  %vm1248 = vcmp.eq.f32.partialorder %v1244, inf
  %v1249 = vsel %vm1248, %v1244, %v1247
  %vm1250 = vcmp.eq.f32.partialorder %v1244, 0.0
  %v1251 = vand.u32 %v1244, 2147483648
  %v1252 = vsel %vm1250, %v1251, %v1249
  %v1253 = vrsqrt.pop %v1245
  %v1254 = vmul.f32 %v1245, %v1253
  %vm1255 = vcmp.eq.f32.partialorder %v1245, inf
  %v1256 = vsel %vm1255, %v1245, %v1254
  %vm1257 = vcmp.eq.f32.partialorder %v1245, 0.0
  %v1258 = vand.u32 %v1245, 2147483648
  %v1259 = vsel %vm1257, %v1258, %v1256
  %v1260 = vpack.c.bf16 %v1127, %v1123
  %v1261 = vpack.c.bf16 %v1128, %v1124
  %v1262 = vpack.c.bf16 %v1129, %v1125
  %v1263 = vpack.c.bf16 %v1130, %v1126
  %v1264 = vld [vmem:[%s14] sm:$0xf]
  %v1265 = vld [vmem:[%s14 + $0x4] sm:$0xf]
  %v1266 = vld [vmem:[%s14 + $0x8] sm:$0xf]
  %v1267 = vld [vmem:[%s14 + $0xc] sm:$0xf]
  %v1268 = vld [vmem:[%s14 + $0x10] sm:$0xf]
  %v1269 = vld [vmem:[%s14 + $0x14] sm:$0xf]
  %v1270 = vld [vmem:[%s14 + $0x18] sm:$0xf]
  %v1271 = vld [vmem:[%s14 + $0x1c] sm:$0xf]
  %v1272 = vld [vmem:[%s14 + $0x20] sm:$0xf]
  %v1273 = vld [vmem:[%s14 + $0x24] sm:$0xf]
  %v1274 = vld [vmem:[%s14 + $0x28] sm:$0xf]
  %v1275 = vld [vmem:[%s14 + $0x2c] sm:$0xf]
  %v1276 = vld [vmem:[%s14 + $0x30] sm:$0xf]
  %v1277 = vld [vmem:[%s14 + $0x34] sm:$0xf]
  %v1278 = vld [vmem:[%s14 + $0x38] sm:$0xf]
  %v1279 = vld [vmem:[%s14 + $0x3c] sm:$0xf]
  %v1280 = vld [vmem:[%s14 + $0x40] sm:$0xf]
  %v1281 = vld [vmem:[%s14 + $0x44] sm:$0xf]
  %v1282 = vld [vmem:[%s14 + $0x48] sm:$0xf]
  %v1283 = vld [vmem:[%s14 + $0x4c] sm:$0xf]
  %v1284 = vld [vmem:[%s14 + $0x50] sm:$0xf]
  %v1285 = vld [vmem:[%s14 + $0x54] sm:$0xf]
  %v1286 = vld [vmem:[%s14 + $0x58] sm:$0xf]
  %v1287 = vld [vmem:[%s14 + $0x5c] sm:$0xf]
  %v1288 = vld [vmem:[%s14 + $0x60] sm:$0xf]
  %v1289 = vld [vmem:[%s14 + $0x64] sm:$0xf]
  %v1290 = vld [vmem:[%s14 + $0x68] sm:$0xf]
  %v1291 = vld [vmem:[%s14 + $0x6c] sm:$0xf]
  %v1292 = vld [vmem:[%s14 + $0x70] sm:$0xf]
  %v1293 = vld [vmem:[%s14 + $0x74] sm:$0xf]
  %v1294 = vld [vmem:[%s14 + $0x78] sm:$0xf]
  %v1295 = vld [vmem:[%s14 + $0x7c] sm:$0xf]
  %v1296 = vld [vmem:[%s14 + $0x80] sm:$0xf]
  %v1297 = vld [vmem:[%s14 + $0x84] sm:$0xf]
  %v1298 = vld [vmem:[%s14 + $0x88] sm:$0xf]
  %v1299 = vld [vmem:[%s14 + $0x8c] sm:$0xf]
  %v1300 = vld [vmem:[%s14 + $0x90] sm:$0xf]
  %v1301 = vld [vmem:[%s14 + $0x94] sm:$0xf]
  %v1302 = vld [vmem:[%s14 + $0x98] sm:$0xf]
  %v1303 = vld [vmem:[%s14 + $0x9c] sm:$0xf]
  %v1304 = vld [vmem:[%s14 + $0xa0] sm:$0xf]
  %v1305 = vld [vmem:[%s14 + $0xa4] sm:$0xf]
  %v1306 = vld [vmem:[%s14 + $0xa8] sm:$0xf]
  %v1307 = vld [vmem:[%s14 + $0xac] sm:$0xf]
  %v1308 = vld [vmem:[%s14 + $0xb0] sm:$0xf]
  %v1309 = vld [vmem:[%s14 + $0xb4] sm:$0xf]
  %v1310 = vld [vmem:[%s14 + $0xb8] sm:$0xf]
  %v1311 = vld [vmem:[%s14 + $0xbc] sm:$0xf]
  %v1312 = vld [vmem:[%s14 + $0xc0] sm:$0xf]
  %v1313 = vld [vmem:[%s14 + $0xc4] sm:$0xf]
  %v1314 = vpack.c.bf16 %v1259, %v1252
  %v1315 = vld [vmem:[%s15] sm:$0xf]
  %v1316 = vld [vmem:[%s15 + $0x4] sm:$0xf]
  %v1317 = vld [vmem:[%s15 + $0x8] sm:$0xf]
  %v1318 = vld [vmem:[%s15 + $0xc] sm:$0xf]
  %v1323 = vunpack.c.l.b16 %v1315
  %v1324 = vunpack.c.l.b16 %v1316
  %v1325 = vunpack.c.l.b16 %v1317
  %v1326 = vunpack.c.l.b16 %v1318
  %v1327 = vpack.c.b16 %v1324, %v1323
  %v1328 = vpack.c.b16 %v1326, %v1325
  %v1332 = vsel %vm350, %v1314, 0
  %1334 = vmatprep.subr.bf16.mxu0 0
  %1335 = vmatpush1.bf16.msra.mxu0 0
  %1336 = vmatprep.subr.bf16.mxu0 0
  %1337 = vmatpush1.bf16.msra.mxu0 0
  %1338 = vmatprep.subr.bf16.mxu0 0
  %1339 = vmatpush1.bf16.msra.mxu0 0
  %1340 = vmatprep.subr.bf16.mxu0 0
  %1341 = vmatpush1.bf16.msra.mxu0 0
  %1342 = vmatprep.subr.bf16.mxu0 0
  %1343 = vmatpush1.bf16.msra.mxu0 0
  %1344 = vmatprep.subr.bf16.mxu0 0
  %1345 = vmatpush1.bf16.msra.mxu0 0
  %1346 = vmatprep.subr.bf16.mxu0 0
  %1347 = vmatpush1.bf16.msra.mxu0 %v1328
  %1348 = vmatprep.subr.bf16.mxu0 0
  %1349 = vmatpush1.bf16.msra.mxu0 %v1327
  %1350 = vmatprep.subr.bf16.mxu0 0
  %1351 = vmatpush2.bf16.msra.mxu0 0
  %1352 = vmatprep.subr.bf16.mxu0 0
  %1353 = vmatpush2.bf16.msra.mxu0 0
  %1354 = vmatprep.subr.bf16.mxu0 0
  %1355 = vmatpush2.bf16.msra.mxu0 0
  %1356 = vmatprep.subr.bf16.mxu0 0
  %1357 = vmatpush2.bf16.msra.mxu0 0
  %1358 = vmatprep.subr.bf16.mxu0 0
  %1359 = vmatpush2.bf16.msra.mxu0 0
  %1360 = vmatprep.subr.bf16.mxu0 0
  %1361 = vmatpush2.bf16.msra.mxu0 0
  %1362 = vmatprep.subr.bf16.mxu0 0
  %1363 = vmatpush2.bf16.msra.mxu0 0
  %1364 = vmatprep.subr.bf16.mxu0 0
  %1365 = vmatpush2.bf16.msra.mxu0 0
  %1366 = vmatprep.mubr.bf16.mxu0 0
  %1367 = vmatmul.mubr.bf16.gmra.mxu0 %v1332
  %v1368 = vpop.f32.mrf.mxu0
  %v1369 = vadd.f32 0.0, %v1368
  %v1370 = vpop.f32.mrf.mxu0
  %v1371 = vpop.f32.mrf.mxu0
  %v1372 = vadd.f32 0.0, %v1371
  %v1373 = vpop.f32.mrf.mxu0
  %1374 = vdwg.mxu0
  %v1425 = vunpack.c.l.b16 %v1264
  %v1426 = vunpack.c.l.b16 %v1265
  %v1427 = vunpack.c.l.b16 %v1266
  %v1428 = vunpack.c.l.b16 %v1267
  %v1429 = vunpack.c.l.b16 %v1268
  %v1430 = vunpack.c.l.b16 %v1269
  %v1431 = vunpack.c.l.b16 %v1270
  %v1432 = vunpack.c.l.b16 %v1271
  %v1433 = vunpack.c.l.b16 %v1272
  %v1434 = vunpack.c.l.b16 %v1273
  %v1435 = vunpack.c.l.b16 %v1274
  %v1436 = vunpack.c.l.b16 %v1275
  %v1437 = vunpack.c.l.b16 %v1276
  %v1438 = vunpack.c.l.b16 %v1277
  %v1439 = vunpack.c.l.b16 %v1278
  %v1440 = vunpack.c.l.b16 %v1279
  %v1441 = vunpack.c.l.b16 %v1280
  %v1442 = vunpack.c.l.b16 %v1281
  %v1443 = vunpack.c.l.b16 %v1282
  %v1444 = vunpack.c.l.b16 %v1283
  %v1445 = vunpack.c.l.b16 %v1284
  %v1446 = vunpack.c.l.b16 %v1285
  %v1447 = vunpack.c.l.b16 %v1286
  %v1448 = vunpack.c.l.b16 %v1287
  %v1449 = vunpack.c.l.b16 %v1288
  %v1450 = vunpack.c.l.b16 %v1289
  %v1451 = vunpack.c.l.b16 %v1290
  %v1452 = vunpack.c.l.b16 %v1291
  %v1453 = vunpack.c.l.b16 %v1292
  %v1454 = vunpack.c.l.b16 %v1293
  %v1455 = vunpack.c.l.b16 %v1294
  %v1456 = vunpack.c.l.b16 %v1295
  %v1457 = vunpack.c.l.b16 %v1296
  %v1458 = vunpack.c.l.b16 %v1297
  %v1459 = vunpack.c.l.b16 %v1298
  %v1460 = vunpack.c.l.b16 %v1299
  %v1461 = vunpack.c.l.b16 %v1300
  %v1462 = vunpack.c.l.b16 %v1301
  %v1463 = vunpack.c.l.b16 %v1302
  %v1464 = vunpack.c.l.b16 %v1303
  %v1465 = vunpack.c.l.b16 %v1304
  %v1466 = vunpack.c.l.b16 %v1305
  %v1467 = vunpack.c.l.b16 %v1306
  %v1468 = vunpack.c.l.b16 %v1307
  %v1469 = vunpack.c.l.b16 %v1308
  %v1470 = vunpack.c.l.b16 %v1309
  %v1471 = vunpack.c.l.b16 %v1310
  %v1472 = vunpack.c.l.b16 %v1311
  %v1473 = vunpack.c.l.b16 %v1312
  %v1474 = vunpack.c.l.b16 %v1313
  %v1475 = vpack.c.b16 %v1426, %v1425
  %v1476 = vpack.c.b16 %v1428, %v1427
  %v1477 = vpack.c.b16 %v1430, %v1429
  %v1478 = vpack.c.b16 %v1432, %v1431
  %v1479 = vpack.c.b16 %v1434, %v1433
  %v1480 = vpack.c.b16 %v1436, %v1435
  %v1481 = vpack.c.b16 %v1438, %v1437
  %v1482 = vpack.c.b16 %v1440, %v1439
  %v1483 = vpack.c.b16 %v1442, %v1441
  %v1484 = vpack.c.b16 %v1444, %v1443
  %v1485 = vpack.c.b16 %v1446, %v1445
  %v1486 = vpack.c.b16 %v1448, %v1447
  %v1487 = vpack.c.b16 %v1450, %v1449
  %v1488 = vpack.c.b16 %v1452, %v1451
  %v1489 = vpack.c.b16 %v1454, %v1453
  %v1490 = vpack.c.b16 %v1456, %v1455
  %v1491 = vpack.c.b16 %v1458, %v1457
  %v1492 = vpack.c.b16 %v1460, %v1459
  %v1493 = vpack.c.b16 %v1462, %v1461
  %v1494 = vpack.c.b16 %v1464, %v1463
  %v1495 = vpack.c.b16 %v1466, %v1465
  %v1496 = vpack.c.b16 %v1468, %v1467
  %v1497 = vpack.c.b16 %v1470, %v1469
  %v1498 = vpack.c.b16 %v1472, %v1471
  %v1499 = vpack.c.b16 %v1474, %v1473
  %v1526 = vsel %vm154, %v1263, 0
  %1528 = vmatprep.subr.bf16.mxu0 0
  %1529 = vmatpush1.bf16.msra.mxu0 %v1482
  %1530 = vmatprep.subr.bf16.mxu0 0
  %1531 = vmatpush1.bf16.msra.mxu0 %v1481
  %1532 = vmatprep.subr.bf16.mxu0 0
  %1533 = vmatpush1.bf16.msra.mxu0 %v1480
  %1534 = vmatprep.subr.bf16.mxu0 0
  %1535 = vmatpush1.bf16.msra.mxu0 %v1479
  %1536 = vmatprep.subr.bf16.mxu0 0
  %1537 = vmatpush1.bf16.msra.mxu0 %v1478
  %1538 = vmatprep.subr.bf16.mxu0 0
  %1539 = vmatpush1.bf16.msra.mxu0 %v1477
  %1540 = vmatprep.subr.bf16.mxu0 0
  %1541 = vmatpush1.bf16.msra.mxu0 %v1476
  %1542 = vmatprep.subr.bf16.mxu0 0
  %1543 = vmatpush1.bf16.msra.mxu0 %v1475
  %1544 = vmatprep.subr.bf16.mxu0 0
  %1545 = vmatpush2.bf16.msra.mxu0 %v1490
  %1546 = vmatprep.subr.bf16.mxu0 0
  %1547 = vmatpush2.bf16.msra.mxu0 %v1489
  %1548 = vmatprep.subr.bf16.mxu0 0
  %1549 = vmatpush2.bf16.msra.mxu0 %v1488
  %1550 = vmatprep.subr.bf16.mxu0 0
  %1551 = vmatpush2.bf16.msra.mxu0 %v1487
  %1552 = vmatprep.subr.bf16.mxu0 0
  %1553 = vmatpush2.bf16.msra.mxu0 %v1486
  %1554 = vmatprep.subr.bf16.mxu0 0
  %1555 = vmatpush2.bf16.msra.mxu0 %v1485
  %1556 = vmatprep.subr.bf16.mxu0 0
  %1557 = vmatpush2.bf16.msra.mxu0 %v1484
  %1558 = vmatprep.subr.bf16.mxu0 0
  %1559 = vmatpush2.bf16.msra.mxu0 %v1483
  %1560 = vmatprep.mubr.bf16.mxu0 %v1261
  %1561 = vmatmul.mubr.bf16.gmra.mxu0 %v1260
  %v1562 = vpop.f32.mrf.mxu0
  %v1563 = vadd.f32 %v1369, %v1562
  %v1564 = vpop.f32.mrf.mxu0
  %v1565 = vpop.f32.mrf.mxu0
  %v1566 = vadd.f32 %v1372, %v1565
  %v1567 = vpop.f32.mrf.mxu0
  %1568 = vdwg.mxu0
  %1569 = vmatprep.subr.bf16.mxu0 0
  %1570 = vmatpush1.bf16.msra.mxu0 %v1498
  %1571 = vmatprep.subr.bf16.mxu0 0
  %1572 = vmatpush1.bf16.msra.mxu0 %v1497
  %1573 = vmatprep.subr.bf16.mxu0 0
  %1574 = vmatpush1.bf16.msra.mxu0 %v1496
  %1575 = vmatprep.subr.bf16.mxu0 0
  %1576 = vmatpush1.bf16.msra.mxu0 %v1495
  %1577 = vmatprep.subr.bf16.mxu0 0
  %1578 = vmatpush1.bf16.msra.mxu0 %v1494
  %1579 = vmatprep.subr.bf16.mxu0 0
  %1580 = vmatpush1.bf16.msra.mxu0 %v1493
  %1581 = vmatprep.subr.bf16.mxu0 0
  %1582 = vmatpush1.bf16.msra.mxu0 %v1492
  %1583 = vmatprep.subr.bf16.mxu0 0
  %1584 = vmatpush1.bf16.msra.mxu0 %v1491
  %1585 = vmatprep.subr.bf16.mxu0 0
  %1586 = vmatpush2.bf16.msra.mxu0 0
  %1587 = vmatprep.subr.bf16.mxu0 0
  %1588 = vmatpush2.bf16.msra.mxu0 0
  %1589 = vmatprep.subr.bf16.mxu0 0
  %1590 = vmatpush2.bf16.msra.mxu0 0
  %1591 = vmatprep.subr.bf16.mxu0 0
  %1592 = vmatpush2.bf16.msra.mxu0 0
  %1593 = vmatprep.subr.bf16.mxu0 0
  %1594 = vmatpush2.bf16.msra.mxu0 0
  %1595 = vmatprep.subr.bf16.mxu0 0
  %1596 = vmatpush2.bf16.msra.mxu0 0
  %1597 = vmatprep.subr.bf16.mxu0 0
  %1598 = vmatpush2.bf16.msra.mxu0 0
  %1599 = vmatprep.subr.bf16.mxu0 0
  %1600 = vmatpush2.bf16.msra.mxu0 %v1499
  %1601 = vmatprep.mubr.bf16.mxu0 %v1526
  %1602 = vmatmul.mubr.bf16.gmra.mxu0 %v1262
  %v1603 = vpop.f32.mrf.mxu0
  %v1604 = vadd.f32 %v1563, %v1603
  %v1605 = vpop.f32.mrf.mxu0
  %v1606 = vpop.f32.mrf.mxu0
  %v1607 = vadd.f32 %v1566, %v1606
  %v1608 = vpop.f32.mrf.mxu0
  %1609 = vdwg.mxu0
  %v1610 = vld [vmem:[%s16] sm:$0x1]
  %v1612 = vlaneseq
  %v1613 = vshrl.u32 %v1612, 7
  %v1614 = vsub.s32 0, %v1613
  %v1615 = vrot.slane %v1610, %v1614
  %v1617 = vadd.f32 %v1604, %v1615
  %v1618 = vadd.f32 %v1607, %v1615
  %v1619 = vpack.c.bf16 %v1618, %v1617
  %v1620 = vld [vmem:[%s18] sm:$0xf]
  %v1621 = vld [vmem:[%s18 + $0x4] sm:$0xf]
  %v1622 = vld [vmem:[%s18 + $0x8] sm:$0xf]
  %v1623 = vld [vmem:[%s18 + $0xc] sm:$0xf]
  %v1624 = vld [vmem:[%s18 + $0x10] sm:$0xf]
  %v1625 = vld [vmem:[%s18 + $0x14] sm:$0xf]
  %v1626 = vld [vmem:[%s18 + $0x18] sm:$0xf]
  %v1627 = vld [vmem:[%s18 + $0x1c] sm:$0xf]
  %v1628 = vld [vmem:[%s18 + $0x20] sm:$0xf]
  %v1629 = vld [vmem:[%s18 + $0x24] sm:$0xf]
  %v1630 = vld [vmem:[%s18 + $0x28] sm:$0xf]
  %v1631 = vld [vmem:[%s18 + $0x2c] sm:$0xf]
  %v1632 = vld [vmem:[%s18 + $0x30] sm:$0x3]
  %v1633 = vld [vmem:[%s19] sm:$0x1]
  %v1635 = vlaneseq
  %v1636 = vshrl.u32 %v1635, 7
  %v1637 = vsub.s32 0, %v1636
  %v1638 = vrot.slane %v1633, %v1637
  %v1653 = vunpack.c.l.b16 %v1620
  %v1654 = vunpack.c.l.b16 %v1621
  %v1655 = vunpack.c.l.b16 %v1622
  %v1656 = vunpack.c.l.b16 %v1623
  %v1657 = vunpack.c.l.b16 %v1624
  %v1658 = vunpack.c.l.b16 %v1625
  %v1659 = vunpack.c.l.b16 %v1626
  %v1660 = vunpack.c.l.b16 %v1627
  %v1661 = vunpack.c.l.b16 %v1628
  %v1662 = vunpack.c.l.b16 %v1629
  %v1663 = vunpack.c.l.b16 %v1630
  %v1664 = vunpack.c.l.b16 %v1631
  %v1665 = vunpack.c.l.b16 %v1632
  %v1666 = vpack.c.b16 %v1654, %v1653
  %v1667 = vpack.c.b16 %v1656, %v1655
  %v1668 = vpack.c.b16 %v1658, %v1657
  %v1669 = vpack.c.b16 %v1660, %v1659
  %v1670 = vpack.c.b16 %v1662, %v1661
  %v1671 = vpack.c.b16 %v1664, %v1663
  %v1672 = vpack.c.b16 %v1665, %v1665
  %v1680 = vsel %vm86, %v1619, 0
  %v1683 = vsel %vm573, %v1672, 0
  %1685 = vmatprep.subr.bf16.mxu0 0
  %1686 = vmatpush1.bf16.msra.mxu0 0
  %1687 = vmatprep.subr.bf16.mxu0 0
  %1688 = vmatpush1.bf16.msra.mxu0 %v1683
  %1689 = vmatprep.subr.bf16.mxu0 0
  %1690 = vmatpush1.bf16.msra.mxu0 %v1671
  %1691 = vmatprep.subr.bf16.mxu0 0
  %1692 = vmatpush1.bf16.msra.mxu0 %v1670
  %1693 = vmatprep.subr.bf16.mxu0 0
  %1694 = vmatpush1.bf16.msra.mxu0 %v1669
  %1695 = vmatprep.subr.bf16.mxu0 0
  %1696 = vmatpush1.bf16.msra.mxu0 %v1668
  %1697 = vmatprep.subr.bf16.mxu0 0
  %1698 = vmatpush1.bf16.msra.mxu0 %v1667
  %1699 = vmatprep.subr.bf16.mxu0 0
  %1700 = vmatpush1.bf16.msra.mxu0 %v1666
  %1701 = vmatprep.subr.bf16.mxu0 0
  %1702 = vmatpush2.bf16.msra.mxu0 0
  %1703 = vmatprep.subr.bf16.mxu0 0
  %1704 = vmatpush2.bf16.msra.mxu0 0
  %1705 = vmatprep.subr.bf16.mxu0 0
  %1706 = vmatpush2.bf16.msra.mxu0 0
  %1707 = vmatprep.subr.bf16.mxu0 0
  %1708 = vmatpush2.bf16.msra.mxu0 0
  %1709 = vmatprep.subr.bf16.mxu0 0
  %1710 = vmatpush2.bf16.msra.mxu0 0
  %1711 = vmatprep.subr.bf16.mxu0 0
  %1712 = vmatpush2.bf16.msra.mxu0 0
  %1713 = vmatprep.subr.bf16.mxu0 0
  %1714 = vmatpush2.bf16.msra.mxu0 0
  %1715 = vmatprep.subr.bf16.mxu0 0
  %1716 = vmatpush2.bf16.msra.mxu0 0
  %1717 = vmatprep.mubr.bf16.mxu0 0
  %1718 = vmatmul.mubr.bf16.gmra.mxu0 %v1680
  %v1719 = vpop.f32.mrf.mxu0
  %v1720 = vadd.f32 %v1638, %v1719
  %v1721 = vpop.f32.mrf.mxu0
  %v1722 = vpop.f32.mrf.mxu0
  %v1723 = vadd.f32 %v1638, %v1722
  %v1724 = vpop.f32.mrf.mxu0
  %1725 = vdwg.mxu0
  %v1726 = vsub.f32 0.0, %v1720
  %v1727 = vsub.f32 0.0, %v1723
  %v1728 = vmul.f32 %v1726, 1.442695
  %v1729 = vpow.pop %v1728
  %v1730 = vmul.f32 %v1727, 1.442695
  %v1731 = vpow.pop %v1730
  %v1732 = vadd.f32 %v1729, 1.0
  %v1733 = vadd.f32 %v1731, 1.0
  %v1734 = vrcp.pop %v1732
  %v1735 = vrcp.pop %v1733
  %v1736 = vpack.c.bf16 %v1221, %v1218
  %v1737 = vld [vmem:[%s17] sm:$0xf]
  %v1738 = vld [vmem:[%s17 + $0x4] sm:$0xf]
  %v1739 = vld [vmem:[%s17 + $0x8] sm:$0xf]
  %v1740 = vld [vmem:[%s17 + $0xc] sm:$0xf]
  %v1741 = vld [vmem:[%s17 + $0x10] sm:$0xf]
  %v1742 = vld [vmem:[%s17 + $0x14] sm:$0xf]
  %v1743 = vld [vmem:[%s17 + $0x18] sm:$0xf]
  %v1744 = vld [vmem:[%s17 + $0x1c] sm:$0xf]
  %v1745 = vld [vmem:[%s17 + $0x20] sm:$0xf]
  %v1746 = vld [vmem:[%s17 + $0x24] sm:$0xf]
  %v1747 = vld [vmem:[%s17 + $0x28] sm:$0xf]
  %v1748 = vld [vmem:[%s17 + $0x2c] sm:$0xf]
  %v1761 = vunpack.c.l.b16 %v1737
  %v1762 = vunpack.c.l.b16 %v1738
  %v1763 = vunpack.c.l.b16 %v1739
  %v1764 = vunpack.c.l.b16 %v1740
  %v1765 = vunpack.c.l.b16 %v1741
  %v1766 = vunpack.c.l.b16 %v1742
  %v1767 = vunpack.c.l.b16 %v1743
  %v1768 = vunpack.c.l.b16 %v1744
  %v1769 = vunpack.c.l.b16 %v1745
  %v1770 = vunpack.c.l.b16 %v1746
  %v1771 = vunpack.c.l.b16 %v1747
  %v1772 = vunpack.c.l.b16 %v1748
  %v1773 = vpack.c.b16 %v1762, %v1761
  %v1774 = vpack.c.b16 %v1764, %v1763
  %v1775 = vpack.c.b16 %v1766, %v1765
  %v1776 = vpack.c.b16 %v1768, %v1767
  %v1777 = vpack.c.b16 %v1770, %v1769
  %v1778 = vpack.c.b16 %v1772, %v1771
  %v1786 = vsel %vm1057, %v1736, 0
  %1788 = vmatprep.subr.bf16.mxu0 0
  %1789 = vmatpush1.bf16.msra.mxu0 0
  %1790 = vmatprep.subr.bf16.mxu0 0
  %1791 = vmatpush1.bf16.msra.mxu0 0
  %1792 = vmatprep.subr.bf16.mxu0 0
  %1793 = vmatpush1.bf16.msra.mxu0 %v1778
  %1794 = vmatprep.subr.bf16.mxu0 0
  %1795 = vmatpush1.bf16.msra.mxu0 %v1777
  %1796 = vmatprep.subr.bf16.mxu0 0
  %1797 = vmatpush1.bf16.msra.mxu0 %v1776
  %1798 = vmatprep.subr.bf16.mxu0 0
  %1799 = vmatpush1.bf16.msra.mxu0 %v1775
  %1800 = vmatprep.subr.bf16.mxu0 0
  %1801 = vmatpush1.bf16.msra.mxu0 %v1774
  %1802 = vmatprep.subr.bf16.mxu0 0
  %1803 = vmatpush1.bf16.msra.mxu0 %v1773
  %1804 = vmatprep.subr.bf16.mxu0 0
  %1805 = vmatpush2.bf16.msra.mxu0 0
  %1806 = vmatprep.subr.bf16.mxu0 0
  %1807 = vmatpush2.bf16.msra.mxu0 0
  %1808 = vmatprep.subr.bf16.mxu0 0
  %1809 = vmatpush2.bf16.msra.mxu0 0
  %1810 = vmatprep.subr.bf16.mxu0 0
  %1811 = vmatpush2.bf16.msra.mxu0 0
  %1812 = vmatprep.subr.bf16.mxu0 0
  %1813 = vmatpush2.bf16.msra.mxu0 0
  %1814 = vmatprep.subr.bf16.mxu0 0
  %1815 = vmatpush2.bf16.msra.mxu0 0
  %1816 = vmatprep.subr.bf16.mxu0 0
  %1817 = vmatpush2.bf16.msra.mxu0 0
  %1818 = vmatprep.subr.bf16.mxu0 0
  %1819 = vmatpush2.bf16.msra.mxu0 0
  %1820 = vmatprep.mubr.bf16.mxu0 0
  %1821 = vmatmul.mubr.bf16.gmra.mxu0 %v1786
  %v1822 = vpop.f32.mrf.mxu0
  %v1823 = vadd.f32 0.0, %v1822
  %v1824 = vpop.f32.mrf.mxu0
  %v1825 = vpop.f32.mrf.mxu0
  %v1826 = vadd.f32 0.0, %v1825
  %v1827 = vpop.f32.mrf.mxu0
  %1828 = vdwg.mxu0
  %1831 = vrot.lane.b32.xlu0 %v1734, 16
  %v1832 = vpop.permute.xlu0 %1831
  %1833 = vrot.lane.b32.xlu0 %v1735, 16
  %v1834 = vpop.permute.xlu0 %1833
  %1837 = vrot.lane.b32.xlu0 %v1734, 32
  %v1838 = vpop.permute.xlu0 %1837
  %1839 = vrot.lane.b32.xlu0 %v1735, 32
  %v1840 = vpop.permute.xlu0 %1839
  %v1843 = vsel %vm154, %v1734, %v1832
  %v1844 = vsel %vm154, %v1735, %v1834
  %v1845 = vsel %vm350, %v1843, %v1838
  %v1846 = vsel %vm350, %v1844, %v1840
  %v1847 = vmul.f32 %v1823, %v1845
  %v1848 = vmul.f32 %v1826, %v1846
  %v1849 = vadd.f32 %v130, %v1617
  %v1850 = vadd.f32 %v131, %v1618
  %v1851 = vsel %vm86, %v1849, 0.0
  %1852 = vadd.xlane.f32.xlu0 %v1851
  %v1853 = vpop.xlane.xlu0 %1852
  %v1854 = vsel %vm86, %v1850, 0.0
  %1855 = vadd.xlane.f32.xlu0 %v1854
  %v1856 = vpop.xlane.xlu0 %1855
  %v1857 = vmul.f32 %v1853, %v93
  %v1858 = vmul.f32 %v1856, %v93
  %v1859 = vsub.f32 %v1849, %v1857
  %v1860 = vsub.f32 %v1850, %v1858
  %v1861 = vmul.f32 %v1859, %v1859
  %v1862 = vmul.f32 %v1860, %v1860
  %v1863 = vsel %vm86, %v1861, 0.0
  %1864 = vadd.xlane.f32.xlu0 %v1863
  %v1865 = vpop.xlane.xlu0 %1864
  %v1866 = vsel %vm86, %v1862, 0.0
  %1867 = vadd.xlane.f32.xlu0 %v1866
  %v1868 = vpop.xlane.xlu0 %1867
  %v1869 = vmul.f32 %v1865, %v93
  %v1870 = vmul.f32 %v1868, %v93
  %v1871 = vadd.f32 %v1869, 1e-05
  %v1872 = vadd.f32 %v1870, 1e-05
  %v1873 = vrsqrt.pop %v1871
  %v1874 = vrsqrt.pop %v1872
  %v1875 = vmul.f32 %v1859, %v1873
  %v1876 = vmul.f32 %v1860, %v1874
  %v1877 = vld [vmem:[%s20] sm:$0x1]
  %v1879 = vlaneseq
  %v1880 = vshrl.u32 %v1879, 7
  %v1881 = vsub.s32 0, %v1880
  %v1882 = vrot.slane %v1877, %v1881
  %v1884 = vmul.f32 %v1875, %v1882
  %v1885 = vmul.f32 %v1876, %v1882
  %v1886 = vld [vmem:[%s21] sm:$0x1]
  %v1888 = vlaneseq
  %v1889 = vshrl.u32 %v1888, 7
  %v1890 = vsub.s32 0, %v1889
  %v1891 = vrot.slane %v1886, %v1890
  %v1893 = vadd.f32 %v1884, %v1891
  %v1894 = vadd.f32 %v1885, %v1891
  %1895 = vst.msk [vmem:[%s22] sm:$0xff] %vm86, %v1893
  %1896 = vst.msk [vmem:[%s22 + $0x8] sm:$0xff] %vm86, %v1894
  %v1897 = vadd.f32 %v166, %v1847
  %v1898 = vadd.f32 %v167, %v1848
  %v1899 = vmul.f32 %v1897, %v1897
  %v1900 = vmul.f32 %v1898, %v1898
  %1903 = vrot.lane.b32.xlu0 %v1899, 112
  %v1904 = vpop.permute.xlu0 %1903
  %1905 = vrot.lane.b32.xlu0 %v1900, 112
  %v1906 = vpop.permute.xlu0 %1905
  %v1909 = vadd.f32 %v1899, %v1904
  %v1910 = vadd.f32 %v1900, %v1906
  %1911 = vrot.lane.b32.xlu0 %v1899, 96
  %v1912 = vpop.permute.xlu0 %1911
  %1913 = vrot.lane.b32.xlu0 %v1900, 96
  %v1914 = vpop.permute.xlu0 %1913
  %v1917 = vadd.f32 %v1909, %v1912
  %v1918 = vadd.f32 %v1910, %v1914
  %v1919 = vmax.f32 %v1917, 1e-08
  %v1920 = vmax.f32 %v1918, 1e-08
  %v1921 = vsel %vm154, %v1919, 0.0
  %1922 = vadd.xlane.f32.xlu0 %v1921
  %v1923 = vpop.xlane.xlu0 %1922
  %v1924 = vsel %vm154, %v1920, 0.0
  %1925 = vadd.xlane.f32.xlu0 %v1924
  %v1926 = vpop.xlane.xlu0 %1925
  %v1927 = vmul.f32 %v1923, %v161
  %v1928 = vmul.f32 %v1926, %v161
  %v1929 = vrsqrt.pop %v1927
  %v1930 = vrsqrt.pop %v1928
  %v1931 = vmul.f32 %v1897, %v1929
  %v1932 = vmul.f32 %v1898, %v1930
  %1933 = vst.msk [vmem:[%s23] sm:$0xff] %vm193, %v1931
  %1934 = vst.msk [vmem:[%s23 + $0x8] sm:$0xff] %vm193, %v1932
  // Predicated region
  $region90: #{base_model_forward.16} parent=0 // pred_check
    _
  $region91: #{base_model_forward.16} parent=0 // pred_check_branch
    %1936 = sbr.rel (0) target = $region93
  $region92: #{base_model_forward.16} parent=0 // pred_region
    _
  $region93: #{base_model_forward.16} parent=0 // pred_fallthru
    _
  // Predicated region
  $region94: #{base_model_forward.16} parent=0 // pred_check
    _
  $region95: #{base_model_forward.16} parent=0 // pred_check_branch
    %1938 = sbr.rel (0) target = $region97
  $region96: #{base_model_forward.16} parent=0 // pred_region
    _
  $region97: #{base_model_forward.16} parent=0 // pred_fallthru
    _
  // Predicated region
  $region98: #{base_model_forward.16} parent=0 // pred_check
    _
  $region99: #{base_model_forward.16} parent=0 // pred_check_branch
    %1940 = sbr.rel (0) target = $region101
  $region100: #{base_model_forward.16} parent=0 // pred_region
    _
  $region101: #{base_model_forward.16} parent=0 // pred_fallthru
    _
  // Predicated region
  $region102: #{base_model_forward.16} parent=0 // pred_check
    _
  $region103: #{base_model_forward.16} parent=0 // pred_check_branch
    %1942 = sbr.rel (0) target = $region105
  $region104: #{base_model_forward.16} parent=0 // pred_region
    _
  $region105: #{base_model_forward.16} parent=0 // pred_fallthru
    _

</llo_original>
